<compile_context>
chip_gen: v5e
topology: v5e:2x2
jax: 0.10.0
libtpu: 0.0.40
codegen_flags: <defaults>
</compile_context>

<pallas_src>
import functools
import math

import jax
import jax.numpy as jnp
from jax import lax
from jax.experimental import pallas as pl
from jax.experimental.pallas import tpu as pltpu

# ----------------------------- configuration --------------------------------
B = 2            # batch
T = 8            # sequence length
C = 64           # n_embd
HEAD_SIZE = 32   # head_size_a
DIM_ATT = 64     # dim_att
N_LAYER = 4
LAYER_ID = 1     # != 0 so the v_first mixing path is exercised
HEAD_DIV = 8     # head_size_divisor

N_HEAD = DIM_ATT // HEAD_SIZE           # H = 2
assert DIM_ATT % HEAD_SIZE == 0

D_DECAY = max(32, int(round(1.8 * C ** 0.5 / 32) * 32))
D_AAA   = max(32, int(round(1.8 * C ** 0.5 / 32) * 32))
D_MV    = max(32, int(round(1.3 * C ** 0.5 / 32) * 32))
D_GATE  = max(32, int(round(0.6 * C ** 0.8 / 32) * 32))

GN_EPS = 1e-5 * HEAD_DIV ** 2
P_HI = jax.lax.Precision.HIGHEST


# ----------------------------- Pallas: matmul --------------------------------
def _matmul_kernel(a_ref, b_ref, o_ref, acc_ref):
    @pl.when(pl.program_id(2) == 0)
    def _():
        acc_ref[...] = jnp.zeros_like(acc_ref)
    # DEFAULT precision (feedback): single-pass MXU, tolerance budget is 5e-2.
    acc_ref[...] += jnp.dot(a_ref[...], b_ref[...],
                            preferred_element_type=jnp.float32)

    @pl.when(pl.program_id(2) == pl.num_programs(2) - 1)
    def _():
        o_ref[...] = acc_ref[...].astype(o_ref.dtype)


def matmul(a, b, *, tm_cap=256, tk_cap=512, tn_cap=512):
    """(M, K) @ (K, N) -> (M, N) f32.  Tile caps keep VMEM bounded at scale."""
    M, K = a.shape
    K2, N = b.shape
    assert K == K2
    tm = M if M <= tm_cap else tm_cap
    tk = K if K <= tk_cap else tk_cap
    tn = N if N <= tn_cap else tn_cap
    assert M % tm == 0 and K % tk == 0 and N % tn == 0
    return pl.pallas_call(
        _matmul_kernel,
        out_shape=jax.ShapeDtypeStruct((M, N), jnp.float32),
        grid=(M // tm, N // tn, K // tk),
        in_specs=[pl.BlockSpec((tm, tk), lambda i, j, kx: (i, kx)),
                  pl.BlockSpec((tk, tn), lambda i, j, kx: (kx, j))],
        out_specs=pl.BlockSpec((tm, tn), lambda i, j, kx: (i, j)),
        scratch_shapes=[pltpu.VMEM((tm, tn), jnp.float32)],
        compiler_params=pltpu.CompilerParams(
            dimension_semantics=("parallel", "parallel", "arbitrary")),
    )(a, b)


# --------------------------- Pallas: WKV7 recurrence --------------------------
def _wkv7_kernel(r_ref, w_ref, k_ref, v_ref, a_ref, b_ref, hm_ref, o_ref):
    # refs: (T, C) per batch.  State is kept register-resident as S^T stacked over
    # heads in block-diagonal (C, C) form: rows = key index, cols = value index.
    Tn, Cn = r_ref.shape
    f32 = jnp.float32
    NT = (((1,), (1,)), ((), ()))   # contract both last dims ("trans_b" matmul)

    ii = lax.broadcasted_iota(jnp.int32, (Cn, Cn), 0)
    jj = lax.broadcasted_iota(jnp.int32, (Cn, Cn), 1)
    eye_f = (ii == jj).astype(f32)
    hm = hm_ref[...]                          # block-diagonal head mask (C, C)

    # hoisted: one full-block EUP pass for the decay, one load per input
    decay_all = jnp.exp(-jnp.exp(w_ref[...]))  # (T, C)
    r_all = r_ref[...]
    k_all = k_ref[...]
    v_all = v_ref[...]
    a_all = a_ref[...]
    b_all = b_ref[...]

    S = jnp.zeros((Cn, Cn), f32)
    outs = []
    for t in range(Tn):                        # static unroll (T is compile-time)
        d_row = decay_all[t:t + 1, :]          # (1, C)
        k_row = k_all[t:t + 1, :]
        b_row = b_all[t:t + 1, :]
        a_row = a_all[t:t + 1, :]
        r_row = r_all[t:t + 1, :]
        v_row = v_all[t:t + 1, :]
        # lane->sublane moves done on the MXU via identity trans-B matmuls
        d_col = lax.dot_general(eye_f, d_row, NT, precision=P_HI,
                                preferred_element_type=f32)          # (C, 1)
        k_col = lax.dot_general(eye_f, k_row, NT, precision=P_HI,
                                preferred_element_type=f32)
        b_col = lax.dot_general(eye_f, b_row, NT, precision=P_HI,
                                preferred_element_type=f32)
        sa = jnp.dot(a_row, S, precision=P_HI,
                     preferred_element_type=f32)                     # (1, C)
        S = S * d_col + (b_col * sa + k_col * v_row) * hm
        outs.append(jnp.dot(r_row, S, precision=P_HI,
                            preferred_element_type=f32))             # (1, C)
    o_ref[...] = jnp.concatenate(outs, axis=0).astype(o_ref.dtype)   # one store


def wkv7(r, w, k, v, a, b, hmask):
    """Inputs (B, T, C) f32 -> output (B, T, C) f32 (heads packed on the lane dim)."""
    Bn, Tn, Cn = r.shape
    spec = pl.BlockSpec((None, Tn, Cn), lambda bi: (bi, 0, 0))
    mspec = pl.BlockSpec((Cn, Cn), lambda bi: (0, 0))
    return pl.pallas_call(
        _wkv7_kernel,
        out_shape=jax.ShapeDtypeStruct((Bn, Tn, Cn), jnp.float32),
        grid=(Bn,),
        in_specs=[spec] * 6 + [mspec],
        out_specs=spec,
        compiler_params=pltpu.CompilerParams(dimension_semantics=("parallel",)),
    )(r, w, k, v, a, b, hmask)
    # TODO(synk): for large H this block-diagonal packing wastes lanes; add a head
    # grid axis with per-head (N, N) states for production head counts.


def wkv7_ref(r, w, k, v, a, b):
    """Pure-JAX reference of the recurrence, layout (B, H, T, N)."""
    def head(r, w, k, v, a, b):
        Nn = r.shape[-1]

        def step(S, inp):
            r_t, w_t, k_t, v_t, a_t, b_t = inp
            decay = jnp.exp(-jnp.exp(w_t))
            sa = jnp.dot(S, a_t, precision=P_HI)
            S = (S * decay[None, :] + sa[:, None] * b_t[None, :]
                 + v_t[:, None] * k_t[None, :])
            return S, jnp.dot(S, r_t, precision=P_HI)

        S0 = jnp.zeros((Nn, Nn), jnp.float32)
        _, out = lax.scan(step, S0, (r, w, k, v, a, b))
        return out
    return jax.vmap(jax.vmap(head))(r, w, k, v, a, b)


# -------- Pallas: fused GroupNorm + r_k bonus + gate + output projection ------
def _out_kernel(y_ref, r_ref, k_ref, v_ref, g_ref, rk_ref, gamma_ref, beta_ref,
                wo_ref, hm_ref, o_ref, *, eps, head_size):
    inv_n = 1.0 / head_size
    hm = hm_ref[...]                                            # (C, C) 0/1 mask
    y = y_ref[...]                                              # (rows, C)
    # per-head mean / var via mask matmul (MXU) -> broadcast over the head's lanes
    mean = jnp.dot(y, hm, precision=P_HI,
                   preferred_element_type=jnp.float32) * inv_n
    d = y - mean
    var = jnp.dot(d * d, hm, precision=P_HI,
                  preferred_element_type=jnp.float32) * inv_n
    yn = d * lax.rsqrt(var + eps) * gamma_ref[...] + beta_ref[...]
    bsum = jnp.dot(r_ref[...] * k_ref[...] * rk_ref[...], hm, precision=P_HI,
                   preferred_element_type=jnp.float32)
    z = (yn + bsum * v_ref[...]) * g_ref[...]
    # fused output projection (DEFAULT precision GEMM), lane-dense store
    o_ref[...] = jnp.dot(z, wo_ref[...],
                         preferred_element_type=jnp.float32).astype(o_ref.dtype)


def out_fused(y, r, k, v, g, rk, gamma, beta, wo, hmask, *, eps, head_size):
    rows, Cn = y.shape
    rblk = 8 if rows % 8 == 0 else rows
    big = pl.BlockSpec((rblk, Cn), lambda i: (i, 0))
    vec = pl.BlockSpec((1, Cn), lambda i: (0, 0))     # broadcast params, no tiling
    mat = pl.BlockSpec((Cn, Cn), lambda i: (0, 0))
    kern = functools.partial(_out_kernel, eps=eps, head_size=head_size)
    return pl.pallas_call(
        kern,
        out_shape=jax.ShapeDtypeStruct((rows, Cn), jnp.float32),
        grid=(rows // rblk,),
        in_specs=[big] * 5 + [vec] * 3 + [mat, mat],
        out_specs=big,
        compiler_params=pltpu.CompilerParams(dimension_semantics=("parallel",)),
    )(y, r, k, v, g, rk, gamma, beta, wo, hmask)


# ----------------------------- parameter init --------------------------------
def init_params(key):
    ks = jax.random.split(key, 16)
    r01 = LAYER_ID / (N_LAYER - 1)
    r1a0 = 1.0 - LAYER_ID / N_LAYER
    ddd = jnp.arange(C, dtype=jnp.float32) / C
    p = {}
    p['x_r'] = 1.0 - ddd ** (0.2 * r1a0)
    p['x_w'] = 1.0 - ddd ** (0.9 * r1a0)
    p['x_k'] = 1.0 - (ddd ** (0.9 * r1a0) + 0.4 * r01)
    p['x_v'] = 1.0 - (ddd ** (0.4 * r1a0) + 0.6 * r01)
    p['x_a'] = 1.0 - ddd ** (0.9 * r1a0)
    p['x_g'] = 1.0 - ddd ** (0.2 * r1a0)

    n = jnp.arange(C, dtype=jnp.float32)
    decay_speed = -7.0 + 5.0 * (n / (C - 1)) ** (0.85 + 1.0 * r01 ** 0.5)
    p['w0'] = decay_speed + 0.5

    # TODO(synk): module uses zeros / orthogonal_ init for the LoRA mats; use small
    # random normals here so the synthetic test exercises all paths.
    s = 0.1
    p['w1'] = jax.random.normal(ks[0], (C, D_DECAY)) * s
    p['w2'] = jax.random.normal(ks[1], (D_DECAY, C)) * s
    p['a0'] = jnp.zeros((C,), jnp.float32)
    p['a1'] = jax.random.normal(ks[2], (C, D_AAA)) * s
    p['a2'] = jax.random.normal(ks[3], (D_AAA, C)) * s
    p['v0'] = jnp.ones((C,), jnp.float32)
    p['v1'] = jax.random.normal(ks[4], (C, D_MV)) * s
    p['v2'] = jax.random.normal(ks[5], (D_MV, C)) * s
    p['g1'] = jax.random.normal(ks[6], (C, D_GATE)) * s
    p['g2'] = jax.random.normal(ks[7], (D_GATE, C)) * s

    p['k_k'] = jnp.full((C,), 0.85, jnp.float32)
    p['k_a'] = jnp.ones((C,), jnp.float32)
    p['r_k'] = jax.random.normal(ks[8], (N_HEAD, HEAD_SIZE)) * 0.1

    wscale = 1.0 / math.sqrt(C)
    # Linear weights stored pre-transposed as (in, out): y = x @ W
    p['wr'] = jax.random.normal(ks[9], (C, C)) * wscale
    p['wk'] = jax.random.normal(ks[10], (C, C)) * wscale
    p['wv'] = jax.random.normal(ks[11], (C, C)) * wscale
    # module zero-inits output.weight; small random here -> non-trivial test output.
    p['wo'] = jax.random.normal(ks[12], (C, C)) * wscale

    layer_scale = (1 + LAYER_ID) / N_LAYER
    p['ln_w'] = jnp.full((C,), layer_scale ** 0.7, jnp.float32)
    p['ln_b'] = jnp.zeros((C,), jnp.float32)
    return p


# ----------------------------- Pallas forward --------------------------------
def forward_pallas(params, x, v_first):
    Bn, Tn, Cn = x.shape
    H, N = N_HEAD, HEAD_SIZE
    M = Bn * Tn

    shifted = jnp.concatenate([jnp.zeros((Bn, 1, Cn), x.dtype), x[:, :-1, :]], axis=1)
    xx = shifted - x
    # one wide GEMM for all first-stage projections:
    #   x_j @ W_j = x @ W_j + xx @ (diag(mix_j) W_j)  for every projection j
    X2 = jnp.concatenate([x, xx], axis=-1).reshape(M, 2 * Cn)          # (M, 2C)

    mixes = [params['x_r'], params['x_k'], params['x_v'],
             params['x_w'], params['x_a'], params['x_v'], params['x_g']]
    weights = [params['wr'], params['wk'], params['wv'],
               params['w1'], params['a1'], params['v1'], params['g1']]
    top = jnp.concatenate(weights, axis=1)
    bot = jnp.concatenate([m[:, None] * wgt for m, wgt in zip(mixes, weights)], axis=1)
    W1 = jnp.concatenate([top, bot], axis=0)                           # (2C, 320)

    Y1 = matmul(X2, W1)
    c = Cn
    r = Y1[:, 0:c]
    k_raw = Y1[:, c:2 * c]
    v_raw = Y1[:, 2 * c:3 * c]
    off = 3 * c
    hw = Y1[:, off:off + D_DECAY]; off += D_DECAY
    ha = Y1[:, off:off + D_AAA];   off += D_AAA
    hv = Y1[:, off:off + D_MV];    off += D_MV
    hg = Y1[:, off:off + D_GATE]

    # one block-diagonal GEMM for all LoRA up-projections
    H2 = jnp.concatenate([jnp.tanh(hw), ha, hv, jax.nn.sigmoid(hg)], axis=1)
    blocks = [params['w2'], params['a2'], params['v2'], params['g2']]
    rows2 = []
    for i, blk in enumerate(blocks):
        row = [blk if j == i else jnp.zeros((blk.shape[0], b2.shape[1]), blk.dtype)
               for j, b2 in enumerate(blocks)]
        rows2.append(jnp.concatenate(row, axis=1))
    W2 = jnp.concatenate(rows2, axis=0)                                # (128, 256)

    Y2 = matmul(H2, W2)
    w_lora = Y2[:, 0:c]
    a_lora = Y2[:, c:2 * c]
    v_lora = Y2[:, 2 * c:3 * c]
    g = Y2[:, 3 * c:4 * c]

    w = -jax.nn.softplus(-(params['w0'] + w_lora)) - 0.5
    a = jax.nn.sigmoid(params['a0'] + a_lora)
    if LAYER_ID == 0:
        v = v_raw
        v_first_out = v.reshape(Bn, Tn, Cn)
    else:
        vf = v_first.reshape(M, Cn)
        v = v_raw + (vf - v_raw) * jax.nn.sigmoid(params['v0'] + v_lora)
        v_first_out = v_first

    kk = k_raw * params['k_k']
    kk = kk.reshape(M, H, N)
    kk = kk / jnp.maximum(jnp.sqrt(jnp.sum(kk * kk, axis=-1, keepdims=True)), 1e-12)
    kk = kk.reshape(M, Cn)
    k = k_raw * (1.0 + (a - 1.0) * params['k_a'])
    aa = -kk
    bb = kk * a

    lane = jnp.arange(Cn)
    hmask = (lane[:, None] // N == lane[None, :] // N).astype(jnp.float32)

    to3 = lambda t: t.reshape(Bn, Tn, Cn)      # free reshape, no transposes needed
    y = wkv7(to3(r), to3(w), to3(k), to3(v), to3(aa), to3(bb), hmask)  # (B, T, C)

    out = out_fused(y.reshape(M, Cn), r, k, v, g,
                    params['r_k'].reshape(1, Cn),
                    params['ln_w'].reshape(1, Cn),
                    params['ln_b'].reshape(1, Cn),
                    params['wo'], hmask,
                    eps=GN_EPS, head_size=N)
    return out.reshape(Bn, Tn, Cn), v_first_out


# --------------------------- pure-JAX reference -------------------------------
def forward_ref(params, x, v_first):
    Bn, Tn, Cn = x.shape
    H, N = N_HEAD, HEAD_SIZE
    mm = lambda aa_, bb_: jnp.dot(aa_, bb_, precision=P_HI)

    shifted = jnp.concatenate([jnp.zeros((Bn, 1, Cn), x.dtype), x[:, :-1, :]], axis=1)
    xx = shifted - x
    xr = x + xx * params['x_r']
    xw = x + xx * params['x_w']
    xk = x + xx * params['x_k']
    xv = x + xx * params['x_v']
    xa = x + xx * params['x_a']
    xg = x + xx * params['x_g']

    r = mm(xr, params['wr'])
    w = -jax.nn.softplus(-(params['w0'] + mm(jnp.tanh(mm(xw, params['w1'])),
                                             params['w2']))) - 0.5
    k = mm(xk, params['wk'])
    v = mm(xv, params['wv'])
    if LAYER_ID == 0:
        v_first = v
    else:
        v = v + (v_first - v) * jax.nn.sigmoid(
            params['v0'] + mm(mm(xv, params['v1']), params['v2']))
    a = jax.nn.sigmoid(params['a0'] + mm(mm(xa, params['a1']), params['a2']))
    g = mm(jax.nn.sigmoid(mm(xg, params['g1'])), params['g2'])

    kk = k * params['k_k']
    kk = kk.reshape(Bn, Tn, H, N)
    kk = kk / jnp.maximum(jnp.sqrt(jnp.sum(kk * kk, axis=-1, keepdims=True)), 1e-12)
    kk = kk.reshape(Bn, Tn, Cn)
    k = k * (1.0 + (a - 1.0) * params['k_a'])

    to_bhtn = lambda t: t.reshape(Bn, Tn, H, N).transpose(0, 2, 1, 3)
    y = wkv7_ref(to_bhtn(r), to_bhtn(w), to_bhtn(k), to_bhtn(v),
                 to_bhtn(-kk), to_bhtn(kk * a))
    y = y.transpose(0, 2, 1, 3).reshape(Bn, Tn, Cn)

    yh = y.reshape(Bn * Tn, H, N)
    mean = jnp.mean(yh, axis=-1, keepdims=True)
    var = jnp.mean((yh - mean) ** 2, axis=-1, keepdims=True)
    yn = ((yh - mean) * lax.rsqrt(var + GN_EPS)).reshape(Bn * Tn, Cn)
    yn = (yn * params['ln_w'] + params['ln_b']).reshape(Bn, Tn, Cn)

    bonus = (jnp.sum(r.reshape(Bn, Tn, H, N) * k.reshape(Bn, Tn, H, N) * params['r_k'],
                     axis=-1, keepdims=True)
             * v.reshape(Bn, Tn, H, N)).reshape(Bn, Tn, Cn)
    out = mm((yn + bonus) * g, params['wo'])
    return out, v_first


# ---------------------------------- main --------------------------------------
if __name__ == "__main__":
    key = jax.random.PRNGKey(0)
    pkey, xkey, vkey = jax.random.split(key, 3)
    params = init_params(pkey)
    x = jax.random.normal(xkey, (B, T, C), jnp.float32) * 0.5
    v_first_in = jax.random.normal(vkey, (B, T, C), jnp.float32) * 0.5

    fwd_pallas = jax.jit(forward_pallas)
    fwd_ref = jax.jit(forward_ref)

    out, v_first_out = fwd_pallas(params, x, v_first_in)
    jax.block_until_ready(out)

    out_ref, v_first_ref = fwd_ref(params, x, v_first_in)
    err = float(jnp.max(jnp.abs(out - out_ref)))
    err_v = float(jnp.max(jnp.abs(v_first_out - v_first_ref)))
    assert err < 5e-2 and err_v < 5e-2, (err, err_v)

    print("KERNEL_OK")
</pallas_src>

<mosaic_0001>
module attributes {stable_mosaic.version = 11 : i64} {
  func.func @_matmul_kernel(%arg0: i32, %arg1: i32, %arg2: i32, %arg3: memref<16x128xf32, #tpu.memory_space<vmem>>, %arg4: memref<128x320xf32, #tpu.memory_space<vmem>>, %arg5: memref<16x320xf32, #tpu.memory_space<vmem>>, %arg6: memref<16x320xf32, #tpu.memory_space<vmem>>) attributes {dimension_semantics = [#tpu.dimension_semantics<parallel>, #tpu.dimension_semantics<parallel>, #tpu.dimension_semantics<arbitrary>], iteration_bounds = array<i64: 1, 1, 1>, scalar_prefetch = 0 : i64, scratch_operands = 1 : i64, tpu.core_type = #tpu.core_type<tc>, window_params = [{transform_indices = @transform_0, window_bounds = array<i64: 16, 128>}, {transform_indices = @transform_1, window_bounds = array<i64: 128, 320>}, {transform_indices = @transform_2, window_bounds = array<i64: 16, 320>}]} {
    %c0_i32 = arith.constant 0 : i32
    %0 = arith.cmpi eq, %arg2, %c0_i32 : i32
    %1 = arith.extui %0 : i1 to i32
    %c0_i32_0 = arith.constant 0 : i32
    %2 = arith.cmpi ne, %1, %c0_i32_0 : i32
    scf.if %2 {
      %cst_10 = arith.constant 0.000000e+00 : f32
      %12 = vector.broadcast %cst_10 : f32 to vector<16x320xf32>
      %c0_11 = arith.constant 0 : index
      %c0_12 = arith.constant 0 : index
      %13 = vector.load %arg6[%c0_11, %c0_12] : memref<16x320xf32, #tpu.memory_space<vmem>>, vector<16x320xf32>
      tpu.vector_store %arg6[%c0_11, %c0_12], %12 {strides = array<i32>} : memref<16x320xf32, #tpu.memory_space<vmem>>, vector<16x320xf32>,
    } else {
    }
    %c0 = arith.constant 0 : index
    %c0_1 = arith.constant 0 : index
    %3 = vector.load %arg6[%c0, %c0_1] : memref<16x320xf32, #tpu.memory_space<vmem>>, vector<16x320xf32>
    %c0_2 = arith.constant 0 : index
    %c0_3 = arith.constant 0 : index
    %4 = vector.load %arg3[%c0_2, %c0_3] : memref<16x128xf32, #tpu.memory_space<vmem>>, vector<16x128xf32>
    %c0_4 = arith.constant 0 : index
    %c0_5 = arith.constant 0 : index
    %5 = vector.load %arg4[%c0_4, %c0_5] : memref<128x320xf32, #tpu.memory_space<vmem>>, vector<128x320xf32>
    %cst = arith.constant dense<0.000000e+00> : vector<16x320xf32>
    %6 = tpu.matmul %4, %5, %cst {dimension_numbers = #tpu.dot_dimension_numbers<[1], [0], [0], [1], [0, 0, 1, 1], [], []>} : vector<16x128xf32>, vector<128x320xf32>, vector<16x320xf32> -> vector<16x320xf32>
    %7 = arith.addf %3, %6 : vector<16x320xf32>
    %c0_6 = arith.constant 0 : index
    %c0_7 = arith.constant 0 : index
    %8 = vector.load %arg6[%c0_6, %c0_7] : memref<16x320xf32, #tpu.memory_space<vmem>>, vector<16x320xf32>
    tpu.vector_store %arg6[%c0_6, %c0_7], %7 {strides = array<i32>} : memref<16x320xf32, #tpu.memory_space<vmem>>, vector<16x320xf32>,
    %c0_i32_8 = arith.constant 0 : i32
    %9 = arith.cmpi eq, %arg2, %c0_i32_8 : i32
    %10 = arith.extui %9 : i1 to i32
    %c0_i32_9 = arith.constant 0 : i32
    %11 = arith.cmpi ne, %10, %c0_i32_9 : i32
    scf.if %11 {
      %c0_10 = arith.constant 0 : index
      %c0_11 = arith.constant 0 : index
      %12 = vector.load %arg6[%c0_10, %c0_11] : memref<16x320xf32, #tpu.memory_space<vmem>>, vector<16x320xf32>
      %c0_12 = arith.constant 0 : index
      %c0_13 = arith.constant 0 : index
      %13 = vector.load %arg5[%c0_12, %c0_13] : memref<16x320xf32, #tpu.memory_space<vmem>>, vector<16x320xf32>
      tpu.vector_store %arg5[%c0_12, %c0_13], %12 {strides = array<i32>} : memref<16x320xf32, #tpu.memory_space<vmem>>, vector<16x320xf32>,
    } else {
    }
    return
  }
  func.func @transform_0(%arg0: i32, %arg1: i32, %arg2: i32) -> (i32, i32) {
    %c0_i32 = arith.constant 0 : i32
    return %arg0, %arg2 : i32, i32
  }
  func.func @transform_1(%arg0: i32, %arg1: i32, %arg2: i32) -> (i32, i32) {
    %c0_i32 = arith.constant 0 : i32
    return %arg2, %arg1 : i32, i32
  }
  func.func @transform_2(%arg0: i32, %arg1: i32, %arg2: i32) -> (i32, i32) {
    %c0_i32 = arith.constant 0 : i32
    return %arg0, %arg1 : i32, i32
  }
}

module attributes {stable_mosaic.version = 11 : i64} {
  func.func @_matmul_kernel(%arg0: i32, %arg1: i32, %arg2: i32, %arg3: memref<16x128xf32, #tpu.memory_space<vmem>>, %arg4: memref<128x256xf32, #tpu.memory_space<vmem>>, %arg5: memref<16x256xf32, #tpu.memory_space<vmem>>, %arg6: memref<16x256xf32, #tpu.memory_space<vmem>>) attributes {dimension_semantics = [#tpu.dimension_semantics<parallel>, #tpu.dimension_semantics<parallel>, #tpu.dimension_semantics<arbitrary>], iteration_bounds = array<i64: 1, 1, 1>, scalar_prefetch = 0 : i64, scratch_operands = 1 : i64, tpu.core_type = #tpu.core_type<tc>, window_params = [{transform_indices = @transform_0, window_bounds = array<i64: 16, 128>}, {transform_indices = @transform_1, window_bounds = array<i64: 128, 256>}, {transform_indices = @transform_2, window_bounds = array<i64: 16, 256>}]} {
    %c0_i32 = arith.constant 0 : i32
    %0 = arith.cmpi eq, %arg2, %c0_i32 : i32
    %1 = arith.extui %0 : i1 to i32
    %c0_i32_0 = arith.constant 0 : i32
    %2 = arith.cmpi ne, %1, %c0_i32_0 : i32
    scf.if %2 {
      %cst_10 = arith.constant 0.000000e+00 : f32
      %12 = vector.broadcast %cst_10 : f32 to vector<16x256xf32>
      %c0_11 = arith.constant 0 : index
      %c0_12 = arith.constant 0 : index
      %13 = vector.load %arg6[%c0_11, %c0_12] : memref<16x256xf32, #tpu.memory_space<vmem>>, vector<16x256xf32>
      tpu.vector_store %arg6[%c0_11, %c0_12], %12 {strides = array<i32>} : memref<16x256xf32, #tpu.memory_space<vmem>>, vector<16x256xf32>,
    } else {
    }
    %c0 = arith.constant 0 : index
    %c0_1 = arith.constant 0 : index
    %3 = vector.load %arg6[%c0, %c0_1] : memref<16x256xf32, #tpu.memory_space<vmem>>, vector<16x256xf32>
    %c0_2 = arith.constant 0 : index
    %c0_3 = arith.constant 0 : index
    %4 = vector.load %arg3[%c0_2, %c0_3] : memref<16x128xf32, #tpu.memory_space<vmem>>, vector<16x128xf32>
    %c0_4 = arith.constant 0 : index
    %c0_5 = arith.constant 0 : index
    %5 = vector.load %arg4[%c0_4, %c0_5] : memref<128x256xf32, #tpu.memory_space<vmem>>, vector<128x256xf32>
    %cst = arith.constant dense<0.000000e+00> : vector<16x256xf32>
    %6 = tpu.matmul %4, %5, %cst {dimension_numbers = #tpu.dot_dimension_numbers<[1], [0], [0], [1], [0, 0, 1, 1], [], []>} : vector<16x128xf32>, vector<128x256xf32>, vector<16x256xf32> -> vector<16x256xf32>
    %7 = arith.addf %3, %6 : vector<16x256xf32>
    %c0_6 = arith.constant 0 : index
    %c0_7 = arith.constant 0 : index
    %8 = vector.load %arg6[%c0_6, %c0_7] : memref<16x256xf32, #tpu.memory_space<vmem>>, vector<16x256xf32>
    tpu.vector_store %arg6[%c0_6, %c0_7], %7 {strides = array<i32>} : memref<16x256xf32, #tpu.memory_space<vmem>>, vector<16x256xf32>,
    %c0_i32_8 = arith.constant 0 : i32
    %9 = arith.cmpi eq, %arg2, %c0_i32_8 : i32
    %10 = arith.extui %9 : i1 to i32
    %c0_i32_9 = arith.constant 0 : i32
    %11 = arith.cmpi ne, %10, %c0_i32_9 : i32
    scf.if %11 {
      %c0_10 = arith.constant 0 : index
      %c0_11 = arith.constant 0 : index
      %12 = vector.load %arg6[%c0_10, %c0_11] : memref<16x256xf32, #tpu.memory_space<vmem>>, vector<16x256xf32>
      %c0_12 = arith.constant 0 : index
      %c0_13 = arith.constant 0 : index
      %13 = vector.load %arg5[%c0_12, %c0_13] : memref<16x256xf32, #tpu.memory_space<vmem>>, vector<16x256xf32>
      tpu.vector_store %arg5[%c0_12, %c0_13], %12 {strides = array<i32>} : memref<16x256xf32, #tpu.memory_space<vmem>>, vector<16x256xf32>,
    } else {
    }
    return
  }
  func.func @transform_0(%arg0: i32, %arg1: i32, %arg2: i32) -> (i32, i32) {
    %c0_i32 = arith.constant 0 : i32
    return %arg0, %arg2 : i32, i32
  }
  func.func @transform_1(%arg0: i32, %arg1: i32, %arg2: i32) -> (i32, i32) {
    %c0_i32 = arith.constant 0 : i32
    return %arg2, %arg1 : i32, i32
  }
  func.func @transform_2(%arg0: i32, %arg1: i32, %arg2: i32) -> (i32, i32) {
    %c0_i32 = arith.constant 0 : i32
    return %arg0, %arg1 : i32, i32
  }
}

module attributes {stable_mosaic.version = 11 : i64} {
  func.func @_wkv7_kernel(%arg0: i32, %arg1: memref<1x8x64xf32, #tpu.memory_space<vmem>>, %arg2: memref<1x8x64xf32, #tpu.memory_space<vmem>>, %arg3: memref<1x8x64xf32, #tpu.memory_space<vmem>>, %arg4: memref<1x8x64xf32, #tpu.memory_space<vmem>>, %arg5: memref<1x8x64xf32, #tpu.memory_space<vmem>>, %arg6: memref<1x8x64xf32, #tpu.memory_space<vmem>>, %arg7: memref<64x64xf32, #tpu.memory_space<vmem>>, %arg8: memref<1x8x64xf32, #tpu.memory_space<vmem>>) attributes {dimension_semantics = [#tpu.dimension_semantics<parallel>], iteration_bounds = array<i64: 2>, scalar_prefetch = 0 : i64, scratch_operands = 0 : i64, tpu.core_type = #tpu.core_type<tc>, window_params = [{transform_indices = @transform_0, window_bounds = array<i64: 1, 8, 64>}, {transform_indices = @transform_1, window_bounds = array<i64: 1, 8, 64>}, {transform_indices = @transform_2, window_bounds = array<i64: 1, 8, 64>}, {transform_indices = @transform_3, window_bounds = array<i64: 1, 8, 64>}, {transform_indices = @transform_4, window_bounds = array<i64: 1, 8, 64>}, {transform_indices = @transform_5, window_bounds = array<i64: 1, 8, 64>}, {pipeline_mode = #tpu.pipeline_mode<synchronous>, transform_indices = @transform_6, window_bounds = array<i64: 64, 64>}, {transform_indices = @transform_7, window_bounds = array<i64: 1, 8, 64>}]} {
    %0 = tpu.iota {dimensions = array<i32: 0>} : vector<64x64xi32>
    %1 = tpu.iota {dimensions = array<i32: 1>} : vector<64x64xi32>
    %2 = arith.cmpi eq, %0, %1 : vector<64x64xi32>
    %3 = arith.extui %2 : vector<64x64xi1> to vector<64x64xi32>
    %4 = arith.sitofp %3 : vector<64x64xi32> to vector<64x64xf32>
    %c0 = arith.constant 0 : index
    %c0_0 = arith.constant 0 : index
    %5 = vector.load %arg7[%c0, %c0_0] : memref<64x64xf32, #tpu.memory_space<vmem>>, vector<64x64xf32>
    %c0_1 = arith.constant 0 : index
    %c0_2 = arith.constant 0 : index
    %c0_3 = arith.constant 0 : index
    %6 = vector.load %arg2[%c0_1, %c0_2, %c0_3] : memref<1x8x64xf32, #tpu.memory_space<vmem>>, vector<1x8x64xf32>
    %7 = vector.shape_cast %6 : vector<1x8x64xf32> to vector<8x64xf32>
    %8 = math.exp %7 : vector<8x64xf32>
    %cst = arith.constant 0.000000e+00 : f32
    %9 = vector.broadcast %cst : f32 to vector<8x64xf32>
    %10 = arith.subf %9, %8 : vector<8x64xf32>
    %11 = math.exp %10 : vector<8x64xf32>
    %c0_4 = arith.constant 0 : index
    %c0_5 = arith.constant 0 : index
    %c0_6 = arith.constant 0 : index
    %12 = vector.load %arg1[%c0_4, %c0_5, %c0_6] : memref<1x8x64xf32, #tpu.memory_space<vmem>>, vector<1x8x64xf32>
    %13 = vector.shape_cast %12 : vector<1x8x64xf32> to vector<8x64xf32>
    %c0_7 = arith.constant 0 : index
    %c0_8 = arith.constant 0 : index
    %c0_9 = arith.constant 0 : index
    %14 = vector.load %arg3[%c0_7, %c0_8, %c0_9] : memref<1x8x64xf32, #tpu.memory_space<vmem>>, vector<1x8x64xf32>
    %15 = vector.shape_cast %14 : vector<1x8x64xf32> to vector<8x64xf32>
    %c0_10 = arith.constant 0 : index
    %c0_11 = arith.constant 0 : index
    %c0_12 = arith.constant 0 : index
    %16 = vector.load %arg4[%c0_10, %c0_11, %c0_12] : memref<1x8x64xf32, #tpu.memory_space<vmem>>, vector<1x8x64xf32>
    %17 = vector.shape_cast %16 : vector<1x8x64xf32> to vector<8x64xf32>
    %c0_13 = arith.constant 0 : index
    %c0_14 = arith.constant 0 : index
    %c0_15 = arith.constant 0 : index
    %18 = vector.load %arg5[%c0_13, %c0_14, %c0_15] : memref<1x8x64xf32, #tpu.memory_space<vmem>>, vector<1x8x64xf32>
    %19 = vector.shape_cast %18 : vector<1x8x64xf32> to vector<8x64xf32>
    %c0_16 = arith.constant 0 : index
    %c0_17 = arith.constant 0 : index
    %c0_18 = arith.constant 0 : index
    %20 = vector.load %arg6[%c0_16, %c0_17, %c0_18] : memref<1x8x64xf32, #tpu.memory_space<vmem>>, vector<1x8x64xf32>
    %21 = vector.shape_cast %20 : vector<1x8x64xf32> to vector<8x64xf32>
    %cst_19 = arith.constant 0.000000e+00 : f32
    %22 = vector.broadcast %cst_19 : f32 to vector<64x64xf32>
    %23 = vector.extract_strided_slice %11 {offsets = [0, 0], sizes = [1, 64], strides = [1, 1]} : vector<8x64xf32> to vector<1x64xf32>
    %24 = vector.extract_strided_slice %15 {offsets = [0, 0], sizes = [1, 64], strides = [1, 1]} : vector<8x64xf32> to vector<1x64xf32>
    %25 = vector.extract_strided_slice %21 {offsets = [0, 0], sizes = [1, 64], strides = [1, 1]} : vector<8x64xf32> to vector<1x64xf32>
    %26 = vector.extract_strided_slice %19 {offsets = [0, 0], sizes = [1, 64], strides = [1, 1]} : vector<8x64xf32> to vector<1x64xf32>
    %27 = vector.extract_strided_slice %13 {offsets = [0, 0], sizes = [1, 64], strides = [1, 1]} : vector<8x64xf32> to vector<1x64xf32>
    %28 = vector.extract_strided_slice %17 {offsets = [0, 0], sizes = [1, 64], strides = [1, 1]} : vector<8x64xf32> to vector<1x64xf32>
    %cst_20 = arith.constant dense<0.000000e+00> : vector<64x1xf32>
    %29 = tpu.matmul %4, %23, %cst_20 {dimension_numbers = #tpu.dot_dimension_numbers<[1], [1], [0], [0], [0, 0, 1, 0], [], []>, precision = #tpu.contract_precision<fp32>} : vector<64x64xf32>, vector<1x64xf32>, vector<64x1xf32> -> vector<64x1xf32>
    %cst_21 = arith.constant dense<0.000000e+00> : vector<64x1xf32>
    %30 = tpu.matmul %4, %24, %cst_21 {dimension_numbers = #tpu.dot_dimension_numbers<[1], [1], [0], [0], [0, 0, 1, 0], [], []>, precision = #tpu.contract_precision<fp32>} : vector<64x64xf32>, vector<1x64xf32>, vector<64x1xf32> -> vector<64x1xf32>
    %cst_22 = arith.constant dense<0.000000e+00> : vector<64x1xf32>
    %31 = tpu.matmul %4, %25, %cst_22 {dimension_numbers = #tpu.dot_dimension_numbers<[1], [1], [0], [0], [0, 0, 1, 0], [], []>, precision = #tpu.contract_precision<fp32>} : vector<64x64xf32>, vector<1x64xf32>, vector<64x1xf32> -> vector<64x1xf32>
    %cst_23 = arith.constant dense<0.000000e+00> : vector<1x64xf32>
    %32 = tpu.matmul %26, %22, %cst_23 {dimension_numbers = #tpu.dot_dimension_numbers<[1], [0], [0], [1], [0, 0, 1, 1], [], []>, precision = #tpu.contract_precision<fp32>} : vector<1x64xf32>, vector<64x64xf32>, vector<1x64xf32> -> vector<1x64xf32>
    %33 = vector.broadcast %29 : vector<64x1xf32> to vector<64x64xf32>
    %34 = arith.mulf %22, %33 : vector<64x64xf32>
    %35 = vector.broadcast %31 : vector<64x1xf32> to vector<64x64xf32>
    %36 = vector.broadcast %32 : vector<1x64xf32> to vector<64x64xf32>
    %37 = arith.mulf %35, %36 : vector<64x64xf32>
    %38 = vector.broadcast %30 : vector<64x1xf32> to vector<64x64xf32>
    %39 = vector.broadcast %28 : vector<1x64xf32> to vector<64x64xf32>
    %40 = arith.mulf %38, %39 : vector<64x64xf32>
    %41 = arith.addf %37, %40 : vector<64x64xf32>
    %42 = arith.mulf %41, %5 : vector<64x64xf32>
    %43 = arith.addf %34, %42 : vector<64x64xf32>
    %cst_24 = arith.constant dense<0.000000e+00> : vector<1x64xf32>
    %44 = tpu.matmul %27, %43, %cst_24 {dimension_numbers = #tpu.dot_dimension_numbers<[1], [0], [0], [1], [0, 0, 1, 1], [], []>, precision = #tpu.contract_precision<fp32>} : vector<1x64xf32>, vector<64x64xf32>, vector<1x64xf32> -> vector<1x64xf32>
    %45 = vector.extract_strided_slice %11 {offsets = [1, 0], sizes = [1, 64], strides = [1, 1]} : vector<8x64xf32> to vector<1x64xf32>
    %46 = vector.extract_strided_slice %15 {offsets = [1, 0], sizes = [1, 64], strides = [1, 1]} : vector<8x64xf32> to vector<1x64xf32>
    %47 = vector.extract_strided_slice %21 {offsets = [1, 0], sizes = [1, 64], strides = [1, 1]} : vector<8x64xf32> to vector<1x64xf32>
    %48 = vector.extract_strided_slice %19 {offsets = [1, 0], sizes = [1, 64], strides = [1, 1]} : vector<8x64xf32> to vector<1x64xf32>
    %49 = vector.extract_strided_slice %13 {offsets = [1, 0], sizes = [1, 64], strides = [1, 1]} : vector<8x64xf32> to vector<1x64xf32>
    %50 = vector.extract_strided_slice %17 {offsets = [1, 0], sizes = [1, 64], strides = [1, 1]} : vector<8x64xf32> to vector<1x64xf32>
    %cst_25 = arith.constant dense<0.000000e+00> : vector<64x1xf32>
    %51 = tpu.matmul %4, %45, %cst_25 {dimension_numbers = #tpu.dot_dimension_numbers<[1], [1], [0], [0], [0, 0, 1, 0], [], []>, precision = #tpu.contract_precision<fp32>} : vector<64x64xf32>, vector<1x64xf32>, vector<64x1xf32> -> vector<64x1xf32>
    %cst_26 = arith.constant dense<0.000000e+00> : vector<64x1xf32>
    %52 = tpu.matmul %4, %46, %cst_26 {dimension_numbers = #tpu.dot_dimension_numbers<[1], [1], [0], [0], [0, 0, 1, 0], [], []>, precision = #tpu.contract_precision<fp32>} : vector<64x64xf32>, vector<1x64xf32>, vector<64x1xf32> -> vector<64x1xf32>
    %cst_27 = arith.constant dense<0.000000e+00> : vector<64x1xf32>
    %53 = tpu.matmul %4, %47, %cst_27 {dimension_numbers = #tpu.dot_dimension_numbers<[1], [1], [0], [0], [0, 0, 1, 0], [], []>, precision = #tpu.contract_precision<fp32>} : vector<64x64xf32>, vector<1x64xf32>, vector<64x1xf32> -> vector<64x1xf32>
    %cst_28 = arith.constant dense<0.000000e+00> : vector<1x64xf32>
    %54 = tpu.matmul %48, %43, %cst_28 {dimension_numbers = #tpu.dot_dimension_numbers<[1], [0], [0], [1], [0, 0, 1, 1], [], []>, precision = #tpu.contract_precision<fp32>} : vector<1x64xf32>, vector<64x64xf32>, vector<1x64xf32> -> vector<1x64xf32>
    %55 = vector.broadcast %51 : vector<64x1xf32> to vector<64x64xf32>
    %56 = arith.mulf %43, %55 : vector<64x64xf32>
    %57 = vector.broadcast %53 : vector<64x1xf32> to vector<64x64xf32>
    %58 = vector.broadcast %54 : vector<1x64xf32> to vector<64x64xf32>
    %59 = arith.mulf %57, %58 : vector<64x64xf32>
    %60 = vector.broadcast %52 : vector<64x1xf32> to vector<64x64xf32>
    %61 = vector.broadcast %50 : vector<1x64xf32> to vector<64x64xf32>
    %62 = arith.mulf %60, %61 : vector<64x64xf32>
    %63 = arith.addf %59, %62 : vector<64x64xf32>
    %64 = arith.mulf %63, %5 : vector<64x64xf32>
    %65 = arith.addf %56, %64 : vector<64x64xf32>
    %cst_29 = arith.constant dense<0.000000e+00> : vector<1x64xf32>
    %66 = tpu.matmul %49, %65, %cst_29 {dimension_numbers = #tpu.dot_dimension_numbers<[1], [0], [0], [1], [0, 0, 1, 1], [], []>, precision = #tpu.contract_precision<fp32>} : vector<1x64xf32>, vector<64x64xf32>, vector<1x64xf32> -> vector<1x64xf32>
    %67 = vector.extract_strided_slice %11 {offsets = [2, 0], sizes = [1, 64], strides = [1, 1]} : vector<8x64xf32> to vector<1x64xf32>
    %68 = vector.extract_strided_slice %15 {offsets = [2, 0], sizes = [1, 64], strides = [1, 1]} : vector<8x64xf32> to vector<1x64xf32>
    %69 = vector.extract_strided_slice %21 {offsets = [2, 0], sizes = [1, 64], strides = [1, 1]} : vector<8x64xf32> to vector<1x64xf32>
    %70 = vector.extract_strided_slice %19 {offsets = [2, 0], sizes = [1, 64], strides = [1, 1]} : vector<8x64xf32> to vector<1x64xf32>
    %71 = vector.extract_strided_slice %13 {offsets = [2, 0], sizes = [1, 64], strides = [1, 1]} : vector<8x64xf32> to vector<1x64xf32>
    %72 = vector.extract_strided_slice %17 {offsets = [2, 0], sizes = [1, 64], strides = [1, 1]} : vector<8x64xf32> to vector<1x64xf32>
    %cst_30 = arith.constant dense<0.000000e+00> : vector<64x1xf32>
    %73 = tpu.matmul %4, %67, %cst_30 {dimension_numbers = #tpu.dot_dimension_numbers<[1], [1], [0], [0], [0, 0, 1, 0], [], []>, precision = #tpu.contract_precision<fp32>} : vector<64x64xf32>, vector<1x64xf32>, vector<64x1xf32> -> vector<64x1xf32>
    %cst_31 = arith.constant dense<0.000000e+00> : vector<64x1xf32>
    %74 = tpu.matmul %4, %68, %cst_31 {dimension_numbers = #tpu.dot_dimension_numbers<[1], [1], [0], [0], [0, 0, 1, 0], [], []>, precision = #tpu.contract_precision<fp32>} : vector<64x64xf32>, vector<1x64xf32>, vector<64x1xf32> -> vector<64x1xf32>
    %cst_32 = arith.constant dense<0.000000e+00> : vector<64x1xf32>
    %75 = tpu.matmul %4, %69, %cst_32 {dimension_numbers = #tpu.dot_dimension_numbers<[1], [1], [0], [0], [0, 0, 1, 0], [], []>, precision = #tpu.contract_precision<fp32>} : vector<64x64xf32>, vector<1x64xf32>, vector<64x1xf32> -> vector<64x1xf32>
    %cst_33 = arith.constant dense<0.000000e+00> : vector<1x64xf32>
    %76 = tpu.matmul %70, %65, %cst_33 {dimension_numbers = #tpu.dot_dimension_numbers<[1], [0], [0], [1], [0, 0, 1, 1], [], []>, precision = #tpu.contract_precision<fp32>} : vector<1x64xf32>, vector<64x64xf32>, vector<1x64xf32> -> vector<1x64xf32>
    %77 = vector.broadcast %73 : vector<64x1xf32> to vector<64x64xf32>
    %78 = arith.mulf %65, %77 : vector<64x64xf32>
    %79 = vector.broadcast %75 : vector<64x1xf32> to vector<64x64xf32>
    %80 = vector.broadcast %76 : vector<1x64xf32> to vector<64x64xf32>
    %81 = arith.mulf %79, %80 : vector<64x64xf32>
    %82 = vector.broadcast %74 : vector<64x1xf32> to vector<64x64xf32>
    %83 = vector.broadcast %72 : vector<1x64xf32> to vector<64x64xf32>
    %84 = arith.mulf %82, %83 : vector<64x64xf32>
    %85 = arith.addf %81, %84 : vector<64x64xf32>
    %86 = arith.mulf %85, %5 : vector<64x64xf32>
    %87 = arith.addf %78, %86 : vector<64x64xf32>
    %cst_34 = arith.constant dense<0.000000e+00> : vector<1x64xf32>
    %88 = tpu.matmul %71, %87, %cst_34 {dimension_numbers = #tpu.dot_dimension_numbers<[1], [0], [0], [1], [0, 0, 1, 1], [], []>, precision = #tpu.contract_precision<fp32>} : vector<1x64xf32>, vector<64x64xf32>, vector<1x64xf32> -> vector<1x64xf32>
    %89 = vector.extract_strided_slice %11 {offsets = [3, 0], sizes = [1, 64], strides = [1, 1]} : vector<8x64xf32> to vector<1x64xf32>
    %90 = vector.extract_strided_slice %15 {offsets = [3, 0], sizes = [1, 64], strides = [1, 1]} : vector<8x64xf32> to vector<1x64xf32>
    %91 = vector.extract_strided_slice %21 {offsets = [3, 0], sizes = [1, 64], strides = [1, 1]} : vector<8x64xf32> to vector<1x64xf32>
    %92 = vector.extract_strided_slice %19 {offsets = [3, 0], sizes = [1, 64], strides = [1, 1]} : vector<8x64xf32> to vector<1x64xf32>
    %93 = vector.extract_strided_slice %13 {offsets = [3, 0], sizes = [1, 64], strides = [1, 1]} : vector<8x64xf32> to vector<1x64xf32>
    %94 = vector.extract_strided_slice %17 {offsets = [3, 0], sizes = [1, 64], strides = [1, 1]} : vector<8x64xf32> to vector<1x64xf32>
    %cst_35 = arith.constant dense<0.000000e+00> : vector<64x1xf32>
    %95 = tpu.matmul %4, %89, %cst_35 {dimension_numbers = #tpu.dot_dimension_numbers<[1], [1], [0], [0], [0, 0, 1, 0], [], []>, precision = #tpu.contract_precision<fp32>} : vector<64x64xf32>, vector<1x64xf32>, vector<64x1xf32> -> vector<64x1xf32>
    %cst_36 = arith.constant dense<0.000000e+00> : vector<64x1xf32>
    %96 = tpu.matmul %4, %90, %cst_36 {dimension_numbers = #tpu.dot_dimension_numbers<[1], [1], [0], [0], [0, 0, 1, 0], [], []>, precision = #tpu.contract_precision<fp32>} : vector<64x64xf32>, vector<1x64xf32>, vector<64x1xf32> -> vector<64x1xf32>
    %cst_37 = arith.constant dense<0.000000e+00> : vector<64x1xf32>
    %97 = tpu.matmul %4, %91, %cst_37 {dimension_numbers = #tpu.dot_dimension_numbers<[1], [1], [0], [0], [0, 0, 1, 0], [], []>, precision = #tpu.contract_precision<fp32>} : vector<64x64xf32>, vector<1x64xf32>, vector<64x1xf32> -> vector<64x1xf32>
    %cst_38 = arith.constant dense<0.000000e+00> : vector<1x64xf32>
    %98 = tpu.matmul %92, %87, %cst_38 {dimension_numbers = #tpu.dot_dimension_numbers<[1], [0], [0], [1], [0, 0, 1, 1], [], []>, precision = #tpu.contract_precision<fp32>} : vector<1x64xf32>, vector<64x64xf32>, vector<1x64xf32> -> vector<1x64xf32>
    %99 = vector.broadcast %95 : vector<64x1xf32> to vector<64x64xf32>
    %100 = arith.mulf %87, %99 : vector<64x64xf32>
    %101 = vector.broadcast %97 : vector<64x1xf32> to vector<64x64xf32>
    %102 = vector.broadcast %98 : vector<1x64xf32> to vector<64x64xf32>
    %103 = arith.mulf %101, %102 : vector<64x64xf32>
    %104 = vector.broadcast %96 : vector<64x1xf32> to vector<64x64xf32>
    %105 = vector.broadcast %94 : vector<1x64xf32> to vector<64x64xf32>
    %106 = arith.mulf %104, %105 : vector<64x64xf32>
    %107 = arith.addf %103, %106 : vector<64x64xf32>
    %108 = arith.mulf %107, %5 : vector<64x64xf32>
    %109 = arith.addf %100, %108 : vector<64x64xf32>
    %cst_39 = arith.constant dense<0.000000e+00> : vector<1x64xf32>
    %110 = tpu.matmul %93, %109, %cst_39 {dimension_numbers = #tpu.dot_dimension_numbers<[1], [0], [0], [1], [0, 0, 1, 1], [], []>, precision = #tpu.contract_precision<fp32>} : vector<1x64xf32>, vector<64x64xf32>, vector<1x64xf32> -> vector<1x64xf32>
    %111 = vector.extract_strided_slice %11 {offsets = [4, 0], sizes = [1, 64], strides = [1, 1]} : vector<8x64xf32> to vector<1x64xf32>
    %112 = vector.extract_strided_slice %15 {offsets = [4, 0], sizes = [1, 64], strides = [1, 1]} : vector<8x64xf32> to vector<1x64xf32>
    %113 = vector.extract_strided_slice %21 {offsets = [4, 0], sizes = [1, 64], strides = [1, 1]} : vector<8x64xf32> to vector<1x64xf32>
    %114 = vector.extract_strided_slice %19 {offsets = [4, 0], sizes = [1, 64], strides = [1, 1]} : vector<8x64xf32> to vector<1x64xf32>
    %115 = vector.extract_strided_slice %13 {offsets = [4, 0], sizes = [1, 64], strides = [1, 1]} : vector<8x64xf32> to vector<1x64xf32>
    %116 = vector.extract_strided_slice %17 {offsets = [4, 0], sizes = [1, 64], strides = [1, 1]} : vector<8x64xf32> to vector<1x64xf32>
    %cst_40 = arith.constant dense<0.000000e+00> : vector<64x1xf32>
    %117 = tpu.matmul %4, %111, %cst_40 {dimension_numbers = #tpu.dot_dimension_numbers<[1], [1], [0], [0], [0, 0, 1, 0], [], []>, precision = #tpu.contract_precision<fp32>} : vector<64x64xf32>, vector<1x64xf32>, vector<64x1xf32> -> vector<64x1xf32>
    %cst_41 = arith.constant dense<0.000000e+00> : vector<64x1xf32>
    %118 = tpu.matmul %4, %112, %cst_41 {dimension_numbers = #tpu.dot_dimension_numbers<[1], [1], [0], [0], [0, 0, 1, 0], [], []>, precision = #tpu.contract_precision<fp32>} : vector<64x64xf32>, vector<1x64xf32>, vector<64x1xf32> -> vector<64x1xf32>
    %cst_42 = arith.constant dense<0.000000e+00> : vector<64x1xf32>
    %119 = tpu.matmul %4, %113, %cst_42 {dimension_numbers = #tpu.dot_dimension_numbers<[1], [1], [0], [0], [0, 0, 1, 0], [], []>, precision = #tpu.contract_precision<fp32>} : vector<64x64xf32>, vector<1x64xf32>, vector<64x1xf32> -> vector<64x1xf32>
    %cst_43 = arith.constant dense<0.000000e+00> : vector<1x64xf32>
    %120 = tpu.matmul %114, %109, %cst_43 {dimension_numbers = #tpu.dot_dimension_numbers<[1], [0], [0], [1], [0, 0, 1, 1], [], []>, precision = #tpu.contract_precision<fp32>} : vector<1x64xf32>, vector<64x64xf32>, vector<1x64xf32> -> vector<1x64xf32>
    %121 = vector.broadcast %117 : vector<64x1xf32> to vector<64x64xf32>
    %122 = arith.mulf %109, %121 : vector<64x64xf32>
    %123 = vector.broadcast %119 : vector<64x1xf32> to vector<64x64xf32>
    %124 = vector.broadcast %120 : vector<1x64xf32> to vector<64x64xf32>
    %125 = arith.mulf %123, %124 : vector<64x64xf32>
    %126 = vector.broadcast %118 : vector<64x1xf32> to vector<64x64xf32>
    %127 = vector.broadcast %116 : vector<1x64xf32> to vector<64x64xf32>
    %128 = arith.mulf %126, %127 : vector<64x64xf32>
    %129 = arith.addf %125, %128 : vector<64x64xf32>
    %130 = arith.mulf %129, %5 : vector<64x64xf32>
    %131 = arith.addf %122, %130 : vector<64x64xf32>
    %cst_44 = arith.constant dense<0.000000e+00> : vector<1x64xf32>
    %132 = tpu.matmul %115, %131, %cst_44 {dimension_numbers = #tpu.dot_dimension_numbers<[1], [0], [0], [1], [0, 0, 1, 1], [], []>, precision = #tpu.contract_precision<fp32>} : vector<1x64xf32>, vector<64x64xf32>, vector<1x64xf32> -> vector<1x64xf32>
    %133 = vector.extract_strided_slice %11 {offsets = [5, 0], sizes = [1, 64], strides = [1, 1]} : vector<8x64xf32> to vector<1x64xf32>
    %134 = vector.extract_strided_slice %15 {offsets = [5, 0], sizes = [1, 64], strides = [1, 1]} : vector<8x64xf32> to vector<1x64xf32>
    %135 = vector.extract_strided_slice %21 {offsets = [5, 0], sizes = [1, 64], strides = [1, 1]} : vector<8x64xf32> to vector<1x64xf32>
    %136 = vector.extract_strided_slice %19 {offsets = [5, 0], sizes = [1, 64], strides = [1, 1]} : vector<8x64xf32> to vector<1x64xf32>
    %137 = vector.extract_strided_slice %13 {offsets = [5, 0], sizes = [1, 64], strides = [1, 1]} : vector<8x64xf32> to vector<1x64xf32>
    %138 = vector.extract_strided_slice %17 {offsets = [5, 0], sizes = [1, 64], strides = [1, 1]} : vector<8x64xf32> to vector<1x64xf32>
    %cst_45 = arith.constant dense<0.000000e+00> : vector<64x1xf32>
    %139 = tpu.matmul %4, %133, %cst_45 {dimension_numbers = #tpu.dot_dimension_numbers<[1], [1], [0], [0], [0, 0, 1, 0], [], []>, precision = #tpu.contract_precision<fp32>} : vector<64x64xf32>, vector<1x64xf32>, vector<64x1xf32> -> vector<64x1xf32>
    %cst_46 = arith.constant dense<0.000000e+00> : vector<64x1xf32>
    %140 = tpu.matmul %4, %134, %cst_46 {dimension_numbers = #tpu.dot_dimension_numbers<[1], [1], [0], [0], [0, 0, 1, 0], [], []>, precision = #tpu.contract_precision<fp32>} : vector<64x64xf32>, vector<1x64xf32>, vector<64x1xf32> -> vector<64x1xf32>
    %cst_47 = arith.constant dense<0.000000e+00> : vector<64x1xf32>
    %141 = tpu.matmul %4, %135, %cst_47 {dimension_numbers = #tpu.dot_dimension_numbers<[1], [1], [0], [0], [0, 0, 1, 0], [], []>, precision = #tpu.contract_precision<fp32>} : vector<64x64xf32>, vector<1x64xf32>, vector<64x1xf32> -> vector<64x1xf32>
    %cst_48 = arith.constant dense<0.000000e+00> : vector<1x64xf32>
    %142 = tpu.matmul %136, %131, %cst_48 {dimension_numbers = #tpu.dot_dimension_numbers<[1], [0], [0], [1], [0, 0, 1, 1], [], []>, precision = #tpu.contract_precision<fp32>} : vector<1x64xf32>, vector<64x64xf32>, vector<1x64xf32> -> vector<1x64xf32>
    %143 = vector.broadcast %139 : vector<64x1xf32> to vector<64x64xf32>
    %144 = arith.mulf %131, %143 : vector<64x64xf32>
    %145 = vector.broadcast %141 : vector<64x1xf32> to vector<64x64xf32>
    %146 = vector.broadcast %142 : vector<1x64xf32> to vector<64x64xf32>
    %147 = arith.mulf %145, %146 : vector<64x64xf32>
    %148 = vector.broadcast %140 : vector<64x1xf32> to vector<64x64xf32>
    %149 = vector.broadcast %138 : vector<1x64xf32> to vector<64x64xf32>
    %150 = arith.mulf %148, %149 : vector<64x64xf32>
    %151 = arith.addf %147, %150 : vector<64x64xf32>
    %152 = arith.mulf %151, %5 : vector<64x64xf32>
    %153 = arith.addf %144, %152 : vector<64x64xf32>
    %cst_49 = arith.constant dense<0.000000e+00> : vector<1x64xf32>
    %154 = tpu.matmul %137, %153, %cst_49 {dimension_numbers = #tpu.dot_dimension_numbers<[1], [0], [0], [1], [0, 0, 1, 1], [], []>, precision = #tpu.contract_precision<fp32>} : vector<1x64xf32>, vector<64x64xf32>, vector<1x64xf32> -> vector<1x64xf32>
    %155 = vector.extract_strided_slice %11 {offsets = [6, 0], sizes = [1, 64], strides = [1, 1]} : vector<8x64xf32> to vector<1x64xf32>
    %156 = vector.extract_strided_slice %15 {offsets = [6, 0], sizes = [1, 64], strides = [1, 1]} : vector<8x64xf32> to vector<1x64xf32>
    %157 = vector.extract_strided_slice %21 {offsets = [6, 0], sizes = [1, 64], strides = [1, 1]} : vector<8x64xf32> to vector<1x64xf32>
    %158 = vector.extract_strided_slice %19 {offsets = [6, 0], sizes = [1, 64], strides = [1, 1]} : vector<8x64xf32> to vector<1x64xf32>
    %159 = vector.extract_strided_slice %13 {offsets = [6, 0], sizes = [1, 64], strides = [1, 1]} : vector<8x64xf32> to vector<1x64xf32>
    %160 = vector.extract_strided_slice %17 {offsets = [6, 0], sizes = [1, 64], strides = [1, 1]} : vector<8x64xf32> to vector<1x64xf32>
    %cst_50 = arith.constant dense<0.000000e+00> : vector<64x1xf32>
    %161 = tpu.matmul %4, %155, %cst_50 {dimension_numbers = #tpu.dot_dimension_numbers<[1], [1], [0], [0], [0, 0, 1, 0], [], []>, precision = #tpu.contract_precision<fp32>} : vector<64x64xf32>, vector<1x64xf32>, vector<64x1xf32> -> vector<64x1xf32>
    %cst_51 = arith.constant dense<0.000000e+00> : vector<64x1xf32>
    %162 = tpu.matmul %4, %156, %cst_51 {dimension_numbers = #tpu.dot_dimension_numbers<[1], [1], [0], [0], [0, 0, 1, 0], [], []>, precision = #tpu.contract_precision<fp32>} : vector<64x64xf32>, vector<1x64xf32>, vector<64x1xf32> -> vector<64x1xf32>
    %cst_52 = arith.constant dense<0.000000e+00> : vector<64x1xf32>
    %163 = tpu.matmul %4, %157, %cst_52 {dimension_numbers = #tpu.dot_dimension_numbers<[1], [1], [0], [0], [0, 0, 1, 0], [], []>, precision = #tpu.contract_precision<fp32>} : vector<64x64xf32>, vector<1x64xf32>, vector<64x1xf32> -> vector<64x1xf32>
    %cst_53 = arith.constant dense<0.000000e+00> : vector<1x64xf32>
    %164 = tpu.matmul %158, %153, %cst_53 {dimension_numbers = #tpu.dot_dimension_numbers<[1], [0], [0], [1], [0, 0, 1, 1], [], []>, precision = #tpu.contract_precision<fp32>} : vector<1x64xf32>, vector<64x64xf32>, vector<1x64xf32> -> vector<1x64xf32>
    %165 = vector.broadcast %161 : vector<64x1xf32> to vector<64x64xf32>
    %166 = arith.mulf %153, %165 : vector<64x64xf32>
    %167 = vector.broadcast %163 : vector<64x1xf32> to vector<64x64xf32>
    %168 = vector.broadcast %164 : vector<1x64xf32> to vector<64x64xf32>
    %169 = arith.mulf %167, %168 : vector<64x64xf32>
    %170 = vector.broadcast %162 : vector<64x1xf32> to vector<64x64xf32>
    %171 = vector.broadcast %160 : vector<1x64xf32> to vector<64x64xf32>
    %172 = arith.mulf %170, %171 : vector<64x64xf32>
    %173 = arith.addf %169, %172 : vector<64x64xf32>
    %174 = arith.mulf %173, %5 : vector<64x64xf32>
    %175 = arith.addf %166, %174 : vector<64x64xf32>
    %cst_54 = arith.constant dense<0.000000e+00> : vector<1x64xf32>
    %176 = tpu.matmul %159, %175, %cst_54 {dimension_numbers = #tpu.dot_dimension_numbers<[1], [0], [0], [1], [0, 0, 1, 1], [], []>, precision = #tpu.contract_precision<fp32>} : vector<1x64xf32>, vector<64x64xf32>, vector<1x64xf32> -> vector<1x64xf32>
    %177 = vector.extract_strided_slice %11 {offsets = [7, 0], sizes = [1, 64], strides = [1, 1]} : vector<8x64xf32> to vector<1x64xf32>
    %178 = vector.extract_strided_slice %15 {offsets = [7, 0], sizes = [1, 64], strides = [1, 1]} : vector<8x64xf32> to vector<1x64xf32>
    %179 = vector.extract_strided_slice %21 {offsets = [7, 0], sizes = [1, 64], strides = [1, 1]} : vector<8x64xf32> to vector<1x64xf32>
    %180 = vector.extract_strided_slice %19 {offsets = [7, 0], sizes = [1, 64], strides = [1, 1]} : vector<8x64xf32> to vector<1x64xf32>
    %181 = vector.extract_strided_slice %13 {offsets = [7, 0], sizes = [1, 64], strides = [1, 1]} : vector<8x64xf32> to vector<1x64xf32>
    %182 = vector.extract_strided_slice %17 {offsets = [7, 0], sizes = [1, 64], strides = [1, 1]} : vector<8x64xf32> to vector<1x64xf32>
    %cst_55 = arith.constant dense<0.000000e+00> : vector<64x1xf32>
    %183 = tpu.matmul %4, %177, %cst_55 {dimension_numbers = #tpu.dot_dimension_numbers<[1], [1], [0], [0], [0, 0, 1, 0], [], []>, precision = #tpu.contract_precision<fp32>} : vector<64x64xf32>, vector<1x64xf32>, vector<64x1xf32> -> vector<64x1xf32>
    %cst_56 = arith.constant dense<0.000000e+00> : vector<64x1xf32>
    %184 = tpu.matmul %4, %178, %cst_56 {dimension_numbers = #tpu.dot_dimension_numbers<[1], [1], [0], [0], [0, 0, 1, 0], [], []>, precision = #tpu.contract_precision<fp32>} : vector<64x64xf32>, vector<1x64xf32>, vector<64x1xf32> -> vector<64x1xf32>
    %cst_57 = arith.constant dense<0.000000e+00> : vector<64x1xf32>
    %185 = tpu.matmul %4, %179, %cst_57 {dimension_numbers = #tpu.dot_dimension_numbers<[1], [1], [0], [0], [0, 0, 1, 0], [], []>, precision = #tpu.contract_precision<fp32>} : vector<64x64xf32>, vector<1x64xf32>, vector<64x1xf32> -> vector<64x1xf32>
    %cst_58 = arith.constant dense<0.000000e+00> : vector<1x64xf32>
    %186 = tpu.matmul %180, %175, %cst_58 {dimension_numbers = #tpu.dot_dimension_numbers<[1], [0], [0], [1], [0, 0, 1, 1], [], []>, precision = #tpu.contract_precision<fp32>} : vector<1x64xf32>, vector<64x64xf32>, vector<1x64xf32> -> vector<1x64xf32>
    %187 = vector.broadcast %183 : vector<64x1xf32> to vector<64x64xf32>
    %188 = arith.mulf %175, %187 : vector<64x64xf32>
    %189 = vector.broadcast %185 : vector<64x1xf32> to vector<64x64xf32>
    %190 = vector.broadcast %186 : vector<1x64xf32> to vector<64x64xf32>
    %191 = arith.mulf %189, %190 : vector<64x64xf32>
    %192 = vector.broadcast %184 : vector<64x1xf32> to vector<64x64xf32>
    %193 = vector.broadcast %182 : vector<1x64xf32> to vector<64x64xf32>
    %194 = arith.mulf %192, %193 : vector<64x64xf32>
    %195 = arith.addf %191, %194 : vector<64x64xf32>
    %196 = arith.mulf %195, %5 : vector<64x64xf32>
    %197 = arith.addf %188, %196 : vector<64x64xf32>
    %cst_59 = arith.constant dense<0.000000e+00> : vector<1x64xf32>
    %198 = tpu.matmul %181, %197, %cst_59 {dimension_numbers = #tpu.dot_dimension_numbers<[1], [0], [0], [1], [0, 0, 1, 1], [], []>, precision = #tpu.contract_precision<fp32>} : vector<1x64xf32>, vector<64x64xf32>, vector<1x64xf32> -> vector<1x64xf32>
    %199 = tpu.concatenate %44, %66, %88, %110, %132, %154, %176, %198 in 0 : vector<1x64xf32>, vector<1x64xf32>, vector<1x64xf32>, vector<1x64xf32>, vector<1x64xf32>, vector<1x64xf32>, vector<1x64xf32>, vector<1x64xf32> -> vector<8x64xf32>
    %c0_60 = arith.constant 0 : index
    %c0_61 = arith.constant 0 : index
    %c0_62 = arith.constant 0 : index
    %200 = vector.load %arg8[%c0_60, %c0_61, %c0_62] : memref<1x8x64xf32, #tpu.memory_space<vmem>>, vector<1x8x64xf32>
    %201 = vector.shape_cast %200 : vector<1x8x64xf32> to vector<8x64xf32>
    %202 = vector.shape_cast %199 : vector<8x64xf32> to vector<1x8x64xf32>
    tpu.vector_store %arg8[%c0_60, %c0_61, %c0_62], %202 {strides = array<i32>} : memref<1x8x64xf32, #tpu.memory_space<vmem>>, vector<1x8x64xf32>,
    return
  }
  func.func @transform_0(%arg0: i32) -> (i32, i32, i32) {
    %c0_i32 = arith.constant 0 : i32
    %c0_i32_0 = arith.constant 0 : i32
    %c0_i32_1 = arith.constant 0 : i32
    return %arg0, %c0_i32, %c0_i32_0 : i32, i32, i32
  }
  func.func @transform_1(%arg0: i32) -> (i32, i32, i32) {
    %c0_i32 = arith.constant 0 : i32
    %c0_i32_0 = arith.constant 0 : i32
    %c0_i32_1 = arith.constant 0 : i32
    return %arg0, %c0_i32, %c0_i32_0 : i32, i32, i32
  }
  func.func @transform_2(%arg0: i32) -> (i32, i32, i32) {
    %c0_i32 = arith.constant 0 : i32
    %c0_i32_0 = arith.constant 0 : i32
    %c0_i32_1 = arith.constant 0 : i32
    return %arg0, %c0_i32, %c0_i32_0 : i32, i32, i32
  }
  func.func @transform_3(%arg0: i32) -> (i32, i32, i32) {
    %c0_i32 = arith.constant 0 : i32
    %c0_i32_0 = arith.constant 0 : i32
    %c0_i32_1 = arith.constant 0 : i32
    return %arg0, %c0_i32, %c0_i32_0 : i32, i32, i32
  }
  func.func @transform_4(%arg0: i32) -> (i32, i32, i32) {
    %c0_i32 = arith.constant 0 : i32
    %c0_i32_0 = arith.constant 0 : i32
    %c0_i32_1 = arith.constant 0 : i32
    return %arg0, %c0_i32, %c0_i32_0 : i32, i32, i32
  }
  func.func @transform_5(%arg0: i32) -> (i32, i32, i32) {
    %c0_i32 = arith.constant 0 : i32
    %c0_i32_0 = arith.constant 0 : i32
    %c0_i32_1 = arith.constant 0 : i32
    return %arg0, %c0_i32, %c0_i32_0 : i32, i32, i32
  }
  func.func @transform_6(%arg0: i32) -> (i32, i32) {
    %c0_i32 = arith.constant 0 : i32
    %c0_i32_0 = arith.constant 0 : i32
    %c0_i32_1 = arith.constant 0 : i32
    return %c0_i32, %c0_i32_0 : i32, i32
  }
  func.func @transform_7(%arg0: i32) -> (i32, i32, i32) {
    %c0_i32 = arith.constant 0 : i32
    %c0_i32_0 = arith.constant 0 : i32
    %c0_i32_1 = arith.constant 0 : i32
    return %arg0, %c0_i32, %c0_i32_0 : i32, i32, i32
  }
}

module attributes {stable_mosaic.version = 11 : i64} {
  func.func @_out_kernel(%arg0: i32, %arg1: memref<8x64xf32, #tpu.memory_space<vmem>>, %arg2: memref<8x64xf32, #tpu.memory_space<vmem>>, %arg3: memref<8x64xf32, #tpu.memory_space<vmem>>, %arg4: memref<8x64xf32, #tpu.memory_space<vmem>>, %arg5: memref<8x64xf32, #tpu.memory_space<vmem>>, %arg6: memref<1x64xf32, #tpu.memory_space<vmem>>, %arg7: memref<1x64xf32, #tpu.memory_space<vmem>>, %arg8: memref<1x64xf32, #tpu.memory_space<vmem>>, %arg9: memref<64x64xf32, #tpu.memory_space<vmem>>, %arg10: memref<64x64xf32, #tpu.memory_space<vmem>>, %arg11: memref<8x64xf32, #tpu.memory_space<vmem>>) attributes {dimension_semantics = [#tpu.dimension_semantics<parallel>], iteration_bounds = array<i64: 2>, scalar_prefetch = 0 : i64, scratch_operands = 0 : i64, tpu.core_type = #tpu.core_type<tc>, window_params = [{transform_indices = @transform_0, window_bounds = array<i64: 8, 64>}, {transform_indices = @transform_1, window_bounds = array<i64: 8, 64>}, {transform_indices = @transform_2, window_bounds = array<i64: 8, 64>}, {transform_indices = @transform_3, window_bounds = array<i64: 8, 64>}, {transform_indices = @transform_4, window_bounds = array<i64: 8, 64>}, {pipeline_mode = #tpu.pipeline_mode<synchronous>, transform_indices = @transform_5, window_bounds = array<i64: 1, 64>}, {pipeline_mode = #tpu.pipeline_mode<synchronous>, transform_indices = @transform_6, window_bounds = array<i64: 1, 64>}, {pipeline_mode = #tpu.pipeline_mode<synchronous>, transform_indices = @transform_7, window_bounds = array<i64: 1, 64>}, {pipeline_mode = #tpu.pipeline_mode<synchronous>, transform_indices = @transform_8, window_bounds = array<i64: 64, 64>}, {pipeline_mode = #tpu.pipeline_mode<synchronous>, transform_indices = @transform_9, window_bounds = array<i64: 64, 64>}, {transform_indices = @transform_10, window_bounds = array<i64: 8, 64>}]} {
    %c0 = arith.constant 0 : index
    %c0_0 = arith.constant 0 : index
    %0 = vector.load %arg10[%c0, %c0_0] : memref<64x64xf32, #tpu.memory_space<vmem>>, vector<64x64xf32>
    %c0_1 = arith.constant 0 : index
    %c0_2 = arith.constant 0 : index
    %1 = vector.load %arg1[%c0_1, %c0_2] : memref<8x64xf32, #tpu.memory_space<vmem>>, vector<8x64xf32>
    %cst = arith.constant dense<0.000000e+00> : vector<8x64xf32>
    %2 = tpu.matmul %1, %0, %cst {dimension_numbers = #tpu.dot_dimension_numbers<[1], [0], [0], [1], [0, 0, 1, 1], [], []>, precision = #tpu.contract_precision<fp32>} : vector<8x64xf32>, vector<64x64xf32>, vector<8x64xf32> -> vector<8x64xf32>
    %cst_3 = arith.constant 3.125000e-02 : f32
    %3 = vector.broadcast %cst_3 : f32 to vector<8x64xf32>
    %4 = arith.mulf %2, %3 : vector<8x64xf32>
    %5 = arith.subf %1, %4 : vector<8x64xf32>
    %6 = arith.mulf %5, %5 : vector<8x64xf32>
    %cst_4 = arith.constant dense<0.000000e+00> : vector<8x64xf32>
    %7 = tpu.matmul %6, %0, %cst_4 {dimension_numbers = #tpu.dot_dimension_numbers<[1], [0], [0], [1], [0, 0, 1, 1], [], []>, precision = #tpu.contract_precision<fp32>} : vector<8x64xf32>, vector<64x64xf32>, vector<8x64xf32> -> vector<8x64xf32>
    %cst_5 = arith.constant 3.125000e-02 : f32
    %8 = vector.broadcast %cst_5 : f32 to vector<8x64xf32>
    %9 = arith.mulf %7, %8 : vector<8x64xf32>
    %cst_6 = arith.constant 6.400000e-04 : f32
    %10 = vector.broadcast %cst_6 : f32 to vector<8x64xf32>
    %11 = arith.addf %9, %10 : vector<8x64xf32>
    %12 = math.rsqrt %11 : vector<8x64xf32>
    %13 = arith.mulf %5, %12 : vector<8x64xf32>
    %c0_7 = arith.constant 0 : index
    %c0_8 = arith.constant 0 : index
    %14 = vector.load %arg7[%c0_7, %c0_8] : memref<1x64xf32, #tpu.memory_space<vmem>>, vector<1x64xf32>
    %15 = vector.broadcast %14 : vector<1x64xf32> to vector<8x64xf32>
    %16 = arith.mulf %13, %15 : vector<8x64xf32>
    %c0_9 = arith.constant 0 : index
    %c0_10 = arith.constant 0 : index
    %17 = vector.load %arg8[%c0_9, %c0_10] : memref<1x64xf32, #tpu.memory_space<vmem>>, vector<1x64xf32>
    %18 = vector.broadcast %17 : vector<1x64xf32> to vector<8x64xf32>
    %19 = arith.addf %16, %18 : vector<8x64xf32>
    %c0_11 = arith.constant 0 : index
    %c0_12 = arith.constant 0 : index
    %20 = vector.load %arg2[%c0_11, %c0_12] : memref<8x64xf32, #tpu.memory_space<vmem>>, vector<8x64xf32>
    %c0_13 = arith.constant 0 : index
    %c0_14 = arith.constant 0 : index
    %21 = vector.load %arg3[%c0_13, %c0_14] : memref<8x64xf32, #tpu.memory_space<vmem>>, vector<8x64xf32>
    %22 = arith.mulf %20, %21 : vector<8x64xf32>
    %c0_15 = arith.constant 0 : index
    %c0_16 = arith.constant 0 : index
    %23 = vector.load %arg6[%c0_15, %c0_16] : memref<1x64xf32, #tpu.memory_space<vmem>>, vector<1x64xf32>
    %24 = vector.broadcast %23 : vector<1x64xf32> to vector<8x64xf32>
    %25 = arith.mulf %22, %24 : vector<8x64xf32>
    %cst_17 = arith.constant dense<0.000000e+00> : vector<8x64xf32>
    %26 = tpu.matmul %25, %0, %cst_17 {dimension_numbers = #tpu.dot_dimension_numbers<[1], [0], [0], [1], [0, 0, 1, 1], [], []>, precision = #tpu.contract_precision<fp32>} : vector<8x64xf32>, vector<64x64xf32>, vector<8x64xf32> -> vector<8x64xf32>
    %c0_18 = arith.constant 0 : index
    %c0_19 = arith.constant 0 : index
    %27 = vector.load %arg4[%c0_18, %c0_19] : memref<8x64xf32, #tpu.memory_space<vmem>>, vector<8x64xf32>
    %28 = arith.mulf %26, %27 : vector<8x64xf32>
    %29 = arith.addf %19, %28 : vector<8x64xf32>
    %c0_20 = arith.constant 0 : index
    %c0_21 = arith.constant 0 : index
    %30 = vector.load %arg5[%c0_20, %c0_21] : memref<8x64xf32, #tpu.memory_space<vmem>>, vector<8x64xf32>
    %31 = arith.mulf %29, %30 : vector<8x64xf32>
    %c0_22 = arith.constant 0 : index
    %c0_23 = arith.constant 0 : index
    %32 = vector.load %arg9[%c0_22, %c0_23] : memref<64x64xf32, #tpu.memory_space<vmem>>, vector<64x64xf32>
    %cst_24 = arith.constant dense<0.000000e+00> : vector<8x64xf32>
    %33 = tpu.matmul %31, %32, %cst_24 {dimension_numbers = #tpu.dot_dimension_numbers<[1], [0], [0], [1], [0, 0, 1, 1], [], []>} : vector<8x64xf32>, vector<64x64xf32>, vector<8x64xf32> -> vector<8x64xf32>
    %c0_25 = arith.constant 0 : index
    %c0_26 = arith.constant 0 : index
    %34 = vector.load %arg11[%c0_25, %c0_26] : memref<8x64xf32, #tpu.memory_space<vmem>>, vector<8x64xf32>
    tpu.vector_store %arg11[%c0_25, %c0_26], %33 {strides = array<i32>} : memref<8x64xf32, #tpu.memory_space<vmem>>, vector<8x64xf32>,
    return
  }
  func.func @transform_0(%arg0: i32) -> (i32, i32) {
    %c0_i32 = arith.constant 0 : i32
    %c0_i32_0 = arith.constant 0 : i32
    return %arg0, %c0_i32 : i32, i32
  }
  func.func @transform_1(%arg0: i32) -> (i32, i32) {
    %c0_i32 = arith.constant 0 : i32
    %c0_i32_0 = arith.constant 0 : i32
    return %arg0, %c0_i32 : i32, i32
  }
  func.func @transform_2(%arg0: i32) -> (i32, i32) {
    %c0_i32 = arith.constant 0 : i32
    %c0_i32_0 = arith.constant 0 : i32
    return %arg0, %c0_i32 : i32, i32
  }
  func.func @transform_3(%arg0: i32) -> (i32, i32) {
    %c0_i32 = arith.constant 0 : i32
    %c0_i32_0 = arith.constant 0 : i32
    return %arg0, %c0_i32 : i32, i32
  }
  func.func @transform_4(%arg0: i32) -> (i32, i32) {
    %c0_i32 = arith.constant 0 : i32
    %c0_i32_0 = arith.constant 0 : i32
    return %arg0, %c0_i32 : i32, i32
  }
  func.func @transform_5(%arg0: i32) -> (i32, i32) {
    %c0_i32 = arith.constant 0 : i32
    %c0_i32_0 = arith.constant 0 : i32
    %c0_i32_1 = arith.constant 0 : i32
    return %c0_i32, %c0_i32_0 : i32, i32
  }
  func.func @transform_6(%arg0: i32) -> (i32, i32) {
    %c0_i32 = arith.constant 0 : i32
    %c0_i32_0 = arith.constant 0 : i32
    %c0_i32_1 = arith.constant 0 : i32
    return %c0_i32, %c0_i32_0 : i32, i32
  }
  func.func @transform_7(%arg0: i32) -> (i32, i32) {
    %c0_i32 = arith.constant 0 : i32
    %c0_i32_0 = arith.constant 0 : i32
    %c0_i32_1 = arith.constant 0 : i32
    return %c0_i32, %c0_i32_0 : i32, i32
  }
  func.func @transform_8(%arg0: i32) -> (i32, i32) {
    %c0_i32 = arith.constant 0 : i32
    %c0_i32_0 = arith.constant 0 : i32
    %c0_i32_1 = arith.constant 0 : i32
    return %c0_i32, %c0_i32_0 : i32, i32
  }
  func.func @transform_9(%arg0: i32) -> (i32, i32) {
    %c0_i32 = arith.constant 0 : i32
    %c0_i32_0 = arith.constant 0 : i32
    %c0_i32_1 = arith.constant 0 : i32
    return %c0_i32, %c0_i32_0 : i32, i32
  }
  func.func @transform_10(%arg0: i32) -> (i32, i32) {
    %c0_i32 = arith.constant 0 : i32
    %c0_i32_0 = arith.constant 0 : i32
    return %arg0, %c0_i32 : i32, i32
  }
}

</mosaic_0001>

<llo_original>
// kernel: forward_pallas.5
$region0: #{forward_pallas.5}
  #allocation0 [shape = 'u32[]', space=smem, size = 0x4, offset = 0x4, fixed_abs, tag = 'smem constant byte address 0x4 - core index']
  #allocation1 [shape = 'u32[72,128]{1,0:T(1,128)}', space=vmem, size = 0x9000, scoped, tag = 'internal scratch']
  #allocation2 [shape = 'f32[16,256]{1,0:T(8,128)}', space=vmem, size = 0x4000, scoped, tag = 'scratch operand']
  %s0 = inlined_call_operand.vmem [shape: f32[16,128], index: 0, kind: input, shape index: {}]
  %s1 = inlined_call_operand.vmem [shape: f32[128,256], index: 1, kind: input, shape index: {}]
  %s2 = inlined_call_operand.vmem [shape: f32[16,256], index: 2, kind: output, shape index: {}]
  %s3 = sld [smem:[#allocation0]]
  $region26: #{forward_pallas.5} parent=0
    _
  %s5 = ssub.s32 1, %s3
  %s6 = scalar_select 0, %s5, %s3
  // Predicated region
  $region2: #{forward_pallas.5} parent=0 // pred_check
    _
  $region3: #{forward_pallas.5} parent=0 // pred_check_branch
    %8 = sbr.rel (0) target = $region5
  $region4: #{forward_pallas.5} parent=0 // pred_region
    _
  $region5: #{forward_pallas.5} parent=0 // pred_fallthru
    _
  // Predicated region
  $region6: #{forward_pallas.5} parent=0 // pred_check
    _
  $region7: #{forward_pallas.5} parent=0 // pred_check_branch
    %10 = sbr.rel (0) target = $region9
  $region8: #{forward_pallas.5} parent=0 // pred_region
    _
  $region9: #{forward_pallas.5} parent=0 // pred_fallthru
    _
  %p11 = scmp.eq.s32.totalorder 0, 0
  // Predicated region
  $region10: #{forward_pallas.5} parent=0 // pred_check
    %p12 = pneg %p11
  $region11: #{forward_pallas.5} parent=0 // pred_check_branch
    %14 = sbr.rel (%p12) target = $region13
  $region12: #{forward_pallas.5} parent=0 // pred_region
    %15 = vst [vmem:[#allocation2] sm:$0xff] 0.0
    %16 = vst [vmem:[#allocation2 + $0x8] sm:$0xff] 0.0
    %17 = vst [vmem:[#allocation2 + $0x10] sm:$0xff] 0.0
    %18 = vst [vmem:[#allocation2 + $0x18] sm:$0xff] 0.0
  $region13: #{forward_pallas.5} parent=0 // pred_fallthru
    _
  %v19 = vld [vmem:[#allocation2] sm:$0xff]
  %v20 = vld [vmem:[#allocation2 + $0x8] sm:$0xff]
  %v21 = vld [vmem:[#allocation2 + $0x10] sm:$0xff]
  %v22 = vld [vmem:[#allocation2 + $0x18] sm:$0xff]
  %v23 = vld [vmem:[%s0] sm:$0xff]
  %v24 = vld [vmem:[%s0 + $0x8] sm:$0xff]
  %v25 = vld [vmem:[%s1] sm:$0xff]
  %v26 = vld [vmem:[%s1 + $0x8] sm:$0xff]
  %v27 = vld [vmem:[%s1 + $0x10] sm:$0xff]
  %v28 = vld [vmem:[%s1 + $0x18] sm:$0xff]
  %v29 = vld [vmem:[%s1 + $0x20] sm:$0xff]
  %v30 = vld [vmem:[%s1 + $0x28] sm:$0xff]
  %v31 = vld [vmem:[%s1 + $0x30] sm:$0xff]
  %v32 = vld [vmem:[%s1 + $0x38] sm:$0xff]
  %v33 = vld [vmem:[%s1 + $0x40] sm:$0xff]
  %v34 = vld [vmem:[%s1 + $0x48] sm:$0xff]
  %v35 = vld [vmem:[%s1 + $0x50] sm:$0xff]
  %v36 = vld [vmem:[%s1 + $0x58] sm:$0xff]
  %v37 = vld [vmem:[%s1 + $0x60] sm:$0xff]
  %v38 = vld [vmem:[%s1 + $0x68] sm:$0xff]
  %v39 = vld [vmem:[%s1 + $0x70] sm:$0xff]
  %v40 = vld [vmem:[%s1 + $0x78] sm:$0xff]
  %v41 = vld [vmem:[%s1 + $0x80] sm:$0xff]
  %v42 = vld [vmem:[%s1 + $0x88] sm:$0xff]
  %v43 = vld [vmem:[%s1 + $0x90] sm:$0xff]
  %v44 = vld [vmem:[%s1 + $0x98] sm:$0xff]
  %v45 = vld [vmem:[%s1 + $0xa0] sm:$0xff]
  %v46 = vld [vmem:[%s1 + $0xa8] sm:$0xff]
  %v47 = vld [vmem:[%s1 + $0xb0] sm:$0xff]
  %v48 = vld [vmem:[%s1 + $0xb8] sm:$0xff]
  %v49 = vld [vmem:[%s1 + $0xc0] sm:$0xff]
  %v50 = vld [vmem:[%s1 + $0xc8] sm:$0xff]
  %v51 = vld [vmem:[%s1 + $0xd0] sm:$0xff]
  %v52 = vld [vmem:[%s1 + $0xd8] sm:$0xff]
  %v53 = vld [vmem:[%s1 + $0xe0] sm:$0xff]
  %v54 = vld [vmem:[%s1 + $0xe8] sm:$0xff]
  %v55 = vld [vmem:[%s1 + $0xf0] sm:$0xff]
  %v56 = vld [vmem:[%s1 + $0xf8] sm:$0xff]
  %57 = vmatpush.msra.mxu0 %v55
  %58 = vmatpush.msra.mxu0 %v53
  %59 = vmatpush.msra.mxu0 %v51
  %60 = vmatpush.msra.mxu0 %v49
  %61 = vmatpush.msra.mxu0 %v47
  %62 = vmatpush.msra.mxu0 %v45
  %63 = vmatpush.msra.mxu0 %v43
  %64 = vmatpush.msra.mxu0 %v41
  %65 = vmatpush.msra.mxu0 %v39
  %66 = vmatpush.msra.mxu0 %v37
  %67 = vmatpush.msra.mxu0 %v35
  %68 = vmatpush.msra.mxu0 %v33
  %69 = vmatpush.msra.mxu0 %v31
  %70 = vmatpush.msra.mxu0 %v29
  %71 = vmatpush.msra.mxu0 %v27
  %72 = vmatpush.msra.mxu0 %v25
  %73 = vmatmul.f32.gmra.mxu0 %v23
  %v74 = vpop.f32.mrf.mxu0
  %v75 = vadd.f32 0.0, %v74
  %76 = vmatmul.f32.gmra.mxu0 %v24
  %v77 = vpop.f32.mrf.mxu0
  %v78 = vadd.f32 0.0, %v77
  %79 = vdwg.mxu0
  %80 = vmatpush.msra.mxu0 %v56
  %81 = vmatpush.msra.mxu0 %v54
  %82 = vmatpush.msra.mxu0 %v52
  %83 = vmatpush.msra.mxu0 %v50
  %84 = vmatpush.msra.mxu0 %v48
  %85 = vmatpush.msra.mxu0 %v46
  %86 = vmatpush.msra.mxu0 %v44
  %87 = vmatpush.msra.mxu0 %v42
  %88 = vmatpush.msra.mxu0 %v40
  %89 = vmatpush.msra.mxu0 %v38
  %90 = vmatpush.msra.mxu0 %v36
  %91 = vmatpush.msra.mxu0 %v34
  %92 = vmatpush.msra.mxu0 %v32
  %93 = vmatpush.msra.mxu0 %v30
  %94 = vmatpush.msra.mxu0 %v28
  %95 = vmatpush.msra.mxu0 %v26
  %96 = vmatmul.f32.gmra.mxu0 %v23
  %v97 = vpop.f32.mrf.mxu0
  %v98 = vadd.f32 0.0, %v97
  %99 = vmatmul.f32.gmra.mxu0 %v24
  %v100 = vpop.f32.mrf.mxu0
  %v101 = vadd.f32 0.0, %v100
  %102 = vdwg.mxu0
  %v103 = vadd.f32 %v19, %v75
  %v104 = vadd.f32 %v20, %v98
  %v105 = vadd.f32 %v21, %v78
  %v106 = vadd.f32 %v22, %v101
  %107 = vst [vmem:[#allocation2] sm:$0xff] %v103
  %108 = vst [vmem:[#allocation2 + $0x8] sm:$0xff] %v104
  %109 = vst [vmem:[#allocation2 + $0x10] sm:$0xff] %v105
  %110 = vst [vmem:[#allocation2 + $0x18] sm:$0xff] %v106
  // Predicated region
  $region14: #{forward_pallas.5} parent=0 // pred_check
    %p111 = pneg %p11
  $region15: #{forward_pallas.5} parent=0 // pred_check_branch
    %113 = sbr.rel (%p111) target = $region17
  $region16: #{forward_pallas.5} parent=0 // pred_region
    %v114 = vld [vmem:[#allocation2] sm:$0xff]
    %v115 = vld [vmem:[#allocation2 + $0x8] sm:$0xff]
    %v116 = vld [vmem:[#allocation2 + $0x10] sm:$0xff]
    %v117 = vld [vmem:[#allocation2 + $0x18] sm:$0xff]
    %118 = vst [vmem:[%s2] sm:$0xff] %v114
    %119 = vst [vmem:[%s2 + $0x8] sm:$0xff] %v115
    %120 = vst [vmem:[%s2 + $0x10] sm:$0xff] %v116
    %121 = vst [vmem:[%s2 + $0x18] sm:$0xff] %v117
  $region17: #{forward_pallas.5} parent=0 // pred_fallthru
    _
  // Predicated region
  $region18: #{forward_pallas.5} parent=0 // pred_check
    _
  $region19: #{forward_pallas.5} parent=0 // pred_check_branch
    %123 = sbr.rel (0) target = $region21
  $region20: #{forward_pallas.5} parent=0 // pred_region
    _
  $region21: #{forward_pallas.5} parent=0 // pred_fallthru
    _
  // Predicated region
  $region22: #{forward_pallas.5} parent=0 // pred_check
    _
  $region23: #{forward_pallas.5} parent=0 // pred_check_branch
    %125 = sbr.rel (0) target = $region25
  $region24: #{forward_pallas.5} parent=0 // pred_region
    _
  $region25: #{forward_pallas.5} parent=0 // pred_fallthru
    _

// kernel: forward_pallas.4
$region0: #{forward_pallas.4}
  #allocation0 [shape = 'u32[]', space=smem, size = 0x4, offset = 0x4, fixed_abs, tag = 'smem constant byte address 0x4 - core index']
  #allocation1 [shape = 'u32[72,128]{1,0:T(1,128)}', space=vmem, size = 0x9000, scoped, tag = 'internal scratch']
  #allocation2 [shape = 'f32[16,320]{1,0:T(8,128)}', space=vmem, size = 0x6000, scoped, tag = 'scratch operand']
  %s0 = inlined_call_operand.vmem [shape: f32[16,128], index: 0, kind: input, shape index: {}]
  %s1 = inlined_call_operand.vmem [shape: f32[128,320], index: 1, kind: input, shape index: {}]
  %s2 = inlined_call_operand.vmem [shape: f32[16,320], index: 2, kind: output, shape index: {}]
  %s3 = sld [smem:[#allocation0]]
  $region26: #{forward_pallas.4} parent=0
    _
  %s5 = ssub.s32 1, %s3
  %s6 = scalar_select 0, %s5, %s3
  // Predicated region
  $region2: #{forward_pallas.4} parent=0 // pred_check
    _
  $region3: #{forward_pallas.4} parent=0 // pred_check_branch
    %8 = sbr.rel (0) target = $region5
  $region4: #{forward_pallas.4} parent=0 // pred_region
    _
  $region5: #{forward_pallas.4} parent=0 // pred_fallthru
    _
  // Predicated region
  $region6: #{forward_pallas.4} parent=0 // pred_check
    _
  $region7: #{forward_pallas.4} parent=0 // pred_check_branch
    %10 = sbr.rel (0) target = $region9
  $region8: #{forward_pallas.4} parent=0 // pred_region
    _
  $region9: #{forward_pallas.4} parent=0 // pred_fallthru
    _
  %p11 = scmp.eq.s32.totalorder 0, 0
  // Predicated region
  $region10: #{forward_pallas.4} parent=0 // pred_check
    %p12 = pneg %p11
  $region11: #{forward_pallas.4} parent=0 // pred_check_branch
    %14 = sbr.rel (%p12) target = $region13
  $region12: #{forward_pallas.4} parent=0 // pred_region
    %15 = vst [vmem:[#allocation2] sm:$0xff] 0.0
    %16 = vst [vmem:[#allocation2 + $0x8] sm:$0xff] 0.0
    %vm17 = vcmask 523264
    %18 = vst.msk [vmem:[#allocation2 + $0x10] sm:$0xff] %vm17, 0.0
    %19 = vst [vmem:[#allocation2 + $0x18] sm:$0xff] 0.0
    %20 = vst [vmem:[#allocation2 + $0x20] sm:$0xff] 0.0
    %21 = vst.msk [vmem:[#allocation2 + $0x28] sm:$0xff] %vm17, 0.0
  $region13: #{forward_pallas.4} parent=0 // pred_fallthru
    _
  %v22 = vld [vmem:[#allocation2] sm:$0xff]
  %v23 = vld [vmem:[#allocation2 + $0x8] sm:$0xff]
  %v24 = vld [vmem:[#allocation2 + $0x10] sm:$0xff]
  %v25 = vld [vmem:[#allocation2 + $0x18] sm:$0xff]
  %v26 = vld [vmem:[#allocation2 + $0x20] sm:$0xff]
  %v27 = vld [vmem:[#allocation2 + $0x28] sm:$0xff]
  %v28 = vld [vmem:[%s0] sm:$0xff]
  %v29 = vld [vmem:[%s0 + $0x8] sm:$0xff]
  %v30 = vld [vmem:[%s1] sm:$0xff]
  %v31 = vld [vmem:[%s1 + $0x8] sm:$0xff]
  %v32 = vld [vmem:[%s1 + $0x10] sm:$0xff]
  %v33 = vld [vmem:[%s1 + $0x18] sm:$0xff]
  %v34 = vld [vmem:[%s1 + $0x20] sm:$0xff]
  %v35 = vld [vmem:[%s1 + $0x28] sm:$0xff]
  %v36 = vld [vmem:[%s1 + $0x30] sm:$0xff]
  %v37 = vld [vmem:[%s1 + $0x38] sm:$0xff]
  %v38 = vld [vmem:[%s1 + $0x40] sm:$0xff]
  %v39 = vld [vmem:[%s1 + $0x48] sm:$0xff]
  %v40 = vld [vmem:[%s1 + $0x50] sm:$0xff]
  %v41 = vld [vmem:[%s1 + $0x58] sm:$0xff]
  %v42 = vld [vmem:[%s1 + $0x60] sm:$0xff]
  %v43 = vld [vmem:[%s1 + $0x68] sm:$0xff]
  %v44 = vld [vmem:[%s1 + $0x70] sm:$0xff]
  %v45 = vld [vmem:[%s1 + $0x78] sm:$0xff]
  %v46 = vld [vmem:[%s1 + $0x80] sm:$0xff]
  %v47 = vld [vmem:[%s1 + $0x88] sm:$0xff]
  %v48 = vld [vmem:[%s1 + $0x90] sm:$0xff]
  %v49 = vld [vmem:[%s1 + $0x98] sm:$0xff]
  %v50 = vld [vmem:[%s1 + $0xa0] sm:$0xff]
  %v51 = vld [vmem:[%s1 + $0xa8] sm:$0xff]
  %v52 = vld [vmem:[%s1 + $0xb0] sm:$0xff]
  %v53 = vld [vmem:[%s1 + $0xb8] sm:$0xff]
  %v54 = vld [vmem:[%s1 + $0xc0] sm:$0xff]
  %v55 = vld [vmem:[%s1 + $0xc8] sm:$0xff]
  %v56 = vld [vmem:[%s1 + $0xd0] sm:$0xff]
  %v57 = vld [vmem:[%s1 + $0xd8] sm:$0xff]
  %v58 = vld [vmem:[%s1 + $0xe0] sm:$0xff]
  %v59 = vld [vmem:[%s1 + $0xe8] sm:$0xff]
  %v60 = vld [vmem:[%s1 + $0xf0] sm:$0xff]
  %v61 = vld [vmem:[%s1 + $0xf8] sm:$0xff]
  %v62 = vld [vmem:[%s1 + $0x100] sm:$0xff]
  %v63 = vld [vmem:[%s1 + $0x108] sm:$0xff]
  %v64 = vld [vmem:[%s1 + $0x110] sm:$0xff]
  %v65 = vld [vmem:[%s1 + $0x118] sm:$0xff]
  %v66 = vld [vmem:[%s1 + $0x120] sm:$0xff]
  %v67 = vld [vmem:[%s1 + $0x128] sm:$0xff]
  %v68 = vld [vmem:[%s1 + $0x130] sm:$0xff]
  %v69 = vld [vmem:[%s1 + $0x138] sm:$0xff]
  %v70 = vld [vmem:[%s1 + $0x140] sm:$0xff]
  %v71 = vld [vmem:[%s1 + $0x148] sm:$0xff]
  %v72 = vld [vmem:[%s1 + $0x150] sm:$0xff]
  %v73 = vld [vmem:[%s1 + $0x158] sm:$0xff]
  %v74 = vld [vmem:[%s1 + $0x160] sm:$0xff]
  %v75 = vld [vmem:[%s1 + $0x168] sm:$0xff]
  %v76 = vld [vmem:[%s1 + $0x170] sm:$0xff]
  %v77 = vld [vmem:[%s1 + $0x178] sm:$0xff]
  %78 = vmatpush.msra.mxu0 %v75
  %79 = vmatpush.msra.mxu0 %v72
  %80 = vmatpush.msra.mxu0 %v69
  %81 = vmatpush.msra.mxu0 %v66
  %82 = vmatpush.msra.mxu0 %v63
  %83 = vmatpush.msra.mxu0 %v60
  %84 = vmatpush.msra.mxu0 %v57
  %85 = vmatpush.msra.mxu0 %v54
  %86 = vmatpush.msra.mxu0 %v51
  %87 = vmatpush.msra.mxu0 %v48
  %88 = vmatpush.msra.mxu0 %v45
  %89 = vmatpush.msra.mxu0 %v42
  %90 = vmatpush.msra.mxu0 %v39
  %91 = vmatpush.msra.mxu0 %v36
  %92 = vmatpush.msra.mxu0 %v33
  %93 = vmatpush.msra.mxu0 %v30
  %94 = vmatmul.f32.gmra.mxu0 %v28
  %v95 = vpop.f32.mrf.mxu0
  %v96 = vadd.f32 0.0, %v95
  %97 = vmatmul.f32.gmra.mxu0 %v29
  %v98 = vpop.f32.mrf.mxu0
  %v99 = vadd.f32 0.0, %v98
  %100 = vdwg.mxu0
  %101 = vmatpush.msra.mxu0 %v76
  %102 = vmatpush.msra.mxu0 %v73
  %103 = vmatpush.msra.mxu0 %v70
  %104 = vmatpush.msra.mxu0 %v67
  %105 = vmatpush.msra.mxu0 %v64
  %106 = vmatpush.msra.mxu0 %v61
  %107 = vmatpush.msra.mxu0 %v58
  %108 = vmatpush.msra.mxu0 %v55
  %109 = vmatpush.msra.mxu0 %v52
  %110 = vmatpush.msra.mxu0 %v49
  %111 = vmatpush.msra.mxu0 %v46
  %112 = vmatpush.msra.mxu0 %v43
  %113 = vmatpush.msra.mxu0 %v40
  %114 = vmatpush.msra.mxu0 %v37
  %115 = vmatpush.msra.mxu0 %v34
  %116 = vmatpush.msra.mxu0 %v31
  %117 = vmatmul.f32.gmra.mxu0 %v28
  %v118 = vpop.f32.mrf.mxu0
  %v119 = vadd.f32 0.0, %v118
  %120 = vmatmul.f32.gmra.mxu0 %v29
  %v121 = vpop.f32.mrf.mxu0
  %v122 = vadd.f32 0.0, %v121
  %123 = vdwg.mxu0
  %124 = vmatpush.msra.mxu0 %v77
  %125 = vmatpush.msra.mxu0 %v74
  %126 = vmatpush.msra.mxu0 %v71
  %127 = vmatpush.msra.mxu0 %v68
  %128 = vmatpush.msra.mxu0 %v65
  %129 = vmatpush.msra.mxu0 %v62
  %130 = vmatpush.msra.mxu0 %v59
  %131 = vmatpush.msra.mxu0 %v56
  %132 = vmatpush.msra.mxu0 %v53
  %133 = vmatpush.msra.mxu0 %v50
  %134 = vmatpush.msra.mxu0 %v47
  %135 = vmatpush.msra.mxu0 %v44
  %136 = vmatpush.msra.mxu0 %v41
  %137 = vmatpush.msra.mxu0 %v38
  %138 = vmatpush.msra.mxu0 %v35
  %139 = vmatpush.msra.mxu0 %v32
  %140 = vmatmul.f32.gmra.mxu0 %v28
  %v141 = vpop.f32.mrf.mxu0
  %v142 = vadd.f32 0.0, %v141
  %143 = vmatmul.f32.gmra.mxu0 %v29
  %v144 = vpop.f32.mrf.mxu0
  %v145 = vadd.f32 0.0, %v144
  %146 = vdwg.mxu0
  %v147 = vadd.f32 %v22, %v96
  %v148 = vadd.f32 %v23, %v119
  %v149 = vadd.f32 %v24, %v142
  %v150 = vadd.f32 %v25, %v99
  %v151 = vadd.f32 %v26, %v122
  %v152 = vadd.f32 %v27, %v145
  %153 = vst [vmem:[#allocation2] sm:$0xff] %v147
  %154 = vst [vmem:[#allocation2 + $0x8] sm:$0xff] %v148
  %vm155 = vcmask 523264
  %156 = vst.msk [vmem:[#allocation2 + $0x10] sm:$0xff] %vm155, %v149
  %157 = vst [vmem:[#allocation2 + $0x18] sm:$0xff] %v150
  %158 = vst [vmem:[#allocation2 + $0x20] sm:$0xff] %v151
  %159 = vst.msk [vmem:[#allocation2 + $0x28] sm:$0xff] %vm155, %v152
  // Predicated region
  $region14: #{forward_pallas.4} parent=0 // pred_check
    %p160 = pneg %p11
  $region15: #{forward_pallas.4} parent=0 // pred_check_branch
    %162 = sbr.rel (%p160) target = $region17
  $region16: #{forward_pallas.4} parent=0 // pred_region
    %v163 = vld [vmem:[#allocation2] sm:$0xff]
    %v164 = vld [vmem:[#allocation2 + $0x8] sm:$0xff]
    %v165 = vld [vmem:[#allocation2 + $0x10] sm:$0xff]
    %v166 = vld [vmem:[#allocation2 + $0x18] sm:$0xff]
    %v167 = vld [vmem:[#allocation2 + $0x20] sm:$0xff]
    %v168 = vld [vmem:[#allocation2 + $0x28] sm:$0xff]
    %169 = vst [vmem:[%s2] sm:$0xff] %v163
    %170 = vst [vmem:[%s2 + $0x8] sm:$0xff] %v164
    %171 = vst.msk [vmem:[%s2 + $0x10] sm:$0xff] %vm155, %v165
    %172 = vst [vmem:[%s2 + $0x18] sm:$0xff] %v166
    %173 = vst [vmem:[%s2 + $0x20] sm:$0xff] %v167
    %174 = vst.msk [vmem:[%s2 + $0x28] sm:$0xff] %vm155, %v168
  $region17: #{forward_pallas.4} parent=0 // pred_fallthru
    _
  // Predicated region
  $region18: #{forward_pallas.4} parent=0 // pred_check
    _
  $region19: #{forward_pallas.4} parent=0 // pred_check_branch
    %176 = sbr.rel (0) target = $region21
  $region20: #{forward_pallas.4} parent=0 // pred_region
    _
  $region21: #{forward_pallas.4} parent=0 // pred_fallthru
    _
  // Predicated region
  $region22: #{forward_pallas.4} parent=0 // pred_check
    _
  $region23: #{forward_pallas.4} parent=0 // pred_check_branch
    %178 = sbr.rel (0) target = $region25
  $region24: #{forward_pallas.4} parent=0 // pred_region
    _
  $region25: #{forward_pallas.4} parent=0 // pred_fallthru
    _

// kernel: forward_pallas.7
$region0: #{forward_pallas.7}
  #allocation0 [shape = 'u32[]', space=smem, size = 0x4, offset = 0x4, fixed_abs, tag = 'smem constant byte address 0x4 - core index']
  #allocation1 [shape = 'u32[72,128]{1,0:T(1,128)}', space=vmem, size = 0x9000, scoped, tag = 'internal scratch']
  %s0 = inlined_call_operand.vmem [shape: f32[16,64], index: 0, kind: input, shape index: {}]
  %s1 = inlined_call_operand.vmem [shape: f32[16,64], index: 1, kind: input, shape index: {}]
  %s2 = inlined_call_operand.vmem [shape: f32[16,64], index: 2, kind: input, shape index: {}]
  %s3 = inlined_call_operand.vmem [shape: f32[16,64], index: 3, kind: input, shape index: {}]
  %s4 = inlined_call_operand.vmem [shape: f32[16,64], index: 4, kind: input, shape index: {}]
  %s5 = inlined_call_operand.vmem [shape: f32[1,64], index: 5, kind: input, shape index: {}]
  %s6 = inlined_call_operand.vmem [shape: f32[1,64], index: 6, kind: input, shape index: {}]
  %s7 = inlined_call_operand.vmem [shape: f32[1,64], index: 7, kind: input, shape index: {}]
  %s8 = inlined_call_operand.vmem [shape: f32[64,64], index: 8, kind: input, shape index: {}]
  %s9 = inlined_call_operand.vmem [shape: f32[64,64], index: 9, kind: input, shape index: {}]
  %s10 = inlined_call_operand.hbm [shape: f32[16,64], index: 10, kind: output, shape index: {}]
  %s11 = sld [smem:[#allocation0]]
  $region73: #{forward_pallas.7} parent=0
    _
  %s13 = ssub.s32 1, %s11
  %s14 = scalar_select 0, %s13, %s11
  $region1: #{forward_pallas.7} parent=0
    #allocation2 [shape = 'u8[8192]{0}', space=vmem, size = 0x2000, scoped, tag = 'output window, operand 0']
    #allocation3 [shape = 's32[2]{0}', space=sflag, size = 0x8, scoped, tag = 'scoped memory for forward_pallas.7']
    %15 = vsyncpa [#allocation3], 0
    %s16 = scalar_lea.sflag [#allocation3], 1
    %17 = vsyncpa %s16, 0
    loop: start=0, step=1, limit=4
    $region2: #{forward_pallas.7} parent=1 // loop_pre_header
      _
    $region3: #{forward_pallas.7} parent=1 // loop_header
      %s19 = sphi 0, %s23
      %p20 = scmp.ge.s32.totalorder %s19, 4
      %s29 = sphi 0, %s31
      %s32 = sphi 0, %s29
      %s33 = sphi 0, %s32
      %s49 = sphi 0, %s33
      %s55 = sphi 0, %s57
      %s58 = sphi 0, %s55
      %s59 = sphi 0, %s58
      %s75 = sphi 0, %s59
      %s81 = sphi 0, %s83
      %s84 = sphi 0, %s81
      %s85 = sphi 0, %s84
      %s101 = sphi 0, %s85
      %s107 = sphi 0, %s109
      %s110 = sphi 0, %s107
      %s111 = sphi 0, %s110
      %s127 = sphi 0, %s111
      %s133 = sphi 0, %s135
      %s136 = sphi 0, %s133
      %s137 = sphi 0, %s136
      %s153 = sphi 0, %s137
      %s157 = sphi 0, %s157
      %s159 = sphi 0, %s157
      %s160 = sphi 0, %s159
      %s174 = sphi 0, %s160
      %s178 = sphi 0, %s178
      %s180 = sphi 0, %s178
      %s181 = sphi 0, %s180
      %s195 = sphi 0, %s181
      %s199 = sphi 0, %s199
      %s201 = sphi 0, %s199
      %s202 = sphi 0, %s201
      %s216 = sphi 0, %s202
      %s220 = sphi 0, %s220
      %s222 = sphi 0, %s220
      %s223 = sphi 0, %s222
      %s237 = sphi 0, %s223
      %s241 = sphi 0, %s241
      %s243 = sphi 0, %s241
      %s244 = sphi 0, %s243
      %s258 = sphi 0, %s244
      %s264 = sphi 0, %s266
      %s267 = sphi 0, %s264
      %s268 = sphi 0, %s267
      %s284 = sphi 0, %s268
    $region4: #{forward_pallas.7} parent=1 // loop_header_branch
      %22 = sbr.rel (%p20) target = $region8
    $region5: #{forward_pallas.7} parent=1 // loop_body
      %s24 = ssub.s32 %s19, 1
      %s25 = ssub.s32 %s19, 2
      %s26 = sadd.s32 %s19, 1
      %s27 = ssub.s32 %s19, %s26
      %p28 = scmp.eq.s32.totalorder %s27, 0
      %s30 = sadd.s32 %s29, 1
      %s31 = scalar_select %p28, %s29, %s30
      %p34 = pneg %p28
      %p35 = scmp.eq.s32.totalorder %s19, 1
      %p36 = por %p34, %p35
      %p37 = scmp.ne.s32.totalorder %s29, %s32
      %p38 = scmp.eq.s32.totalorder %s19, 0
      %p39 = por %p37, %p38
      %p40 = scmp.ne.s32.totalorder %s29, %s32
      %p41 = scmp.eq.s32.totalorder %s24, 1
      %p42 = por %p40, %p41
      %p43 = scmp.ne.s32.totalorder %s32, %s33
      %p44 = scmp.eq.s32.totalorder %s24, 0
      %p45 = por %p43, %p44
      %p46 = scmp.ne.s32.totalorder %s32, %s33
      %p47 = scmp.eq.s32.totalorder %s25, 1
      %p48 = por %p46, %p47
      %p50 = scmp.ne.s32.totalorder %s33, %s49
      %p51 = scmp.eq.s32.totalorder %s25, 0
      %p52 = por %p50, %p51
      %s53 = ssub.s32 %s19, %s26
      %p54 = scmp.eq.s32.totalorder %s53, 0
      %s56 = sadd.s32 %s55, 1
      %s57 = scalar_select %p54, %s55, %s56
      %p60 = pneg %p54
      %p61 = scmp.eq.s32.totalorder %s19, 1
      %p62 = por %p60, %p61
      %p63 = scmp.ne.s32.totalorder %s55, %s58
      %p64 = scmp.eq.s32.totalorder %s19, 0
      %p65 = por %p63, %p64
      %p66 = scmp.ne.s32.totalorder %s55, %s58
      %p67 = scmp.eq.s32.totalorder %s24, 1
      %p68 = por %p66, %p67
      %p69 = scmp.ne.s32.totalorder %s58, %s59
      %p70 = scmp.eq.s32.totalorder %s24, 0
      %p71 = por %p69, %p70
      %p72 = scmp.ne.s32.totalorder %s58, %s59
      %p73 = scmp.eq.s32.totalorder %s25, 1
      %p74 = por %p72, %p73
      %p76 = scmp.ne.s32.totalorder %s59, %s75
      %p77 = scmp.eq.s32.totalorder %s25, 0
      %p78 = por %p76, %p77
      %s79 = ssub.s32 %s19, %s26
      %p80 = scmp.eq.s32.totalorder %s79, 0
      %s82 = sadd.s32 %s81, 1
      %s83 = scalar_select %p80, %s81, %s82
      %p86 = pneg %p80
      %p87 = scmp.eq.s32.totalorder %s19, 1
      %p88 = por %p86, %p87
      %p89 = scmp.ne.s32.totalorder %s81, %s84
      %p90 = scmp.eq.s32.totalorder %s19, 0
      %p91 = por %p89, %p90
      %p92 = scmp.ne.s32.totalorder %s81, %s84
      %p93 = scmp.eq.s32.totalorder %s24, 1
      %p94 = por %p92, %p93
      %p95 = scmp.ne.s32.totalorder %s84, %s85
      %p96 = scmp.eq.s32.totalorder %s24, 0
      %p97 = por %p95, %p96
      %p98 = scmp.ne.s32.totalorder %s84, %s85
      %p99 = scmp.eq.s32.totalorder %s25, 1
      %p100 = por %p98, %p99
      %p102 = scmp.ne.s32.totalorder %s85, %s101
      %p103 = scmp.eq.s32.totalorder %s25, 0
      %p104 = por %p102, %p103
      %s105 = ssub.s32 %s19, %s26
      %p106 = scmp.eq.s32.totalorder %s105, 0
      %s108 = sadd.s32 %s107, 1
      %s109 = scalar_select %p106, %s107, %s108
      %p112 = pneg %p106
      %p113 = scmp.eq.s32.totalorder %s19, 1
      %p114 = por %p112, %p113
      %p115 = scmp.ne.s32.totalorder %s107, %s110
      %p116 = scmp.eq.s32.totalorder %s19, 0
      %p117 = por %p115, %p116
      %p118 = scmp.ne.s32.totalorder %s107, %s110
      %p119 = scmp.eq.s32.totalorder %s24, 1
      %p120 = por %p118, %p119
      %p121 = scmp.ne.s32.totalorder %s110, %s111
      %p122 = scmp.eq.s32.totalorder %s24, 0
      %p123 = por %p121, %p122
      %p124 = scmp.ne.s32.totalorder %s110, %s111
      %p125 = scmp.eq.s32.totalorder %s25, 1
      %p126 = por %p124, %p125
      %p128 = scmp.ne.s32.totalorder %s111, %s127
      %p129 = scmp.eq.s32.totalorder %s25, 0
      %p130 = por %p128, %p129
      %s131 = ssub.s32 %s19, %s26
      %p132 = scmp.eq.s32.totalorder %s131, 0
      %s134 = sadd.s32 %s133, 1
      %s135 = scalar_select %p132, %s133, %s134
      %p138 = pneg %p132
      %p139 = scmp.eq.s32.totalorder %s19, 1
      %p140 = por %p138, %p139
      %p141 = scmp.ne.s32.totalorder %s133, %s136
      %p142 = scmp.eq.s32.totalorder %s19, 0
      %p143 = por %p141, %p142
      %p144 = scmp.ne.s32.totalorder %s133, %s136
      %p145 = scmp.eq.s32.totalorder %s24, 1
      %p146 = por %p144, %p145
      %p147 = scmp.ne.s32.totalorder %s136, %s137
      %p148 = scmp.eq.s32.totalorder %s24, 0
      %p149 = por %p147, %p148
      %p150 = scmp.ne.s32.totalorder %s136, %s137
      %p151 = scmp.eq.s32.totalorder %s25, 1
      %p152 = por %p150, %p151
      %p154 = scmp.ne.s32.totalorder %s137, %s153
      %p155 = scmp.eq.s32.totalorder %s25, 0
      %p156 = por %p154, %p155
      %s158 = sadd.s32 %s157, 1
      %p161 = scmp.eq.s32.totalorder %s19, 1
      %p162 = scmp.ne.s32.totalorder %s157, %s159
      %p163 = scmp.eq.s32.totalorder %s19, 0
      %p164 = por %p162, %p163
      %p165 = scmp.ne.s32.totalorder %s157, %s159
      %p166 = scmp.eq.s32.totalorder %s24, 1
      %p167 = por %p165, %p166
      %p168 = scmp.ne.s32.totalorder %s159, %s160
      %p169 = scmp.eq.s32.totalorder %s24, 0
      %p170 = por %p168, %p169
      %p171 = scmp.ne.s32.totalorder %s159, %s160
      %p172 = scmp.eq.s32.totalorder %s25, 1
      %p173 = por %p171, %p172
      %p175 = scmp.ne.s32.totalorder %s160, %s174
      %p176 = scmp.eq.s32.totalorder %s25, 0
      %p177 = por %p175, %p176
      %s179 = sadd.s32 %s178, 1
      %p182 = scmp.eq.s32.totalorder %s19, 1
      %p183 = scmp.ne.s32.totalorder %s178, %s180
      %p184 = scmp.eq.s32.totalorder %s19, 0
      %p185 = por %p183, %p184
      %p186 = scmp.ne.s32.totalorder %s178, %s180
      %p187 = scmp.eq.s32.totalorder %s24, 1
      %p188 = por %p186, %p187
      %p189 = scmp.ne.s32.totalorder %s180, %s181
      %p190 = scmp.eq.s32.totalorder %s24, 0
      %p191 = por %p189, %p190
      %p192 = scmp.ne.s32.totalorder %s180, %s181
      %p193 = scmp.eq.s32.totalorder %s25, 1
      %p194 = por %p192, %p193
      %p196 = scmp.ne.s32.totalorder %s181, %s195
      %p197 = scmp.eq.s32.totalorder %s25, 0
      %p198 = por %p196, %p197
      %s200 = sadd.s32 %s199, 1
      %p203 = scmp.eq.s32.totalorder %s19, 1
      %p204 = scmp.ne.s32.totalorder %s199, %s201
      %p205 = scmp.eq.s32.totalorder %s19, 0
      %p206 = por %p204, %p205
      %p207 = scmp.ne.s32.totalorder %s199, %s201
      %p208 = scmp.eq.s32.totalorder %s24, 1
      %p209 = por %p207, %p208
      %p210 = scmp.ne.s32.totalorder %s201, %s202
      %p211 = scmp.eq.s32.totalorder %s24, 0
      %p212 = por %p210, %p211
      %p213 = scmp.ne.s32.totalorder %s201, %s202
      %p214 = scmp.eq.s32.totalorder %s25, 1
      %p215 = por %p213, %p214
      %p217 = scmp.ne.s32.totalorder %s202, %s216
      %p218 = scmp.eq.s32.totalorder %s25, 0
      %p219 = por %p217, %p218
      %s221 = sadd.s32 %s220, 1
      %p224 = scmp.eq.s32.totalorder %s19, 1
      %p225 = scmp.ne.s32.totalorder %s220, %s222
      %p226 = scmp.eq.s32.totalorder %s19, 0
      %p227 = por %p225, %p226
      %p228 = scmp.ne.s32.totalorder %s220, %s222
      %p229 = scmp.eq.s32.totalorder %s24, 1
      %p230 = por %p228, %p229
      %p231 = scmp.ne.s32.totalorder %s222, %s223
      %p232 = scmp.eq.s32.totalorder %s24, 0
      %p233 = por %p231, %p232
      %p234 = scmp.ne.s32.totalorder %s222, %s223
      %p235 = scmp.eq.s32.totalorder %s25, 1
      %p236 = por %p234, %p235
      %p238 = scmp.ne.s32.totalorder %s223, %s237
      %p239 = scmp.eq.s32.totalorder %s25, 0
      %p240 = por %p238, %p239
      %s242 = sadd.s32 %s241, 1
      %p245 = scmp.eq.s32.totalorder %s19, 1
      %p246 = scmp.ne.s32.totalorder %s241, %s243
      %p247 = scmp.eq.s32.totalorder %s19, 0
      %p248 = por %p246, %p247
      %p249 = scmp.ne.s32.totalorder %s241, %s243
      %p250 = scmp.eq.s32.totalorder %s24, 1
      %p251 = por %p249, %p250
      %p252 = scmp.ne.s32.totalorder %s243, %s244
      %p253 = scmp.eq.s32.totalorder %s24, 0
      %p254 = por %p252, %p253
      %p255 = scmp.ne.s32.totalorder %s243, %s244
      %p256 = scmp.eq.s32.totalorder %s25, 1
      %p257 = por %p255, %p256
      %p259 = scmp.ne.s32.totalorder %s244, %s258
      %p260 = scmp.eq.s32.totalorder %s25, 0
      %p261 = por %p259, %p260
      %s262 = ssub.s32 %s19, %s26
      %p263 = scmp.eq.s32.totalorder %s262, 0
      %s265 = sadd.s32 %s264, 1
      %s266 = scalar_select %p263, %s264, %s265
      %p269 = pneg %p263
      %p270 = scmp.eq.s32.totalorder %s19, 1
      %p271 = por %p269, %p270
      %p272 = scmp.ne.s32.totalorder %s264, %s267
      %p273 = scmp.eq.s32.totalorder %s19, 0
      %p274 = por %p272, %p273
      %p275 = scmp.ne.s32.totalorder %s264, %s267
      %p276 = scmp.eq.s32.totalorder %s24, 1
      %p277 = por %p275, %p276
      %p278 = scmp.ne.s32.totalorder %s267, %s268
      %p279 = scmp.eq.s32.totalorder %s24, 0
      %p280 = por %p278, %p279
      %p281 = scmp.ne.s32.totalorder %s267, %s268
      %p282 = scmp.eq.s32.totalorder %s25, 1
      %p283 = por %p281, %p282
      %p285 = scmp.ne.s32.totalorder %s268, %s284
      %p286 = scmp.eq.s32.totalorder %s25, 0
      %p287 = por %p285, %p286
      %p288 = scmp.le.s32.totalorder 1, %s19
      %p289 = scmp.lt.s32.totalorder %s19, 3
      %p290 = pnand %p288, %p289
      %p291 = pneg %p290
      // Predicated region
      $region9: #{forward_pallas.7} parent=5 // pred_check
        _
      $region10: #{forward_pallas.7} parent=5 // pred_check_branch
        %293 = sbr.rel (%p290) target = $region12
      $region11: #{forward_pallas.7} parent=5 // pred_region
        %s294 = ssub.s32 %s19, 1
        // Predicated region
        $region13: #{forward_pallas.7} parent=11 // pred_check
          %p295 = pneg %p170
        $region14: #{forward_pallas.7} parent=11 // pred_check_branch
          %297 = sbr.rel (%p295) target = $region16
        $region15: #{forward_pallas.7} parent=11 // pred_region
          _
        $region16: #{forward_pallas.7} parent=11 // pred_fallthru
          _
        // Predicated region
        $region17: #{forward_pallas.7} parent=11 // pred_check
          %p298 = pneg %p191
        $region18: #{forward_pallas.7} parent=11 // pred_check_branch
          %300 = sbr.rel (%p298) target = $region20
        $region19: #{forward_pallas.7} parent=11 // pred_region
          _
        $region20: #{forward_pallas.7} parent=11 // pred_fallthru
          _
        // Predicated region
        $region21: #{forward_pallas.7} parent=11 // pred_check
          %p301 = pneg %p212
        $region22: #{forward_pallas.7} parent=11 // pred_check_branch
          %303 = sbr.rel (%p301) target = $region24
        $region23: #{forward_pallas.7} parent=11 // pred_region
          _
        $region24: #{forward_pallas.7} parent=11 // pred_fallthru
          _
        // Predicated region
        $region25: #{forward_pallas.7} parent=11 // pred_check
          %p304 = pneg %p233
        $region26: #{forward_pallas.7} parent=11 // pred_check_branch
          %306 = sbr.rel (%p304) target = $region28
        $region27: #{forward_pallas.7} parent=11 // pred_region
          _
        $region28: #{forward_pallas.7} parent=11 // pred_fallthru
          _
        // Predicated region
        $region29: #{forward_pallas.7} parent=11 // pred_check
          %p307 = pneg %p254
        $region30: #{forward_pallas.7} parent=11 // pred_check_branch
          %309 = sbr.rel (%p307) target = $region32
        $region31: #{forward_pallas.7} parent=11 // pred_region
          _
        $region32: #{forward_pallas.7} parent=11 // pred_fallthru
          _
      $region12: #{forward_pallas.7} parent=5 // pred_fallthru
        _
      %p310 = scmp.lt.s32.totalorder %s19, 2
      // Predicated region
      $region33: #{forward_pallas.7} parent=5 // pred_check
        %p311 = pneg %p310
      $region34: #{forward_pallas.7} parent=5 // pred_check_branch
        %313 = sbr.rel (%p311) target = $region36
      $region35: #{forward_pallas.7} parent=5 // pred_region
        // Predicated region
        $region37: #{forward_pallas.7} parent=35 // pred_check
          %p314 = pneg %p39
        $region38: #{forward_pallas.7} parent=35 // pred_check_branch
          %316 = sbr.rel (%p314) target = $region40
        $region39: #{forward_pallas.7} parent=35 // pred_region
          %p317 = scmp.lt.s32.totalorder %s19, 1
          %s318 = scalar_select %p317, %s19, 1
          %s319 = smul.addr %s318, 8
          %s320 = scalar_lea.vmem %s0, %s319
        $region40: #{forward_pallas.7} parent=35 // pred_fallthru
          _
        // Predicated region
        $region41: #{forward_pallas.7} parent=35 // pred_check
          %p321 = pneg %p65
        $region42: #{forward_pallas.7} parent=35 // pred_check_branch
          %323 = sbr.rel (%p321) target = $region44
        $region43: #{forward_pallas.7} parent=35 // pred_region
          %p324 = scmp.lt.s32.totalorder %s19, 1
          %s325 = scalar_select %p324, %s19, 1
          %s326 = smul.addr %s325, 8
          %s327 = scalar_lea.vmem %s1, %s326
        $region44: #{forward_pallas.7} parent=35 // pred_fallthru
          _
        // Predicated region
        $region45: #{forward_pallas.7} parent=35 // pred_check
          %p328 = pneg %p91
        $region46: #{forward_pallas.7} parent=35 // pred_check_branch
          %330 = sbr.rel (%p328) target = $region48
        $region47: #{forward_pallas.7} parent=35 // pred_region
          %p331 = scmp.lt.s32.totalorder %s19, 1
          %s332 = scalar_select %p331, %s19, 1
          %s333 = smul.addr %s332, 8
          %s334 = scalar_lea.vmem %s2, %s333
        $region48: #{forward_pallas.7} parent=35 // pred_fallthru
          _
        // Predicated region
        $region49: #{forward_pallas.7} parent=35 // pred_check
          %p335 = pneg %p117
        $region50: #{forward_pallas.7} parent=35 // pred_check_branch
          %337 = sbr.rel (%p335) target = $region52
        $region51: #{forward_pallas.7} parent=35 // pred_region
          %p338 = scmp.lt.s32.totalorder %s19, 1
          %s339 = scalar_select %p338, %s19, 1
          %s340 = smul.addr %s339, 8
          %s341 = scalar_lea.vmem %s3, %s340
        $region52: #{forward_pallas.7} parent=35 // pred_fallthru
          _
        // Predicated region
        $region53: #{forward_pallas.7} parent=35 // pred_check
          %p342 = pneg %p143
        $region54: #{forward_pallas.7} parent=35 // pred_check_branch
          %344 = sbr.rel (%p342) target = $region56
        $region55: #{forward_pallas.7} parent=35 // pred_region
          %p345 = scmp.lt.s32.totalorder %s19, 1
          %s346 = scalar_select %p345, %s19, 1
          %s347 = smul.addr %s346, 8
          %s348 = scalar_lea.vmem %s4, %s347
        $region56: #{forward_pallas.7} parent=35 // pred_fallthru
          _
      $region36: #{forward_pallas.7} parent=5 // pred_fallthru
        _
      %p349 = scmp.le.s32.totalorder 1, %s19
      %p350 = scmp.lt.s32.totalorder %s19, 3
      %p351 = pnand %p349, %p350
      %p352 = pneg %p351
      // Predicated region
      $region57: #{forward_pallas.7} parent=5 // pred_check
        _
      $region58: #{forward_pallas.7} parent=5 // pred_check_branch
        %354 = sbr.rel (%p351) target = $region60
      $region59: #{forward_pallas.7} parent=5 // pred_region
        %s355 = ssub.s32 %s19, 1
        %p356 = scmp.lt.s32.totalorder %s24, 1
        %s357 = scalar_select %p356, %s24, 1
        %s358 = smul.addr %s357, 8
        %s359 = scalar_lea.vmem %s0, %s358
        %p360 = pneg %p45
        %p361 = pneg %p42
        %p362 = scmp.lt.s32.totalorder %s24, 1
        %s363 = scalar_select %p362, %s24, 1
        %s364 = smul.addr %s363, 8
        %s365 = scalar_lea.vmem %s1, %s364
        %p366 = pneg %p71
        %p367 = pneg %p68
        %p368 = scmp.lt.s32.totalorder %s24, 1
        %s369 = scalar_select %p368, %s24, 1
        %s370 = smul.addr %s369, 8
        %s371 = scalar_lea.vmem %s2, %s370
        %p372 = pneg %p97
        %p373 = pneg %p94
        %p374 = scmp.lt.s32.totalorder %s24, 1
        %s375 = scalar_select %p374, %s24, 1
        %s376 = smul.addr %s375, 8
        %s377 = scalar_lea.vmem %s3, %s376
        %p378 = pneg %p123
        %p379 = pneg %p120
        %p380 = scmp.lt.s32.totalorder %s24, 1
        %s381 = scalar_select %p380, %s24, 1
        %s382 = smul.addr %s381, 8
        %s383 = scalar_lea.vmem %s4, %s382
        %p384 = pneg %p149
        %p385 = pneg %p146
        %p386 = pneg %p170
        %p387 = pneg %p167
        %p388 = pneg %p191
        %p389 = pneg %p188
        %p390 = pneg %p212
        %p391 = pneg %p209
        %p392 = pneg %p233
        %p393 = pneg %p230
        %p394 = pneg %p254
        %p395 = pneg %p251
        %p396 = pneg %p280
        %p397 = pneg %p277
        %s398 = sand.u32 %s267, 1
        %s399 = scalar_lea.sflag [#allocation3], %s398
        %s400 = sand.u32 %s267, 1
        %s401 = smul.addr %s400, 8
        %s402 = scalar_lea.vmem [#allocation2], %s401
        %p403 = scmp.lt.s32.totalorder %s24, 1
        %s404 = scalar_select %p403, %s24, 1
        %s405 = smul.addr %s404, 8
        %s406 = scalar_lea.vmem %s0, %s405
        %p407 = scmp.lt.s32.totalorder %s24, 1
        %s408 = scalar_select %p407, %s24, 1
        %s409 = smul.addr %s408, 8
        %s410 = scalar_lea.vmem %s1, %s409
        %p411 = scmp.lt.s32.totalorder %s24, 1
        %s412 = scalar_select %p411, %s24, 1
        %s413 = smul.addr %s412, 8
        %s414 = scalar_lea.vmem %s2, %s413
        %p415 = scmp.lt.s32.totalorder %s24, 1
        %s416 = scalar_select %p415, %s24, 1
        %s417 = smul.addr %s416, 8
        %s418 = scalar_lea.vmem %s3, %s417
        %p419 = scmp.lt.s32.totalorder %s24, 1
        %s420 = scalar_select %p419, %s24, 1
        %s421 = smul.addr %s420, 8
        %s422 = scalar_lea.vmem %s4, %s421
        %v423 = vld [vmem:[%s9] sm:$0xff]
        %v424 = vld [vmem:[%s9 + $0x8] sm:$0xff]
        %v425 = vld [vmem:[%s9 + $0x10] sm:$0xff]
        %v426 = vld [vmem:[%s9 + $0x18] sm:$0xff]
        %v427 = vld [vmem:[%s9 + $0x20] sm:$0xff]
        %v428 = vld [vmem:[%s9 + $0x28] sm:$0xff]
        %v429 = vld [vmem:[%s9 + $0x30] sm:$0xff]
        %v430 = vld [vmem:[%s9 + $0x38] sm:$0xff]
        %v431 = vld [vmem:[%s406] sm:$0xff]
        %vm432 = vcmask 523264
        %v434 = vsel %vm432, %v431, 0
        %436 = vmatpush.msra.mxu0 0.0
        %437 = vmatpush.msra.mxu0 0.0
        %438 = vmatpush.msra.mxu0 0.0
        %439 = vmatpush.msra.mxu0 0.0
        %440 = vmatpush.msra.mxu0 0.0
        %441 = vmatpush.msra.mxu0 0.0
        %442 = vmatpush.msra.mxu0 0.0
        %443 = vmatpush.msra.mxu0 0.0
        %v444 = vand.u32 %v430, 4294901760
        %445 = vmatpush.msra.mxu0 %v444
        %v446 = vand.u32 %v429, 4294901760
        %447 = vmatpush.msra.mxu0 %v446
        %v448 = vand.u32 %v428, 4294901760
        %449 = vmatpush.msra.mxu0 %v448
        %v450 = vand.u32 %v427, 4294901760
        %451 = vmatpush.msra.mxu0 %v450
        %v452 = vand.u32 %v426, 4294901760
        %453 = vmatpush.msra.mxu0 %v452
        %v454 = vand.u32 %v425, 4294901760
        %455 = vmatpush.msra.mxu0 %v454
        %v456 = vand.u32 %v424, 4294901760
        %457 = vmatpush.msra.mxu0 %v456
        %v458 = vand.u32 %v423, 4294901760
        %459 = vmatpush.msra.mxu0 %v458
        %v460 = vand.u32 %v434, 4294901760
        %v461 = vsub.f32 %v434, %v460
        %v462 = vand.u32 %v461, 4294901760
        %v463 = vsub.f32 %v461, %v462
        %v464 = vand.u32 %v463, 4294901760
        %465 = vmatmul.f32.gmra.mxu0 %v464
        %v466 = vpop.f32.mrf.mxu0
        %v467 = vadd.f32 0.0, %v466
        %468 = vdwg.mxu0
        %469 = vmatpush.msra.mxu0 0.0
        %470 = vmatpush.msra.mxu0 0.0
        %471 = vmatpush.msra.mxu0 0.0
        %472 = vmatpush.msra.mxu0 0.0
        %473 = vmatpush.msra.mxu0 0.0
        %474 = vmatpush.msra.mxu0 0.0
        %475 = vmatpush.msra.mxu0 0.0
        %476 = vmatpush.msra.mxu0 0.0
        %v477 = vand.u32 %v430, 4294901760
        %v478 = vsub.f32 %v430, %v477
        %v479 = vand.u32 %v478, 4294901760
        %v480 = vsub.f32 %v478, %v479
        %v481 = vand.u32 %v480, 4294901760
        %482 = vmatpush.msra.mxu0 %v481
        %v483 = vand.u32 %v429, 4294901760
        %v484 = vsub.f32 %v429, %v483
        %v485 = vand.u32 %v484, 4294901760
        %v486 = vsub.f32 %v484, %v485
        %v487 = vand.u32 %v486, 4294901760
        %488 = vmatpush.msra.mxu0 %v487
        %v489 = vand.u32 %v428, 4294901760
        %v490 = vsub.f32 %v428, %v489
        %v491 = vand.u32 %v490, 4294901760
        %v492 = vsub.f32 %v490, %v491
        %v493 = vand.u32 %v492, 4294901760
        %494 = vmatpush.msra.mxu0 %v493
        %v495 = vand.u32 %v427, 4294901760
        %v496 = vsub.f32 %v427, %v495
        %v497 = vand.u32 %v496, 4294901760
        %v498 = vsub.f32 %v496, %v497
        %v499 = vand.u32 %v498, 4294901760
        %500 = vmatpush.msra.mxu0 %v499
        %v501 = vand.u32 %v426, 4294901760
        %v502 = vsub.f32 %v426, %v501
        %v503 = vand.u32 %v502, 4294901760
        %v504 = vsub.f32 %v502, %v503
        %v505 = vand.u32 %v504, 4294901760
        %506 = vmatpush.msra.mxu0 %v505
        %v507 = vand.u32 %v425, 4294901760
        %v508 = vsub.f32 %v425, %v507
        %v509 = vand.u32 %v508, 4294901760
        %v510 = vsub.f32 %v508, %v509
        %v511 = vand.u32 %v510, 4294901760
        %512 = vmatpush.msra.mxu0 %v511
        %v513 = vand.u32 %v424, 4294901760
        %v514 = vsub.f32 %v424, %v513
        %v515 = vand.u32 %v514, 4294901760
        %v516 = vsub.f32 %v514, %v515
        %v517 = vand.u32 %v516, 4294901760
        %518 = vmatpush.msra.mxu0 %v517
        %v519 = vand.u32 %v423, 4294901760
        %v520 = vsub.f32 %v423, %v519
        %v521 = vand.u32 %v520, 4294901760
        %v522 = vsub.f32 %v520, %v521
        %v523 = vand.u32 %v522, 4294901760
        %524 = vmatpush.msra.mxu0 %v523
        %v525 = vand.u32 %v434, 4294901760
        %526 = vmatmul.f32.gmra.mxu0 %v525
        %v527 = vpop.f32.mrf.mxu0
        %v528 = vadd.f32 %v467, %v527
        %529 = vdwg.mxu0
        %530 = vmatpush.msra.mxu0 0.0
        %531 = vmatpush.msra.mxu0 0.0
        %532 = vmatpush.msra.mxu0 0.0
        %533 = vmatpush.msra.mxu0 0.0
        %534 = vmatpush.msra.mxu0 0.0
        %535 = vmatpush.msra.mxu0 0.0
        %536 = vmatpush.msra.mxu0 0.0
        %537 = vmatpush.msra.mxu0 0.0
        %v538 = vand.u32 %v430, 4294901760
        %v539 = vsub.f32 %v430, %v538
        %540 = vmatpush.msra.mxu0 %v539
        %v541 = vand.u32 %v429, 4294901760
        %v542 = vsub.f32 %v429, %v541
        %543 = vmatpush.msra.mxu0 %v542
        %v544 = vand.u32 %v428, 4294901760
        %v545 = vsub.f32 %v428, %v544
        %546 = vmatpush.msra.mxu0 %v545
        %v547 = vand.u32 %v427, 4294901760
        %v548 = vsub.f32 %v427, %v547
        %549 = vmatpush.msra.mxu0 %v548
        %v550 = vand.u32 %v426, 4294901760
        %v551 = vsub.f32 %v426, %v550
        %552 = vmatpush.msra.mxu0 %v551
        %v553 = vand.u32 %v425, 4294901760
        %v554 = vsub.f32 %v425, %v553
        %555 = vmatpush.msra.mxu0 %v554
        %v556 = vand.u32 %v424, 4294901760
        %v557 = vsub.f32 %v424, %v556
        %558 = vmatpush.msra.mxu0 %v557
        %v559 = vand.u32 %v423, 4294901760
        %v560 = vsub.f32 %v423, %v559
        %561 = vmatpush.msra.mxu0 %v560
        %v562 = vand.u32 %v434, 4294901760
        %v563 = vsub.f32 %v434, %v562
        %564 = vmatmul.f32.gmra.mxu0 %v563
        %v565 = vpop.f32.mrf.mxu0
        %v566 = vadd.f32 %v528, %v565
        %567 = vdwg.mxu0
        %568 = vmatpush.msra.mxu0 0.0
        %569 = vmatpush.msra.mxu0 0.0
        %570 = vmatpush.msra.mxu0 0.0
        %571 = vmatpush.msra.mxu0 0.0
        %572 = vmatpush.msra.mxu0 0.0
        %573 = vmatpush.msra.mxu0 0.0
        %574 = vmatpush.msra.mxu0 0.0
        %575 = vmatpush.msra.mxu0 0.0
        %v576 = vand.u32 %v430, 4294901760
        %577 = vmatpush.msra.mxu0 %v576
        %v578 = vand.u32 %v429, 4294901760
        %579 = vmatpush.msra.mxu0 %v578
        %v580 = vand.u32 %v428, 4294901760
        %581 = vmatpush.msra.mxu0 %v580
        %v582 = vand.u32 %v427, 4294901760
        %583 = vmatpush.msra.mxu0 %v582
        %v584 = vand.u32 %v426, 4294901760
        %585 = vmatpush.msra.mxu0 %v584
        %v586 = vand.u32 %v425, 4294901760
        %587 = vmatpush.msra.mxu0 %v586
        %v588 = vand.u32 %v424, 4294901760
        %589 = vmatpush.msra.mxu0 %v588
        %v590 = vand.u32 %v423, 4294901760
        %591 = vmatpush.msra.mxu0 %v590
        %v592 = vand.u32 %v434, 4294901760
        %v593 = vsub.f32 %v434, %v592
        %v594 = vand.u32 %v593, 4294901760
        %595 = vmatmul.f32.gmra.mxu0 %v594
        %v596 = vpop.f32.mrf.mxu0
        %v597 = vadd.f32 %v566, %v596
        %598 = vdwg.mxu0
        %599 = vmatpush.msra.mxu0 0.0
        %600 = vmatpush.msra.mxu0 0.0
        %601 = vmatpush.msra.mxu0 0.0
        %602 = vmatpush.msra.mxu0 0.0
        %603 = vmatpush.msra.mxu0 0.0
        %604 = vmatpush.msra.mxu0 0.0
        %605 = vmatpush.msra.mxu0 0.0
        %606 = vmatpush.msra.mxu0 0.0
        %v607 = vand.u32 %v430, 4294901760
        %v608 = vsub.f32 %v430, %v607
        %v609 = vand.u32 %v608, 4294901760
        %610 = vmatpush.msra.mxu0 %v609
        %v611 = vand.u32 %v429, 4294901760
        %v612 = vsub.f32 %v429, %v611
        %v613 = vand.u32 %v612, 4294901760
        %614 = vmatpush.msra.mxu0 %v613
        %v615 = vand.u32 %v428, 4294901760
        %v616 = vsub.f32 %v428, %v615
        %v617 = vand.u32 %v616, 4294901760
        %618 = vmatpush.msra.mxu0 %v617
        %v619 = vand.u32 %v427, 4294901760
        %v620 = vsub.f32 %v427, %v619
        %v621 = vand.u32 %v620, 4294901760
        %622 = vmatpush.msra.mxu0 %v621
        %v623 = vand.u32 %v426, 4294901760
        %v624 = vsub.f32 %v426, %v623
        %v625 = vand.u32 %v624, 4294901760
        %626 = vmatpush.msra.mxu0 %v625
        %v627 = vand.u32 %v425, 4294901760
        %v628 = vsub.f32 %v425, %v627
        %v629 = vand.u32 %v628, 4294901760
        %630 = vmatpush.msra.mxu0 %v629
        %v631 = vand.u32 %v424, 4294901760
        %v632 = vsub.f32 %v424, %v631
        %v633 = vand.u32 %v632, 4294901760
        %634 = vmatpush.msra.mxu0 %v633
        %v635 = vand.u32 %v423, 4294901760
        %v636 = vsub.f32 %v423, %v635
        %v637 = vand.u32 %v636, 4294901760
        %638 = vmatpush.msra.mxu0 %v637
        %v639 = vand.u32 %v434, 4294901760
        %640 = vmatmul.f32.gmra.mxu0 %v639
        %v641 = vpop.f32.mrf.mxu0
        %v642 = vadd.f32 %v597, %v641
        %643 = vdwg.mxu0
        %644 = vmatpush.msra.mxu0 0.0
        %645 = vmatpush.msra.mxu0 0.0
        %646 = vmatpush.msra.mxu0 0.0
        %647 = vmatpush.msra.mxu0 0.0
        %648 = vmatpush.msra.mxu0 0.0
        %649 = vmatpush.msra.mxu0 0.0
        %650 = vmatpush.msra.mxu0 0.0
        %651 = vmatpush.msra.mxu0 0.0
        %v652 = vand.u32 %v430, 4294901760
        %653 = vmatpush.msra.mxu0 %v652
        %v654 = vand.u32 %v429, 4294901760
        %655 = vmatpush.msra.mxu0 %v654
        %v656 = vand.u32 %v428, 4294901760
        %657 = vmatpush.msra.mxu0 %v656
        %v658 = vand.u32 %v427, 4294901760
        %659 = vmatpush.msra.mxu0 %v658
        %v660 = vand.u32 %v426, 4294901760
        %661 = vmatpush.msra.mxu0 %v660
        %v662 = vand.u32 %v425, 4294901760
        %663 = vmatpush.msra.mxu0 %v662
        %v664 = vand.u32 %v424, 4294901760
        %665 = vmatpush.msra.mxu0 %v664
        %v666 = vand.u32 %v423, 4294901760
        %667 = vmatpush.msra.mxu0 %v666
        %v668 = vand.u32 %v434, 4294901760
        %669 = vmatmul.f32.gmra.mxu0 %v668
        %v670 = vpop.f32.mrf.mxu0
        %v671 = vadd.f32 %v642, %v670
        %672 = vdwg.mxu0
        %v673 = vmul.f32 %v671, 0.03125
        %v674 = vsub.f32 %v431, %v673
        %v675 = vmul.f32 %v674, %v674
        %v677 = vsel %vm432, %v675, 0
        %679 = vmatpush.msra.mxu0 0.0
        %680 = vmatpush.msra.mxu0 0.0
        %681 = vmatpush.msra.mxu0 0.0
        %682 = vmatpush.msra.mxu0 0.0
        %683 = vmatpush.msra.mxu0 0.0
        %684 = vmatpush.msra.mxu0 0.0
        %685 = vmatpush.msra.mxu0 0.0
        %686 = vmatpush.msra.mxu0 0.0
        %v687 = vand.u32 %v430, 4294901760
        %688 = vmatpush.msra.mxu0 %v687
        %v689 = vand.u32 %v429, 4294901760
        %690 = vmatpush.msra.mxu0 %v689
        %v691 = vand.u32 %v428, 4294901760
        %692 = vmatpush.msra.mxu0 %v691
        %v693 = vand.u32 %v427, 4294901760
        %694 = vmatpush.msra.mxu0 %v693
        %v695 = vand.u32 %v426, 4294901760
        %696 = vmatpush.msra.mxu0 %v695
        %v697 = vand.u32 %v425, 4294901760
        %698 = vmatpush.msra.mxu0 %v697
        %v699 = vand.u32 %v424, 4294901760
        %700 = vmatpush.msra.mxu0 %v699
        %v701 = vand.u32 %v423, 4294901760
        %702 = vmatpush.msra.mxu0 %v701
        %v703 = vand.u32 %v677, 4294901760
        %v704 = vsub.f32 %v677, %v703
        %v705 = vand.u32 %v704, 4294901760
        %v706 = vsub.f32 %v704, %v705
        %v707 = vand.u32 %v706, 4294901760
        %708 = vmatmul.f32.gmra.mxu0 %v707
        %v709 = vpop.f32.mrf.mxu0
        %v710 = vadd.f32 0.0, %v709
        %711 = vdwg.mxu0
        %712 = vmatpush.msra.mxu0 0.0
        %713 = vmatpush.msra.mxu0 0.0
        %714 = vmatpush.msra.mxu0 0.0
        %715 = vmatpush.msra.mxu0 0.0
        %716 = vmatpush.msra.mxu0 0.0
        %717 = vmatpush.msra.mxu0 0.0
        %718 = vmatpush.msra.mxu0 0.0
        %719 = vmatpush.msra.mxu0 0.0
        %v720 = vand.u32 %v430, 4294901760
        %v721 = vsub.f32 %v430, %v720
        %v722 = vand.u32 %v721, 4294901760
        %v723 = vsub.f32 %v721, %v722
        %v724 = vand.u32 %v723, 4294901760
        %725 = vmatpush.msra.mxu0 %v724
        %v726 = vand.u32 %v429, 4294901760
        %v727 = vsub.f32 %v429, %v726
        %v728 = vand.u32 %v727, 4294901760
        %v729 = vsub.f32 %v727, %v728
        %v730 = vand.u32 %v729, 4294901760
        %731 = vmatpush.msra.mxu0 %v730
        %v732 = vand.u32 %v428, 4294901760
        %v733 = vsub.f32 %v428, %v732
        %v734 = vand.u32 %v733, 4294901760
        %v735 = vsub.f32 %v733, %v734
        %v736 = vand.u32 %v735, 4294901760
        %737 = vmatpush.msra.mxu0 %v736
        %v738 = vand.u32 %v427, 4294901760
        %v739 = vsub.f32 %v427, %v738
        %v740 = vand.u32 %v739, 4294901760
        %v741 = vsub.f32 %v739, %v740
        %v742 = vand.u32 %v741, 4294901760
        %743 = vmatpush.msra.mxu0 %v742
        %v744 = vand.u32 %v426, 4294901760
        %v745 = vsub.f32 %v426, %v744
        %v746 = vand.u32 %v745, 4294901760
        %v747 = vsub.f32 %v745, %v746
        %v748 = vand.u32 %v747, 4294901760
        %749 = vmatpush.msra.mxu0 %v748
        %v750 = vand.u32 %v425, 4294901760
        %v751 = vsub.f32 %v425, %v750
        %v752 = vand.u32 %v751, 4294901760
        %v753 = vsub.f32 %v751, %v752
        %v754 = vand.u32 %v753, 4294901760
        %755 = vmatpush.msra.mxu0 %v754
        %v756 = vand.u32 %v424, 4294901760
        %v757 = vsub.f32 %v424, %v756
        %v758 = vand.u32 %v757, 4294901760
        %v759 = vsub.f32 %v757, %v758
        %v760 = vand.u32 %v759, 4294901760
        %761 = vmatpush.msra.mxu0 %v760
        %v762 = vand.u32 %v423, 4294901760
        %v763 = vsub.f32 %v423, %v762
        %v764 = vand.u32 %v763, 4294901760
        %v765 = vsub.f32 %v763, %v764
        %v766 = vand.u32 %v765, 4294901760
        %767 = vmatpush.msra.mxu0 %v766
        %v768 = vand.u32 %v677, 4294901760
        %769 = vmatmul.f32.gmra.mxu0 %v768
        %v770 = vpop.f32.mrf.mxu0
        %v771 = vadd.f32 %v710, %v770
        %772 = vdwg.mxu0
        %773 = vmatpush.msra.mxu0 0.0
        %774 = vmatpush.msra.mxu0 0.0
        %775 = vmatpush.msra.mxu0 0.0
        %776 = vmatpush.msra.mxu0 0.0
        %777 = vmatpush.msra.mxu0 0.0
        %778 = vmatpush.msra.mxu0 0.0
        %779 = vmatpush.msra.mxu0 0.0
        %780 = vmatpush.msra.mxu0 0.0
        %v781 = vand.u32 %v430, 4294901760
        %v782 = vsub.f32 %v430, %v781
        %783 = vmatpush.msra.mxu0 %v782
        %v784 = vand.u32 %v429, 4294901760
        %v785 = vsub.f32 %v429, %v784
        %786 = vmatpush.msra.mxu0 %v785
        %v787 = vand.u32 %v428, 4294901760
        %v788 = vsub.f32 %v428, %v787
        %789 = vmatpush.msra.mxu0 %v788
        %v790 = vand.u32 %v427, 4294901760
        %v791 = vsub.f32 %v427, %v790
        %792 = vmatpush.msra.mxu0 %v791
        %v793 = vand.u32 %v426, 4294901760
        %v794 = vsub.f32 %v426, %v793
        %795 = vmatpush.msra.mxu0 %v794
        %v796 = vand.u32 %v425, 4294901760
        %v797 = vsub.f32 %v425, %v796
        %798 = vmatpush.msra.mxu0 %v797
        %v799 = vand.u32 %v424, 4294901760
        %v800 = vsub.f32 %v424, %v799
        %801 = vmatpush.msra.mxu0 %v800
        %v802 = vand.u32 %v423, 4294901760
        %v803 = vsub.f32 %v423, %v802
        %804 = vmatpush.msra.mxu0 %v803
        %v805 = vand.u32 %v677, 4294901760
        %v806 = vsub.f32 %v677, %v805
        %807 = vmatmul.f32.gmra.mxu0 %v806
        %v808 = vpop.f32.mrf.mxu0
        %v809 = vadd.f32 %v771, %v808
        %810 = vdwg.mxu0
        %811 = vmatpush.msra.mxu0 0.0
        %812 = vmatpush.msra.mxu0 0.0
        %813 = vmatpush.msra.mxu0 0.0
        %814 = vmatpush.msra.mxu0 0.0
        %815 = vmatpush.msra.mxu0 0.0
        %816 = vmatpush.msra.mxu0 0.0
        %817 = vmatpush.msra.mxu0 0.0
        %818 = vmatpush.msra.mxu0 0.0
        %v819 = vand.u32 %v430, 4294901760
        %820 = vmatpush.msra.mxu0 %v819
        %v821 = vand.u32 %v429, 4294901760
        %822 = vmatpush.msra.mxu0 %v821
        %v823 = vand.u32 %v428, 4294901760
        %824 = vmatpush.msra.mxu0 %v823
        %v825 = vand.u32 %v427, 4294901760
        %826 = vmatpush.msra.mxu0 %v825
        %v827 = vand.u32 %v426, 4294901760
        %828 = vmatpush.msra.mxu0 %v827
        %v829 = vand.u32 %v425, 4294901760
        %830 = vmatpush.msra.mxu0 %v829
        %v831 = vand.u32 %v424, 4294901760
        %832 = vmatpush.msra.mxu0 %v831
        %v833 = vand.u32 %v423, 4294901760
        %834 = vmatpush.msra.mxu0 %v833
        %v835 = vand.u32 %v677, 4294901760
        %v836 = vsub.f32 %v677, %v835
        %v837 = vand.u32 %v836, 4294901760
        %838 = vmatmul.f32.gmra.mxu0 %v837
        %v839 = vpop.f32.mrf.mxu0
        %v840 = vadd.f32 %v809, %v839
        %841 = vdwg.mxu0
        %842 = vmatpush.msra.mxu0 0.0
        %843 = vmatpush.msra.mxu0 0.0
        %844 = vmatpush.msra.mxu0 0.0
        %845 = vmatpush.msra.mxu0 0.0
        %846 = vmatpush.msra.mxu0 0.0
        %847 = vmatpush.msra.mxu0 0.0
        %848 = vmatpush.msra.mxu0 0.0
        %849 = vmatpush.msra.mxu0 0.0
        %v850 = vand.u32 %v430, 4294901760
        %v851 = vsub.f32 %v430, %v850
        %v852 = vand.u32 %v851, 4294901760
        %853 = vmatpush.msra.mxu0 %v852
        %v854 = vand.u32 %v429, 4294901760
        %v855 = vsub.f32 %v429, %v854
        %v856 = vand.u32 %v855, 4294901760
        %857 = vmatpush.msra.mxu0 %v856
        %v858 = vand.u32 %v428, 4294901760
        %v859 = vsub.f32 %v428, %v858
        %v860 = vand.u32 %v859, 4294901760
        %861 = vmatpush.msra.mxu0 %v860
        %v862 = vand.u32 %v427, 4294901760
        %v863 = vsub.f32 %v427, %v862
        %v864 = vand.u32 %v863, 4294901760
        %865 = vmatpush.msra.mxu0 %v864
        %v866 = vand.u32 %v426, 4294901760
        %v867 = vsub.f32 %v426, %v866
        %v868 = vand.u32 %v867, 4294901760
        %869 = vmatpush.msra.mxu0 %v868
        %v870 = vand.u32 %v425, 4294901760
        %v871 = vsub.f32 %v425, %v870
        %v872 = vand.u32 %v871, 4294901760
        %873 = vmatpush.msra.mxu0 %v872
        %v874 = vand.u32 %v424, 4294901760
        %v875 = vsub.f32 %v424, %v874
        %v876 = vand.u32 %v875, 4294901760
        %877 = vmatpush.msra.mxu0 %v876
        %v878 = vand.u32 %v423, 4294901760
        %v879 = vsub.f32 %v423, %v878
        %v880 = vand.u32 %v879, 4294901760
        %881 = vmatpush.msra.mxu0 %v880
        %v882 = vand.u32 %v677, 4294901760
        %883 = vmatmul.f32.gmra.mxu0 %v882
        %v884 = vpop.f32.mrf.mxu0
        %v885 = vadd.f32 %v840, %v884
        %886 = vdwg.mxu0
        %887 = vmatpush.msra.mxu0 0.0
        %888 = vmatpush.msra.mxu0 0.0
        %889 = vmatpush.msra.mxu0 0.0
        %890 = vmatpush.msra.mxu0 0.0
        %891 = vmatpush.msra.mxu0 0.0
        %892 = vmatpush.msra.mxu0 0.0
        %893 = vmatpush.msra.mxu0 0.0
        %894 = vmatpush.msra.mxu0 0.0
        %v895 = vand.u32 %v430, 4294901760
        %896 = vmatpush.msra.mxu0 %v895
        %v897 = vand.u32 %v429, 4294901760
        %898 = vmatpush.msra.mxu0 %v897
        %v899 = vand.u32 %v428, 4294901760
        %900 = vmatpush.msra.mxu0 %v899
        %v901 = vand.u32 %v427, 4294901760
        %902 = vmatpush.msra.mxu0 %v901
        %v903 = vand.u32 %v426, 4294901760
        %904 = vmatpush.msra.mxu0 %v903
        %v905 = vand.u32 %v425, 4294901760
        %906 = vmatpush.msra.mxu0 %v905
        %v907 = vand.u32 %v424, 4294901760
        %908 = vmatpush.msra.mxu0 %v907
        %v909 = vand.u32 %v423, 4294901760
        %910 = vmatpush.msra.mxu0 %v909
        %v911 = vand.u32 %v677, 4294901760
        %912 = vmatmul.f32.gmra.mxu0 %v911
        %v913 = vpop.f32.mrf.mxu0
        %v914 = vadd.f32 %v885, %v913
        %915 = vdwg.mxu0
        %v916 = vmul.f32 %v914, 0.03125
        %v917 = vadd.f32 %v916, 0.00064
        %v918 = vrsqrt.pop %v917
        %v919 = vmul.f32 %v918, %v917
        %v920 = vmul.f32 %v919, %v918
        %v921 = vmul.f32 0.5, %v920
        %v922 = vsub.f32 1.5, %v921
        %v923 = vmul.f32 %v918, %v922
        %vm924 = vweird.f32 %v917
        %vm925 = vweird.f32 %v918
        %vm926 = vmor %vm924, %vm925
        %v927 = vsel %vm926, %v918, %v923
        %v928 = vmul.f32 %v674, %v927
        %v929 = vld [vmem:[%s6] sm:$0x1]
        %v931 = vperm.slane %v929, 0
        %v933 = vmul.f32 %v928, %v931
        %v934 = vld [vmem:[%s7] sm:$0x1]
        %v936 = vperm.slane %v934, 0
        %v938 = vadd.f32 %v933, %v936
        %v939 = vld [vmem:[%s410] sm:$0xff]
        %v940 = vld [vmem:[%s414] sm:$0xff]
        %v941 = vmul.f32 %v939, %v940
        %v942 = vld [vmem:[%s5] sm:$0x1]
        %v944 = vperm.slane %v942, 0
        %v946 = vmul.f32 %v941, %v944
        %v948 = vsel %vm432, %v946, 0
        %950 = vmatpush.msra.mxu0 0.0
        %951 = vmatpush.msra.mxu0 0.0
        %952 = vmatpush.msra.mxu0 0.0
        %953 = vmatpush.msra.mxu0 0.0
        %954 = vmatpush.msra.mxu0 0.0
        %955 = vmatpush.msra.mxu0 0.0
        %956 = vmatpush.msra.mxu0 0.0
        %957 = vmatpush.msra.mxu0 0.0
        %v958 = vand.u32 %v430, 4294901760
        %959 = vmatpush.msra.mxu0 %v958
        %v960 = vand.u32 %v429, 4294901760
        %961 = vmatpush.msra.mxu0 %v960
        %v962 = vand.u32 %v428, 4294901760
        %963 = vmatpush.msra.mxu0 %v962
        %v964 = vand.u32 %v427, 4294901760
        %965 = vmatpush.msra.mxu0 %v964
        %v966 = vand.u32 %v426, 4294901760
        %967 = vmatpush.msra.mxu0 %v966
        %v968 = vand.u32 %v425, 4294901760
        %969 = vmatpush.msra.mxu0 %v968
        %v970 = vand.u32 %v424, 4294901760
        %971 = vmatpush.msra.mxu0 %v970
        %v972 = vand.u32 %v423, 4294901760
        %973 = vmatpush.msra.mxu0 %v972
        %v974 = vand.u32 %v948, 4294901760
        %v975 = vsub.f32 %v948, %v974
        %v976 = vand.u32 %v975, 4294901760
        %v977 = vsub.f32 %v975, %v976
        %v978 = vand.u32 %v977, 4294901760
        %979 = vmatmul.f32.gmra.mxu0 %v978
        %v980 = vpop.f32.mrf.mxu0
        %v981 = vadd.f32 0.0, %v980
        %982 = vdwg.mxu0
        %983 = vmatpush.msra.mxu0 0.0
        %984 = vmatpush.msra.mxu0 0.0
        %985 = vmatpush.msra.mxu0 0.0
        %986 = vmatpush.msra.mxu0 0.0
        %987 = vmatpush.msra.mxu0 0.0
        %988 = vmatpush.msra.mxu0 0.0
        %989 = vmatpush.msra.mxu0 0.0
        %990 = vmatpush.msra.mxu0 0.0
        %v991 = vand.u32 %v430, 4294901760
        %v992 = vsub.f32 %v430, %v991
        %v993 = vand.u32 %v992, 4294901760
        %v994 = vsub.f32 %v992, %v993
        %v995 = vand.u32 %v994, 4294901760
        %996 = vmatpush.msra.mxu0 %v995
        %v997 = vand.u32 %v429, 4294901760
        %v998 = vsub.f32 %v429, %v997
        %v999 = vand.u32 %v998, 4294901760
        %v1000 = vsub.f32 %v998, %v999
        %v1001 = vand.u32 %v1000, 4294901760
        %1002 = vmatpush.msra.mxu0 %v1001
        %v1003 = vand.u32 %v428, 4294901760
        %v1004 = vsub.f32 %v428, %v1003
        %v1005 = vand.u32 %v1004, 4294901760
        %v1006 = vsub.f32 %v1004, %v1005
        %v1007 = vand.u32 %v1006, 4294901760
        %1008 = vmatpush.msra.mxu0 %v1007
        %v1009 = vand.u32 %v427, 4294901760
        %v1010 = vsub.f32 %v427, %v1009
        %v1011 = vand.u32 %v1010, 4294901760
        %v1012 = vsub.f32 %v1010, %v1011
        %v1013 = vand.u32 %v1012, 4294901760
        %1014 = vmatpush.msra.mxu0 %v1013
        %v1015 = vand.u32 %v426, 4294901760
        %v1016 = vsub.f32 %v426, %v1015
        %v1017 = vand.u32 %v1016, 4294901760
        %v1018 = vsub.f32 %v1016, %v1017
        %v1019 = vand.u32 %v1018, 4294901760
        %1020 = vmatpush.msra.mxu0 %v1019
        %v1021 = vand.u32 %v425, 4294901760
        %v1022 = vsub.f32 %v425, %v1021
        %v1023 = vand.u32 %v1022, 4294901760
        %v1024 = vsub.f32 %v1022, %v1023
        %v1025 = vand.u32 %v1024, 4294901760
        %1026 = vmatpush.msra.mxu0 %v1025
        %v1027 = vand.u32 %v424, 4294901760
        %v1028 = vsub.f32 %v424, %v1027
        %v1029 = vand.u32 %v1028, 4294901760
        %v1030 = vsub.f32 %v1028, %v1029
        %v1031 = vand.u32 %v1030, 4294901760
        %1032 = vmatpush.msra.mxu0 %v1031
        %v1033 = vand.u32 %v423, 4294901760
        %v1034 = vsub.f32 %v423, %v1033
        %v1035 = vand.u32 %v1034, 4294901760
        %v1036 = vsub.f32 %v1034, %v1035
        %v1037 = vand.u32 %v1036, 4294901760
        %1038 = vmatpush.msra.mxu0 %v1037
        %v1039 = vand.u32 %v948, 4294901760
        %1040 = vmatmul.f32.gmra.mxu0 %v1039
        %v1041 = vpop.f32.mrf.mxu0
        %v1042 = vadd.f32 %v981, %v1041
        %1043 = vdwg.mxu0
        %1044 = vmatpush.msra.mxu0 0.0
        %1045 = vmatpush.msra.mxu0 0.0
        %1046 = vmatpush.msra.mxu0 0.0
        %1047 = vmatpush.msra.mxu0 0.0
        %1048 = vmatpush.msra.mxu0 0.0
        %1049 = vmatpush.msra.mxu0 0.0
        %1050 = vmatpush.msra.mxu0 0.0
        %1051 = vmatpush.msra.mxu0 0.0
        %v1052 = vand.u32 %v430, 4294901760
        %v1053 = vsub.f32 %v430, %v1052
        %1054 = vmatpush.msra.mxu0 %v1053
        %v1055 = vand.u32 %v429, 4294901760
        %v1056 = vsub.f32 %v429, %v1055
        %1057 = vmatpush.msra.mxu0 %v1056
        %v1058 = vand.u32 %v428, 4294901760
        %v1059 = vsub.f32 %v428, %v1058
        %1060 = vmatpush.msra.mxu0 %v1059
        %v1061 = vand.u32 %v427, 4294901760
        %v1062 = vsub.f32 %v427, %v1061
        %1063 = vmatpush.msra.mxu0 %v1062
        %v1064 = vand.u32 %v426, 4294901760
        %v1065 = vsub.f32 %v426, %v1064
        %1066 = vmatpush.msra.mxu0 %v1065
        %v1067 = vand.u32 %v425, 4294901760
        %v1068 = vsub.f32 %v425, %v1067
        %1069 = vmatpush.msra.mxu0 %v1068
        %v1070 = vand.u32 %v424, 4294901760
        %v1071 = vsub.f32 %v424, %v1070
        %1072 = vmatpush.msra.mxu0 %v1071
        %v1073 = vand.u32 %v423, 4294901760
        %v1074 = vsub.f32 %v423, %v1073
        %1075 = vmatpush.msra.mxu0 %v1074
        %v1076 = vand.u32 %v948, 4294901760
        %v1077 = vsub.f32 %v948, %v1076
        %1078 = vmatmul.f32.gmra.mxu0 %v1077
        %v1079 = vpop.f32.mrf.mxu0
        %v1080 = vadd.f32 %v1042, %v1079
        %1081 = vdwg.mxu0
        %1082 = vmatpush.msra.mxu0 0.0
        %1083 = vmatpush.msra.mxu0 0.0
        %1084 = vmatpush.msra.mxu0 0.0
        %1085 = vmatpush.msra.mxu0 0.0
        %1086 = vmatpush.msra.mxu0 0.0
        %1087 = vmatpush.msra.mxu0 0.0
        %1088 = vmatpush.msra.mxu0 0.0
        %1089 = vmatpush.msra.mxu0 0.0
        %v1090 = vand.u32 %v430, 4294901760
        %1091 = vmatpush.msra.mxu0 %v1090
        %v1092 = vand.u32 %v429, 4294901760
        %1093 = vmatpush.msra.mxu0 %v1092
        %v1094 = vand.u32 %v428, 4294901760
        %1095 = vmatpush.msra.mxu0 %v1094
        %v1096 = vand.u32 %v427, 4294901760
        %1097 = vmatpush.msra.mxu0 %v1096
        %v1098 = vand.u32 %v426, 4294901760
        %1099 = vmatpush.msra.mxu0 %v1098
        %v1100 = vand.u32 %v425, 4294901760
        %1101 = vmatpush.msra.mxu0 %v1100
        %v1102 = vand.u32 %v424, 4294901760
        %1103 = vmatpush.msra.mxu0 %v1102
        %v1104 = vand.u32 %v423, 4294901760
        %1105 = vmatpush.msra.mxu0 %v1104
        %v1106 = vand.u32 %v948, 4294901760
        %v1107 = vsub.f32 %v948, %v1106
        %v1108 = vand.u32 %v1107, 4294901760
        %1109 = vmatmul.f32.gmra.mxu0 %v1108
        %v1110 = vpop.f32.mrf.mxu0
        %v1111 = vadd.f32 %v1080, %v1110
        %1112 = vdwg.mxu0
        %1113 = vmatpush.msra.mxu0 0.0
        %1114 = vmatpush.msra.mxu0 0.0
        %1115 = vmatpush.msra.mxu0 0.0
        %1116 = vmatpush.msra.mxu0 0.0
        %1117 = vmatpush.msra.mxu0 0.0
        %1118 = vmatpush.msra.mxu0 0.0
        %1119 = vmatpush.msra.mxu0 0.0
        %1120 = vmatpush.msra.mxu0 0.0
        %v1121 = vand.u32 %v430, 4294901760
        %v1122 = vsub.f32 %v430, %v1121
        %v1123 = vand.u32 %v1122, 4294901760
        %1124 = vmatpush.msra.mxu0 %v1123
        %v1125 = vand.u32 %v429, 4294901760
        %v1126 = vsub.f32 %v429, %v1125
        %v1127 = vand.u32 %v1126, 4294901760
        %1128 = vmatpush.msra.mxu0 %v1127
        %v1129 = vand.u32 %v428, 4294901760
        %v1130 = vsub.f32 %v428, %v1129
        %v1131 = vand.u32 %v1130, 4294901760
        %1132 = vmatpush.msra.mxu0 %v1131
        %v1133 = vand.u32 %v427, 4294901760
        %v1134 = vsub.f32 %v427, %v1133
        %v1135 = vand.u32 %v1134, 4294901760
        %1136 = vmatpush.msra.mxu0 %v1135
        %v1137 = vand.u32 %v426, 4294901760
        %v1138 = vsub.f32 %v426, %v1137
        %v1139 = vand.u32 %v1138, 4294901760
        %1140 = vmatpush.msra.mxu0 %v1139
        %v1141 = vand.u32 %v425, 4294901760
        %v1142 = vsub.f32 %v425, %v1141
        %v1143 = vand.u32 %v1142, 4294901760
        %1144 = vmatpush.msra.mxu0 %v1143
        %v1145 = vand.u32 %v424, 4294901760
        %v1146 = vsub.f32 %v424, %v1145
        %v1147 = vand.u32 %v1146, 4294901760
        %1148 = vmatpush.msra.mxu0 %v1147
        %v1149 = vand.u32 %v423, 4294901760
        %v1150 = vsub.f32 %v423, %v1149
        %v1151 = vand.u32 %v1150, 4294901760
        %1152 = vmatpush.msra.mxu0 %v1151
        %v1153 = vand.u32 %v948, 4294901760
        %1154 = vmatmul.f32.gmra.mxu0 %v1153
        %v1155 = vpop.f32.mrf.mxu0
        %v1156 = vadd.f32 %v1111, %v1155
        %1157 = vdwg.mxu0
        %1158 = vmatpush.msra.mxu0 0.0
        %1159 = vmatpush.msra.mxu0 0.0
        %1160 = vmatpush.msra.mxu0 0.0
        %1161 = vmatpush.msra.mxu0 0.0
        %1162 = vmatpush.msra.mxu0 0.0
        %1163 = vmatpush.msra.mxu0 0.0
        %1164 = vmatpush.msra.mxu0 0.0
        %1165 = vmatpush.msra.mxu0 0.0
        %v1166 = vand.u32 %v430, 4294901760
        %1167 = vmatpush.msra.mxu0 %v1166
        %v1168 = vand.u32 %v429, 4294901760
        %1169 = vmatpush.msra.mxu0 %v1168
        %v1170 = vand.u32 %v428, 4294901760
        %1171 = vmatpush.msra.mxu0 %v1170
        %v1172 = vand.u32 %v427, 4294901760
        %1173 = vmatpush.msra.mxu0 %v1172
        %v1174 = vand.u32 %v426, 4294901760
        %1175 = vmatpush.msra.mxu0 %v1174
        %v1176 = vand.u32 %v425, 4294901760
        %1177 = vmatpush.msra.mxu0 %v1176
        %v1178 = vand.u32 %v424, 4294901760
        %1179 = vmatpush.msra.mxu0 %v1178
        %v1180 = vand.u32 %v423, 4294901760
        %1181 = vmatpush.msra.mxu0 %v1180
        %v1182 = vand.u32 %v948, 4294901760
        %1183 = vmatmul.f32.gmra.mxu0 %v1182
        %v1184 = vpop.f32.mrf.mxu0
        %v1185 = vadd.f32 %v1156, %v1184
        %1186 = vdwg.mxu0
        %v1187 = vld [vmem:[%s418] sm:$0xff]
        %v1188 = vmul.f32 %v1185, %v1187
        %v1189 = vadd.f32 %v938, %v1188
        %v1190 = vld [vmem:[%s422] sm:$0xff]
        %v1191 = vmul.f32 %v1189, %v1190
        %v1192 = vld [vmem:[%s8] sm:$0xff]
        %v1193 = vld [vmem:[%s8 + $0x8] sm:$0xff]
        %v1194 = vld [vmem:[%s8 + $0x10] sm:$0xff]
        %v1195 = vld [vmem:[%s8 + $0x18] sm:$0xff]
        %v1196 = vld [vmem:[%s8 + $0x20] sm:$0xff]
        %v1197 = vld [vmem:[%s8 + $0x28] sm:$0xff]
        %v1198 = vld [vmem:[%s8 + $0x30] sm:$0xff]
        %v1199 = vld [vmem:[%s8 + $0x38] sm:$0xff]
        %v1201 = vsel %vm432, %v1191, 0
        %1203 = vmatpush.msra.mxu0 0.0
        %1204 = vmatpush.msra.mxu0 0.0
        %1205 = vmatpush.msra.mxu0 0.0
        %1206 = vmatpush.msra.mxu0 0.0
        %1207 = vmatpush.msra.mxu0 0.0
        %1208 = vmatpush.msra.mxu0 0.0
        %1209 = vmatpush.msra.mxu0 0.0
        %1210 = vmatpush.msra.mxu0 0.0
        %1211 = vmatpush.msra.mxu0 %v1199
        %1212 = vmatpush.msra.mxu0 %v1198
        %1213 = vmatpush.msra.mxu0 %v1197
        %1214 = vmatpush.msra.mxu0 %v1196
        %1215 = vmatpush.msra.mxu0 %v1195
        %1216 = vmatpush.msra.mxu0 %v1194
        %1217 = vmatpush.msra.mxu0 %v1193
        %1218 = vmatpush.msra.mxu0 %v1192
        %1219 = vmatmul.f32.gmra.mxu0 %v1201
        %v1220 = vpop.f32.mrf.mxu0
        %v1221 = vadd.f32 0.0, %v1220
        %1222 = vdwg.mxu0
        %1223 = vst.msk [vmem:[%s402] sm:$0xff] %vm432, %v1221
        %s1224 = sand.u32 %s267, 1
        %s1225 = scalar_lea.sflag [#allocation3], %s1224
        %s1226 = sand.u32 %s267, 1
        %s1227 = smul.addr %s1226, 8
        %s1228 = scalar_lea.vmem [#allocation2], %s1227
        // Predicated region
        $region61: #{forward_pallas.7} parent=59 // pred_check
          %p1229 = pneg %p277
        $region62: #{forward_pallas.7} parent=59 // pred_check_branch
          %1231 = sbr.rel (%p1229) target = $region64
        $region63: #{forward_pallas.7} parent=59 // pred_region
          %1233 = vsyncadd %s1225, 0
          %s1234 = smul.addr %s24, 8
          %s1235 = scalar_lea.hbm %s10, %s1234
          %s1237 = sshll.u32 %s1228, 4
          %s1238 = int_to_ptr.vmem [resolvable:$true] %s1237
          %s1239 = sshll.u32 %s1235, 4
          %s1240 = int_to_ptr.hbm [resolvable:$true] %s1239
          %1242 = dma.vmem_to_hbm [thread:$0]  %s1238, 128, %s1240, %s1225
        $region64: #{forward_pallas.7} parent=59 // pred_fallthru
          _
      $region60: #{forward_pallas.7} parent=5 // pred_fallthru
        _
      %p1243 = scmp.le.s32.totalorder 2, %s19
      // Predicated region
      $region65: #{forward_pallas.7} parent=5 // pred_check
        %p1244 = pneg %p1243
      $region66: #{forward_pallas.7} parent=5 // pred_check_branch
        %1246 = sbr.rel (%p1244) target = $region68
      $region67: #{forward_pallas.7} parent=5 // pred_region
        %s1247 = ssub.s32 %s19, 2
        // Predicated region
        $region69: #{forward_pallas.7} parent=67 // pred_check
          %p1248 = pneg %p283
        $region70: #{forward_pallas.7} parent=67 // pred_check_branch
          %1250 = sbr.rel (%p1248) target = $region72
        $region71: #{forward_pallas.7} parent=67 // pred_region
          %s1251 = sand.u32 %s268, 1
          %s1252 = scalar_lea.sflag [#allocation3], %s1251
          %s1253 = sand.u32 %s268, 1
          %s1254 = smul.addr %s1253, 8
          %s1255 = scalar_lea.vmem [#allocation2], %s1254
          %1257 = dma.done %s1252, 128
        $region72: #{forward_pallas.7} parent=67 // pred_fallthru
          _
      $region68: #{forward_pallas.7} parent=5 // pred_fallthru
        _
    $region6: #{forward_pallas.7} parent=1 // loop_footer
      %s23 = sadd.s32 1, %s19
    $region7: #{forward_pallas.7} parent=1 // loop_footer_branch
      %18 = sbr.rel target = $region3
    $region8: #{forward_pallas.7} parent=1 // loop_exit
      _
    %1258 = vsyncpa [#allocation3], 1
    %s1259 = scalar_lea.sflag [#allocation3], 1
    %1260 = vsyncpa %s1259, 1

// kernel: forward_pallas.6
$region0: #{forward_pallas.6}
  #allocation0 [shape = 'u32[]', space=smem, size = 0x4, offset = 0x4, fixed_abs, tag = 'smem constant byte address 0x4 - core index']
  #allocation1 [shape = 'u32[72,128]{1,0:T(1,128)}', space=vmem, size = 0x9000, scoped, tag = 'internal scratch']
  %s0 = inlined_call_operand.vmem [shape: f32[2,8,64], index: 0, kind: input, shape index: {}]
  %s1 = inlined_call_operand.vmem [shape: f32[2,8,64], index: 1, kind: input, shape index: {}]
  %s2 = inlined_call_operand.vmem [shape: f32[2,8,64], index: 2, kind: input, shape index: {}]
  %s3 = inlined_call_operand.vmem [shape: f32[2,8,64], index: 3, kind: input, shape index: {}]
  %s4 = inlined_call_operand.vmem [shape: f32[2,8,64], index: 4, kind: input, shape index: {}]
  %s5 = inlined_call_operand.vmem [shape: f32[2,8,64], index: 5, kind: input, shape index: {}]
  %s6 = inlined_call_operand.vmem [shape: f32[64,64], index: 6, kind: input, shape index: {}]
  %s7 = inlined_call_operand.vmem [shape: f32[2,8,64], index: 7, kind: output, shape index: {}]
  %s8 = sld [smem:[#allocation0]]
  $region61: #{forward_pallas.6} parent=0
    _
  %s10 = ssub.s32 1, %s8
  %s11 = scalar_select 0, %s10, %s8
  loop: start=0, step=1, limit=4
  $region2: #{forward_pallas.6} parent=0 // loop_pre_header
    _
  $region3: #{forward_pallas.6} parent=0 // loop_header
    %s13 = sphi 0, %s17
    %p14 = scmp.ge.s32.totalorder %s13, 4
    %s23 = sphi 0, %s25
    %s26 = sphi 0, %s23
    %s27 = sphi 0, %s26
    %s43 = sphi 0, %s27
    %s49 = sphi 0, %s51
    %s52 = sphi 0, %s49
    %s53 = sphi 0, %s52
    %s69 = sphi 0, %s53
    %s75 = sphi 0, %s77
    %s78 = sphi 0, %s75
    %s79 = sphi 0, %s78
    %s95 = sphi 0, %s79
    %s101 = sphi 0, %s103
    %s104 = sphi 0, %s101
    %s105 = sphi 0, %s104
    %s121 = sphi 0, %s105
    %s127 = sphi 0, %s129
    %s130 = sphi 0, %s127
    %s131 = sphi 0, %s130
    %s147 = sphi 0, %s131
    %s153 = sphi 0, %s155
    %s156 = sphi 0, %s153
    %s157 = sphi 0, %s156
    %s173 = sphi 0, %s157
    %s177 = sphi 0, %s177
    %s179 = sphi 0, %s177
    %s180 = sphi 0, %s179
    %s194 = sphi 0, %s180
    %s200 = sphi 0, %s202
    %s203 = sphi 0, %s200
    %s204 = sphi 0, %s203
    %s220 = sphi 0, %s204
  $region4: #{forward_pallas.6} parent=0 // loop_header_branch
    %16 = sbr.rel (%p14) target = $region8
  $region5: #{forward_pallas.6} parent=0 // loop_body
    %s18 = ssub.s32 %s13, 1
    %s19 = ssub.s32 %s13, 2
    %s20 = sadd.s32 %s13, 1
    %s21 = ssub.s32 %s13, %s20
    %p22 = scmp.eq.s32.totalorder %s21, 0
    %s24 = sadd.s32 %s23, 1
    %s25 = scalar_select %p22, %s23, %s24
    %p28 = pneg %p22
    %p29 = scmp.eq.s32.totalorder %s13, 1
    %p30 = por %p28, %p29
    %p31 = scmp.ne.s32.totalorder %s23, %s26
    %p32 = scmp.eq.s32.totalorder %s13, 0
    %p33 = por %p31, %p32
    %p34 = scmp.ne.s32.totalorder %s23, %s26
    %p35 = scmp.eq.s32.totalorder %s18, 1
    %p36 = por %p34, %p35
    %p37 = scmp.ne.s32.totalorder %s26, %s27
    %p38 = scmp.eq.s32.totalorder %s18, 0
    %p39 = por %p37, %p38
    %p40 = scmp.ne.s32.totalorder %s26, %s27
    %p41 = scmp.eq.s32.totalorder %s19, 1
    %p42 = por %p40, %p41
    %p44 = scmp.ne.s32.totalorder %s27, %s43
    %p45 = scmp.eq.s32.totalorder %s19, 0
    %p46 = por %p44, %p45
    %s47 = ssub.s32 %s13, %s20
    %p48 = scmp.eq.s32.totalorder %s47, 0
    %s50 = sadd.s32 %s49, 1
    %s51 = scalar_select %p48, %s49, %s50
    %p54 = pneg %p48
    %p55 = scmp.eq.s32.totalorder %s13, 1
    %p56 = por %p54, %p55
    %p57 = scmp.ne.s32.totalorder %s49, %s52
    %p58 = scmp.eq.s32.totalorder %s13, 0
    %p59 = por %p57, %p58
    %p60 = scmp.ne.s32.totalorder %s49, %s52
    %p61 = scmp.eq.s32.totalorder %s18, 1
    %p62 = por %p60, %p61
    %p63 = scmp.ne.s32.totalorder %s52, %s53
    %p64 = scmp.eq.s32.totalorder %s18, 0
    %p65 = por %p63, %p64
    %p66 = scmp.ne.s32.totalorder %s52, %s53
    %p67 = scmp.eq.s32.totalorder %s19, 1
    %p68 = por %p66, %p67
    %p70 = scmp.ne.s32.totalorder %s53, %s69
    %p71 = scmp.eq.s32.totalorder %s19, 0
    %p72 = por %p70, %p71
    %s73 = ssub.s32 %s13, %s20
    %p74 = scmp.eq.s32.totalorder %s73, 0
    %s76 = sadd.s32 %s75, 1
    %s77 = scalar_select %p74, %s75, %s76
    %p80 = pneg %p74
    %p81 = scmp.eq.s32.totalorder %s13, 1
    %p82 = por %p80, %p81
    %p83 = scmp.ne.s32.totalorder %s75, %s78
    %p84 = scmp.eq.s32.totalorder %s13, 0
    %p85 = por %p83, %p84
    %p86 = scmp.ne.s32.totalorder %s75, %s78
    %p87 = scmp.eq.s32.totalorder %s18, 1
    %p88 = por %p86, %p87
    %p89 = scmp.ne.s32.totalorder %s78, %s79
    %p90 = scmp.eq.s32.totalorder %s18, 0
    %p91 = por %p89, %p90
    %p92 = scmp.ne.s32.totalorder %s78, %s79
    %p93 = scmp.eq.s32.totalorder %s19, 1
    %p94 = por %p92, %p93
    %p96 = scmp.ne.s32.totalorder %s79, %s95
    %p97 = scmp.eq.s32.totalorder %s19, 0
    %p98 = por %p96, %p97
    %s99 = ssub.s32 %s13, %s20
    %p100 = scmp.eq.s32.totalorder %s99, 0
    %s102 = sadd.s32 %s101, 1
    %s103 = scalar_select %p100, %s101, %s102
    %p106 = pneg %p100
    %p107 = scmp.eq.s32.totalorder %s13, 1
    %p108 = por %p106, %p107
    %p109 = scmp.ne.s32.totalorder %s101, %s104
    %p110 = scmp.eq.s32.totalorder %s13, 0
    %p111 = por %p109, %p110
    %p112 = scmp.ne.s32.totalorder %s101, %s104
    %p113 = scmp.eq.s32.totalorder %s18, 1
    %p114 = por %p112, %p113
    %p115 = scmp.ne.s32.totalorder %s104, %s105
    %p116 = scmp.eq.s32.totalorder %s18, 0
    %p117 = por %p115, %p116
    %p118 = scmp.ne.s32.totalorder %s104, %s105
    %p119 = scmp.eq.s32.totalorder %s19, 1
    %p120 = por %p118, %p119
    %p122 = scmp.ne.s32.totalorder %s105, %s121
    %p123 = scmp.eq.s32.totalorder %s19, 0
    %p124 = por %p122, %p123
    %s125 = ssub.s32 %s13, %s20
    %p126 = scmp.eq.s32.totalorder %s125, 0
    %s128 = sadd.s32 %s127, 1
    %s129 = scalar_select %p126, %s127, %s128
    %p132 = pneg %p126
    %p133 = scmp.eq.s32.totalorder %s13, 1
    %p134 = por %p132, %p133
    %p135 = scmp.ne.s32.totalorder %s127, %s130
    %p136 = scmp.eq.s32.totalorder %s13, 0
    %p137 = por %p135, %p136
    %p138 = scmp.ne.s32.totalorder %s127, %s130
    %p139 = scmp.eq.s32.totalorder %s18, 1
    %p140 = por %p138, %p139
    %p141 = scmp.ne.s32.totalorder %s130, %s131
    %p142 = scmp.eq.s32.totalorder %s18, 0
    %p143 = por %p141, %p142
    %p144 = scmp.ne.s32.totalorder %s130, %s131
    %p145 = scmp.eq.s32.totalorder %s19, 1
    %p146 = por %p144, %p145
    %p148 = scmp.ne.s32.totalorder %s131, %s147
    %p149 = scmp.eq.s32.totalorder %s19, 0
    %p150 = por %p148, %p149
    %s151 = ssub.s32 %s13, %s20
    %p152 = scmp.eq.s32.totalorder %s151, 0
    %s154 = sadd.s32 %s153, 1
    %s155 = scalar_select %p152, %s153, %s154
    %p158 = pneg %p152
    %p159 = scmp.eq.s32.totalorder %s13, 1
    %p160 = por %p158, %p159
    %p161 = scmp.ne.s32.totalorder %s153, %s156
    %p162 = scmp.eq.s32.totalorder %s13, 0
    %p163 = por %p161, %p162
    %p164 = scmp.ne.s32.totalorder %s153, %s156
    %p165 = scmp.eq.s32.totalorder %s18, 1
    %p166 = por %p164, %p165
    %p167 = scmp.ne.s32.totalorder %s156, %s157
    %p168 = scmp.eq.s32.totalorder %s18, 0
    %p169 = por %p167, %p168
    %p170 = scmp.ne.s32.totalorder %s156, %s157
    %p171 = scmp.eq.s32.totalorder %s19, 1
    %p172 = por %p170, %p171
    %p174 = scmp.ne.s32.totalorder %s157, %s173
    %p175 = scmp.eq.s32.totalorder %s19, 0
    %p176 = por %p174, %p175
    %s178 = sadd.s32 %s177, 1
    %p181 = scmp.eq.s32.totalorder %s13, 1
    %p182 = scmp.ne.s32.totalorder %s177, %s179
    %p183 = scmp.eq.s32.totalorder %s13, 0
    %p184 = por %p182, %p183
    %p185 = scmp.ne.s32.totalorder %s177, %s179
    %p186 = scmp.eq.s32.totalorder %s18, 1
    %p187 = por %p185, %p186
    %p188 = scmp.ne.s32.totalorder %s179, %s180
    %p189 = scmp.eq.s32.totalorder %s18, 0
    %p190 = por %p188, %p189
    %p191 = scmp.ne.s32.totalorder %s179, %s180
    %p192 = scmp.eq.s32.totalorder %s19, 1
    %p193 = por %p191, %p192
    %p195 = scmp.ne.s32.totalorder %s180, %s194
    %p196 = scmp.eq.s32.totalorder %s19, 0
    %p197 = por %p195, %p196
    %s198 = ssub.s32 %s13, %s20
    %p199 = scmp.eq.s32.totalorder %s198, 0
    %s201 = sadd.s32 %s200, 1
    %s202 = scalar_select %p199, %s200, %s201
    %p205 = pneg %p199
    %p206 = scmp.eq.s32.totalorder %s13, 1
    %p207 = por %p205, %p206
    %p208 = scmp.ne.s32.totalorder %s200, %s203
    %p209 = scmp.eq.s32.totalorder %s13, 0
    %p210 = por %p208, %p209
    %p211 = scmp.ne.s32.totalorder %s200, %s203
    %p212 = scmp.eq.s32.totalorder %s18, 1
    %p213 = por %p211, %p212
    %p214 = scmp.ne.s32.totalorder %s203, %s204
    %p215 = scmp.eq.s32.totalorder %s18, 0
    %p216 = por %p214, %p215
    %p217 = scmp.ne.s32.totalorder %s203, %s204
    %p218 = scmp.eq.s32.totalorder %s19, 1
    %p219 = por %p217, %p218
    %p221 = scmp.ne.s32.totalorder %s204, %s220
    %p222 = scmp.eq.s32.totalorder %s19, 0
    %p223 = por %p221, %p222
    %p224 = scmp.le.s32.totalorder 1, %s13
    %p225 = scmp.lt.s32.totalorder %s13, 3
    %p226 = pnand %p224, %p225
    %p227 = pneg %p226
    // Predicated region
    $region9: #{forward_pallas.6} parent=5 // pred_check
      _
    $region10: #{forward_pallas.6} parent=5 // pred_check_branch
      %229 = sbr.rel (%p226) target = $region12
    $region11: #{forward_pallas.6} parent=5 // pred_region
      %s230 = ssub.s32 %s13, 1
      // Predicated region
      $region13: #{forward_pallas.6} parent=11 // pred_check
        %p231 = pneg %p190
      $region14: #{forward_pallas.6} parent=11 // pred_check_branch
        %233 = sbr.rel (%p231) target = $region16
      $region15: #{forward_pallas.6} parent=11 // pred_region
        _
      $region16: #{forward_pallas.6} parent=11 // pred_fallthru
        _
    $region12: #{forward_pallas.6} parent=5 // pred_fallthru
      _
    %p234 = scmp.lt.s32.totalorder %s13, 2
    // Predicated region
    $region17: #{forward_pallas.6} parent=5 // pred_check
      %p235 = pneg %p234
    $region18: #{forward_pallas.6} parent=5 // pred_check_branch
      %237 = sbr.rel (%p235) target = $region20
    $region19: #{forward_pallas.6} parent=5 // pred_region
      // Predicated region
      $region21: #{forward_pallas.6} parent=19 // pred_check
        %p238 = pneg %p33
      $region22: #{forward_pallas.6} parent=19 // pred_check_branch
        %240 = sbr.rel (%p238) target = $region24
      $region23: #{forward_pallas.6} parent=19 // pred_region
        %p241 = scmp.lt.s32.totalorder %s13, 1
        %s242 = scalar_select %p241, %s13, 1
        %s243 = smul.addr %s242, 8
        %s244 = scalar_lea.vmem %s0, %s243
      $region24: #{forward_pallas.6} parent=19 // pred_fallthru
        _
      // Predicated region
      $region25: #{forward_pallas.6} parent=19 // pred_check
        %p245 = pneg %p59
      $region26: #{forward_pallas.6} parent=19 // pred_check_branch
        %247 = sbr.rel (%p245) target = $region28
      $region27: #{forward_pallas.6} parent=19 // pred_region
        %p248 = scmp.lt.s32.totalorder %s13, 1
        %s249 = scalar_select %p248, %s13, 1
        %s250 = smul.addr %s249, 8
        %s251 = scalar_lea.vmem %s1, %s250
      $region28: #{forward_pallas.6} parent=19 // pred_fallthru
        _
      // Predicated region
      $region29: #{forward_pallas.6} parent=19 // pred_check
        %p252 = pneg %p85
      $region30: #{forward_pallas.6} parent=19 // pred_check_branch
        %254 = sbr.rel (%p252) target = $region32
      $region31: #{forward_pallas.6} parent=19 // pred_region
        %p255 = scmp.lt.s32.totalorder %s13, 1
        %s256 = scalar_select %p255, %s13, 1
        %s257 = smul.addr %s256, 8
        %s258 = scalar_lea.vmem %s2, %s257
      $region32: #{forward_pallas.6} parent=19 // pred_fallthru
        _
      // Predicated region
      $region33: #{forward_pallas.6} parent=19 // pred_check
        %p259 = pneg %p111
      $region34: #{forward_pallas.6} parent=19 // pred_check_branch
        %261 = sbr.rel (%p259) target = $region36
      $region35: #{forward_pallas.6} parent=19 // pred_region
        %p262 = scmp.lt.s32.totalorder %s13, 1
        %s263 = scalar_select %p262, %s13, 1
        %s264 = smul.addr %s263, 8
        %s265 = scalar_lea.vmem %s3, %s264
      $region36: #{forward_pallas.6} parent=19 // pred_fallthru
        _
      // Predicated region
      $region37: #{forward_pallas.6} parent=19 // pred_check
        %p266 = pneg %p137
      $region38: #{forward_pallas.6} parent=19 // pred_check_branch
        %268 = sbr.rel (%p266) target = $region40
      $region39: #{forward_pallas.6} parent=19 // pred_region
        %p269 = scmp.lt.s32.totalorder %s13, 1
        %s270 = scalar_select %p269, %s13, 1
        %s271 = smul.addr %s270, 8
        %s272 = scalar_lea.vmem %s4, %s271
      $region40: #{forward_pallas.6} parent=19 // pred_fallthru
        _
      // Predicated region
      $region41: #{forward_pallas.6} parent=19 // pred_check
        %p273 = pneg %p163
      $region42: #{forward_pallas.6} parent=19 // pred_check_branch
        %275 = sbr.rel (%p273) target = $region44
      $region43: #{forward_pallas.6} parent=19 // pred_region
        %p276 = scmp.lt.s32.totalorder %s13, 1
        %s277 = scalar_select %p276, %s13, 1
        %s278 = smul.addr %s277, 8
        %s279 = scalar_lea.vmem %s5, %s278
      $region44: #{forward_pallas.6} parent=19 // pred_fallthru
        _
    $region20: #{forward_pallas.6} parent=5 // pred_fallthru
      _
    %p280 = scmp.le.s32.totalorder 1, %s13
    %p281 = scmp.lt.s32.totalorder %s13, 3
    %p282 = pnand %p280, %p281
    %p283 = pneg %p282
    // Predicated region
    $region45: #{forward_pallas.6} parent=5 // pred_check
      _
    $region46: #{forward_pallas.6} parent=5 // pred_check_branch
      %285 = sbr.rel (%p282) target = $region48
    $region47: #{forward_pallas.6} parent=5 // pred_region
      %s286 = ssub.s32 %s13, 1
      %p287 = scmp.lt.s32.totalorder %s18, 1
      %s288 = scalar_select %p287, %s18, 1
      %s289 = smul.addr %s288, 8
      %s290 = scalar_lea.vmem %s0, %s289
      %p291 = pneg %p39
      %p292 = pneg %p36
      %p293 = scmp.lt.s32.totalorder %s18, 1
      %s294 = scalar_select %p293, %s18, 1
      %s295 = smul.addr %s294, 8
      %s296 = scalar_lea.vmem %s1, %s295
      %p297 = pneg %p65
      %p298 = pneg %p62
      %p299 = scmp.lt.s32.totalorder %s18, 1
      %s300 = scalar_select %p299, %s18, 1
      %s301 = smul.addr %s300, 8
      %s302 = scalar_lea.vmem %s2, %s301
      %p303 = pneg %p91
      %p304 = pneg %p88
      %p305 = scmp.lt.s32.totalorder %s18, 1
      %s306 = scalar_select %p305, %s18, 1
      %s307 = smul.addr %s306, 8
      %s308 = scalar_lea.vmem %s3, %s307
      %p309 = pneg %p117
      %p310 = pneg %p114
      %p311 = scmp.lt.s32.totalorder %s18, 1
      %s312 = scalar_select %p311, %s18, 1
      %s313 = smul.addr %s312, 8
      %s314 = scalar_lea.vmem %s4, %s313
      %p315 = pneg %p143
      %p316 = pneg %p140
      %p317 = scmp.lt.s32.totalorder %s18, 1
      %s318 = scalar_select %p317, %s18, 1
      %s319 = smul.addr %s318, 8
      %s320 = scalar_lea.vmem %s5, %s319
      %p321 = pneg %p169
      %p322 = pneg %p166
      %p323 = pneg %p190
      %p324 = pneg %p187
      %p325 = pneg %p216
      %p326 = pneg %p213
      %p327 = scmp.lt.s32.totalorder %s18, 1
      %s328 = scalar_select %p327, %s18, 1
      %s329 = smul.addr %s328, 8
      %s330 = scalar_lea.vmem %s7, %s329
      %p331 = scmp.lt.s32.totalorder %s18, 1
      %s332 = scalar_select %p331, %s18, 1
      %s333 = smul.addr %s332, 8
      %s334 = scalar_lea.vmem %s0, %s333
      %p335 = scmp.lt.s32.totalorder %s18, 1
      %s336 = scalar_select %p335, %s18, 1
      %s337 = smul.addr %s336, 8
      %s338 = scalar_lea.vmem %s1, %s337
      %p339 = scmp.lt.s32.totalorder %s18, 1
      %s340 = scalar_select %p339, %s18, 1
      %s341 = smul.addr %s340, 8
      %s342 = scalar_lea.vmem %s2, %s341
      %p343 = scmp.lt.s32.totalorder %s18, 1
      %s344 = scalar_select %p343, %s18, 1
      %s345 = smul.addr %s344, 8
      %s346 = scalar_lea.vmem %s3, %s345
      %p347 = scmp.lt.s32.totalorder %s18, 1
      %s348 = scalar_select %p347, %s18, 1
      %s349 = smul.addr %s348, 8
      %s350 = scalar_lea.vmem %s4, %s349
      %p351 = scmp.lt.s32.totalorder %s18, 1
      %s352 = scalar_select %p351, %s18, 1
      %s353 = smul.addr %s352, 8
      %s354 = scalar_lea.vmem %s5, %s353
      %p355 = scmp.lt.s32.totalorder %s18, 1
      %s356 = scalar_select %p355, %s18, 1
      %s357 = smul.addr %s356, 8
      %s358 = scalar_lea.vmem %s7, %s357
      %v359 = vlaneseq
      %v360 = vshrl.u32 %v359, 7
      %v361 = vadd.s32 %v360, 8
      %v362 = vadd.s32 %v360, 16
      %v363 = vadd.s32 %v360, 24
      %v364 = vadd.s32 %v360, 32
      %v365 = vadd.s32 %v360, 40
      %v366 = vadd.s32 %v360, 48
      %v367 = vadd.s32 %v360, 56
      %v368 = vlaneseq
      %v369 = vand.u32 %v368, 127
      %vm370 = vcmp.eq.s32.totalorder %v360, %v369
      %vm371 = vcmp.eq.s32.totalorder %v361, %v369
      %vm372 = vcmp.eq.s32.totalorder %v362, %v369
      %vm373 = vcmp.eq.s32.totalorder %v363, %v369
      %vm374 = vcmp.eq.s32.totalorder %v364, %v369
      %vm375 = vcmp.eq.s32.totalorder %v365, %v369
      %vm376 = vcmp.eq.s32.totalorder %v366, %v369
      %vm377 = vcmp.eq.s32.totalorder %v367, %v369
      %v378 = vsel %vm370, 1, 0
      %v379 = vsel %vm371, 1, 0
      %v380 = vsel %vm372, 1, 0
      %v381 = vsel %vm373, 1, 0
      %v382 = vsel %vm374, 1, 0
      %v383 = vsel %vm375, 1, 0
      %v384 = vsel %vm376, 1, 0
      %v385 = vsel %vm377, 1, 0
      %v386 = vcvt.s32.f32 %v378
      %v387 = vcvt.s32.f32 %v379
      %v388 = vcvt.s32.f32 %v380
      %v389 = vcvt.s32.f32 %v381
      %v390 = vcvt.s32.f32 %v382
      %v391 = vcvt.s32.f32 %v383
      %v392 = vcvt.s32.f32 %v384
      %v393 = vcvt.s32.f32 %v385
      %v394 = vld [vmem:[%s6] sm:$0xff]
      %v395 = vld [vmem:[%s6 + $0x8] sm:$0xff]
      %v396 = vld [vmem:[%s6 + $0x10] sm:$0xff]
      %v397 = vld [vmem:[%s6 + $0x18] sm:$0xff]
      %v398 = vld [vmem:[%s6 + $0x20] sm:$0xff]
      %v399 = vld [vmem:[%s6 + $0x28] sm:$0xff]
      %v400 = vld [vmem:[%s6 + $0x30] sm:$0xff]
      %v401 = vld [vmem:[%s6 + $0x38] sm:$0xff]
      %v402 = vld [vmem:[%s338] sm:$0xff]
      %v403 = vmul.f32 %v402, 1.442695
      %v404 = vpow.pop %v403
      %v405 = vsub.f32 0.0, %v404
      %v406 = vmul.f32 %v405, 1.442695
      %v407 = vpow.pop %v406
      %v408 = vld [vmem:[%s334] sm:$0xff]
      %v409 = vld [vmem:[%s342] sm:$0xff]
      %v410 = vld [vmem:[%s346] sm:$0xff]
      %v411 = vld [vmem:[%s350] sm:$0xff]
      %v412 = vld [vmem:[%s354] sm:$0xff]
      %v413 = vperm.slane %v407, 0
      %v414 = vmul.f32 %v386, %v413
      %v415 = vmul.f32 %v387, %v413
      %v416 = vmul.f32 %v388, %v413
      %v417 = vmul.f32 %v389, %v413
      %v418 = vmul.f32 %v390, %v413
      %v419 = vmul.f32 %v391, %v413
      %v420 = vmul.f32 %v392, %v413
      %v421 = vmul.f32 %v393, %v413
      %vm422 = vcmask 523264
      %v423 = vsel %vm422, %v414, 0.0
      %424 = vadd.xlane.f32.xlu0 %v423
      %v425 = vpop.xlane.xlu0 %424
      %v426 = vsel %vm422, %v415, 0.0
      %427 = vadd.xlane.f32.xlu0 %v426
      %v428 = vpop.xlane.xlu0 %427
      %v429 = vsel %vm422, %v416, 0.0
      %430 = vadd.xlane.f32.xlu0 %v429
      %v431 = vpop.xlane.xlu0 %430
      %v432 = vsel %vm422, %v417, 0.0
      %433 = vadd.xlane.f32.xlu0 %v432
      %v434 = vpop.xlane.xlu0 %433
      %v435 = vsel %vm422, %v418, 0.0
      %436 = vadd.xlane.f32.xlu0 %v435
      %v437 = vpop.xlane.xlu0 %436
      %v438 = vsel %vm422, %v419, 0.0
      %439 = vadd.xlane.f32.xlu0 %v438
      %v440 = vpop.xlane.xlu0 %439
      %v441 = vsel %vm422, %v420, 0.0
      %442 = vadd.xlane.f32.xlu0 %v441
      %v443 = vpop.xlane.xlu0 %442
      %v444 = vsel %vm422, %v421, 0.0
      %445 = vadd.xlane.f32.xlu0 %v444
      %v446 = vpop.xlane.xlu0 %445
      %v447 = vperm.slane %v409, 0
      %v448 = vmul.f32 %v386, %v447
      %v449 = vmul.f32 %v387, %v447
      %v450 = vmul.f32 %v388, %v447
      %v451 = vmul.f32 %v389, %v447
      %v452 = vmul.f32 %v390, %v447
      %v453 = vmul.f32 %v391, %v447
      %v454 = vmul.f32 %v392, %v447
      %v455 = vmul.f32 %v393, %v447
      %v456 = vsel %vm422, %v448, 0.0
      %457 = vadd.xlane.f32.xlu0 %v456
      %v458 = vpop.xlane.xlu0 %457
      %v459 = vsel %vm422, %v449, 0.0
      %460 = vadd.xlane.f32.xlu0 %v459
      %v461 = vpop.xlane.xlu0 %460
      %v462 = vsel %vm422, %v450, 0.0
      %463 = vadd.xlane.f32.xlu0 %v462
      %v464 = vpop.xlane.xlu0 %463
      %v465 = vsel %vm422, %v451, 0.0
      %466 = vadd.xlane.f32.xlu0 %v465
      %v467 = vpop.xlane.xlu0 %466
      %v468 = vsel %vm422, %v452, 0.0
      %469 = vadd.xlane.f32.xlu0 %v468
      %v470 = vpop.xlane.xlu0 %469
      %v471 = vsel %vm422, %v453, 0.0
      %472 = vadd.xlane.f32.xlu0 %v471
      %v473 = vpop.xlane.xlu0 %472
      %v474 = vsel %vm422, %v454, 0.0
      %475 = vadd.xlane.f32.xlu0 %v474
      %v476 = vpop.xlane.xlu0 %475
      %v477 = vsel %vm422, %v455, 0.0
      %478 = vadd.xlane.f32.xlu0 %v477
      %v479 = vpop.xlane.xlu0 %478
      %v480 = vperm.slane %v412, 0
      %v481 = vmul.f32 %v386, %v480
      %v482 = vmul.f32 %v387, %v480
      %v483 = vmul.f32 %v388, %v480
      %v484 = vmul.f32 %v389, %v480
      %v485 = vmul.f32 %v390, %v480
      %v486 = vmul.f32 %v391, %v480
      %v487 = vmul.f32 %v392, %v480
      %v488 = vmul.f32 %v393, %v480
      %v489 = vsel %vm422, %v481, 0.0
      %490 = vadd.xlane.f32.xlu0 %v489
      %v491 = vpop.xlane.xlu0 %490
      %v492 = vsel %vm422, %v482, 0.0
      %493 = vadd.xlane.f32.xlu0 %v492
      %v494 = vpop.xlane.xlu0 %493
      %v495 = vsel %vm422, %v483, 0.0
      %496 = vadd.xlane.f32.xlu0 %v495
      %v497 = vpop.xlane.xlu0 %496
      %v498 = vsel %vm422, %v484, 0.0
      %499 = vadd.xlane.f32.xlu0 %v498
      %v500 = vpop.xlane.xlu0 %499
      %v501 = vsel %vm422, %v485, 0.0
      %502 = vadd.xlane.f32.xlu0 %v501
      %v503 = vpop.xlane.xlu0 %502
      %v504 = vsel %vm422, %v486, 0.0
      %505 = vadd.xlane.f32.xlu0 %v504
      %v506 = vpop.xlane.xlu0 %505
      %v507 = vsel %vm422, %v487, 0.0
      %508 = vadd.xlane.f32.xlu0 %v507
      %v509 = vpop.xlane.xlu0 %508
      %v510 = vsel %vm422, %v488, 0.0
      %511 = vadd.xlane.f32.xlu0 %v510
      %v512 = vpop.xlane.xlu0 %511
      %v514 = vsel %vm422, %v411, 0
      %516 = vmatpush.msra.mxu0 0.0
      %517 = vmatpush.msra.mxu0 0.0
      %518 = vmatpush.msra.mxu0 0.0
      %519 = vmatpush.msra.mxu0 0.0
      %520 = vmatpush.msra.mxu0 0.0
      %521 = vmatpush.msra.mxu0 0.0
      %522 = vmatpush.msra.mxu0 0.0
      %523 = vmatpush.msra.mxu0 0.0
      %524 = vmatpush.msra.mxu0 0.0
      %525 = vmatpush.msra.mxu0 0.0
      %526 = vmatpush.msra.mxu0 0.0
      %527 = vmatpush.msra.mxu0 0.0
      %528 = vmatpush.msra.mxu0 0.0
      %529 = vmatpush.msra.mxu0 0.0
      %530 = vmatpush.msra.mxu0 0.0
      %531 = vmatpush.msra.mxu0 0.0
      %v532 = vand.u32 %v514, 4294901760
      %v533 = vsub.f32 %v514, %v532
      %v534 = vand.u32 %v533, 4294901760
      %v535 = vsub.f32 %v533, %v534
      %v536 = vand.u32 %v535, 4294901760
      %537 = vmatmul.f32.gmra.mxu0 %v536
      %v538 = vpop.f32.mrf.mxu0
      %v539 = vadd.f32 0.0, %v538
      %540 = vdwg.mxu0
      %541 = vmatpush.msra.mxu0 0.0
      %542 = vmatpush.msra.mxu0 0.0
      %543 = vmatpush.msra.mxu0 0.0
      %544 = vmatpush.msra.mxu0 0.0
      %545 = vmatpush.msra.mxu0 0.0
      %546 = vmatpush.msra.mxu0 0.0
      %547 = vmatpush.msra.mxu0 0.0
      %548 = vmatpush.msra.mxu0 0.0
      %549 = vmatpush.msra.mxu0 0.0
      %550 = vmatpush.msra.mxu0 0.0
      %551 = vmatpush.msra.mxu0 0.0
      %552 = vmatpush.msra.mxu0 0.0
      %553 = vmatpush.msra.mxu0 0.0
      %554 = vmatpush.msra.mxu0 0.0
      %555 = vmatpush.msra.mxu0 0.0
      %556 = vmatpush.msra.mxu0 0.0
      %v557 = vand.u32 %v514, 4294901760
      %558 = vmatmul.f32.gmra.mxu0 %v557
      %v559 = vpop.f32.mrf.mxu0
      %v560 = vadd.f32 %v539, %v559
      %561 = vdwg.mxu0
      %562 = vmatpush.msra.mxu0 0.0
      %563 = vmatpush.msra.mxu0 0.0
      %564 = vmatpush.msra.mxu0 0.0
      %565 = vmatpush.msra.mxu0 0.0
      %566 = vmatpush.msra.mxu0 0.0
      %567 = vmatpush.msra.mxu0 0.0
      %568 = vmatpush.msra.mxu0 0.0
      %569 = vmatpush.msra.mxu0 0.0
      %570 = vmatpush.msra.mxu0 0.0
      %571 = vmatpush.msra.mxu0 0.0
      %572 = vmatpush.msra.mxu0 0.0
      %573 = vmatpush.msra.mxu0 0.0
      %574 = vmatpush.msra.mxu0 0.0
      %575 = vmatpush.msra.mxu0 0.0
      %576 = vmatpush.msra.mxu0 0.0
      %577 = vmatpush.msra.mxu0 0.0
      %v578 = vand.u32 %v514, 4294901760
      %v579 = vsub.f32 %v514, %v578
      %580 = vmatmul.f32.gmra.mxu0 %v579
      %v581 = vpop.f32.mrf.mxu0
      %v582 = vadd.f32 %v560, %v581
      %583 = vdwg.mxu0
      %584 = vmatpush.msra.mxu0 0.0
      %585 = vmatpush.msra.mxu0 0.0
      %586 = vmatpush.msra.mxu0 0.0
      %587 = vmatpush.msra.mxu0 0.0
      %588 = vmatpush.msra.mxu0 0.0
      %589 = vmatpush.msra.mxu0 0.0
      %590 = vmatpush.msra.mxu0 0.0
      %591 = vmatpush.msra.mxu0 0.0
      %592 = vmatpush.msra.mxu0 0.0
      %593 = vmatpush.msra.mxu0 0.0
      %594 = vmatpush.msra.mxu0 0.0
      %595 = vmatpush.msra.mxu0 0.0
      %596 = vmatpush.msra.mxu0 0.0
      %597 = vmatpush.msra.mxu0 0.0
      %598 = vmatpush.msra.mxu0 0.0
      %599 = vmatpush.msra.mxu0 0.0
      %v600 = vand.u32 %v514, 4294901760
      %v601 = vsub.f32 %v514, %v600
      %v602 = vand.u32 %v601, 4294901760
      %603 = vmatmul.f32.gmra.mxu0 %v602
      %v604 = vpop.f32.mrf.mxu0
      %v605 = vadd.f32 %v582, %v604
      %606 = vdwg.mxu0
      %607 = vmatpush.msra.mxu0 0.0
      %608 = vmatpush.msra.mxu0 0.0
      %609 = vmatpush.msra.mxu0 0.0
      %610 = vmatpush.msra.mxu0 0.0
      %611 = vmatpush.msra.mxu0 0.0
      %612 = vmatpush.msra.mxu0 0.0
      %613 = vmatpush.msra.mxu0 0.0
      %614 = vmatpush.msra.mxu0 0.0
      %615 = vmatpush.msra.mxu0 0.0
      %616 = vmatpush.msra.mxu0 0.0
      %617 = vmatpush.msra.mxu0 0.0
      %618 = vmatpush.msra.mxu0 0.0
      %619 = vmatpush.msra.mxu0 0.0
      %620 = vmatpush.msra.mxu0 0.0
      %621 = vmatpush.msra.mxu0 0.0
      %622 = vmatpush.msra.mxu0 0.0
      %v623 = vand.u32 %v514, 4294901760
      %624 = vmatmul.f32.gmra.mxu0 %v623
      %v625 = vpop.f32.mrf.mxu0
      %v626 = vadd.f32 %v605, %v625
      %627 = vdwg.mxu0
      %628 = vmatpush.msra.mxu0 0.0
      %629 = vmatpush.msra.mxu0 0.0
      %630 = vmatpush.msra.mxu0 0.0
      %631 = vmatpush.msra.mxu0 0.0
      %632 = vmatpush.msra.mxu0 0.0
      %633 = vmatpush.msra.mxu0 0.0
      %634 = vmatpush.msra.mxu0 0.0
      %635 = vmatpush.msra.mxu0 0.0
      %636 = vmatpush.msra.mxu0 0.0
      %637 = vmatpush.msra.mxu0 0.0
      %638 = vmatpush.msra.mxu0 0.0
      %639 = vmatpush.msra.mxu0 0.0
      %640 = vmatpush.msra.mxu0 0.0
      %641 = vmatpush.msra.mxu0 0.0
      %642 = vmatpush.msra.mxu0 0.0
      %643 = vmatpush.msra.mxu0 0.0
      %v644 = vand.u32 %v514, 4294901760
      %645 = vmatmul.f32.gmra.mxu0 %v644
      %v646 = vpop.f32.mrf.mxu0
      %v647 = vadd.f32 %v626, %v646
      %648 = vdwg.mxu0
      %v649 = vmul.f32 %v425, 0.0
      %v650 = vmul.f32 %v428, 0.0
      %v651 = vmul.f32 %v431, 0.0
      %v652 = vmul.f32 %v434, 0.0
      %v653 = vmul.f32 %v437, 0.0
      %v654 = vmul.f32 %v440, 0.0
      %v655 = vmul.f32 %v443, 0.0
      %v656 = vmul.f32 %v446, 0.0
      %v657 = vperm.slane %v647, 0
      %v658 = vmul.f32 %v491, %v657
      %v659 = vmul.f32 %v494, %v657
      %v660 = vmul.f32 %v497, %v657
      %v661 = vmul.f32 %v500, %v657
      %v662 = vmul.f32 %v503, %v657
      %v663 = vmul.f32 %v506, %v657
      %v664 = vmul.f32 %v509, %v657
      %v665 = vmul.f32 %v512, %v657
      %v666 = vperm.slane %v410, 0
      %v667 = vmul.f32 %v458, %v666
      %v668 = vmul.f32 %v461, %v666
      %v669 = vmul.f32 %v464, %v666
      %v670 = vmul.f32 %v467, %v666
      %v671 = vmul.f32 %v470, %v666
      %v672 = vmul.f32 %v473, %v666
      %v673 = vmul.f32 %v476, %v666
      %v674 = vmul.f32 %v479, %v666
      %v675 = vadd.f32 %v658, %v667
      %v676 = vadd.f32 %v659, %v668
      %v677 = vadd.f32 %v660, %v669
      %v678 = vadd.f32 %v661, %v670
      %v679 = vadd.f32 %v662, %v671
      %v680 = vadd.f32 %v663, %v672
      %v681 = vadd.f32 %v664, %v673
      %v682 = vadd.f32 %v665, %v674
      %v683 = vmul.f32 %v675, %v394
      %v684 = vmul.f32 %v676, %v395
      %v685 = vmul.f32 %v677, %v396
      %v686 = vmul.f32 %v678, %v397
      %v687 = vmul.f32 %v679, %v398
      %v688 = vmul.f32 %v680, %v399
      %v689 = vmul.f32 %v681, %v400
      %v690 = vmul.f32 %v682, %v401
      %v691 = vadd.f32 %v649, %v683
      %v692 = vadd.f32 %v650, %v684
      %v693 = vadd.f32 %v651, %v685
      %v694 = vadd.f32 %v652, %v686
      %v695 = vadd.f32 %v653, %v687
      %v696 = vadd.f32 %v654, %v688
      %v697 = vadd.f32 %v655, %v689
      %v698 = vadd.f32 %v656, %v690
      %v700 = vsel %vm422, %v408, 0
      %702 = vmatpush.msra.mxu0 0.0
      %703 = vmatpush.msra.mxu0 0.0
      %704 = vmatpush.msra.mxu0 0.0
      %705 = vmatpush.msra.mxu0 0.0
      %706 = vmatpush.msra.mxu0 0.0
      %707 = vmatpush.msra.mxu0 0.0
      %708 = vmatpush.msra.mxu0 0.0
      %709 = vmatpush.msra.mxu0 0.0
      %v710 = vand.u32 %v698, 4294901760
      %711 = vmatpush.msra.mxu0 %v710
      %v712 = vand.u32 %v697, 4294901760
      %713 = vmatpush.msra.mxu0 %v712
      %v714 = vand.u32 %v696, 4294901760
      %715 = vmatpush.msra.mxu0 %v714
      %v716 = vand.u32 %v695, 4294901760
      %717 = vmatpush.msra.mxu0 %v716
      %v718 = vand.u32 %v694, 4294901760
      %719 = vmatpush.msra.mxu0 %v718
      %v720 = vand.u32 %v693, 4294901760
      %721 = vmatpush.msra.mxu0 %v720
      %v722 = vand.u32 %v692, 4294901760
      %723 = vmatpush.msra.mxu0 %v722
      %v724 = vand.u32 %v691, 4294901760
      %725 = vmatpush.msra.mxu0 %v724
      %v726 = vand.u32 %v700, 4294901760
      %v727 = vsub.f32 %v700, %v726
      %v728 = vand.u32 %v727, 4294901760
      %v729 = vsub.f32 %v727, %v728
      %v730 = vand.u32 %v729, 4294901760
      %731 = vmatmul.f32.gmra.mxu0 %v730
      %v732 = vpop.f32.mrf.mxu0
      %v733 = vadd.f32 0.0, %v732
      %734 = vdwg.mxu0
      %735 = vmatpush.msra.mxu0 0.0
      %736 = vmatpush.msra.mxu0 0.0
      %737 = vmatpush.msra.mxu0 0.0
      %738 = vmatpush.msra.mxu0 0.0
      %739 = vmatpush.msra.mxu0 0.0
      %740 = vmatpush.msra.mxu0 0.0
      %741 = vmatpush.msra.mxu0 0.0
      %742 = vmatpush.msra.mxu0 0.0
      %v743 = vand.u32 %v698, 4294901760
      %v744 = vsub.f32 %v698, %v743
      %v745 = vand.u32 %v744, 4294901760
      %v746 = vsub.f32 %v744, %v745
      %v747 = vand.u32 %v746, 4294901760
      %748 = vmatpush.msra.mxu0 %v747
      %v749 = vand.u32 %v697, 4294901760
      %v750 = vsub.f32 %v697, %v749
      %v751 = vand.u32 %v750, 4294901760
      %v752 = vsub.f32 %v750, %v751
      %v753 = vand.u32 %v752, 4294901760
      %754 = vmatpush.msra.mxu0 %v753
      %v755 = vand.u32 %v696, 4294901760
      %v756 = vsub.f32 %v696, %v755
      %v757 = vand.u32 %v756, 4294901760
      %v758 = vsub.f32 %v756, %v757
      %v759 = vand.u32 %v758, 4294901760
      %760 = vmatpush.msra.mxu0 %v759
      %v761 = vand.u32 %v695, 4294901760
      %v762 = vsub.f32 %v695, %v761
      %v763 = vand.u32 %v762, 4294901760
      %v764 = vsub.f32 %v762, %v763
      %v765 = vand.u32 %v764, 4294901760
      %766 = vmatpush.msra.mxu0 %v765
      %v767 = vand.u32 %v694, 4294901760
      %v768 = vsub.f32 %v694, %v767
      %v769 = vand.u32 %v768, 4294901760
      %v770 = vsub.f32 %v768, %v769
      %v771 = vand.u32 %v770, 4294901760
      %772 = vmatpush.msra.mxu0 %v771
      %v773 = vand.u32 %v693, 4294901760
      %v774 = vsub.f32 %v693, %v773
      %v775 = vand.u32 %v774, 4294901760
      %v776 = vsub.f32 %v774, %v775
      %v777 = vand.u32 %v776, 4294901760
      %778 = vmatpush.msra.mxu0 %v777
      %v779 = vand.u32 %v692, 4294901760
      %v780 = vsub.f32 %v692, %v779
      %v781 = vand.u32 %v780, 4294901760
      %v782 = vsub.f32 %v780, %v781
      %v783 = vand.u32 %v782, 4294901760
      %784 = vmatpush.msra.mxu0 %v783
      %v785 = vand.u32 %v691, 4294901760
      %v786 = vsub.f32 %v691, %v785
      %v787 = vand.u32 %v786, 4294901760
      %v788 = vsub.f32 %v786, %v787
      %v789 = vand.u32 %v788, 4294901760
      %790 = vmatpush.msra.mxu0 %v789
      %v791 = vand.u32 %v700, 4294901760
      %792 = vmatmul.f32.gmra.mxu0 %v791
      %v793 = vpop.f32.mrf.mxu0
      %v794 = vadd.f32 %v733, %v793
      %795 = vdwg.mxu0
      %796 = vmatpush.msra.mxu0 0.0
      %797 = vmatpush.msra.mxu0 0.0
      %798 = vmatpush.msra.mxu0 0.0
      %799 = vmatpush.msra.mxu0 0.0
      %800 = vmatpush.msra.mxu0 0.0
      %801 = vmatpush.msra.mxu0 0.0
      %802 = vmatpush.msra.mxu0 0.0
      %803 = vmatpush.msra.mxu0 0.0
      %v804 = vand.u32 %v698, 4294901760
      %v805 = vsub.f32 %v698, %v804
      %806 = vmatpush.msra.mxu0 %v805
      %v807 = vand.u32 %v697, 4294901760
      %v808 = vsub.f32 %v697, %v807
      %809 = vmatpush.msra.mxu0 %v808
      %v810 = vand.u32 %v696, 4294901760
      %v811 = vsub.f32 %v696, %v810
      %812 = vmatpush.msra.mxu0 %v811
      %v813 = vand.u32 %v695, 4294901760
      %v814 = vsub.f32 %v695, %v813
      %815 = vmatpush.msra.mxu0 %v814
      %v816 = vand.u32 %v694, 4294901760
      %v817 = vsub.f32 %v694, %v816
      %818 = vmatpush.msra.mxu0 %v817
      %v819 = vand.u32 %v693, 4294901760
      %v820 = vsub.f32 %v693, %v819
      %821 = vmatpush.msra.mxu0 %v820
      %v822 = vand.u32 %v692, 4294901760
      %v823 = vsub.f32 %v692, %v822
      %824 = vmatpush.msra.mxu0 %v823
      %v825 = vand.u32 %v691, 4294901760
      %v826 = vsub.f32 %v691, %v825
      %827 = vmatpush.msra.mxu0 %v826
      %v828 = vand.u32 %v700, 4294901760
      %v829 = vsub.f32 %v700, %v828
      %830 = vmatmul.f32.gmra.mxu0 %v829
      %v831 = vpop.f32.mrf.mxu0
      %v832 = vadd.f32 %v794, %v831
      %833 = vdwg.mxu0
      %834 = vmatpush.msra.mxu0 0.0
      %835 = vmatpush.msra.mxu0 0.0
      %836 = vmatpush.msra.mxu0 0.0
      %837 = vmatpush.msra.mxu0 0.0
      %838 = vmatpush.msra.mxu0 0.0
      %839 = vmatpush.msra.mxu0 0.0
      %840 = vmatpush.msra.mxu0 0.0
      %841 = vmatpush.msra.mxu0 0.0
      %v842 = vand.u32 %v698, 4294901760
      %843 = vmatpush.msra.mxu0 %v842
      %v844 = vand.u32 %v697, 4294901760
      %845 = vmatpush.msra.mxu0 %v844
      %v846 = vand.u32 %v696, 4294901760
      %847 = vmatpush.msra.mxu0 %v846
      %v848 = vand.u32 %v695, 4294901760
      %849 = vmatpush.msra.mxu0 %v848
      %v850 = vand.u32 %v694, 4294901760
      %851 = vmatpush.msra.mxu0 %v850
      %v852 = vand.u32 %v693, 4294901760
      %853 = vmatpush.msra.mxu0 %v852
      %v854 = vand.u32 %v692, 4294901760
      %855 = vmatpush.msra.mxu0 %v854
      %v856 = vand.u32 %v691, 4294901760
      %857 = vmatpush.msra.mxu0 %v856
      %v858 = vand.u32 %v700, 4294901760
      %v859 = vsub.f32 %v700, %v858
      %v860 = vand.u32 %v859, 4294901760
      %861 = vmatmul.f32.gmra.mxu0 %v860
      %v862 = vpop.f32.mrf.mxu0
      %v863 = vadd.f32 %v832, %v862
      %864 = vdwg.mxu0
      %865 = vmatpush.msra.mxu0 0.0
      %866 = vmatpush.msra.mxu0 0.0
      %867 = vmatpush.msra.mxu0 0.0
      %868 = vmatpush.msra.mxu0 0.0
      %869 = vmatpush.msra.mxu0 0.0
      %870 = vmatpush.msra.mxu0 0.0
      %871 = vmatpush.msra.mxu0 0.0
      %872 = vmatpush.msra.mxu0 0.0
      %v873 = vand.u32 %v698, 4294901760
      %v874 = vsub.f32 %v698, %v873
      %v875 = vand.u32 %v874, 4294901760
      %876 = vmatpush.msra.mxu0 %v875
      %v877 = vand.u32 %v697, 4294901760
      %v878 = vsub.f32 %v697, %v877
      %v879 = vand.u32 %v878, 4294901760
      %880 = vmatpush.msra.mxu0 %v879
      %v881 = vand.u32 %v696, 4294901760
      %v882 = vsub.f32 %v696, %v881
      %v883 = vand.u32 %v882, 4294901760
      %884 = vmatpush.msra.mxu0 %v883
      %v885 = vand.u32 %v695, 4294901760
      %v886 = vsub.f32 %v695, %v885
      %v887 = vand.u32 %v886, 4294901760
      %888 = vmatpush.msra.mxu0 %v887
      %v889 = vand.u32 %v694, 4294901760
      %v890 = vsub.f32 %v694, %v889
      %v891 = vand.u32 %v890, 4294901760
      %892 = vmatpush.msra.mxu0 %v891
      %v893 = vand.u32 %v693, 4294901760
      %v894 = vsub.f32 %v693, %v893
      %v895 = vand.u32 %v894, 4294901760
      %896 = vmatpush.msra.mxu0 %v895
      %v897 = vand.u32 %v692, 4294901760
      %v898 = vsub.f32 %v692, %v897
      %v899 = vand.u32 %v898, 4294901760
      %900 = vmatpush.msra.mxu0 %v899
      %v901 = vand.u32 %v691, 4294901760
      %v902 = vsub.f32 %v691, %v901
      %v903 = vand.u32 %v902, 4294901760
      %904 = vmatpush.msra.mxu0 %v903
      %v905 = vand.u32 %v700, 4294901760
      %906 = vmatmul.f32.gmra.mxu0 %v905
      %v907 = vpop.f32.mrf.mxu0
      %v908 = vadd.f32 %v863, %v907
      %909 = vdwg.mxu0
      %910 = vmatpush.msra.mxu0 0.0
      %911 = vmatpush.msra.mxu0 0.0
      %912 = vmatpush.msra.mxu0 0.0
      %913 = vmatpush.msra.mxu0 0.0
      %914 = vmatpush.msra.mxu0 0.0
      %915 = vmatpush.msra.mxu0 0.0
      %916 = vmatpush.msra.mxu0 0.0
      %917 = vmatpush.msra.mxu0 0.0
      %v918 = vand.u32 %v698, 4294901760
      %919 = vmatpush.msra.mxu0 %v918
      %v920 = vand.u32 %v697, 4294901760
      %921 = vmatpush.msra.mxu0 %v920
      %v922 = vand.u32 %v696, 4294901760
      %923 = vmatpush.msra.mxu0 %v922
      %v924 = vand.u32 %v695, 4294901760
      %925 = vmatpush.msra.mxu0 %v924
      %v926 = vand.u32 %v694, 4294901760
      %927 = vmatpush.msra.mxu0 %v926
      %v928 = vand.u32 %v693, 4294901760
      %929 = vmatpush.msra.mxu0 %v928
      %v930 = vand.u32 %v692, 4294901760
      %931 = vmatpush.msra.mxu0 %v930
      %v932 = vand.u32 %v691, 4294901760
      %933 = vmatpush.msra.mxu0 %v932
      %v934 = vand.u32 %v700, 4294901760
      %935 = vmatmul.f32.gmra.mxu0 %v934
      %v936 = vpop.f32.mrf.mxu0
      %v937 = vadd.f32 %v908, %v936
      %938 = vdwg.mxu0
      %v939 = vperm.slane %v407, 1
      %v940 = vmul.f32 %v386, %v939
      %v941 = vmul.f32 %v387, %v939
      %v942 = vmul.f32 %v388, %v939
      %v943 = vmul.f32 %v389, %v939
      %v944 = vmul.f32 %v390, %v939
      %v945 = vmul.f32 %v391, %v939
      %v946 = vmul.f32 %v392, %v939
      %v947 = vmul.f32 %v393, %v939
      %v948 = vsel %vm422, %v940, 0.0
      %949 = vadd.xlane.f32.xlu0 %v948
      %v950 = vpop.xlane.xlu0 %949
      %v951 = vsel %vm422, %v941, 0.0
      %952 = vadd.xlane.f32.xlu0 %v951
      %v953 = vpop.xlane.xlu0 %952
      %v954 = vsel %vm422, %v942, 0.0
      %955 = vadd.xlane.f32.xlu0 %v954
      %v956 = vpop.xlane.xlu0 %955
      %v957 = vsel %vm422, %v943, 0.0
      %958 = vadd.xlane.f32.xlu0 %v957
      %v959 = vpop.xlane.xlu0 %958
      %v960 = vsel %vm422, %v944, 0.0
      %961 = vadd.xlane.f32.xlu0 %v960
      %v962 = vpop.xlane.xlu0 %961
      %v963 = vsel %vm422, %v945, 0.0
      %964 = vadd.xlane.f32.xlu0 %v963
      %v965 = vpop.xlane.xlu0 %964
      %v966 = vsel %vm422, %v946, 0.0
      %967 = vadd.xlane.f32.xlu0 %v966
      %v968 = vpop.xlane.xlu0 %967
      %v969 = vsel %vm422, %v947, 0.0
      %970 = vadd.xlane.f32.xlu0 %v969
      %v971 = vpop.xlane.xlu0 %970
      %v972 = vperm.slane %v409, 1
      %v973 = vmul.f32 %v386, %v972
      %v974 = vmul.f32 %v387, %v972
      %v975 = vmul.f32 %v388, %v972
      %v976 = vmul.f32 %v389, %v972
      %v977 = vmul.f32 %v390, %v972
      %v978 = vmul.f32 %v391, %v972
      %v979 = vmul.f32 %v392, %v972
      %v980 = vmul.f32 %v393, %v972
      %v981 = vsel %vm422, %v973, 0.0
      %982 = vadd.xlane.f32.xlu0 %v981
      %v983 = vpop.xlane.xlu0 %982
      %v984 = vsel %vm422, %v974, 0.0
      %985 = vadd.xlane.f32.xlu0 %v984
      %v986 = vpop.xlane.xlu0 %985
      %v987 = vsel %vm422, %v975, 0.0
      %988 = vadd.xlane.f32.xlu0 %v987
      %v989 = vpop.xlane.xlu0 %988
      %v990 = vsel %vm422, %v976, 0.0
      %991 = vadd.xlane.f32.xlu0 %v990
      %v992 = vpop.xlane.xlu0 %991
      %v993 = vsel %vm422, %v977, 0.0
      %994 = vadd.xlane.f32.xlu0 %v993
      %v995 = vpop.xlane.xlu0 %994
      %v996 = vsel %vm422, %v978, 0.0
      %997 = vadd.xlane.f32.xlu0 %v996
      %v998 = vpop.xlane.xlu0 %997
      %v999 = vsel %vm422, %v979, 0.0
      %1000 = vadd.xlane.f32.xlu0 %v999
      %v1001 = vpop.xlane.xlu0 %1000
      %v1002 = vsel %vm422, %v980, 0.0
      %1003 = vadd.xlane.f32.xlu0 %v1002
      %v1004 = vpop.xlane.xlu0 %1003
      %v1005 = vperm.slane %v412, 1
      %v1006 = vmul.f32 %v386, %v1005
      %v1007 = vmul.f32 %v387, %v1005
      %v1008 = vmul.f32 %v388, %v1005
      %v1009 = vmul.f32 %v389, %v1005
      %v1010 = vmul.f32 %v390, %v1005
      %v1011 = vmul.f32 %v391, %v1005
      %v1012 = vmul.f32 %v392, %v1005
      %v1013 = vmul.f32 %v393, %v1005
      %v1014 = vsel %vm422, %v1006, 0.0
      %1015 = vadd.xlane.f32.xlu0 %v1014
      %v1016 = vpop.xlane.xlu0 %1015
      %v1017 = vsel %vm422, %v1007, 0.0
      %1018 = vadd.xlane.f32.xlu0 %v1017
      %v1019 = vpop.xlane.xlu0 %1018
      %v1020 = vsel %vm422, %v1008, 0.0
      %1021 = vadd.xlane.f32.xlu0 %v1020
      %v1022 = vpop.xlane.xlu0 %1021
      %v1023 = vsel %vm422, %v1009, 0.0
      %1024 = vadd.xlane.f32.xlu0 %v1023
      %v1025 = vpop.xlane.xlu0 %1024
      %v1026 = vsel %vm422, %v1010, 0.0
      %1027 = vadd.xlane.f32.xlu0 %v1026
      %v1028 = vpop.xlane.xlu0 %1027
      %v1029 = vsel %vm422, %v1011, 0.0
      %1030 = vadd.xlane.f32.xlu0 %v1029
      %v1031 = vpop.xlane.xlu0 %1030
      %v1032 = vsel %vm422, %v1012, 0.0
      %1033 = vadd.xlane.f32.xlu0 %v1032
      %v1034 = vpop.xlane.xlu0 %1033
      %v1035 = vsel %vm422, %v1013, 0.0
      %1036 = vadd.xlane.f32.xlu0 %v1035
      %v1037 = vpop.xlane.xlu0 %1036
      %v1038 = vrot.slane %v411, 1
      %v1039 = vsel %vm422, %v1038, 0
      %1041 = vmatpush.msra.mxu0 0.0
      %1042 = vmatpush.msra.mxu0 0.0
      %1043 = vmatpush.msra.mxu0 0.0
      %1044 = vmatpush.msra.mxu0 0.0
      %1045 = vmatpush.msra.mxu0 0.0
      %1046 = vmatpush.msra.mxu0 0.0
      %1047 = vmatpush.msra.mxu0 0.0
      %1048 = vmatpush.msra.mxu0 0.0
      %v1049 = vand.u32 %v698, 4294901760
      %1050 = vmatpush.msra.mxu0 %v1049
      %v1051 = vand.u32 %v697, 4294901760
      %1052 = vmatpush.msra.mxu0 %v1051
      %v1053 = vand.u32 %v696, 4294901760
      %1054 = vmatpush.msra.mxu0 %v1053
      %v1055 = vand.u32 %v695, 4294901760
      %1056 = vmatpush.msra.mxu0 %v1055
      %v1057 = vand.u32 %v694, 4294901760
      %1058 = vmatpush.msra.mxu0 %v1057
      %v1059 = vand.u32 %v693, 4294901760
      %1060 = vmatpush.msra.mxu0 %v1059
      %v1061 = vand.u32 %v692, 4294901760
      %1062 = vmatpush.msra.mxu0 %v1061
      %v1063 = vand.u32 %v691, 4294901760
      %1064 = vmatpush.msra.mxu0 %v1063
      %v1065 = vand.u32 %v1039, 4294901760
      %v1066 = vsub.f32 %v1039, %v1065
      %v1067 = vand.u32 %v1066, 4294901760
      %v1068 = vsub.f32 %v1066, %v1067
      %v1069 = vand.u32 %v1068, 4294901760
      %1070 = vmatmul.f32.gmra.mxu0 %v1069
      %v1071 = vpop.f32.mrf.mxu0
      %v1072 = vadd.f32 0.0, %v1071
      %1073 = vdwg.mxu0
      %1074 = vmatpush.msra.mxu0 0.0
      %1075 = vmatpush.msra.mxu0 0.0
      %1076 = vmatpush.msra.mxu0 0.0
      %1077 = vmatpush.msra.mxu0 0.0
      %1078 = vmatpush.msra.mxu0 0.0
      %1079 = vmatpush.msra.mxu0 0.0
      %1080 = vmatpush.msra.mxu0 0.0
      %1081 = vmatpush.msra.mxu0 0.0
      %v1082 = vand.u32 %v698, 4294901760
      %v1083 = vsub.f32 %v698, %v1082
      %v1084 = vand.u32 %v1083, 4294901760
      %v1085 = vsub.f32 %v1083, %v1084
      %v1086 = vand.u32 %v1085, 4294901760
      %1087 = vmatpush.msra.mxu0 %v1086
      %v1088 = vand.u32 %v697, 4294901760
      %v1089 = vsub.f32 %v697, %v1088
      %v1090 = vand.u32 %v1089, 4294901760
      %v1091 = vsub.f32 %v1089, %v1090
      %v1092 = vand.u32 %v1091, 4294901760
      %1093 = vmatpush.msra.mxu0 %v1092
      %v1094 = vand.u32 %v696, 4294901760
      %v1095 = vsub.f32 %v696, %v1094
      %v1096 = vand.u32 %v1095, 4294901760
      %v1097 = vsub.f32 %v1095, %v1096
      %v1098 = vand.u32 %v1097, 4294901760
      %1099 = vmatpush.msra.mxu0 %v1098
      %v1100 = vand.u32 %v695, 4294901760
      %v1101 = vsub.f32 %v695, %v1100
      %v1102 = vand.u32 %v1101, 4294901760
      %v1103 = vsub.f32 %v1101, %v1102
      %v1104 = vand.u32 %v1103, 4294901760
      %1105 = vmatpush.msra.mxu0 %v1104
      %v1106 = vand.u32 %v694, 4294901760
      %v1107 = vsub.f32 %v694, %v1106
      %v1108 = vand.u32 %v1107, 4294901760
      %v1109 = vsub.f32 %v1107, %v1108
      %v1110 = vand.u32 %v1109, 4294901760
      %1111 = vmatpush.msra.mxu0 %v1110
      %v1112 = vand.u32 %v693, 4294901760
      %v1113 = vsub.f32 %v693, %v1112
      %v1114 = vand.u32 %v1113, 4294901760
      %v1115 = vsub.f32 %v1113, %v1114
      %v1116 = vand.u32 %v1115, 4294901760
      %1117 = vmatpush.msra.mxu0 %v1116
      %v1118 = vand.u32 %v692, 4294901760
      %v1119 = vsub.f32 %v692, %v1118
      %v1120 = vand.u32 %v1119, 4294901760
      %v1121 = vsub.f32 %v1119, %v1120
      %v1122 = vand.u32 %v1121, 4294901760
      %1123 = vmatpush.msra.mxu0 %v1122
      %v1124 = vand.u32 %v691, 4294901760
      %v1125 = vsub.f32 %v691, %v1124
      %v1126 = vand.u32 %v1125, 4294901760
      %v1127 = vsub.f32 %v1125, %v1126
      %v1128 = vand.u32 %v1127, 4294901760
      %1129 = vmatpush.msra.mxu0 %v1128
      %v1130 = vand.u32 %v1039, 4294901760
      %1131 = vmatmul.f32.gmra.mxu0 %v1130
      %v1132 = vpop.f32.mrf.mxu0
      %v1133 = vadd.f32 %v1072, %v1132
      %1134 = vdwg.mxu0
      %1135 = vmatpush.msra.mxu0 0.0
      %1136 = vmatpush.msra.mxu0 0.0
      %1137 = vmatpush.msra.mxu0 0.0
      %1138 = vmatpush.msra.mxu0 0.0
      %1139 = vmatpush.msra.mxu0 0.0
      %1140 = vmatpush.msra.mxu0 0.0
      %1141 = vmatpush.msra.mxu0 0.0
      %1142 = vmatpush.msra.mxu0 0.0
      %v1143 = vand.u32 %v698, 4294901760
      %v1144 = vsub.f32 %v698, %v1143
      %1145 = vmatpush.msra.mxu0 %v1144
      %v1146 = vand.u32 %v697, 4294901760
      %v1147 = vsub.f32 %v697, %v1146
      %1148 = vmatpush.msra.mxu0 %v1147
      %v1149 = vand.u32 %v696, 4294901760
      %v1150 = vsub.f32 %v696, %v1149
      %1151 = vmatpush.msra.mxu0 %v1150
      %v1152 = vand.u32 %v695, 4294901760
      %v1153 = vsub.f32 %v695, %v1152
      %1154 = vmatpush.msra.mxu0 %v1153
      %v1155 = vand.u32 %v694, 4294901760
      %v1156 = vsub.f32 %v694, %v1155
      %1157 = vmatpush.msra.mxu0 %v1156
      %v1158 = vand.u32 %v693, 4294901760
      %v1159 = vsub.f32 %v693, %v1158
      %1160 = vmatpush.msra.mxu0 %v1159
      %v1161 = vand.u32 %v692, 4294901760
      %v1162 = vsub.f32 %v692, %v1161
      %1163 = vmatpush.msra.mxu0 %v1162
      %v1164 = vand.u32 %v691, 4294901760
      %v1165 = vsub.f32 %v691, %v1164
      %1166 = vmatpush.msra.mxu0 %v1165
      %v1167 = vand.u32 %v1039, 4294901760
      %v1168 = vsub.f32 %v1039, %v1167
      %1169 = vmatmul.f32.gmra.mxu0 %v1168
      %v1170 = vpop.f32.mrf.mxu0
      %v1171 = vadd.f32 %v1133, %v1170
      %1172 = vdwg.mxu0
      %1173 = vmatpush.msra.mxu0 0.0
      %1174 = vmatpush.msra.mxu0 0.0
      %1175 = vmatpush.msra.mxu0 0.0
      %1176 = vmatpush.msra.mxu0 0.0
      %1177 = vmatpush.msra.mxu0 0.0
      %1178 = vmatpush.msra.mxu0 0.0
      %1179 = vmatpush.msra.mxu0 0.0
      %1180 = vmatpush.msra.mxu0 0.0
      %v1181 = vand.u32 %v698, 4294901760
      %1182 = vmatpush.msra.mxu0 %v1181
      %v1183 = vand.u32 %v697, 4294901760
      %1184 = vmatpush.msra.mxu0 %v1183
      %v1185 = vand.u32 %v696, 4294901760
      %1186 = vmatpush.msra.mxu0 %v1185
      %v1187 = vand.u32 %v695, 4294901760
      %1188 = vmatpush.msra.mxu0 %v1187
      %v1189 = vand.u32 %v694, 4294901760
      %1190 = vmatpush.msra.mxu0 %v1189
      %v1191 = vand.u32 %v693, 4294901760
      %1192 = vmatpush.msra.mxu0 %v1191
      %v1193 = vand.u32 %v692, 4294901760
      %1194 = vmatpush.msra.mxu0 %v1193
      %v1195 = vand.u32 %v691, 4294901760
      %1196 = vmatpush.msra.mxu0 %v1195
      %v1197 = vand.u32 %v1039, 4294901760
      %v1198 = vsub.f32 %v1039, %v1197
      %v1199 = vand.u32 %v1198, 4294901760
      %1200 = vmatmul.f32.gmra.mxu0 %v1199
      %v1201 = vpop.f32.mrf.mxu0
      %v1202 = vadd.f32 %v1171, %v1201
      %1203 = vdwg.mxu0
      %1204 = vmatpush.msra.mxu0 0.0
      %1205 = vmatpush.msra.mxu0 0.0
      %1206 = vmatpush.msra.mxu0 0.0
      %1207 = vmatpush.msra.mxu0 0.0
      %1208 = vmatpush.msra.mxu0 0.0
      %1209 = vmatpush.msra.mxu0 0.0
      %1210 = vmatpush.msra.mxu0 0.0
      %1211 = vmatpush.msra.mxu0 0.0
      %v1212 = vand.u32 %v698, 4294901760
      %v1213 = vsub.f32 %v698, %v1212
      %v1214 = vand.u32 %v1213, 4294901760
      %1215 = vmatpush.msra.mxu0 %v1214
      %v1216 = vand.u32 %v697, 4294901760
      %v1217 = vsub.f32 %v697, %v1216
      %v1218 = vand.u32 %v1217, 4294901760
      %1219 = vmatpush.msra.mxu0 %v1218
      %v1220 = vand.u32 %v696, 4294901760
      %v1221 = vsub.f32 %v696, %v1220
      %v1222 = vand.u32 %v1221, 4294901760
      %1223 = vmatpush.msra.mxu0 %v1222
      %v1224 = vand.u32 %v695, 4294901760
      %v1225 = vsub.f32 %v695, %v1224
      %v1226 = vand.u32 %v1225, 4294901760
      %1227 = vmatpush.msra.mxu0 %v1226
      %v1228 = vand.u32 %v694, 4294901760
      %v1229 = vsub.f32 %v694, %v1228
      %v1230 = vand.u32 %v1229, 4294901760
      %1231 = vmatpush.msra.mxu0 %v1230
      %v1232 = vand.u32 %v693, 4294901760
      %v1233 = vsub.f32 %v693, %v1232
      %v1234 = vand.u32 %v1233, 4294901760
      %1235 = vmatpush.msra.mxu0 %v1234
      %v1236 = vand.u32 %v692, 4294901760
      %v1237 = vsub.f32 %v692, %v1236
      %v1238 = vand.u32 %v1237, 4294901760
      %1239 = vmatpush.msra.mxu0 %v1238
      %v1240 = vand.u32 %v691, 4294901760
      %v1241 = vsub.f32 %v691, %v1240
      %v1242 = vand.u32 %v1241, 4294901760
      %1243 = vmatpush.msra.mxu0 %v1242
      %v1244 = vand.u32 %v1039, 4294901760
      %1245 = vmatmul.f32.gmra.mxu0 %v1244
      %v1246 = vpop.f32.mrf.mxu0
      %v1247 = vadd.f32 %v1202, %v1246
      %1248 = vdwg.mxu0
      %1249 = vmatpush.msra.mxu0 0.0
      %1250 = vmatpush.msra.mxu0 0.0
      %1251 = vmatpush.msra.mxu0 0.0
      %1252 = vmatpush.msra.mxu0 0.0
      %1253 = vmatpush.msra.mxu0 0.0
      %1254 = vmatpush.msra.mxu0 0.0
      %1255 = vmatpush.msra.mxu0 0.0
      %1256 = vmatpush.msra.mxu0 0.0
      %v1257 = vand.u32 %v698, 4294901760
      %1258 = vmatpush.msra.mxu0 %v1257
      %v1259 = vand.u32 %v697, 4294901760
      %1260 = vmatpush.msra.mxu0 %v1259
      %v1261 = vand.u32 %v696, 4294901760
      %1262 = vmatpush.msra.mxu0 %v1261
      %v1263 = vand.u32 %v695, 4294901760
      %1264 = vmatpush.msra.mxu0 %v1263
      %v1265 = vand.u32 %v694, 4294901760
      %1266 = vmatpush.msra.mxu0 %v1265
      %v1267 = vand.u32 %v693, 4294901760
      %1268 = vmatpush.msra.mxu0 %v1267
      %v1269 = vand.u32 %v692, 4294901760
      %1270 = vmatpush.msra.mxu0 %v1269
      %v1271 = vand.u32 %v691, 4294901760
      %1272 = vmatpush.msra.mxu0 %v1271
      %v1273 = vand.u32 %v1039, 4294901760
      %1274 = vmatmul.f32.gmra.mxu0 %v1273
      %v1275 = vpop.f32.mrf.mxu0
      %v1276 = vadd.f32 %v1247, %v1275
      %1277 = vdwg.mxu0
      %v1278 = vmul.f32 %v691, %v950
      %v1279 = vmul.f32 %v692, %v953
      %v1280 = vmul.f32 %v693, %v956
      %v1281 = vmul.f32 %v694, %v959
      %v1282 = vmul.f32 %v695, %v962
      %v1283 = vmul.f32 %v696, %v965
      %v1284 = vmul.f32 %v697, %v968
      %v1285 = vmul.f32 %v698, %v971
      %v1286 = vperm.slane %v1276, 0
      %v1287 = vmul.f32 %v1016, %v1286
      %v1288 = vmul.f32 %v1019, %v1286
      %v1289 = vmul.f32 %v1022, %v1286
      %v1290 = vmul.f32 %v1025, %v1286
      %v1291 = vmul.f32 %v1028, %v1286
      %v1292 = vmul.f32 %v1031, %v1286
      %v1293 = vmul.f32 %v1034, %v1286
      %v1294 = vmul.f32 %v1037, %v1286
      %v1295 = vperm.slane %v410, 1
      %v1296 = vmul.f32 %v983, %v1295
      %v1297 = vmul.f32 %v986, %v1295
      %v1298 = vmul.f32 %v989, %v1295
      %v1299 = vmul.f32 %v992, %v1295
      %v1300 = vmul.f32 %v995, %v1295
      %v1301 = vmul.f32 %v998, %v1295
      %v1302 = vmul.f32 %v1001, %v1295
      %v1303 = vmul.f32 %v1004, %v1295
      %v1304 = vadd.f32 %v1287, %v1296
      %v1305 = vadd.f32 %v1288, %v1297
      %v1306 = vadd.f32 %v1289, %v1298
      %v1307 = vadd.f32 %v1290, %v1299
      %v1308 = vadd.f32 %v1291, %v1300
      %v1309 = vadd.f32 %v1292, %v1301
      %v1310 = vadd.f32 %v1293, %v1302
      %v1311 = vadd.f32 %v1294, %v1303
      %v1312 = vmul.f32 %v1304, %v394
      %v1313 = vmul.f32 %v1305, %v395
      %v1314 = vmul.f32 %v1306, %v396
      %v1315 = vmul.f32 %v1307, %v397
      %v1316 = vmul.f32 %v1308, %v398
      %v1317 = vmul.f32 %v1309, %v399
      %v1318 = vmul.f32 %v1310, %v400
      %v1319 = vmul.f32 %v1311, %v401
      %v1320 = vadd.f32 %v1278, %v1312
      %v1321 = vadd.f32 %v1279, %v1313
      %v1322 = vadd.f32 %v1280, %v1314
      %v1323 = vadd.f32 %v1281, %v1315
      %v1324 = vadd.f32 %v1282, %v1316
      %v1325 = vadd.f32 %v1283, %v1317
      %v1326 = vadd.f32 %v1284, %v1318
      %v1327 = vadd.f32 %v1285, %v1319
      %v1328 = vrot.slane %v408, 1
      %v1329 = vsel %vm422, %v1328, 0
      %1331 = vmatpush.msra.mxu0 0.0
      %1332 = vmatpush.msra.mxu0 0.0
      %1333 = vmatpush.msra.mxu0 0.0
      %1334 = vmatpush.msra.mxu0 0.0
      %1335 = vmatpush.msra.mxu0 0.0
      %1336 = vmatpush.msra.mxu0 0.0
      %1337 = vmatpush.msra.mxu0 0.0
      %1338 = vmatpush.msra.mxu0 0.0
      %v1339 = vand.u32 %v1327, 4294901760
      %1340 = vmatpush.msra.mxu0 %v1339
      %v1341 = vand.u32 %v1326, 4294901760
      %1342 = vmatpush.msra.mxu0 %v1341
      %v1343 = vand.u32 %v1325, 4294901760
      %1344 = vmatpush.msra.mxu0 %v1343
      %v1345 = vand.u32 %v1324, 4294901760
      %1346 = vmatpush.msra.mxu0 %v1345
      %v1347 = vand.u32 %v1323, 4294901760
      %1348 = vmatpush.msra.mxu0 %v1347
      %v1349 = vand.u32 %v1322, 4294901760
      %1350 = vmatpush.msra.mxu0 %v1349
      %v1351 = vand.u32 %v1321, 4294901760
      %1352 = vmatpush.msra.mxu0 %v1351
      %v1353 = vand.u32 %v1320, 4294901760
      %1354 = vmatpush.msra.mxu0 %v1353
      %v1355 = vand.u32 %v1329, 4294901760
      %v1356 = vsub.f32 %v1329, %v1355
      %v1357 = vand.u32 %v1356, 4294901760
      %v1358 = vsub.f32 %v1356, %v1357
      %v1359 = vand.u32 %v1358, 4294901760
      %1360 = vmatmul.f32.gmra.mxu0 %v1359
      %v1361 = vpop.f32.mrf.mxu0
      %v1362 = vadd.f32 0.0, %v1361
      %1363 = vdwg.mxu0
      %1364 = vmatpush.msra.mxu0 0.0
      %1365 = vmatpush.msra.mxu0 0.0
      %1366 = vmatpush.msra.mxu0 0.0
      %1367 = vmatpush.msra.mxu0 0.0
      %1368 = vmatpush.msra.mxu0 0.0
      %1369 = vmatpush.msra.mxu0 0.0
      %1370 = vmatpush.msra.mxu0 0.0
      %1371 = vmatpush.msra.mxu0 0.0
      %v1372 = vand.u32 %v1327, 4294901760
      %v1373 = vsub.f32 %v1327, %v1372
      %v1374 = vand.u32 %v1373, 4294901760
      %v1375 = vsub.f32 %v1373, %v1374
      %v1376 = vand.u32 %v1375, 4294901760
      %1377 = vmatpush.msra.mxu0 %v1376
      %v1378 = vand.u32 %v1326, 4294901760
      %v1379 = vsub.f32 %v1326, %v1378
      %v1380 = vand.u32 %v1379, 4294901760
      %v1381 = vsub.f32 %v1379, %v1380
      %v1382 = vand.u32 %v1381, 4294901760
      %1383 = vmatpush.msra.mxu0 %v1382
      %v1384 = vand.u32 %v1325, 4294901760
      %v1385 = vsub.f32 %v1325, %v1384
      %v1386 = vand.u32 %v1385, 4294901760
      %v1387 = vsub.f32 %v1385, %v1386
      %v1388 = vand.u32 %v1387, 4294901760
      %1389 = vmatpush.msra.mxu0 %v1388
      %v1390 = vand.u32 %v1324, 4294901760
      %v1391 = vsub.f32 %v1324, %v1390
      %v1392 = vand.u32 %v1391, 4294901760
      %v1393 = vsub.f32 %v1391, %v1392
      %v1394 = vand.u32 %v1393, 4294901760
      %1395 = vmatpush.msra.mxu0 %v1394
      %v1396 = vand.u32 %v1323, 4294901760
      %v1397 = vsub.f32 %v1323, %v1396
      %v1398 = vand.u32 %v1397, 4294901760
      %v1399 = vsub.f32 %v1397, %v1398
      %v1400 = vand.u32 %v1399, 4294901760
      %1401 = vmatpush.msra.mxu0 %v1400
      %v1402 = vand.u32 %v1322, 4294901760
      %v1403 = vsub.f32 %v1322, %v1402
      %v1404 = vand.u32 %v1403, 4294901760
      %v1405 = vsub.f32 %v1403, %v1404
      %v1406 = vand.u32 %v1405, 4294901760
      %1407 = vmatpush.msra.mxu0 %v1406
      %v1408 = vand.u32 %v1321, 4294901760
      %v1409 = vsub.f32 %v1321, %v1408
      %v1410 = vand.u32 %v1409, 4294901760
      %v1411 = vsub.f32 %v1409, %v1410
      %v1412 = vand.u32 %v1411, 4294901760
      %1413 = vmatpush.msra.mxu0 %v1412
      %v1414 = vand.u32 %v1320, 4294901760
      %v1415 = vsub.f32 %v1320, %v1414
      %v1416 = vand.u32 %v1415, 4294901760
      %v1417 = vsub.f32 %v1415, %v1416
      %v1418 = vand.u32 %v1417, 4294901760
      %1419 = vmatpush.msra.mxu0 %v1418
      %v1420 = vand.u32 %v1329, 4294901760
      %1421 = vmatmul.f32.gmra.mxu0 %v1420
      %v1422 = vpop.f32.mrf.mxu0
      %v1423 = vadd.f32 %v1362, %v1422
      %1424 = vdwg.mxu0
      %1425 = vmatpush.msra.mxu0 0.0
      %1426 = vmatpush.msra.mxu0 0.0
      %1427 = vmatpush.msra.mxu0 0.0
      %1428 = vmatpush.msra.mxu0 0.0
      %1429 = vmatpush.msra.mxu0 0.0
      %1430 = vmatpush.msra.mxu0 0.0
      %1431 = vmatpush.msra.mxu0 0.0
      %1432 = vmatpush.msra.mxu0 0.0
      %v1433 = vand.u32 %v1327, 4294901760
      %v1434 = vsub.f32 %v1327, %v1433
      %1435 = vmatpush.msra.mxu0 %v1434
      %v1436 = vand.u32 %v1326, 4294901760
      %v1437 = vsub.f32 %v1326, %v1436
      %1438 = vmatpush.msra.mxu0 %v1437
      %v1439 = vand.u32 %v1325, 4294901760
      %v1440 = vsub.f32 %v1325, %v1439
      %1441 = vmatpush.msra.mxu0 %v1440
      %v1442 = vand.u32 %v1324, 4294901760
      %v1443 = vsub.f32 %v1324, %v1442
      %1444 = vmatpush.msra.mxu0 %v1443
      %v1445 = vand.u32 %v1323, 4294901760
      %v1446 = vsub.f32 %v1323, %v1445
      %1447 = vmatpush.msra.mxu0 %v1446
      %v1448 = vand.u32 %v1322, 4294901760
      %v1449 = vsub.f32 %v1322, %v1448
      %1450 = vmatpush.msra.mxu0 %v1449
      %v1451 = vand.u32 %v1321, 4294901760
      %v1452 = vsub.f32 %v1321, %v1451
      %1453 = vmatpush.msra.mxu0 %v1452
      %v1454 = vand.u32 %v1320, 4294901760
      %v1455 = vsub.f32 %v1320, %v1454
      %1456 = vmatpush.msra.mxu0 %v1455
      %v1457 = vand.u32 %v1329, 4294901760
      %v1458 = vsub.f32 %v1329, %v1457
      %1459 = vmatmul.f32.gmra.mxu0 %v1458
      %v1460 = vpop.f32.mrf.mxu0
      %v1461 = vadd.f32 %v1423, %v1460
      %1462 = vdwg.mxu0
      %1463 = vmatpush.msra.mxu0 0.0
      %1464 = vmatpush.msra.mxu0 0.0
      %1465 = vmatpush.msra.mxu0 0.0
      %1466 = vmatpush.msra.mxu0 0.0
      %1467 = vmatpush.msra.mxu0 0.0
      %1468 = vmatpush.msra.mxu0 0.0
      %1469 = vmatpush.msra.mxu0 0.0
      %1470 = vmatpush.msra.mxu0 0.0
      %v1471 = vand.u32 %v1327, 4294901760
      %1472 = vmatpush.msra.mxu0 %v1471
      %v1473 = vand.u32 %v1326, 4294901760
      %1474 = vmatpush.msra.mxu0 %v1473
      %v1475 = vand.u32 %v1325, 4294901760
      %1476 = vmatpush.msra.mxu0 %v1475
      %v1477 = vand.u32 %v1324, 4294901760
      %1478 = vmatpush.msra.mxu0 %v1477
      %v1479 = vand.u32 %v1323, 4294901760
      %1480 = vmatpush.msra.mxu0 %v1479
      %v1481 = vand.u32 %v1322, 4294901760
      %1482 = vmatpush.msra.mxu0 %v1481
      %v1483 = vand.u32 %v1321, 4294901760
      %1484 = vmatpush.msra.mxu0 %v1483
      %v1485 = vand.u32 %v1320, 4294901760
      %1486 = vmatpush.msra.mxu0 %v1485
      %v1487 = vand.u32 %v1329, 4294901760
      %v1488 = vsub.f32 %v1329, %v1487
      %v1489 = vand.u32 %v1488, 4294901760
      %1490 = vmatmul.f32.gmra.mxu0 %v1489
      %v1491 = vpop.f32.mrf.mxu0
      %v1492 = vadd.f32 %v1461, %v1491
      %1493 = vdwg.mxu0
      %1494 = vmatpush.msra.mxu0 0.0
      %1495 = vmatpush.msra.mxu0 0.0
      %1496 = vmatpush.msra.mxu0 0.0
      %1497 = vmatpush.msra.mxu0 0.0
      %1498 = vmatpush.msra.mxu0 0.0
      %1499 = vmatpush.msra.mxu0 0.0
      %1500 = vmatpush.msra.mxu0 0.0
      %1501 = vmatpush.msra.mxu0 0.0
      %v1502 = vand.u32 %v1327, 4294901760
      %v1503 = vsub.f32 %v1327, %v1502
      %v1504 = vand.u32 %v1503, 4294901760
      %1505 = vmatpush.msra.mxu0 %v1504
      %v1506 = vand.u32 %v1326, 4294901760
      %v1507 = vsub.f32 %v1326, %v1506
      %v1508 = vand.u32 %v1507, 4294901760
      %1509 = vmatpush.msra.mxu0 %v1508
      %v1510 = vand.u32 %v1325, 4294901760
      %v1511 = vsub.f32 %v1325, %v1510
      %v1512 = vand.u32 %v1511, 4294901760
      %1513 = vmatpush.msra.mxu0 %v1512
      %v1514 = vand.u32 %v1324, 4294901760
      %v1515 = vsub.f32 %v1324, %v1514
      %v1516 = vand.u32 %v1515, 4294901760
      %1517 = vmatpush.msra.mxu0 %v1516
      %v1518 = vand.u32 %v1323, 4294901760
      %v1519 = vsub.f32 %v1323, %v1518
      %v1520 = vand.u32 %v1519, 4294901760
      %1521 = vmatpush.msra.mxu0 %v1520
      %v1522 = vand.u32 %v1322, 4294901760
      %v1523 = vsub.f32 %v1322, %v1522
      %v1524 = vand.u32 %v1523, 4294901760
      %1525 = vmatpush.msra.mxu0 %v1524
      %v1526 = vand.u32 %v1321, 4294901760
      %v1527 = vsub.f32 %v1321, %v1526
      %v1528 = vand.u32 %v1527, 4294901760
      %1529 = vmatpush.msra.mxu0 %v1528
      %v1530 = vand.u32 %v1320, 4294901760
      %v1531 = vsub.f32 %v1320, %v1530
      %v1532 = vand.u32 %v1531, 4294901760
      %1533 = vmatpush.msra.mxu0 %v1532
      %v1534 = vand.u32 %v1329, 4294901760
      %1535 = vmatmul.f32.gmra.mxu0 %v1534
      %v1536 = vpop.f32.mrf.mxu0
      %v1537 = vadd.f32 %v1492, %v1536
      %1538 = vdwg.mxu0
      %1539 = vmatpush.msra.mxu0 0.0
      %1540 = vmatpush.msra.mxu0 0.0
      %1541 = vmatpush.msra.mxu0 0.0
      %1542 = vmatpush.msra.mxu0 0.0
      %1543 = vmatpush.msra.mxu0 0.0
      %1544 = vmatpush.msra.mxu0 0.0
      %1545 = vmatpush.msra.mxu0 0.0
      %1546 = vmatpush.msra.mxu0 0.0
      %v1547 = vand.u32 %v1327, 4294901760
      %1548 = vmatpush.msra.mxu0 %v1547
      %v1549 = vand.u32 %v1326, 4294901760
      %1550 = vmatpush.msra.mxu0 %v1549
      %v1551 = vand.u32 %v1325, 4294901760
      %1552 = vmatpush.msra.mxu0 %v1551
      %v1553 = vand.u32 %v1324, 4294901760
      %1554 = vmatpush.msra.mxu0 %v1553
      %v1555 = vand.u32 %v1323, 4294901760
      %1556 = vmatpush.msra.mxu0 %v1555
      %v1557 = vand.u32 %v1322, 4294901760
      %1558 = vmatpush.msra.mxu0 %v1557
      %v1559 = vand.u32 %v1321, 4294901760
      %1560 = vmatpush.msra.mxu0 %v1559
      %v1561 = vand.u32 %v1320, 4294901760
      %1562 = vmatpush.msra.mxu0 %v1561
      %v1563 = vand.u32 %v1329, 4294901760
      %1564 = vmatmul.f32.gmra.mxu0 %v1563
      %v1565 = vpop.f32.mrf.mxu0
      %v1566 = vadd.f32 %v1537, %v1565
      %1567 = vdwg.mxu0
      %v1568 = vperm.slane %v407, 2
      %v1569 = vmul.f32 %v386, %v1568
      %v1570 = vmul.f32 %v387, %v1568
      %v1571 = vmul.f32 %v388, %v1568
      %v1572 = vmul.f32 %v389, %v1568
      %v1573 = vmul.f32 %v390, %v1568
      %v1574 = vmul.f32 %v391, %v1568
      %v1575 = vmul.f32 %v392, %v1568
      %v1576 = vmul.f32 %v393, %v1568
      %v1577 = vsel %vm422, %v1569, 0.0
      %1578 = vadd.xlane.f32.xlu0 %v1577
      %v1579 = vpop.xlane.xlu0 %1578
      %v1580 = vsel %vm422, %v1570, 0.0
      %1581 = vadd.xlane.f32.xlu0 %v1580
      %v1582 = vpop.xlane.xlu0 %1581
      %v1583 = vsel %vm422, %v1571, 0.0
      %1584 = vadd.xlane.f32.xlu0 %v1583
      %v1585 = vpop.xlane.xlu0 %1584
      %v1586 = vsel %vm422, %v1572, 0.0
      %1587 = vadd.xlane.f32.xlu0 %v1586
      %v1588 = vpop.xlane.xlu0 %1587
      %v1589 = vsel %vm422, %v1573, 0.0
      %1590 = vadd.xlane.f32.xlu0 %v1589
      %v1591 = vpop.xlane.xlu0 %1590
      %v1592 = vsel %vm422, %v1574, 0.0
      %1593 = vadd.xlane.f32.xlu0 %v1592
      %v1594 = vpop.xlane.xlu0 %1593
      %v1595 = vsel %vm422, %v1575, 0.0
      %1596 = vadd.xlane.f32.xlu0 %v1595
      %v1597 = vpop.xlane.xlu0 %1596
      %v1598 = vsel %vm422, %v1576, 0.0
      %1599 = vadd.xlane.f32.xlu0 %v1598
      %v1600 = vpop.xlane.xlu0 %1599
      %v1601 = vperm.slane %v409, 2
      %v1602 = vmul.f32 %v386, %v1601
      %v1603 = vmul.f32 %v387, %v1601
      %v1604 = vmul.f32 %v388, %v1601
      %v1605 = vmul.f32 %v389, %v1601
      %v1606 = vmul.f32 %v390, %v1601
      %v1607 = vmul.f32 %v391, %v1601
      %v1608 = vmul.f32 %v392, %v1601
      %v1609 = vmul.f32 %v393, %v1601
      %v1610 = vsel %vm422, %v1602, 0.0
      %1611 = vadd.xlane.f32.xlu0 %v1610
      %v1612 = vpop.xlane.xlu0 %1611
      %v1613 = vsel %vm422, %v1603, 0.0
      %1614 = vadd.xlane.f32.xlu0 %v1613
      %v1615 = vpop.xlane.xlu0 %1614
      %v1616 = vsel %vm422, %v1604, 0.0
      %1617 = vadd.xlane.f32.xlu0 %v1616
      %v1618 = vpop.xlane.xlu0 %1617
      %v1619 = vsel %vm422, %v1605, 0.0
      %1620 = vadd.xlane.f32.xlu0 %v1619
      %v1621 = vpop.xlane.xlu0 %1620
      %v1622 = vsel %vm422, %v1606, 0.0
      %1623 = vadd.xlane.f32.xlu0 %v1622
      %v1624 = vpop.xlane.xlu0 %1623
      %v1625 = vsel %vm422, %v1607, 0.0
      %1626 = vadd.xlane.f32.xlu0 %v1625
      %v1627 = vpop.xlane.xlu0 %1626
      %v1628 = vsel %vm422, %v1608, 0.0
      %1629 = vadd.xlane.f32.xlu0 %v1628
      %v1630 = vpop.xlane.xlu0 %1629
      %v1631 = vsel %vm422, %v1609, 0.0
      %1632 = vadd.xlane.f32.xlu0 %v1631
      %v1633 = vpop.xlane.xlu0 %1632
      %v1634 = vperm.slane %v412, 2
      %v1635 = vmul.f32 %v386, %v1634
      %v1636 = vmul.f32 %v387, %v1634
      %v1637 = vmul.f32 %v388, %v1634
      %v1638 = vmul.f32 %v389, %v1634
      %v1639 = vmul.f32 %v390, %v1634
      %v1640 = vmul.f32 %v391, %v1634
      %v1641 = vmul.f32 %v392, %v1634
      %v1642 = vmul.f32 %v393, %v1634
      %v1643 = vsel %vm422, %v1635, 0.0
      %1644 = vadd.xlane.f32.xlu0 %v1643
      %v1645 = vpop.xlane.xlu0 %1644
      %v1646 = vsel %vm422, %v1636, 0.0
      %1647 = vadd.xlane.f32.xlu0 %v1646
      %v1648 = vpop.xlane.xlu0 %1647
      %v1649 = vsel %vm422, %v1637, 0.0
      %1650 = vadd.xlane.f32.xlu0 %v1649
      %v1651 = vpop.xlane.xlu0 %1650
      %v1652 = vsel %vm422, %v1638, 0.0
      %1653 = vadd.xlane.f32.xlu0 %v1652
      %v1654 = vpop.xlane.xlu0 %1653
      %v1655 = vsel %vm422, %v1639, 0.0
      %1656 = vadd.xlane.f32.xlu0 %v1655
      %v1657 = vpop.xlane.xlu0 %1656
      %v1658 = vsel %vm422, %v1640, 0.0
      %1659 = vadd.xlane.f32.xlu0 %v1658
      %v1660 = vpop.xlane.xlu0 %1659
      %v1661 = vsel %vm422, %v1641, 0.0
      %1662 = vadd.xlane.f32.xlu0 %v1661
      %v1663 = vpop.xlane.xlu0 %1662
      %v1664 = vsel %vm422, %v1642, 0.0
      %1665 = vadd.xlane.f32.xlu0 %v1664
      %v1666 = vpop.xlane.xlu0 %1665
      %v1667 = vrot.slane %v411, 2
      %v1668 = vsel %vm422, %v1667, 0
      %1670 = vmatpush.msra.mxu0 0.0
      %1671 = vmatpush.msra.mxu0 0.0
      %1672 = vmatpush.msra.mxu0 0.0
      %1673 = vmatpush.msra.mxu0 0.0
      %1674 = vmatpush.msra.mxu0 0.0
      %1675 = vmatpush.msra.mxu0 0.0
      %1676 = vmatpush.msra.mxu0 0.0
      %1677 = vmatpush.msra.mxu0 0.0
      %v1678 = vand.u32 %v1327, 4294901760
      %1679 = vmatpush.msra.mxu0 %v1678
      %v1680 = vand.u32 %v1326, 4294901760
      %1681 = vmatpush.msra.mxu0 %v1680
      %v1682 = vand.u32 %v1325, 4294901760
      %1683 = vmatpush.msra.mxu0 %v1682
      %v1684 = vand.u32 %v1324, 4294901760
      %1685 = vmatpush.msra.mxu0 %v1684
      %v1686 = vand.u32 %v1323, 4294901760
      %1687 = vmatpush.msra.mxu0 %v1686
      %v1688 = vand.u32 %v1322, 4294901760
      %1689 = vmatpush.msra.mxu0 %v1688
      %v1690 = vand.u32 %v1321, 4294901760
      %1691 = vmatpush.msra.mxu0 %v1690
      %v1692 = vand.u32 %v1320, 4294901760
      %1693 = vmatpush.msra.mxu0 %v1692
      %v1694 = vand.u32 %v1668, 4294901760
      %v1695 = vsub.f32 %v1668, %v1694
      %v1696 = vand.u32 %v1695, 4294901760
      %v1697 = vsub.f32 %v1695, %v1696
      %v1698 = vand.u32 %v1697, 4294901760
      %1699 = vmatmul.f32.gmra.mxu0 %v1698
      %v1700 = vpop.f32.mrf.mxu0
      %v1701 = vadd.f32 0.0, %v1700
      %1702 = vdwg.mxu0
      %1703 = vmatpush.msra.mxu0 0.0
      %1704 = vmatpush.msra.mxu0 0.0
      %1705 = vmatpush.msra.mxu0 0.0
      %1706 = vmatpush.msra.mxu0 0.0
      %1707 = vmatpush.msra.mxu0 0.0
      %1708 = vmatpush.msra.mxu0 0.0
      %1709 = vmatpush.msra.mxu0 0.0
      %1710 = vmatpush.msra.mxu0 0.0
      %v1711 = vand.u32 %v1327, 4294901760
      %v1712 = vsub.f32 %v1327, %v1711
      %v1713 = vand.u32 %v1712, 4294901760
      %v1714 = vsub.f32 %v1712, %v1713
      %v1715 = vand.u32 %v1714, 4294901760
      %1716 = vmatpush.msra.mxu0 %v1715
      %v1717 = vand.u32 %v1326, 4294901760
      %v1718 = vsub.f32 %v1326, %v1717
      %v1719 = vand.u32 %v1718, 4294901760
      %v1720 = vsub.f32 %v1718, %v1719
      %v1721 = vand.u32 %v1720, 4294901760
      %1722 = vmatpush.msra.mxu0 %v1721
      %v1723 = vand.u32 %v1325, 4294901760
      %v1724 = vsub.f32 %v1325, %v1723
      %v1725 = vand.u32 %v1724, 4294901760
      %v1726 = vsub.f32 %v1724, %v1725
      %v1727 = vand.u32 %v1726, 4294901760
      %1728 = vmatpush.msra.mxu0 %v1727
      %v1729 = vand.u32 %v1324, 4294901760
      %v1730 = vsub.f32 %v1324, %v1729
      %v1731 = vand.u32 %v1730, 4294901760
      %v1732 = vsub.f32 %v1730, %v1731
      %v1733 = vand.u32 %v1732, 4294901760
      %1734 = vmatpush.msra.mxu0 %v1733
      %v1735 = vand.u32 %v1323, 4294901760
      %v1736 = vsub.f32 %v1323, %v1735
      %v1737 = vand.u32 %v1736, 4294901760
      %v1738 = vsub.f32 %v1736, %v1737
      %v1739 = vand.u32 %v1738, 4294901760
      %1740 = vmatpush.msra.mxu0 %v1739
      %v1741 = vand.u32 %v1322, 4294901760
      %v1742 = vsub.f32 %v1322, %v1741
      %v1743 = vand.u32 %v1742, 4294901760
      %v1744 = vsub.f32 %v1742, %v1743
      %v1745 = vand.u32 %v1744, 4294901760
      %1746 = vmatpush.msra.mxu0 %v1745
      %v1747 = vand.u32 %v1321, 4294901760
      %v1748 = vsub.f32 %v1321, %v1747
      %v1749 = vand.u32 %v1748, 4294901760
      %v1750 = vsub.f32 %v1748, %v1749
      %v1751 = vand.u32 %v1750, 4294901760
      %1752 = vmatpush.msra.mxu0 %v1751
      %v1753 = vand.u32 %v1320, 4294901760
      %v1754 = vsub.f32 %v1320, %v1753
      %v1755 = vand.u32 %v1754, 4294901760
      %v1756 = vsub.f32 %v1754, %v1755
      %v1757 = vand.u32 %v1756, 4294901760
      %1758 = vmatpush.msra.mxu0 %v1757
      %v1759 = vand.u32 %v1668, 4294901760
      %1760 = vmatmul.f32.gmra.mxu0 %v1759
      %v1761 = vpop.f32.mrf.mxu0
      %v1762 = vadd.f32 %v1701, %v1761
      %1763 = vdwg.mxu0
      %1764 = vmatpush.msra.mxu0 0.0
      %1765 = vmatpush.msra.mxu0 0.0
      %1766 = vmatpush.msra.mxu0 0.0
      %1767 = vmatpush.msra.mxu0 0.0
      %1768 = vmatpush.msra.mxu0 0.0
      %1769 = vmatpush.msra.mxu0 0.0
      %1770 = vmatpush.msra.mxu0 0.0
      %1771 = vmatpush.msra.mxu0 0.0
      %v1772 = vand.u32 %v1327, 4294901760
      %v1773 = vsub.f32 %v1327, %v1772
      %1774 = vmatpush.msra.mxu0 %v1773
      %v1775 = vand.u32 %v1326, 4294901760
      %v1776 = vsub.f32 %v1326, %v1775
      %1777 = vmatpush.msra.mxu0 %v1776
      %v1778 = vand.u32 %v1325, 4294901760
      %v1779 = vsub.f32 %v1325, %v1778
      %1780 = vmatpush.msra.mxu0 %v1779
      %v1781 = vand.u32 %v1324, 4294901760
      %v1782 = vsub.f32 %v1324, %v1781
      %1783 = vmatpush.msra.mxu0 %v1782
      %v1784 = vand.u32 %v1323, 4294901760
      %v1785 = vsub.f32 %v1323, %v1784
      %1786 = vmatpush.msra.mxu0 %v1785
      %v1787 = vand.u32 %v1322, 4294901760
      %v1788 = vsub.f32 %v1322, %v1787
      %1789 = vmatpush.msra.mxu0 %v1788
      %v1790 = vand.u32 %v1321, 4294901760
      %v1791 = vsub.f32 %v1321, %v1790
      %1792 = vmatpush.msra.mxu0 %v1791
      %v1793 = vand.u32 %v1320, 4294901760
      %v1794 = vsub.f32 %v1320, %v1793
      %1795 = vmatpush.msra.mxu0 %v1794
      %v1796 = vand.u32 %v1668, 4294901760
      %v1797 = vsub.f32 %v1668, %v1796
      %1798 = vmatmul.f32.gmra.mxu0 %v1797
      %v1799 = vpop.f32.mrf.mxu0
      %v1800 = vadd.f32 %v1762, %v1799
      %1801 = vdwg.mxu0
      %1802 = vmatpush.msra.mxu0 0.0
      %1803 = vmatpush.msra.mxu0 0.0
      %1804 = vmatpush.msra.mxu0 0.0
      %1805 = vmatpush.msra.mxu0 0.0
      %1806 = vmatpush.msra.mxu0 0.0
      %1807 = vmatpush.msra.mxu0 0.0
      %1808 = vmatpush.msra.mxu0 0.0
      %1809 = vmatpush.msra.mxu0 0.0
      %v1810 = vand.u32 %v1327, 4294901760
      %1811 = vmatpush.msra.mxu0 %v1810
      %v1812 = vand.u32 %v1326, 4294901760
      %1813 = vmatpush.msra.mxu0 %v1812
      %v1814 = vand.u32 %v1325, 4294901760
      %1815 = vmatpush.msra.mxu0 %v1814
      %v1816 = vand.u32 %v1324, 4294901760
      %1817 = vmatpush.msra.mxu0 %v1816
      %v1818 = vand.u32 %v1323, 4294901760
      %1819 = vmatpush.msra.mxu0 %v1818
      %v1820 = vand.u32 %v1322, 4294901760
      %1821 = vmatpush.msra.mxu0 %v1820
      %v1822 = vand.u32 %v1321, 4294901760
      %1823 = vmatpush.msra.mxu0 %v1822
      %v1824 = vand.u32 %v1320, 4294901760
      %1825 = vmatpush.msra.mxu0 %v1824
      %v1826 = vand.u32 %v1668, 4294901760
      %v1827 = vsub.f32 %v1668, %v1826
      %v1828 = vand.u32 %v1827, 4294901760
      %1829 = vmatmul.f32.gmra.mxu0 %v1828
      %v1830 = vpop.f32.mrf.mxu0
      %v1831 = vadd.f32 %v1800, %v1830
      %1832 = vdwg.mxu0
      %1833 = vmatpush.msra.mxu0 0.0
      %1834 = vmatpush.msra.mxu0 0.0
      %1835 = vmatpush.msra.mxu0 0.0
      %1836 = vmatpush.msra.mxu0 0.0
      %1837 = vmatpush.msra.mxu0 0.0
      %1838 = vmatpush.msra.mxu0 0.0
      %1839 = vmatpush.msra.mxu0 0.0
      %1840 = vmatpush.msra.mxu0 0.0
      %v1841 = vand.u32 %v1327, 4294901760
      %v1842 = vsub.f32 %v1327, %v1841
      %v1843 = vand.u32 %v1842, 4294901760
      %1844 = vmatpush.msra.mxu0 %v1843
      %v1845 = vand.u32 %v1326, 4294901760
      %v1846 = vsub.f32 %v1326, %v1845
      %v1847 = vand.u32 %v1846, 4294901760
      %1848 = vmatpush.msra.mxu0 %v1847
      %v1849 = vand.u32 %v1325, 4294901760
      %v1850 = vsub.f32 %v1325, %v1849
      %v1851 = vand.u32 %v1850, 4294901760
      %1852 = vmatpush.msra.mxu0 %v1851
      %v1853 = vand.u32 %v1324, 4294901760
      %v1854 = vsub.f32 %v1324, %v1853
      %v1855 = vand.u32 %v1854, 4294901760
      %1856 = vmatpush.msra.mxu0 %v1855
      %v1857 = vand.u32 %v1323, 4294901760
      %v1858 = vsub.f32 %v1323, %v1857
      %v1859 = vand.u32 %v1858, 4294901760
      %1860 = vmatpush.msra.mxu0 %v1859
      %v1861 = vand.u32 %v1322, 4294901760
      %v1862 = vsub.f32 %v1322, %v1861
      %v1863 = vand.u32 %v1862, 4294901760
      %1864 = vmatpush.msra.mxu0 %v1863
      %v1865 = vand.u32 %v1321, 4294901760
      %v1866 = vsub.f32 %v1321, %v1865
      %v1867 = vand.u32 %v1866, 4294901760
      %1868 = vmatpush.msra.mxu0 %v1867
      %v1869 = vand.u32 %v1320, 4294901760
      %v1870 = vsub.f32 %v1320, %v1869
      %v1871 = vand.u32 %v1870, 4294901760
      %1872 = vmatpush.msra.mxu0 %v1871
      %v1873 = vand.u32 %v1668, 4294901760
      %1874 = vmatmul.f32.gmra.mxu0 %v1873
      %v1875 = vpop.f32.mrf.mxu0
      %v1876 = vadd.f32 %v1831, %v1875
      %1877 = vdwg.mxu0
      %1878 = vmatpush.msra.mxu0 0.0
      %1879 = vmatpush.msra.mxu0 0.0
      %1880 = vmatpush.msra.mxu0 0.0
      %1881 = vmatpush.msra.mxu0 0.0
      %1882 = vmatpush.msra.mxu0 0.0
      %1883 = vmatpush.msra.mxu0 0.0
      %1884 = vmatpush.msra.mxu0 0.0
      %1885 = vmatpush.msra.mxu0 0.0
      %v1886 = vand.u32 %v1327, 4294901760
      %1887 = vmatpush.msra.mxu0 %v1886
      %v1888 = vand.u32 %v1326, 4294901760
      %1889 = vmatpush.msra.mxu0 %v1888
      %v1890 = vand.u32 %v1325, 4294901760
      %1891 = vmatpush.msra.mxu0 %v1890
      %v1892 = vand.u32 %v1324, 4294901760
      %1893 = vmatpush.msra.mxu0 %v1892
      %v1894 = vand.u32 %v1323, 4294901760
      %1895 = vmatpush.msra.mxu0 %v1894
      %v1896 = vand.u32 %v1322, 4294901760
      %1897 = vmatpush.msra.mxu0 %v1896
      %v1898 = vand.u32 %v1321, 4294901760
      %1899 = vmatpush.msra.mxu0 %v1898
      %v1900 = vand.u32 %v1320, 4294901760
      %1901 = vmatpush.msra.mxu0 %v1900
      %v1902 = vand.u32 %v1668, 4294901760
      %1903 = vmatmul.f32.gmra.mxu0 %v1902
      %v1904 = vpop.f32.mrf.mxu0
      %v1905 = vadd.f32 %v1876, %v1904
      %1906 = vdwg.mxu0
      %v1907 = vmul.f32 %v1320, %v1579
      %v1908 = vmul.f32 %v1321, %v1582
      %v1909 = vmul.f32 %v1322, %v1585
      %v1910 = vmul.f32 %v1323, %v1588
      %v1911 = vmul.f32 %v1324, %v1591
      %v1912 = vmul.f32 %v1325, %v1594
      %v1913 = vmul.f32 %v1326, %v1597
      %v1914 = vmul.f32 %v1327, %v1600
      %v1915 = vperm.slane %v1905, 0
      %v1916 = vmul.f32 %v1645, %v1915
      %v1917 = vmul.f32 %v1648, %v1915
      %v1918 = vmul.f32 %v1651, %v1915
      %v1919 = vmul.f32 %v1654, %v1915
      %v1920 = vmul.f32 %v1657, %v1915
      %v1921 = vmul.f32 %v1660, %v1915
      %v1922 = vmul.f32 %v1663, %v1915
      %v1923 = vmul.f32 %v1666, %v1915
      %v1924 = vperm.slane %v410, 2
      %v1925 = vmul.f32 %v1612, %v1924
      %v1926 = vmul.f32 %v1615, %v1924
      %v1927 = vmul.f32 %v1618, %v1924
      %v1928 = vmul.f32 %v1621, %v1924
      %v1929 = vmul.f32 %v1624, %v1924
      %v1930 = vmul.f32 %v1627, %v1924
      %v1931 = vmul.f32 %v1630, %v1924
      %v1932 = vmul.f32 %v1633, %v1924
      %v1933 = vadd.f32 %v1916, %v1925
      %v1934 = vadd.f32 %v1917, %v1926
      %v1935 = vadd.f32 %v1918, %v1927
      %v1936 = vadd.f32 %v1919, %v1928
      %v1937 = vadd.f32 %v1920, %v1929
      %v1938 = vadd.f32 %v1921, %v1930
      %v1939 = vadd.f32 %v1922, %v1931
      %v1940 = vadd.f32 %v1923, %v1932
      %v1941 = vmul.f32 %v1933, %v394
      %v1942 = vmul.f32 %v1934, %v395
      %v1943 = vmul.f32 %v1935, %v396
      %v1944 = vmul.f32 %v1936, %v397
      %v1945 = vmul.f32 %v1937, %v398
      %v1946 = vmul.f32 %v1938, %v399
      %v1947 = vmul.f32 %v1939, %v400
      %v1948 = vmul.f32 %v1940, %v401
      %v1949 = vadd.f32 %v1907, %v1941
      %v1950 = vadd.f32 %v1908, %v1942
      %v1951 = vadd.f32 %v1909, %v1943
      %v1952 = vadd.f32 %v1910, %v1944
      %v1953 = vadd.f32 %v1911, %v1945
      %v1954 = vadd.f32 %v1912, %v1946
      %v1955 = vadd.f32 %v1913, %v1947
      %v1956 = vadd.f32 %v1914, %v1948
      %v1957 = vrot.slane %v408, 2
      %v1958 = vsel %vm422, %v1957, 0
      %1960 = vmatpush.msra.mxu0 0.0
      %1961 = vmatpush.msra.mxu0 0.0
      %1962 = vmatpush.msra.mxu0 0.0
      %1963 = vmatpush.msra.mxu0 0.0
      %1964 = vmatpush.msra.mxu0 0.0
      %1965 = vmatpush.msra.mxu0 0.0
      %1966 = vmatpush.msra.mxu0 0.0
      %1967 = vmatpush.msra.mxu0 0.0
      %v1968 = vand.u32 %v1956, 4294901760
      %1969 = vmatpush.msra.mxu0 %v1968
      %v1970 = vand.u32 %v1955, 4294901760
      %1971 = vmatpush.msra.mxu0 %v1970
      %v1972 = vand.u32 %v1954, 4294901760
      %1973 = vmatpush.msra.mxu0 %v1972
      %v1974 = vand.u32 %v1953, 4294901760
      %1975 = vmatpush.msra.mxu0 %v1974
      %v1976 = vand.u32 %v1952, 4294901760
      %1977 = vmatpush.msra.mxu0 %v1976
      %v1978 = vand.u32 %v1951, 4294901760
      %1979 = vmatpush.msra.mxu0 %v1978
      %v1980 = vand.u32 %v1950, 4294901760
      %1981 = vmatpush.msra.mxu0 %v1980
      %v1982 = vand.u32 %v1949, 4294901760
      %1983 = vmatpush.msra.mxu0 %v1982
      %v1984 = vand.u32 %v1958, 4294901760
      %v1985 = vsub.f32 %v1958, %v1984
      %v1986 = vand.u32 %v1985, 4294901760
      %v1987 = vsub.f32 %v1985, %v1986
      %v1988 = vand.u32 %v1987, 4294901760
      %1989 = vmatmul.f32.gmra.mxu0 %v1988
      %v1990 = vpop.f32.mrf.mxu0
      %v1991 = vadd.f32 0.0, %v1990
      %1992 = vdwg.mxu0
      %1993 = vmatpush.msra.mxu0 0.0
      %1994 = vmatpush.msra.mxu0 0.0
      %1995 = vmatpush.msra.mxu0 0.0
      %1996 = vmatpush.msra.mxu0 0.0
      %1997 = vmatpush.msra.mxu0 0.0
      %1998 = vmatpush.msra.mxu0 0.0
      %1999 = vmatpush.msra.mxu0 0.0
      %2000 = vmatpush.msra.mxu0 0.0
      %v2001 = vand.u32 %v1956, 4294901760
      %v2002 = vsub.f32 %v1956, %v2001
      %v2003 = vand.u32 %v2002, 4294901760
      %v2004 = vsub.f32 %v2002, %v2003
      %v2005 = vand.u32 %v2004, 4294901760
      %2006 = vmatpush.msra.mxu0 %v2005
      %v2007 = vand.u32 %v1955, 4294901760
      %v2008 = vsub.f32 %v1955, %v2007
      %v2009 = vand.u32 %v2008, 4294901760
      %v2010 = vsub.f32 %v2008, %v2009
      %v2011 = vand.u32 %v2010, 4294901760
      %2012 = vmatpush.msra.mxu0 %v2011
      %v2013 = vand.u32 %v1954, 4294901760
      %v2014 = vsub.f32 %v1954, %v2013
      %v2015 = vand.u32 %v2014, 4294901760
      %v2016 = vsub.f32 %v2014, %v2015
      %v2017 = vand.u32 %v2016, 4294901760
      %2018 = vmatpush.msra.mxu0 %v2017
      %v2019 = vand.u32 %v1953, 4294901760
      %v2020 = vsub.f32 %v1953, %v2019
      %v2021 = vand.u32 %v2020, 4294901760
      %v2022 = vsub.f32 %v2020, %v2021
      %v2023 = vand.u32 %v2022, 4294901760
      %2024 = vmatpush.msra.mxu0 %v2023
      %v2025 = vand.u32 %v1952, 4294901760
      %v2026 = vsub.f32 %v1952, %v2025
      %v2027 = vand.u32 %v2026, 4294901760
      %v2028 = vsub.f32 %v2026, %v2027
      %v2029 = vand.u32 %v2028, 4294901760
      %2030 = vmatpush.msra.mxu0 %v2029
      %v2031 = vand.u32 %v1951, 4294901760
      %v2032 = vsub.f32 %v1951, %v2031
      %v2033 = vand.u32 %v2032, 4294901760
      %v2034 = vsub.f32 %v2032, %v2033
      %v2035 = vand.u32 %v2034, 4294901760
      %2036 = vmatpush.msra.mxu0 %v2035
      %v2037 = vand.u32 %v1950, 4294901760
      %v2038 = vsub.f32 %v1950, %v2037
      %v2039 = vand.u32 %v2038, 4294901760
      %v2040 = vsub.f32 %v2038, %v2039
      %v2041 = vand.u32 %v2040, 4294901760
      %2042 = vmatpush.msra.mxu0 %v2041
      %v2043 = vand.u32 %v1949, 4294901760
      %v2044 = vsub.f32 %v1949, %v2043
      %v2045 = vand.u32 %v2044, 4294901760
      %v2046 = vsub.f32 %v2044, %v2045
      %v2047 = vand.u32 %v2046, 4294901760
      %2048 = vmatpush.msra.mxu0 %v2047
      %v2049 = vand.u32 %v1958, 4294901760
      %2050 = vmatmul.f32.gmra.mxu0 %v2049
      %v2051 = vpop.f32.mrf.mxu0
      %v2052 = vadd.f32 %v1991, %v2051
      %2053 = vdwg.mxu0
      %2054 = vmatpush.msra.mxu0 0.0
      %2055 = vmatpush.msra.mxu0 0.0
      %2056 = vmatpush.msra.mxu0 0.0
      %2057 = vmatpush.msra.mxu0 0.0
      %2058 = vmatpush.msra.mxu0 0.0
      %2059 = vmatpush.msra.mxu0 0.0
      %2060 = vmatpush.msra.mxu0 0.0
      %2061 = vmatpush.msra.mxu0 0.0
      %v2062 = vand.u32 %v1956, 4294901760
      %v2063 = vsub.f32 %v1956, %v2062
      %2064 = vmatpush.msra.mxu0 %v2063
      %v2065 = vand.u32 %v1955, 4294901760
      %v2066 = vsub.f32 %v1955, %v2065
      %2067 = vmatpush.msra.mxu0 %v2066
      %v2068 = vand.u32 %v1954, 4294901760
      %v2069 = vsub.f32 %v1954, %v2068
      %2070 = vmatpush.msra.mxu0 %v2069
      %v2071 = vand.u32 %v1953, 4294901760
      %v2072 = vsub.f32 %v1953, %v2071
      %2073 = vmatpush.msra.mxu0 %v2072
      %v2074 = vand.u32 %v1952, 4294901760
      %v2075 = vsub.f32 %v1952, %v2074
      %2076 = vmatpush.msra.mxu0 %v2075
      %v2077 = vand.u32 %v1951, 4294901760
      %v2078 = vsub.f32 %v1951, %v2077
      %2079 = vmatpush.msra.mxu0 %v2078
      %v2080 = vand.u32 %v1950, 4294901760
      %v2081 = vsub.f32 %v1950, %v2080
      %2082 = vmatpush.msra.mxu0 %v2081
      %v2083 = vand.u32 %v1949, 4294901760
      %v2084 = vsub.f32 %v1949, %v2083
      %2085 = vmatpush.msra.mxu0 %v2084
      %v2086 = vand.u32 %v1958, 4294901760
      %v2087 = vsub.f32 %v1958, %v2086
      %2088 = vmatmul.f32.gmra.mxu0 %v2087
      %v2089 = vpop.f32.mrf.mxu0
      %v2090 = vadd.f32 %v2052, %v2089
      %2091 = vdwg.mxu0
      %2092 = vmatpush.msra.mxu0 0.0
      %2093 = vmatpush.msra.mxu0 0.0
      %2094 = vmatpush.msra.mxu0 0.0
      %2095 = vmatpush.msra.mxu0 0.0
      %2096 = vmatpush.msra.mxu0 0.0
      %2097 = vmatpush.msra.mxu0 0.0
      %2098 = vmatpush.msra.mxu0 0.0
      %2099 = vmatpush.msra.mxu0 0.0
      %v2100 = vand.u32 %v1956, 4294901760
      %2101 = vmatpush.msra.mxu0 %v2100
      %v2102 = vand.u32 %v1955, 4294901760
      %2103 = vmatpush.msra.mxu0 %v2102
      %v2104 = vand.u32 %v1954, 4294901760
      %2105 = vmatpush.msra.mxu0 %v2104
      %v2106 = vand.u32 %v1953, 4294901760
      %2107 = vmatpush.msra.mxu0 %v2106
      %v2108 = vand.u32 %v1952, 4294901760
      %2109 = vmatpush.msra.mxu0 %v2108
      %v2110 = vand.u32 %v1951, 4294901760
      %2111 = vmatpush.msra.mxu0 %v2110
      %v2112 = vand.u32 %v1950, 4294901760
      %2113 = vmatpush.msra.mxu0 %v2112
      %v2114 = vand.u32 %v1949, 4294901760
      %2115 = vmatpush.msra.mxu0 %v2114
      %v2116 = vand.u32 %v1958, 4294901760
      %v2117 = vsub.f32 %v1958, %v2116
      %v2118 = vand.u32 %v2117, 4294901760
      %2119 = vmatmul.f32.gmra.mxu0 %v2118
      %v2120 = vpop.f32.mrf.mxu0
      %v2121 = vadd.f32 %v2090, %v2120
      %2122 = vdwg.mxu0
      %2123 = vmatpush.msra.mxu0 0.0
      %2124 = vmatpush.msra.mxu0 0.0
      %2125 = vmatpush.msra.mxu0 0.0
      %2126 = vmatpush.msra.mxu0 0.0
      %2127 = vmatpush.msra.mxu0 0.0
      %2128 = vmatpush.msra.mxu0 0.0
      %2129 = vmatpush.msra.mxu0 0.0
      %2130 = vmatpush.msra.mxu0 0.0
      %v2131 = vand.u32 %v1956, 4294901760
      %v2132 = vsub.f32 %v1956, %v2131
      %v2133 = vand.u32 %v2132, 4294901760
      %2134 = vmatpush.msra.mxu0 %v2133
      %v2135 = vand.u32 %v1955, 4294901760
      %v2136 = vsub.f32 %v1955, %v2135
      %v2137 = vand.u32 %v2136, 4294901760
      %2138 = vmatpush.msra.mxu0 %v2137
      %v2139 = vand.u32 %v1954, 4294901760
      %v2140 = vsub.f32 %v1954, %v2139
      %v2141 = vand.u32 %v2140, 4294901760
      %2142 = vmatpush.msra.mxu0 %v2141
      %v2143 = vand.u32 %v1953, 4294901760
      %v2144 = vsub.f32 %v1953, %v2143
      %v2145 = vand.u32 %v2144, 4294901760
      %2146 = vmatpush.msra.mxu0 %v2145
      %v2147 = vand.u32 %v1952, 4294901760
      %v2148 = vsub.f32 %v1952, %v2147
      %v2149 = vand.u32 %v2148, 4294901760
      %2150 = vmatpush.msra.mxu0 %v2149
      %v2151 = vand.u32 %v1951, 4294901760
      %v2152 = vsub.f32 %v1951, %v2151
      %v2153 = vand.u32 %v2152, 4294901760
      %2154 = vmatpush.msra.mxu0 %v2153
      %v2155 = vand.u32 %v1950, 4294901760
      %v2156 = vsub.f32 %v1950, %v2155
      %v2157 = vand.u32 %v2156, 4294901760
      %2158 = vmatpush.msra.mxu0 %v2157
      %v2159 = vand.u32 %v1949, 4294901760
      %v2160 = vsub.f32 %v1949, %v2159
      %v2161 = vand.u32 %v2160, 4294901760
      %2162 = vmatpush.msra.mxu0 %v2161
      %v2163 = vand.u32 %v1958, 4294901760
      %2164 = vmatmul.f32.gmra.mxu0 %v2163
      %v2165 = vpop.f32.mrf.mxu0
      %v2166 = vadd.f32 %v2121, %v2165
      %2167 = vdwg.mxu0
      %2168 = vmatpush.msra.mxu0 0.0
      %2169 = vmatpush.msra.mxu0 0.0
      %2170 = vmatpush.msra.mxu0 0.0
      %2171 = vmatpush.msra.mxu0 0.0
      %2172 = vmatpush.msra.mxu0 0.0
      %2173 = vmatpush.msra.mxu0 0.0
      %2174 = vmatpush.msra.mxu0 0.0
      %2175 = vmatpush.msra.mxu0 0.0
      %v2176 = vand.u32 %v1956, 4294901760
      %2177 = vmatpush.msra.mxu0 %v2176
      %v2178 = vand.u32 %v1955, 4294901760
      %2179 = vmatpush.msra.mxu0 %v2178
      %v2180 = vand.u32 %v1954, 4294901760
      %2181 = vmatpush.msra.mxu0 %v2180
      %v2182 = vand.u32 %v1953, 4294901760
      %2183 = vmatpush.msra.mxu0 %v2182
      %v2184 = vand.u32 %v1952, 4294901760
      %2185 = vmatpush.msra.mxu0 %v2184
      %v2186 = vand.u32 %v1951, 4294901760
      %2187 = vmatpush.msra.mxu0 %v2186
      %v2188 = vand.u32 %v1950, 4294901760
      %2189 = vmatpush.msra.mxu0 %v2188
      %v2190 = vand.u32 %v1949, 4294901760
      %2191 = vmatpush.msra.mxu0 %v2190
      %v2192 = vand.u32 %v1958, 4294901760
      %2193 = vmatmul.f32.gmra.mxu0 %v2192
      %v2194 = vpop.f32.mrf.mxu0
      %v2195 = vadd.f32 %v2166, %v2194
      %2196 = vdwg.mxu0
      %v2197 = vperm.slane %v407, 3
      %v2198 = vmul.f32 %v386, %v2197
      %v2199 = vmul.f32 %v387, %v2197
      %v2200 = vmul.f32 %v388, %v2197
      %v2201 = vmul.f32 %v389, %v2197
      %v2202 = vmul.f32 %v390, %v2197
      %v2203 = vmul.f32 %v391, %v2197
      %v2204 = vmul.f32 %v392, %v2197
      %v2205 = vmul.f32 %v393, %v2197
      %v2206 = vsel %vm422, %v2198, 0.0
      %2207 = vadd.xlane.f32.xlu0 %v2206
      %v2208 = vpop.xlane.xlu0 %2207
      %v2209 = vsel %vm422, %v2199, 0.0
      %2210 = vadd.xlane.f32.xlu0 %v2209
      %v2211 = vpop.xlane.xlu0 %2210
      %v2212 = vsel %vm422, %v2200, 0.0
      %2213 = vadd.xlane.f32.xlu0 %v2212
      %v2214 = vpop.xlane.xlu0 %2213
      %v2215 = vsel %vm422, %v2201, 0.0
      %2216 = vadd.xlane.f32.xlu0 %v2215
      %v2217 = vpop.xlane.xlu0 %2216
      %v2218 = vsel %vm422, %v2202, 0.0
      %2219 = vadd.xlane.f32.xlu0 %v2218
      %v2220 = vpop.xlane.xlu0 %2219
      %v2221 = vsel %vm422, %v2203, 0.0
      %2222 = vadd.xlane.f32.xlu0 %v2221
      %v2223 = vpop.xlane.xlu0 %2222
      %v2224 = vsel %vm422, %v2204, 0.0
      %2225 = vadd.xlane.f32.xlu0 %v2224
      %v2226 = vpop.xlane.xlu0 %2225
      %v2227 = vsel %vm422, %v2205, 0.0
      %2228 = vadd.xlane.f32.xlu0 %v2227
      %v2229 = vpop.xlane.xlu0 %2228
      %v2230 = vperm.slane %v409, 3
      %v2231 = vmul.f32 %v386, %v2230
      %v2232 = vmul.f32 %v387, %v2230
      %v2233 = vmul.f32 %v388, %v2230
      %v2234 = vmul.f32 %v389, %v2230
      %v2235 = vmul.f32 %v390, %v2230
      %v2236 = vmul.f32 %v391, %v2230
      %v2237 = vmul.f32 %v392, %v2230
      %v2238 = vmul.f32 %v393, %v2230
      %v2239 = vsel %vm422, %v2231, 0.0
      %2240 = vadd.xlane.f32.xlu0 %v2239
      %v2241 = vpop.xlane.xlu0 %2240
      %v2242 = vsel %vm422, %v2232, 0.0
      %2243 = vadd.xlane.f32.xlu0 %v2242
      %v2244 = vpop.xlane.xlu0 %2243
      %v2245 = vsel %vm422, %v2233, 0.0
      %2246 = vadd.xlane.f32.xlu0 %v2245
      %v2247 = vpop.xlane.xlu0 %2246
      %v2248 = vsel %vm422, %v2234, 0.0
      %2249 = vadd.xlane.f32.xlu0 %v2248
      %v2250 = vpop.xlane.xlu0 %2249
      %v2251 = vsel %vm422, %v2235, 0.0
      %2252 = vadd.xlane.f32.xlu0 %v2251
      %v2253 = vpop.xlane.xlu0 %2252
      %v2254 = vsel %vm422, %v2236, 0.0
      %2255 = vadd.xlane.f32.xlu0 %v2254
      %v2256 = vpop.xlane.xlu0 %2255
      %v2257 = vsel %vm422, %v2237, 0.0
      %2258 = vadd.xlane.f32.xlu0 %v2257
      %v2259 = vpop.xlane.xlu0 %2258
      %v2260 = vsel %vm422, %v2238, 0.0
      %2261 = vadd.xlane.f32.xlu0 %v2260
      %v2262 = vpop.xlane.xlu0 %2261
      %v2263 = vperm.slane %v412, 3
      %v2264 = vmul.f32 %v386, %v2263
      %v2265 = vmul.f32 %v387, %v2263
      %v2266 = vmul.f32 %v388, %v2263
      %v2267 = vmul.f32 %v389, %v2263
      %v2268 = vmul.f32 %v390, %v2263
      %v2269 = vmul.f32 %v391, %v2263
      %v2270 = vmul.f32 %v392, %v2263
      %v2271 = vmul.f32 %v393, %v2263
      %v2272 = vsel %vm422, %v2264, 0.0
      %2273 = vadd.xlane.f32.xlu0 %v2272
      %v2274 = vpop.xlane.xlu0 %2273
      %v2275 = vsel %vm422, %v2265, 0.0
      %2276 = vadd.xlane.f32.xlu0 %v2275
      %v2277 = vpop.xlane.xlu0 %2276
      %v2278 = vsel %vm422, %v2266, 0.0
      %2279 = vadd.xlane.f32.xlu0 %v2278
      %v2280 = vpop.xlane.xlu0 %2279
      %v2281 = vsel %vm422, %v2267, 0.0
      %2282 = vadd.xlane.f32.xlu0 %v2281
      %v2283 = vpop.xlane.xlu0 %2282
      %v2284 = vsel %vm422, %v2268, 0.0
      %2285 = vadd.xlane.f32.xlu0 %v2284
      %v2286 = vpop.xlane.xlu0 %2285
      %v2287 = vsel %vm422, %v2269, 0.0
      %2288 = vadd.xlane.f32.xlu0 %v2287
      %v2289 = vpop.xlane.xlu0 %2288
      %v2290 = vsel %vm422, %v2270, 0.0
      %2291 = vadd.xlane.f32.xlu0 %v2290
      %v2292 = vpop.xlane.xlu0 %2291
      %v2293 = vsel %vm422, %v2271, 0.0
      %2294 = vadd.xlane.f32.xlu0 %v2293
      %v2295 = vpop.xlane.xlu0 %2294
      %v2296 = vrot.slane %v411, 3
      %v2297 = vsel %vm422, %v2296, 0
      %2299 = vmatpush.msra.mxu0 0.0
      %2300 = vmatpush.msra.mxu0 0.0
      %2301 = vmatpush.msra.mxu0 0.0
      %2302 = vmatpush.msra.mxu0 0.0
      %2303 = vmatpush.msra.mxu0 0.0
      %2304 = vmatpush.msra.mxu0 0.0
      %2305 = vmatpush.msra.mxu0 0.0
      %2306 = vmatpush.msra.mxu0 0.0
      %v2307 = vand.u32 %v1956, 4294901760
      %2308 = vmatpush.msra.mxu0 %v2307
      %v2309 = vand.u32 %v1955, 4294901760
      %2310 = vmatpush.msra.mxu0 %v2309
      %v2311 = vand.u32 %v1954, 4294901760
      %2312 = vmatpush.msra.mxu0 %v2311
      %v2313 = vand.u32 %v1953, 4294901760
      %2314 = vmatpush.msra.mxu0 %v2313
      %v2315 = vand.u32 %v1952, 4294901760
      %2316 = vmatpush.msra.mxu0 %v2315
      %v2317 = vand.u32 %v1951, 4294901760
      %2318 = vmatpush.msra.mxu0 %v2317
      %v2319 = vand.u32 %v1950, 4294901760
      %2320 = vmatpush.msra.mxu0 %v2319
      %v2321 = vand.u32 %v1949, 4294901760
      %2322 = vmatpush.msra.mxu0 %v2321
      %v2323 = vand.u32 %v2297, 4294901760
      %v2324 = vsub.f32 %v2297, %v2323
      %v2325 = vand.u32 %v2324, 4294901760
      %v2326 = vsub.f32 %v2324, %v2325
      %v2327 = vand.u32 %v2326, 4294901760
      %2328 = vmatmul.f32.gmra.mxu0 %v2327
      %v2329 = vpop.f32.mrf.mxu0
      %v2330 = vadd.f32 0.0, %v2329
      %2331 = vdwg.mxu0
      %2332 = vmatpush.msra.mxu0 0.0
      %2333 = vmatpush.msra.mxu0 0.0
      %2334 = vmatpush.msra.mxu0 0.0
      %2335 = vmatpush.msra.mxu0 0.0
      %2336 = vmatpush.msra.mxu0 0.0
      %2337 = vmatpush.msra.mxu0 0.0
      %2338 = vmatpush.msra.mxu0 0.0
      %2339 = vmatpush.msra.mxu0 0.0
      %v2340 = vand.u32 %v1956, 4294901760
      %v2341 = vsub.f32 %v1956, %v2340
      %v2342 = vand.u32 %v2341, 4294901760
      %v2343 = vsub.f32 %v2341, %v2342
      %v2344 = vand.u32 %v2343, 4294901760
      %2345 = vmatpush.msra.mxu0 %v2344
      %v2346 = vand.u32 %v1955, 4294901760
      %v2347 = vsub.f32 %v1955, %v2346
      %v2348 = vand.u32 %v2347, 4294901760
      %v2349 = vsub.f32 %v2347, %v2348
      %v2350 = vand.u32 %v2349, 4294901760
      %2351 = vmatpush.msra.mxu0 %v2350
      %v2352 = vand.u32 %v1954, 4294901760
      %v2353 = vsub.f32 %v1954, %v2352
      %v2354 = vand.u32 %v2353, 4294901760
      %v2355 = vsub.f32 %v2353, %v2354
      %v2356 = vand.u32 %v2355, 4294901760
      %2357 = vmatpush.msra.mxu0 %v2356
      %v2358 = vand.u32 %v1953, 4294901760
      %v2359 = vsub.f32 %v1953, %v2358
      %v2360 = vand.u32 %v2359, 4294901760
      %v2361 = vsub.f32 %v2359, %v2360
      %v2362 = vand.u32 %v2361, 4294901760
      %2363 = vmatpush.msra.mxu0 %v2362
      %v2364 = vand.u32 %v1952, 4294901760
      %v2365 = vsub.f32 %v1952, %v2364
      %v2366 = vand.u32 %v2365, 4294901760
      %v2367 = vsub.f32 %v2365, %v2366
      %v2368 = vand.u32 %v2367, 4294901760
      %2369 = vmatpush.msra.mxu0 %v2368
      %v2370 = vand.u32 %v1951, 4294901760
      %v2371 = vsub.f32 %v1951, %v2370
      %v2372 = vand.u32 %v2371, 4294901760
      %v2373 = vsub.f32 %v2371, %v2372
      %v2374 = vand.u32 %v2373, 4294901760
      %2375 = vmatpush.msra.mxu0 %v2374
      %v2376 = vand.u32 %v1950, 4294901760
      %v2377 = vsub.f32 %v1950, %v2376
      %v2378 = vand.u32 %v2377, 4294901760
      %v2379 = vsub.f32 %v2377, %v2378
      %v2380 = vand.u32 %v2379, 4294901760
      %2381 = vmatpush.msra.mxu0 %v2380
      %v2382 = vand.u32 %v1949, 4294901760
      %v2383 = vsub.f32 %v1949, %v2382
      %v2384 = vand.u32 %v2383, 4294901760
      %v2385 = vsub.f32 %v2383, %v2384
      %v2386 = vand.u32 %v2385, 4294901760
      %2387 = vmatpush.msra.mxu0 %v2386
      %v2388 = vand.u32 %v2297, 4294901760
      %2389 = vmatmul.f32.gmra.mxu0 %v2388
      %v2390 = vpop.f32.mrf.mxu0
      %v2391 = vadd.f32 %v2330, %v2390
      %2392 = vdwg.mxu0
      %2393 = vmatpush.msra.mxu0 0.0
      %2394 = vmatpush.msra.mxu0 0.0
      %2395 = vmatpush.msra.mxu0 0.0
      %2396 = vmatpush.msra.mxu0 0.0
      %2397 = vmatpush.msra.mxu0 0.0
      %2398 = vmatpush.msra.mxu0 0.0
      %2399 = vmatpush.msra.mxu0 0.0
      %2400 = vmatpush.msra.mxu0 0.0
      %v2401 = vand.u32 %v1956, 4294901760
      %v2402 = vsub.f32 %v1956, %v2401
      %2403 = vmatpush.msra.mxu0 %v2402
      %v2404 = vand.u32 %v1955, 4294901760
      %v2405 = vsub.f32 %v1955, %v2404
      %2406 = vmatpush.msra.mxu0 %v2405
      %v2407 = vand.u32 %v1954, 4294901760
      %v2408 = vsub.f32 %v1954, %v2407
      %2409 = vmatpush.msra.mxu0 %v2408
      %v2410 = vand.u32 %v1953, 4294901760
      %v2411 = vsub.f32 %v1953, %v2410
      %2412 = vmatpush.msra.mxu0 %v2411
      %v2413 = vand.u32 %v1952, 4294901760
      %v2414 = vsub.f32 %v1952, %v2413
      %2415 = vmatpush.msra.mxu0 %v2414
      %v2416 = vand.u32 %v1951, 4294901760
      %v2417 = vsub.f32 %v1951, %v2416
      %2418 = vmatpush.msra.mxu0 %v2417
      %v2419 = vand.u32 %v1950, 4294901760
      %v2420 = vsub.f32 %v1950, %v2419
      %2421 = vmatpush.msra.mxu0 %v2420
      %v2422 = vand.u32 %v1949, 4294901760
      %v2423 = vsub.f32 %v1949, %v2422
      %2424 = vmatpush.msra.mxu0 %v2423
      %v2425 = vand.u32 %v2297, 4294901760
      %v2426 = vsub.f32 %v2297, %v2425
      %2427 = vmatmul.f32.gmra.mxu0 %v2426
      %v2428 = vpop.f32.mrf.mxu0
      %v2429 = vadd.f32 %v2391, %v2428
      %2430 = vdwg.mxu0
      %2431 = vmatpush.msra.mxu0 0.0
      %2432 = vmatpush.msra.mxu0 0.0
      %2433 = vmatpush.msra.mxu0 0.0
      %2434 = vmatpush.msra.mxu0 0.0
      %2435 = vmatpush.msra.mxu0 0.0
      %2436 = vmatpush.msra.mxu0 0.0
      %2437 = vmatpush.msra.mxu0 0.0
      %2438 = vmatpush.msra.mxu0 0.0
      %v2439 = vand.u32 %v1956, 4294901760
      %2440 = vmatpush.msra.mxu0 %v2439
      %v2441 = vand.u32 %v1955, 4294901760
      %2442 = vmatpush.msra.mxu0 %v2441
      %v2443 = vand.u32 %v1954, 4294901760
      %2444 = vmatpush.msra.mxu0 %v2443
      %v2445 = vand.u32 %v1953, 4294901760
      %2446 = vmatpush.msra.mxu0 %v2445
      %v2447 = vand.u32 %v1952, 4294901760
      %2448 = vmatpush.msra.mxu0 %v2447
      %v2449 = vand.u32 %v1951, 4294901760
      %2450 = vmatpush.msra.mxu0 %v2449
      %v2451 = vand.u32 %v1950, 4294901760
      %2452 = vmatpush.msra.mxu0 %v2451
      %v2453 = vand.u32 %v1949, 4294901760
      %2454 = vmatpush.msra.mxu0 %v2453
      %v2455 = vand.u32 %v2297, 4294901760
      %v2456 = vsub.f32 %v2297, %v2455
      %v2457 = vand.u32 %v2456, 4294901760
      %2458 = vmatmul.f32.gmra.mxu0 %v2457
      %v2459 = vpop.f32.mrf.mxu0
      %v2460 = vadd.f32 %v2429, %v2459
      %2461 = vdwg.mxu0
      %2462 = vmatpush.msra.mxu0 0.0
      %2463 = vmatpush.msra.mxu0 0.0
      %2464 = vmatpush.msra.mxu0 0.0
      %2465 = vmatpush.msra.mxu0 0.0
      %2466 = vmatpush.msra.mxu0 0.0
      %2467 = vmatpush.msra.mxu0 0.0
      %2468 = vmatpush.msra.mxu0 0.0
      %2469 = vmatpush.msra.mxu0 0.0
      %v2470 = vand.u32 %v1956, 4294901760
      %v2471 = vsub.f32 %v1956, %v2470
      %v2472 = vand.u32 %v2471, 4294901760
      %2473 = vmatpush.msra.mxu0 %v2472
      %v2474 = vand.u32 %v1955, 4294901760
      %v2475 = vsub.f32 %v1955, %v2474
      %v2476 = vand.u32 %v2475, 4294901760
      %2477 = vmatpush.msra.mxu0 %v2476
      %v2478 = vand.u32 %v1954, 4294901760
      %v2479 = vsub.f32 %v1954, %v2478
      %v2480 = vand.u32 %v2479, 4294901760
      %2481 = vmatpush.msra.mxu0 %v2480
      %v2482 = vand.u32 %v1953, 4294901760
      %v2483 = vsub.f32 %v1953, %v2482
      %v2484 = vand.u32 %v2483, 4294901760
      %2485 = vmatpush.msra.mxu0 %v2484
      %v2486 = vand.u32 %v1952, 4294901760
      %v2487 = vsub.f32 %v1952, %v2486
      %v2488 = vand.u32 %v2487, 4294901760
      %2489 = vmatpush.msra.mxu0 %v2488
      %v2490 = vand.u32 %v1951, 4294901760
      %v2491 = vsub.f32 %v1951, %v2490
      %v2492 = vand.u32 %v2491, 4294901760
      %2493 = vmatpush.msra.mxu0 %v2492
      %v2494 = vand.u32 %v1950, 4294901760
      %v2495 = vsub.f32 %v1950, %v2494
      %v2496 = vand.u32 %v2495, 4294901760
      %2497 = vmatpush.msra.mxu0 %v2496
      %v2498 = vand.u32 %v1949, 4294901760
      %v2499 = vsub.f32 %v1949, %v2498
      %v2500 = vand.u32 %v2499, 4294901760
      %2501 = vmatpush.msra.mxu0 %v2500
      %v2502 = vand.u32 %v2297, 4294901760
      %2503 = vmatmul.f32.gmra.mxu0 %v2502
      %v2504 = vpop.f32.mrf.mxu0
      %v2505 = vadd.f32 %v2460, %v2504
      %2506 = vdwg.mxu0
      %2507 = vmatpush.msra.mxu0 0.0
      %2508 = vmatpush.msra.mxu0 0.0
      %2509 = vmatpush.msra.mxu0 0.0
      %2510 = vmatpush.msra.mxu0 0.0
      %2511 = vmatpush.msra.mxu0 0.0
      %2512 = vmatpush.msra.mxu0 0.0
      %2513 = vmatpush.msra.mxu0 0.0
      %2514 = vmatpush.msra.mxu0 0.0
      %v2515 = vand.u32 %v1956, 4294901760
      %2516 = vmatpush.msra.mxu0 %v2515
      %v2517 = vand.u32 %v1955, 4294901760
      %2518 = vmatpush.msra.mxu0 %v2517
      %v2519 = vand.u32 %v1954, 4294901760
      %2520 = vmatpush.msra.mxu0 %v2519
      %v2521 = vand.u32 %v1953, 4294901760
      %2522 = vmatpush.msra.mxu0 %v2521
      %v2523 = vand.u32 %v1952, 4294901760
      %2524 = vmatpush.msra.mxu0 %v2523
      %v2525 = vand.u32 %v1951, 4294901760
      %2526 = vmatpush.msra.mxu0 %v2525
      %v2527 = vand.u32 %v1950, 4294901760
      %2528 = vmatpush.msra.mxu0 %v2527
      %v2529 = vand.u32 %v1949, 4294901760
      %2530 = vmatpush.msra.mxu0 %v2529
      %v2531 = vand.u32 %v2297, 4294901760
      %2532 = vmatmul.f32.gmra.mxu0 %v2531
      %v2533 = vpop.f32.mrf.mxu0
      %v2534 = vadd.f32 %v2505, %v2533
      %2535 = vdwg.mxu0
      %v2536 = vmul.f32 %v1949, %v2208
      %v2537 = vmul.f32 %v1950, %v2211
      %v2538 = vmul.f32 %v1951, %v2214
      %v2539 = vmul.f32 %v1952, %v2217
      %v2540 = vmul.f32 %v1953, %v2220
      %v2541 = vmul.f32 %v1954, %v2223
      %v2542 = vmul.f32 %v1955, %v2226
      %v2543 = vmul.f32 %v1956, %v2229
      %v2544 = vperm.slane %v2534, 0
      %v2545 = vmul.f32 %v2274, %v2544
      %v2546 = vmul.f32 %v2277, %v2544
      %v2547 = vmul.f32 %v2280, %v2544
      %v2548 = vmul.f32 %v2283, %v2544
      %v2549 = vmul.f32 %v2286, %v2544
      %v2550 = vmul.f32 %v2289, %v2544
      %v2551 = vmul.f32 %v2292, %v2544
      %v2552 = vmul.f32 %v2295, %v2544
      %v2553 = vperm.slane %v410, 3
      %v2554 = vmul.f32 %v2241, %v2553
      %v2555 = vmul.f32 %v2244, %v2553
      %v2556 = vmul.f32 %v2247, %v2553
      %v2557 = vmul.f32 %v2250, %v2553
      %v2558 = vmul.f32 %v2253, %v2553
      %v2559 = vmul.f32 %v2256, %v2553
      %v2560 = vmul.f32 %v2259, %v2553
      %v2561 = vmul.f32 %v2262, %v2553
      %v2562 = vadd.f32 %v2545, %v2554
      %v2563 = vadd.f32 %v2546, %v2555
      %v2564 = vadd.f32 %v2547, %v2556
      %v2565 = vadd.f32 %v2548, %v2557
      %v2566 = vadd.f32 %v2549, %v2558
      %v2567 = vadd.f32 %v2550, %v2559
      %v2568 = vadd.f32 %v2551, %v2560
      %v2569 = vadd.f32 %v2552, %v2561
      %v2570 = vmul.f32 %v2562, %v394
      %v2571 = vmul.f32 %v2563, %v395
      %v2572 = vmul.f32 %v2564, %v396
      %v2573 = vmul.f32 %v2565, %v397
      %v2574 = vmul.f32 %v2566, %v398
      %v2575 = vmul.f32 %v2567, %v399
      %v2576 = vmul.f32 %v2568, %v400
      %v2577 = vmul.f32 %v2569, %v401
      %v2578 = vadd.f32 %v2536, %v2570
      %v2579 = vadd.f32 %v2537, %v2571
      %v2580 = vadd.f32 %v2538, %v2572
      %v2581 = vadd.f32 %v2539, %v2573
      %v2582 = vadd.f32 %v2540, %v2574
      %v2583 = vadd.f32 %v2541, %v2575
      %v2584 = vadd.f32 %v2542, %v2576
      %v2585 = vadd.f32 %v2543, %v2577
      %v2586 = vrot.slane %v408, 3
      %v2587 = vsel %vm422, %v2586, 0
      %2589 = vmatpush.msra.mxu0 0.0
      %2590 = vmatpush.msra.mxu0 0.0
      %2591 = vmatpush.msra.mxu0 0.0
      %2592 = vmatpush.msra.mxu0 0.0
      %2593 = vmatpush.msra.mxu0 0.0
      %2594 = vmatpush.msra.mxu0 0.0
      %2595 = vmatpush.msra.mxu0 0.0
      %2596 = vmatpush.msra.mxu0 0.0
      %v2597 = vand.u32 %v2585, 4294901760
      %2598 = vmatpush.msra.mxu0 %v2597
      %v2599 = vand.u32 %v2584, 4294901760
      %2600 = vmatpush.msra.mxu0 %v2599
      %v2601 = vand.u32 %v2583, 4294901760
      %2602 = vmatpush.msra.mxu0 %v2601
      %v2603 = vand.u32 %v2582, 4294901760
      %2604 = vmatpush.msra.mxu0 %v2603
      %v2605 = vand.u32 %v2581, 4294901760
      %2606 = vmatpush.msra.mxu0 %v2605
      %v2607 = vand.u32 %v2580, 4294901760
      %2608 = vmatpush.msra.mxu0 %v2607
      %v2609 = vand.u32 %v2579, 4294901760
      %2610 = vmatpush.msra.mxu0 %v2609
      %v2611 = vand.u32 %v2578, 4294901760
      %2612 = vmatpush.msra.mxu0 %v2611
      %v2613 = vand.u32 %v2587, 4294901760
      %v2614 = vsub.f32 %v2587, %v2613
      %v2615 = vand.u32 %v2614, 4294901760
      %v2616 = vsub.f32 %v2614, %v2615
      %v2617 = vand.u32 %v2616, 4294901760
      %2618 = vmatmul.f32.gmra.mxu0 %v2617
      %v2619 = vpop.f32.mrf.mxu0
      %v2620 = vadd.f32 0.0, %v2619
      %2621 = vdwg.mxu0
      %2622 = vmatpush.msra.mxu0 0.0
      %2623 = vmatpush.msra.mxu0 0.0
      %2624 = vmatpush.msra.mxu0 0.0
      %2625 = vmatpush.msra.mxu0 0.0
      %2626 = vmatpush.msra.mxu0 0.0
      %2627 = vmatpush.msra.mxu0 0.0
      %2628 = vmatpush.msra.mxu0 0.0
      %2629 = vmatpush.msra.mxu0 0.0
      %v2630 = vand.u32 %v2585, 4294901760
      %v2631 = vsub.f32 %v2585, %v2630
      %v2632 = vand.u32 %v2631, 4294901760
      %v2633 = vsub.f32 %v2631, %v2632
      %v2634 = vand.u32 %v2633, 4294901760
      %2635 = vmatpush.msra.mxu0 %v2634
      %v2636 = vand.u32 %v2584, 4294901760
      %v2637 = vsub.f32 %v2584, %v2636
      %v2638 = vand.u32 %v2637, 4294901760
      %v2639 = vsub.f32 %v2637, %v2638
      %v2640 = vand.u32 %v2639, 4294901760
      %2641 = vmatpush.msra.mxu0 %v2640
      %v2642 = vand.u32 %v2583, 4294901760
      %v2643 = vsub.f32 %v2583, %v2642
      %v2644 = vand.u32 %v2643, 4294901760
      %v2645 = vsub.f32 %v2643, %v2644
      %v2646 = vand.u32 %v2645, 4294901760
      %2647 = vmatpush.msra.mxu0 %v2646
      %v2648 = vand.u32 %v2582, 4294901760
      %v2649 = vsub.f32 %v2582, %v2648
      %v2650 = vand.u32 %v2649, 4294901760
      %v2651 = vsub.f32 %v2649, %v2650
      %v2652 = vand.u32 %v2651, 4294901760
      %2653 = vmatpush.msra.mxu0 %v2652
      %v2654 = vand.u32 %v2581, 4294901760
      %v2655 = vsub.f32 %v2581, %v2654
      %v2656 = vand.u32 %v2655, 4294901760
      %v2657 = vsub.f32 %v2655, %v2656
      %v2658 = vand.u32 %v2657, 4294901760
      %2659 = vmatpush.msra.mxu0 %v2658
      %v2660 = vand.u32 %v2580, 4294901760
      %v2661 = vsub.f32 %v2580, %v2660
      %v2662 = vand.u32 %v2661, 4294901760
      %v2663 = vsub.f32 %v2661, %v2662
      %v2664 = vand.u32 %v2663, 4294901760
      %2665 = vmatpush.msra.mxu0 %v2664
      %v2666 = vand.u32 %v2579, 4294901760
      %v2667 = vsub.f32 %v2579, %v2666
      %v2668 = vand.u32 %v2667, 4294901760
      %v2669 = vsub.f32 %v2667, %v2668
      %v2670 = vand.u32 %v2669, 4294901760
      %2671 = vmatpush.msra.mxu0 %v2670
      %v2672 = vand.u32 %v2578, 4294901760
      %v2673 = vsub.f32 %v2578, %v2672
      %v2674 = vand.u32 %v2673, 4294901760
      %v2675 = vsub.f32 %v2673, %v2674
      %v2676 = vand.u32 %v2675, 4294901760
      %2677 = vmatpush.msra.mxu0 %v2676
      %v2678 = vand.u32 %v2587, 4294901760
      %2679 = vmatmul.f32.gmra.mxu0 %v2678
      %v2680 = vpop.f32.mrf.mxu0
      %v2681 = vadd.f32 %v2620, %v2680
      %2682 = vdwg.mxu0
      %2683 = vmatpush.msra.mxu0 0.0
      %2684 = vmatpush.msra.mxu0 0.0
      %2685 = vmatpush.msra.mxu0 0.0
      %2686 = vmatpush.msra.mxu0 0.0
      %2687 = vmatpush.msra.mxu0 0.0
      %2688 = vmatpush.msra.mxu0 0.0
      %2689 = vmatpush.msra.mxu0 0.0
      %2690 = vmatpush.msra.mxu0 0.0
      %v2691 = vand.u32 %v2585, 4294901760
      %v2692 = vsub.f32 %v2585, %v2691
      %2693 = vmatpush.msra.mxu0 %v2692
      %v2694 = vand.u32 %v2584, 4294901760
      %v2695 = vsub.f32 %v2584, %v2694
      %2696 = vmatpush.msra.mxu0 %v2695
      %v2697 = vand.u32 %v2583, 4294901760
      %v2698 = vsub.f32 %v2583, %v2697
      %2699 = vmatpush.msra.mxu0 %v2698
      %v2700 = vand.u32 %v2582, 4294901760
      %v2701 = vsub.f32 %v2582, %v2700
      %2702 = vmatpush.msra.mxu0 %v2701
      %v2703 = vand.u32 %v2581, 4294901760
      %v2704 = vsub.f32 %v2581, %v2703
      %2705 = vmatpush.msra.mxu0 %v2704
      %v2706 = vand.u32 %v2580, 4294901760
      %v2707 = vsub.f32 %v2580, %v2706
      %2708 = vmatpush.msra.mxu0 %v2707
      %v2709 = vand.u32 %v2579, 4294901760
      %v2710 = vsub.f32 %v2579, %v2709
      %2711 = vmatpush.msra.mxu0 %v2710
      %v2712 = vand.u32 %v2578, 4294901760
      %v2713 = vsub.f32 %v2578, %v2712
      %2714 = vmatpush.msra.mxu0 %v2713
      %v2715 = vand.u32 %v2587, 4294901760
      %v2716 = vsub.f32 %v2587, %v2715
      %2717 = vmatmul.f32.gmra.mxu0 %v2716
      %v2718 = vpop.f32.mrf.mxu0
      %v2719 = vadd.f32 %v2681, %v2718
      %2720 = vdwg.mxu0
      %2721 = vmatpush.msra.mxu0 0.0
      %2722 = vmatpush.msra.mxu0 0.0
      %2723 = vmatpush.msra.mxu0 0.0
      %2724 = vmatpush.msra.mxu0 0.0
      %2725 = vmatpush.msra.mxu0 0.0
      %2726 = vmatpush.msra.mxu0 0.0
      %2727 = vmatpush.msra.mxu0 0.0
      %2728 = vmatpush.msra.mxu0 0.0
      %v2729 = vand.u32 %v2585, 4294901760
      %2730 = vmatpush.msra.mxu0 %v2729
      %v2731 = vand.u32 %v2584, 4294901760
      %2732 = vmatpush.msra.mxu0 %v2731
      %v2733 = vand.u32 %v2583, 4294901760
      %2734 = vmatpush.msra.mxu0 %v2733
      %v2735 = vand.u32 %v2582, 4294901760
      %2736 = vmatpush.msra.mxu0 %v2735
      %v2737 = vand.u32 %v2581, 4294901760
      %2738 = vmatpush.msra.mxu0 %v2737
      %v2739 = vand.u32 %v2580, 4294901760
      %2740 = vmatpush.msra.mxu0 %v2739
      %v2741 = vand.u32 %v2579, 4294901760
      %2742 = vmatpush.msra.mxu0 %v2741
      %v2743 = vand.u32 %v2578, 4294901760
      %2744 = vmatpush.msra.mxu0 %v2743
      %v2745 = vand.u32 %v2587, 4294901760
      %v2746 = vsub.f32 %v2587, %v2745
      %v2747 = vand.u32 %v2746, 4294901760
      %2748 = vmatmul.f32.gmra.mxu0 %v2747
      %v2749 = vpop.f32.mrf.mxu0
      %v2750 = vadd.f32 %v2719, %v2749
      %2751 = vdwg.mxu0
      %2752 = vmatpush.msra.mxu0 0.0
      %2753 = vmatpush.msra.mxu0 0.0
      %2754 = vmatpush.msra.mxu0 0.0
      %2755 = vmatpush.msra.mxu0 0.0
      %2756 = vmatpush.msra.mxu0 0.0
      %2757 = vmatpush.msra.mxu0 0.0
      %2758 = vmatpush.msra.mxu0 0.0
      %2759 = vmatpush.msra.mxu0 0.0
      %v2760 = vand.u32 %v2585, 4294901760
      %v2761 = vsub.f32 %v2585, %v2760
      %v2762 = vand.u32 %v2761, 4294901760
      %2763 = vmatpush.msra.mxu0 %v2762
      %v2764 = vand.u32 %v2584, 4294901760
      %v2765 = vsub.f32 %v2584, %v2764
      %v2766 = vand.u32 %v2765, 4294901760
      %2767 = vmatpush.msra.mxu0 %v2766
      %v2768 = vand.u32 %v2583, 4294901760
      %v2769 = vsub.f32 %v2583, %v2768
      %v2770 = vand.u32 %v2769, 4294901760
      %2771 = vmatpush.msra.mxu0 %v2770
      %v2772 = vand.u32 %v2582, 4294901760
      %v2773 = vsub.f32 %v2582, %v2772
      %v2774 = vand.u32 %v2773, 4294901760
      %2775 = vmatpush.msra.mxu0 %v2774
      %v2776 = vand.u32 %v2581, 4294901760
      %v2777 = vsub.f32 %v2581, %v2776
      %v2778 = vand.u32 %v2777, 4294901760
      %2779 = vmatpush.msra.mxu0 %v2778
      %v2780 = vand.u32 %v2580, 4294901760
      %v2781 = vsub.f32 %v2580, %v2780
      %v2782 = vand.u32 %v2781, 4294901760
      %2783 = vmatpush.msra.mxu0 %v2782
      %v2784 = vand.u32 %v2579, 4294901760
      %v2785 = vsub.f32 %v2579, %v2784
      %v2786 = vand.u32 %v2785, 4294901760
      %2787 = vmatpush.msra.mxu0 %v2786
      %v2788 = vand.u32 %v2578, 4294901760
      %v2789 = vsub.f32 %v2578, %v2788
      %v2790 = vand.u32 %v2789, 4294901760
      %2791 = vmatpush.msra.mxu0 %v2790
      %v2792 = vand.u32 %v2587, 4294901760
      %2793 = vmatmul.f32.gmra.mxu0 %v2792
      %v2794 = vpop.f32.mrf.mxu0
      %v2795 = vadd.f32 %v2750, %v2794
      %2796 = vdwg.mxu0
      %2797 = vmatpush.msra.mxu0 0.0
      %2798 = vmatpush.msra.mxu0 0.0
      %2799 = vmatpush.msra.mxu0 0.0
      %2800 = vmatpush.msra.mxu0 0.0
      %2801 = vmatpush.msra.mxu0 0.0
      %2802 = vmatpush.msra.mxu0 0.0
      %2803 = vmatpush.msra.mxu0 0.0
      %2804 = vmatpush.msra.mxu0 0.0
      %v2805 = vand.u32 %v2585, 4294901760
      %2806 = vmatpush.msra.mxu0 %v2805
      %v2807 = vand.u32 %v2584, 4294901760
      %2808 = vmatpush.msra.mxu0 %v2807
      %v2809 = vand.u32 %v2583, 4294901760
      %2810 = vmatpush.msra.mxu0 %v2809
      %v2811 = vand.u32 %v2582, 4294901760
      %2812 = vmatpush.msra.mxu0 %v2811
      %v2813 = vand.u32 %v2581, 4294901760
      %2814 = vmatpush.msra.mxu0 %v2813
      %v2815 = vand.u32 %v2580, 4294901760
      %2816 = vmatpush.msra.mxu0 %v2815
      %v2817 = vand.u32 %v2579, 4294901760
      %2818 = vmatpush.msra.mxu0 %v2817
      %v2819 = vand.u32 %v2578, 4294901760
      %2820 = vmatpush.msra.mxu0 %v2819
      %v2821 = vand.u32 %v2587, 4294901760
      %2822 = vmatmul.f32.gmra.mxu0 %v2821
      %v2823 = vpop.f32.mrf.mxu0
      %v2824 = vadd.f32 %v2795, %v2823
      %2825 = vdwg.mxu0
      %v2826 = vperm.slane %v407, 4
      %v2827 = vmul.f32 %v386, %v2826
      %v2828 = vmul.f32 %v387, %v2826
      %v2829 = vmul.f32 %v388, %v2826
      %v2830 = vmul.f32 %v389, %v2826
      %v2831 = vmul.f32 %v390, %v2826
      %v2832 = vmul.f32 %v391, %v2826
      %v2833 = vmul.f32 %v392, %v2826
      %v2834 = vmul.f32 %v393, %v2826
      %v2835 = vsel %vm422, %v2827, 0.0
      %2836 = vadd.xlane.f32.xlu0 %v2835
      %v2837 = vpop.xlane.xlu0 %2836
      %v2838 = vsel %vm422, %v2828, 0.0
      %2839 = vadd.xlane.f32.xlu0 %v2838
      %v2840 = vpop.xlane.xlu0 %2839
      %v2841 = vsel %vm422, %v2829, 0.0
      %2842 = vadd.xlane.f32.xlu0 %v2841
      %v2843 = vpop.xlane.xlu0 %2842
      %v2844 = vsel %vm422, %v2830, 0.0
      %2845 = vadd.xlane.f32.xlu0 %v2844
      %v2846 = vpop.xlane.xlu0 %2845
      %v2847 = vsel %vm422, %v2831, 0.0
      %2848 = vadd.xlane.f32.xlu0 %v2847
      %v2849 = vpop.xlane.xlu0 %2848
      %v2850 = vsel %vm422, %v2832, 0.0
      %2851 = vadd.xlane.f32.xlu0 %v2850
      %v2852 = vpop.xlane.xlu0 %2851
      %v2853 = vsel %vm422, %v2833, 0.0
      %2854 = vadd.xlane.f32.xlu0 %v2853
      %v2855 = vpop.xlane.xlu0 %2854
      %v2856 = vsel %vm422, %v2834, 0.0
      %2857 = vadd.xlane.f32.xlu0 %v2856
      %v2858 = vpop.xlane.xlu0 %2857
      %v2859 = vperm.slane %v409, 4
      %v2860 = vmul.f32 %v386, %v2859
      %v2861 = vmul.f32 %v387, %v2859
      %v2862 = vmul.f32 %v388, %v2859
      %v2863 = vmul.f32 %v389, %v2859
      %v2864 = vmul.f32 %v390, %v2859
      %v2865 = vmul.f32 %v391, %v2859
      %v2866 = vmul.f32 %v392, %v2859
      %v2867 = vmul.f32 %v393, %v2859
      %v2868 = vsel %vm422, %v2860, 0.0
      %2869 = vadd.xlane.f32.xlu0 %v2868
      %v2870 = vpop.xlane.xlu0 %2869
      %v2871 = vsel %vm422, %v2861, 0.0
      %2872 = vadd.xlane.f32.xlu0 %v2871
      %v2873 = vpop.xlane.xlu0 %2872
      %v2874 = vsel %vm422, %v2862, 0.0
      %2875 = vadd.xlane.f32.xlu0 %v2874
      %v2876 = vpop.xlane.xlu0 %2875
      %v2877 = vsel %vm422, %v2863, 0.0
      %2878 = vadd.xlane.f32.xlu0 %v2877
      %v2879 = vpop.xlane.xlu0 %2878
      %v2880 = vsel %vm422, %v2864, 0.0
      %2881 = vadd.xlane.f32.xlu0 %v2880
      %v2882 = vpop.xlane.xlu0 %2881
      %v2883 = vsel %vm422, %v2865, 0.0
      %2884 = vadd.xlane.f32.xlu0 %v2883
      %v2885 = vpop.xlane.xlu0 %2884
      %v2886 = vsel %vm422, %v2866, 0.0
      %2887 = vadd.xlane.f32.xlu0 %v2886
      %v2888 = vpop.xlane.xlu0 %2887
      %v2889 = vsel %vm422, %v2867, 0.0
      %2890 = vadd.xlane.f32.xlu0 %v2889
      %v2891 = vpop.xlane.xlu0 %2890
      %v2892 = vperm.slane %v412, 4
      %v2893 = vmul.f32 %v386, %v2892
      %v2894 = vmul.f32 %v387, %v2892
      %v2895 = vmul.f32 %v388, %v2892
      %v2896 = vmul.f32 %v389, %v2892
      %v2897 = vmul.f32 %v390, %v2892
      %v2898 = vmul.f32 %v391, %v2892
      %v2899 = vmul.f32 %v392, %v2892
      %v2900 = vmul.f32 %v393, %v2892
      %v2901 = vsel %vm422, %v2893, 0.0
      %2902 = vadd.xlane.f32.xlu0 %v2901
      %v2903 = vpop.xlane.xlu0 %2902
      %v2904 = vsel %vm422, %v2894, 0.0
      %2905 = vadd.xlane.f32.xlu0 %v2904
      %v2906 = vpop.xlane.xlu0 %2905
      %v2907 = vsel %vm422, %v2895, 0.0
      %2908 = vadd.xlane.f32.xlu0 %v2907
      %v2909 = vpop.xlane.xlu0 %2908
      %v2910 = vsel %vm422, %v2896, 0.0
      %2911 = vadd.xlane.f32.xlu0 %v2910
      %v2912 = vpop.xlane.xlu0 %2911
      %v2913 = vsel %vm422, %v2897, 0.0
      %2914 = vadd.xlane.f32.xlu0 %v2913
      %v2915 = vpop.xlane.xlu0 %2914
      %v2916 = vsel %vm422, %v2898, 0.0
      %2917 = vadd.xlane.f32.xlu0 %v2916
      %v2918 = vpop.xlane.xlu0 %2917
      %v2919 = vsel %vm422, %v2899, 0.0
      %2920 = vadd.xlane.f32.xlu0 %v2919
      %v2921 = vpop.xlane.xlu0 %2920
      %v2922 = vsel %vm422, %v2900, 0.0
      %2923 = vadd.xlane.f32.xlu0 %v2922
      %v2924 = vpop.xlane.xlu0 %2923
      %v2925 = vrot.slane %v411, 4
      %v2926 = vsel %vm422, %v2925, 0
      %2928 = vmatpush.msra.mxu0 0.0
      %2929 = vmatpush.msra.mxu0 0.0
      %2930 = vmatpush.msra.mxu0 0.0
      %2931 = vmatpush.msra.mxu0 0.0
      %2932 = vmatpush.msra.mxu0 0.0
      %2933 = vmatpush.msra.mxu0 0.0
      %2934 = vmatpush.msra.mxu0 0.0
      %2935 = vmatpush.msra.mxu0 0.0
      %v2936 = vand.u32 %v2585, 4294901760
      %2937 = vmatpush.msra.mxu0 %v2936
      %v2938 = vand.u32 %v2584, 4294901760
      %2939 = vmatpush.msra.mxu0 %v2938
      %v2940 = vand.u32 %v2583, 4294901760
      %2941 = vmatpush.msra.mxu0 %v2940
      %v2942 = vand.u32 %v2582, 4294901760
      %2943 = vmatpush.msra.mxu0 %v2942
      %v2944 = vand.u32 %v2581, 4294901760
      %2945 = vmatpush.msra.mxu0 %v2944
      %v2946 = vand.u32 %v2580, 4294901760
      %2947 = vmatpush.msra.mxu0 %v2946
      %v2948 = vand.u32 %v2579, 4294901760
      %2949 = vmatpush.msra.mxu0 %v2948
      %v2950 = vand.u32 %v2578, 4294901760
      %2951 = vmatpush.msra.mxu0 %v2950
      %v2952 = vand.u32 %v2926, 4294901760
      %v2953 = vsub.f32 %v2926, %v2952
      %v2954 = vand.u32 %v2953, 4294901760
      %v2955 = vsub.f32 %v2953, %v2954
      %v2956 = vand.u32 %v2955, 4294901760
      %2957 = vmatmul.f32.gmra.mxu0 %v2956
      %v2958 = vpop.f32.mrf.mxu0
      %v2959 = vadd.f32 0.0, %v2958
      %2960 = vdwg.mxu0
      %2961 = vmatpush.msra.mxu0 0.0
      %2962 = vmatpush.msra.mxu0 0.0
      %2963 = vmatpush.msra.mxu0 0.0
      %2964 = vmatpush.msra.mxu0 0.0
      %2965 = vmatpush.msra.mxu0 0.0
      %2966 = vmatpush.msra.mxu0 0.0
      %2967 = vmatpush.msra.mxu0 0.0
      %2968 = vmatpush.msra.mxu0 0.0
      %v2969 = vand.u32 %v2585, 4294901760
      %v2970 = vsub.f32 %v2585, %v2969
      %v2971 = vand.u32 %v2970, 4294901760
      %v2972 = vsub.f32 %v2970, %v2971
      %v2973 = vand.u32 %v2972, 4294901760
      %2974 = vmatpush.msra.mxu0 %v2973
      %v2975 = vand.u32 %v2584, 4294901760
      %v2976 = vsub.f32 %v2584, %v2975
      %v2977 = vand.u32 %v2976, 4294901760
      %v2978 = vsub.f32 %v2976, %v2977
      %v2979 = vand.u32 %v2978, 4294901760
      %2980 = vmatpush.msra.mxu0 %v2979
      %v2981 = vand.u32 %v2583, 4294901760
      %v2982 = vsub.f32 %v2583, %v2981
      %v2983 = vand.u32 %v2982, 4294901760
      %v2984 = vsub.f32 %v2982, %v2983
      %v2985 = vand.u32 %v2984, 4294901760
      %2986 = vmatpush.msra.mxu0 %v2985
      %v2987 = vand.u32 %v2582, 4294901760
      %v2988 = vsub.f32 %v2582, %v2987
      %v2989 = vand.u32 %v2988, 4294901760
      %v2990 = vsub.f32 %v2988, %v2989
      %v2991 = vand.u32 %v2990, 4294901760
      %2992 = vmatpush.msra.mxu0 %v2991
      %v2993 = vand.u32 %v2581, 4294901760
      %v2994 = vsub.f32 %v2581, %v2993
      %v2995 = vand.u32 %v2994, 4294901760
      %v2996 = vsub.f32 %v2994, %v2995
      %v2997 = vand.u32 %v2996, 4294901760
      %2998 = vmatpush.msra.mxu0 %v2997
      %v2999 = vand.u32 %v2580, 4294901760
      %v3000 = vsub.f32 %v2580, %v2999
      %v3001 = vand.u32 %v3000, 4294901760
      %v3002 = vsub.f32 %v3000, %v3001
      %v3003 = vand.u32 %v3002, 4294901760
      %3004 = vmatpush.msra.mxu0 %v3003
      %v3005 = vand.u32 %v2579, 4294901760
      %v3006 = vsub.f32 %v2579, %v3005
      %v3007 = vand.u32 %v3006, 4294901760
      %v3008 = vsub.f32 %v3006, %v3007
      %v3009 = vand.u32 %v3008, 4294901760
      %3010 = vmatpush.msra.mxu0 %v3009
      %v3011 = vand.u32 %v2578, 4294901760
      %v3012 = vsub.f32 %v2578, %v3011
      %v3013 = vand.u32 %v3012, 4294901760
      %v3014 = vsub.f32 %v3012, %v3013
      %v3015 = vand.u32 %v3014, 4294901760
      %3016 = vmatpush.msra.mxu0 %v3015
      %v3017 = vand.u32 %v2926, 4294901760
      %3018 = vmatmul.f32.gmra.mxu0 %v3017
      %v3019 = vpop.f32.mrf.mxu0
      %v3020 = vadd.f32 %v2959, %v3019
      %3021 = vdwg.mxu0
      %3022 = vmatpush.msra.mxu0 0.0
      %3023 = vmatpush.msra.mxu0 0.0
      %3024 = vmatpush.msra.mxu0 0.0
      %3025 = vmatpush.msra.mxu0 0.0
      %3026 = vmatpush.msra.mxu0 0.0
      %3027 = vmatpush.msra.mxu0 0.0
      %3028 = vmatpush.msra.mxu0 0.0
      %3029 = vmatpush.msra.mxu0 0.0
      %v3030 = vand.u32 %v2585, 4294901760
      %v3031 = vsub.f32 %v2585, %v3030
      %3032 = vmatpush.msra.mxu0 %v3031
      %v3033 = vand.u32 %v2584, 4294901760
      %v3034 = vsub.f32 %v2584, %v3033
      %3035 = vmatpush.msra.mxu0 %v3034
      %v3036 = vand.u32 %v2583, 4294901760
      %v3037 = vsub.f32 %v2583, %v3036
      %3038 = vmatpush.msra.mxu0 %v3037
      %v3039 = vand.u32 %v2582, 4294901760
      %v3040 = vsub.f32 %v2582, %v3039
      %3041 = vmatpush.msra.mxu0 %v3040
      %v3042 = vand.u32 %v2581, 4294901760
      %v3043 = vsub.f32 %v2581, %v3042
      %3044 = vmatpush.msra.mxu0 %v3043
      %v3045 = vand.u32 %v2580, 4294901760
      %v3046 = vsub.f32 %v2580, %v3045
      %3047 = vmatpush.msra.mxu0 %v3046
      %v3048 = vand.u32 %v2579, 4294901760
      %v3049 = vsub.f32 %v2579, %v3048
      %3050 = vmatpush.msra.mxu0 %v3049
      %v3051 = vand.u32 %v2578, 4294901760
      %v3052 = vsub.f32 %v2578, %v3051
      %3053 = vmatpush.msra.mxu0 %v3052
      %v3054 = vand.u32 %v2926, 4294901760
      %v3055 = vsub.f32 %v2926, %v3054
      %3056 = vmatmul.f32.gmra.mxu0 %v3055
      %v3057 = vpop.f32.mrf.mxu0
      %v3058 = vadd.f32 %v3020, %v3057
      %3059 = vdwg.mxu0
      %3060 = vmatpush.msra.mxu0 0.0
      %3061 = vmatpush.msra.mxu0 0.0
      %3062 = vmatpush.msra.mxu0 0.0
      %3063 = vmatpush.msra.mxu0 0.0
      %3064 = vmatpush.msra.mxu0 0.0
      %3065 = vmatpush.msra.mxu0 0.0
      %3066 = vmatpush.msra.mxu0 0.0
      %3067 = vmatpush.msra.mxu0 0.0
      %v3068 = vand.u32 %v2585, 4294901760
      %3069 = vmatpush.msra.mxu0 %v3068
      %v3070 = vand.u32 %v2584, 4294901760
      %3071 = vmatpush.msra.mxu0 %v3070
      %v3072 = vand.u32 %v2583, 4294901760
      %3073 = vmatpush.msra.mxu0 %v3072
      %v3074 = vand.u32 %v2582, 4294901760
      %3075 = vmatpush.msra.mxu0 %v3074
      %v3076 = vand.u32 %v2581, 4294901760
      %3077 = vmatpush.msra.mxu0 %v3076
      %v3078 = vand.u32 %v2580, 4294901760
      %3079 = vmatpush.msra.mxu0 %v3078
      %v3080 = vand.u32 %v2579, 4294901760
      %3081 = vmatpush.msra.mxu0 %v3080
      %v3082 = vand.u32 %v2578, 4294901760
      %3083 = vmatpush.msra.mxu0 %v3082
      %v3084 = vand.u32 %v2926, 4294901760
      %v3085 = vsub.f32 %v2926, %v3084
      %v3086 = vand.u32 %v3085, 4294901760
      %3087 = vmatmul.f32.gmra.mxu0 %v3086
      %v3088 = vpop.f32.mrf.mxu0
      %v3089 = vadd.f32 %v3058, %v3088
      %3090 = vdwg.mxu0
      %3091 = vmatpush.msra.mxu0 0.0
      %3092 = vmatpush.msra.mxu0 0.0
      %3093 = vmatpush.msra.mxu0 0.0
      %3094 = vmatpush.msra.mxu0 0.0
      %3095 = vmatpush.msra.mxu0 0.0
      %3096 = vmatpush.msra.mxu0 0.0
      %3097 = vmatpush.msra.mxu0 0.0
      %3098 = vmatpush.msra.mxu0 0.0
      %v3099 = vand.u32 %v2585, 4294901760
      %v3100 = vsub.f32 %v2585, %v3099
      %v3101 = vand.u32 %v3100, 4294901760
      %3102 = vmatpush.msra.mxu0 %v3101
      %v3103 = vand.u32 %v2584, 4294901760
      %v3104 = vsub.f32 %v2584, %v3103
      %v3105 = vand.u32 %v3104, 4294901760
      %3106 = vmatpush.msra.mxu0 %v3105
      %v3107 = vand.u32 %v2583, 4294901760
      %v3108 = vsub.f32 %v2583, %v3107
      %v3109 = vand.u32 %v3108, 4294901760
      %3110 = vmatpush.msra.mxu0 %v3109
      %v3111 = vand.u32 %v2582, 4294901760
      %v3112 = vsub.f32 %v2582, %v3111
      %v3113 = vand.u32 %v3112, 4294901760
      %3114 = vmatpush.msra.mxu0 %v3113
      %v3115 = vand.u32 %v2581, 4294901760
      %v3116 = vsub.f32 %v2581, %v3115
      %v3117 = vand.u32 %v3116, 4294901760
      %3118 = vmatpush.msra.mxu0 %v3117
      %v3119 = vand.u32 %v2580, 4294901760
      %v3120 = vsub.f32 %v2580, %v3119
      %v3121 = vand.u32 %v3120, 4294901760
      %3122 = vmatpush.msra.mxu0 %v3121
      %v3123 = vand.u32 %v2579, 4294901760
      %v3124 = vsub.f32 %v2579, %v3123
      %v3125 = vand.u32 %v3124, 4294901760
      %3126 = vmatpush.msra.mxu0 %v3125
      %v3127 = vand.u32 %v2578, 4294901760
      %v3128 = vsub.f32 %v2578, %v3127
      %v3129 = vand.u32 %v3128, 4294901760
      %3130 = vmatpush.msra.mxu0 %v3129
      %v3131 = vand.u32 %v2926, 4294901760
      %3132 = vmatmul.f32.gmra.mxu0 %v3131
      %v3133 = vpop.f32.mrf.mxu0
      %v3134 = vadd.f32 %v3089, %v3133
      %3135 = vdwg.mxu0
      %3136 = vmatpush.msra.mxu0 0.0
      %3137 = vmatpush.msra.mxu0 0.0
      %3138 = vmatpush.msra.mxu0 0.0
      %3139 = vmatpush.msra.mxu0 0.0
      %3140 = vmatpush.msra.mxu0 0.0
      %3141 = vmatpush.msra.mxu0 0.0
      %3142 = vmatpush.msra.mxu0 0.0
      %3143 = vmatpush.msra.mxu0 0.0
      %v3144 = vand.u32 %v2585, 4294901760
      %3145 = vmatpush.msra.mxu0 %v3144
      %v3146 = vand.u32 %v2584, 4294901760
      %3147 = vmatpush.msra.mxu0 %v3146
      %v3148 = vand.u32 %v2583, 4294901760
      %3149 = vmatpush.msra.mxu0 %v3148
      %v3150 = vand.u32 %v2582, 4294901760
      %3151 = vmatpush.msra.mxu0 %v3150
      %v3152 = vand.u32 %v2581, 4294901760
      %3153 = vmatpush.msra.mxu0 %v3152
      %v3154 = vand.u32 %v2580, 4294901760
      %3155 = vmatpush.msra.mxu0 %v3154
      %v3156 = vand.u32 %v2579, 4294901760
      %3157 = vmatpush.msra.mxu0 %v3156
      %v3158 = vand.u32 %v2578, 4294901760
      %3159 = vmatpush.msra.mxu0 %v3158
      %v3160 = vand.u32 %v2926, 4294901760
      %3161 = vmatmul.f32.gmra.mxu0 %v3160
      %v3162 = vpop.f32.mrf.mxu0
      %v3163 = vadd.f32 %v3134, %v3162
      %3164 = vdwg.mxu0
      %v3165 = vmul.f32 %v2578, %v2837
      %v3166 = vmul.f32 %v2579, %v2840
      %v3167 = vmul.f32 %v2580, %v2843
      %v3168 = vmul.f32 %v2581, %v2846
      %v3169 = vmul.f32 %v2582, %v2849
      %v3170 = vmul.f32 %v2583, %v2852
      %v3171 = vmul.f32 %v2584, %v2855
      %v3172 = vmul.f32 %v2585, %v2858
      %v3173 = vperm.slane %v3163, 0
      %v3174 = vmul.f32 %v2903, %v3173
      %v3175 = vmul.f32 %v2906, %v3173
      %v3176 = vmul.f32 %v2909, %v3173
      %v3177 = vmul.f32 %v2912, %v3173
      %v3178 = vmul.f32 %v2915, %v3173
      %v3179 = vmul.f32 %v2918, %v3173
      %v3180 = vmul.f32 %v2921, %v3173
      %v3181 = vmul.f32 %v2924, %v3173
      %v3182 = vperm.slane %v410, 4
      %v3183 = vmul.f32 %v2870, %v3182
      %v3184 = vmul.f32 %v2873, %v3182
      %v3185 = vmul.f32 %v2876, %v3182
      %v3186 = vmul.f32 %v2879, %v3182
      %v3187 = vmul.f32 %v2882, %v3182
      %v3188 = vmul.f32 %v2885, %v3182
      %v3189 = vmul.f32 %v2888, %v3182
      %v3190 = vmul.f32 %v2891, %v3182
      %v3191 = vadd.f32 %v3174, %v3183
      %v3192 = vadd.f32 %v3175, %v3184
      %v3193 = vadd.f32 %v3176, %v3185
      %v3194 = vadd.f32 %v3177, %v3186
      %v3195 = vadd.f32 %v3178, %v3187
      %v3196 = vadd.f32 %v3179, %v3188
      %v3197 = vadd.f32 %v3180, %v3189
      %v3198 = vadd.f32 %v3181, %v3190
      %v3199 = vmul.f32 %v3191, %v394
      %v3200 = vmul.f32 %v3192, %v395
      %v3201 = vmul.f32 %v3193, %v396
      %v3202 = vmul.f32 %v3194, %v397
      %v3203 = vmul.f32 %v3195, %v398
      %v3204 = vmul.f32 %v3196, %v399
      %v3205 = vmul.f32 %v3197, %v400
      %v3206 = vmul.f32 %v3198, %v401
      %v3207 = vadd.f32 %v3165, %v3199
      %v3208 = vadd.f32 %v3166, %v3200
      %v3209 = vadd.f32 %v3167, %v3201
      %v3210 = vadd.f32 %v3168, %v3202
      %v3211 = vadd.f32 %v3169, %v3203
      %v3212 = vadd.f32 %v3170, %v3204
      %v3213 = vadd.f32 %v3171, %v3205
      %v3214 = vadd.f32 %v3172, %v3206
      %v3215 = vrot.slane %v408, 4
      %v3216 = vsel %vm422, %v3215, 0
      %3218 = vmatpush.msra.mxu0 0.0
      %3219 = vmatpush.msra.mxu0 0.0
      %3220 = vmatpush.msra.mxu0 0.0
      %3221 = vmatpush.msra.mxu0 0.0
      %3222 = vmatpush.msra.mxu0 0.0
      %3223 = vmatpush.msra.mxu0 0.0
      %3224 = vmatpush.msra.mxu0 0.0
      %3225 = vmatpush.msra.mxu0 0.0
      %v3226 = vand.u32 %v3214, 4294901760
      %3227 = vmatpush.msra.mxu0 %v3226
      %v3228 = vand.u32 %v3213, 4294901760
      %3229 = vmatpush.msra.mxu0 %v3228
      %v3230 = vand.u32 %v3212, 4294901760
      %3231 = vmatpush.msra.mxu0 %v3230
      %v3232 = vand.u32 %v3211, 4294901760
      %3233 = vmatpush.msra.mxu0 %v3232
      %v3234 = vand.u32 %v3210, 4294901760
      %3235 = vmatpush.msra.mxu0 %v3234
      %v3236 = vand.u32 %v3209, 4294901760
      %3237 = vmatpush.msra.mxu0 %v3236
      %v3238 = vand.u32 %v3208, 4294901760
      %3239 = vmatpush.msra.mxu0 %v3238
      %v3240 = vand.u32 %v3207, 4294901760
      %3241 = vmatpush.msra.mxu0 %v3240
      %v3242 = vand.u32 %v3216, 4294901760
      %v3243 = vsub.f32 %v3216, %v3242
      %v3244 = vand.u32 %v3243, 4294901760
      %v3245 = vsub.f32 %v3243, %v3244
      %v3246 = vand.u32 %v3245, 4294901760
      %3247 = vmatmul.f32.gmra.mxu0 %v3246
      %v3248 = vpop.f32.mrf.mxu0
      %v3249 = vadd.f32 0.0, %v3248
      %3250 = vdwg.mxu0
      %3251 = vmatpush.msra.mxu0 0.0
      %3252 = vmatpush.msra.mxu0 0.0
      %3253 = vmatpush.msra.mxu0 0.0
      %3254 = vmatpush.msra.mxu0 0.0
      %3255 = vmatpush.msra.mxu0 0.0
      %3256 = vmatpush.msra.mxu0 0.0
      %3257 = vmatpush.msra.mxu0 0.0
      %3258 = vmatpush.msra.mxu0 0.0
      %v3259 = vand.u32 %v3214, 4294901760
      %v3260 = vsub.f32 %v3214, %v3259
      %v3261 = vand.u32 %v3260, 4294901760
      %v3262 = vsub.f32 %v3260, %v3261
      %v3263 = vand.u32 %v3262, 4294901760
      %3264 = vmatpush.msra.mxu0 %v3263
      %v3265 = vand.u32 %v3213, 4294901760
      %v3266 = vsub.f32 %v3213, %v3265
      %v3267 = vand.u32 %v3266, 4294901760
      %v3268 = vsub.f32 %v3266, %v3267
      %v3269 = vand.u32 %v3268, 4294901760
      %3270 = vmatpush.msra.mxu0 %v3269
      %v3271 = vand.u32 %v3212, 4294901760
      %v3272 = vsub.f32 %v3212, %v3271
      %v3273 = vand.u32 %v3272, 4294901760
      %v3274 = vsub.f32 %v3272, %v3273
      %v3275 = vand.u32 %v3274, 4294901760
      %3276 = vmatpush.msra.mxu0 %v3275
      %v3277 = vand.u32 %v3211, 4294901760
      %v3278 = vsub.f32 %v3211, %v3277
      %v3279 = vand.u32 %v3278, 4294901760
      %v3280 = vsub.f32 %v3278, %v3279
      %v3281 = vand.u32 %v3280, 4294901760
      %3282 = vmatpush.msra.mxu0 %v3281
      %v3283 = vand.u32 %v3210, 4294901760
      %v3284 = vsub.f32 %v3210, %v3283
      %v3285 = vand.u32 %v3284, 4294901760
      %v3286 = vsub.f32 %v3284, %v3285
      %v3287 = vand.u32 %v3286, 4294901760
      %3288 = vmatpush.msra.mxu0 %v3287
      %v3289 = vand.u32 %v3209, 4294901760
      %v3290 = vsub.f32 %v3209, %v3289
      %v3291 = vand.u32 %v3290, 4294901760
      %v3292 = vsub.f32 %v3290, %v3291
      %v3293 = vand.u32 %v3292, 4294901760
      %3294 = vmatpush.msra.mxu0 %v3293
      %v3295 = vand.u32 %v3208, 4294901760
      %v3296 = vsub.f32 %v3208, %v3295
      %v3297 = vand.u32 %v3296, 4294901760
      %v3298 = vsub.f32 %v3296, %v3297
      %v3299 = vand.u32 %v3298, 4294901760
      %3300 = vmatpush.msra.mxu0 %v3299
      %v3301 = vand.u32 %v3207, 4294901760
      %v3302 = vsub.f32 %v3207, %v3301
      %v3303 = vand.u32 %v3302, 4294901760
      %v3304 = vsub.f32 %v3302, %v3303
      %v3305 = vand.u32 %v3304, 4294901760
      %3306 = vmatpush.msra.mxu0 %v3305
      %v3307 = vand.u32 %v3216, 4294901760
      %3308 = vmatmul.f32.gmra.mxu0 %v3307
      %v3309 = vpop.f32.mrf.mxu0
      %v3310 = vadd.f32 %v3249, %v3309
      %3311 = vdwg.mxu0
      %3312 = vmatpush.msra.mxu0 0.0
      %3313 = vmatpush.msra.mxu0 0.0
      %3314 = vmatpush.msra.mxu0 0.0
      %3315 = vmatpush.msra.mxu0 0.0
      %3316 = vmatpush.msra.mxu0 0.0
      %3317 = vmatpush.msra.mxu0 0.0
      %3318 = vmatpush.msra.mxu0 0.0
      %3319 = vmatpush.msra.mxu0 0.0
      %v3320 = vand.u32 %v3214, 4294901760
      %v3321 = vsub.f32 %v3214, %v3320
      %3322 = vmatpush.msra.mxu0 %v3321
      %v3323 = vand.u32 %v3213, 4294901760
      %v3324 = vsub.f32 %v3213, %v3323
      %3325 = vmatpush.msra.mxu0 %v3324
      %v3326 = vand.u32 %v3212, 4294901760
      %v3327 = vsub.f32 %v3212, %v3326
      %3328 = vmatpush.msra.mxu0 %v3327
      %v3329 = vand.u32 %v3211, 4294901760
      %v3330 = vsub.f32 %v3211, %v3329
      %3331 = vmatpush.msra.mxu0 %v3330
      %v3332 = vand.u32 %v3210, 4294901760
      %v3333 = vsub.f32 %v3210, %v3332
      %3334 = vmatpush.msra.mxu0 %v3333
      %v3335 = vand.u32 %v3209, 4294901760
      %v3336 = vsub.f32 %v3209, %v3335
      %3337 = vmatpush.msra.mxu0 %v3336
      %v3338 = vand.u32 %v3208, 4294901760
      %v3339 = vsub.f32 %v3208, %v3338
      %3340 = vmatpush.msra.mxu0 %v3339
      %v3341 = vand.u32 %v3207, 4294901760
      %v3342 = vsub.f32 %v3207, %v3341
      %3343 = vmatpush.msra.mxu0 %v3342
      %v3344 = vand.u32 %v3216, 4294901760
      %v3345 = vsub.f32 %v3216, %v3344
      %3346 = vmatmul.f32.gmra.mxu0 %v3345
      %v3347 = vpop.f32.mrf.mxu0
      %v3348 = vadd.f32 %v3310, %v3347
      %3349 = vdwg.mxu0
      %3350 = vmatpush.msra.mxu0 0.0
      %3351 = vmatpush.msra.mxu0 0.0
      %3352 = vmatpush.msra.mxu0 0.0
      %3353 = vmatpush.msra.mxu0 0.0
      %3354 = vmatpush.msra.mxu0 0.0
      %3355 = vmatpush.msra.mxu0 0.0
      %3356 = vmatpush.msra.mxu0 0.0
      %3357 = vmatpush.msra.mxu0 0.0
      %v3358 = vand.u32 %v3214, 4294901760
      %3359 = vmatpush.msra.mxu0 %v3358
      %v3360 = vand.u32 %v3213, 4294901760
      %3361 = vmatpush.msra.mxu0 %v3360
      %v3362 = vand.u32 %v3212, 4294901760
      %3363 = vmatpush.msra.mxu0 %v3362
      %v3364 = vand.u32 %v3211, 4294901760
      %3365 = vmatpush.msra.mxu0 %v3364
      %v3366 = vand.u32 %v3210, 4294901760
      %3367 = vmatpush.msra.mxu0 %v3366
      %v3368 = vand.u32 %v3209, 4294901760
      %3369 = vmatpush.msra.mxu0 %v3368
      %v3370 = vand.u32 %v3208, 4294901760
      %3371 = vmatpush.msra.mxu0 %v3370
      %v3372 = vand.u32 %v3207, 4294901760
      %3373 = vmatpush.msra.mxu0 %v3372
      %v3374 = vand.u32 %v3216, 4294901760
      %v3375 = vsub.f32 %v3216, %v3374
      %v3376 = vand.u32 %v3375, 4294901760
      %3377 = vmatmul.f32.gmra.mxu0 %v3376
      %v3378 = vpop.f32.mrf.mxu0
      %v3379 = vadd.f32 %v3348, %v3378
      %3380 = vdwg.mxu0
      %3381 = vmatpush.msra.mxu0 0.0
      %3382 = vmatpush.msra.mxu0 0.0
      %3383 = vmatpush.msra.mxu0 0.0
      %3384 = vmatpush.msra.mxu0 0.0
      %3385 = vmatpush.msra.mxu0 0.0
      %3386 = vmatpush.msra.mxu0 0.0
      %3387 = vmatpush.msra.mxu0 0.0
      %3388 = vmatpush.msra.mxu0 0.0
      %v3389 = vand.u32 %v3214, 4294901760
      %v3390 = vsub.f32 %v3214, %v3389
      %v3391 = vand.u32 %v3390, 4294901760
      %3392 = vmatpush.msra.mxu0 %v3391
      %v3393 = vand.u32 %v3213, 4294901760
      %v3394 = vsub.f32 %v3213, %v3393
      %v3395 = vand.u32 %v3394, 4294901760
      %3396 = vmatpush.msra.mxu0 %v3395
      %v3397 = vand.u32 %v3212, 4294901760
      %v3398 = vsub.f32 %v3212, %v3397
      %v3399 = vand.u32 %v3398, 4294901760
      %3400 = vmatpush.msra.mxu0 %v3399
      %v3401 = vand.u32 %v3211, 4294901760
      %v3402 = vsub.f32 %v3211, %v3401
      %v3403 = vand.u32 %v3402, 4294901760
      %3404 = vmatpush.msra.mxu0 %v3403
      %v3405 = vand.u32 %v3210, 4294901760
      %v3406 = vsub.f32 %v3210, %v3405
      %v3407 = vand.u32 %v3406, 4294901760
      %3408 = vmatpush.msra.mxu0 %v3407
      %v3409 = vand.u32 %v3209, 4294901760
      %v3410 = vsub.f32 %v3209, %v3409
      %v3411 = vand.u32 %v3410, 4294901760
      %3412 = vmatpush.msra.mxu0 %v3411
      %v3413 = vand.u32 %v3208, 4294901760
      %v3414 = vsub.f32 %v3208, %v3413
      %v3415 = vand.u32 %v3414, 4294901760
      %3416 = vmatpush.msra.mxu0 %v3415
      %v3417 = vand.u32 %v3207, 4294901760
      %v3418 = vsub.f32 %v3207, %v3417
      %v3419 = vand.u32 %v3418, 4294901760
      %3420 = vmatpush.msra.mxu0 %v3419
      %v3421 = vand.u32 %v3216, 4294901760
      %3422 = vmatmul.f32.gmra.mxu0 %v3421
      %v3423 = vpop.f32.mrf.mxu0
      %v3424 = vadd.f32 %v3379, %v3423
      %3425 = vdwg.mxu0
      %3426 = vmatpush.msra.mxu0 0.0
      %3427 = vmatpush.msra.mxu0 0.0
      %3428 = vmatpush.msra.mxu0 0.0
      %3429 = vmatpush.msra.mxu0 0.0
      %3430 = vmatpush.msra.mxu0 0.0
      %3431 = vmatpush.msra.mxu0 0.0
      %3432 = vmatpush.msra.mxu0 0.0
      %3433 = vmatpush.msra.mxu0 0.0
      %v3434 = vand.u32 %v3214, 4294901760
      %3435 = vmatpush.msra.mxu0 %v3434
      %v3436 = vand.u32 %v3213, 4294901760
      %3437 = vmatpush.msra.mxu0 %v3436
      %v3438 = vand.u32 %v3212, 4294901760
      %3439 = vmatpush.msra.mxu0 %v3438
      %v3440 = vand.u32 %v3211, 4294901760
      %3441 = vmatpush.msra.mxu0 %v3440
      %v3442 = vand.u32 %v3210, 4294901760
      %3443 = vmatpush.msra.mxu0 %v3442
      %v3444 = vand.u32 %v3209, 4294901760
      %3445 = vmatpush.msra.mxu0 %v3444
      %v3446 = vand.u32 %v3208, 4294901760
      %3447 = vmatpush.msra.mxu0 %v3446
      %v3448 = vand.u32 %v3207, 4294901760
      %3449 = vmatpush.msra.mxu0 %v3448
      %v3450 = vand.u32 %v3216, 4294901760
      %3451 = vmatmul.f32.gmra.mxu0 %v3450
      %v3452 = vpop.f32.mrf.mxu0
      %v3453 = vadd.f32 %v3424, %v3452
      %3454 = vdwg.mxu0
      %v3455 = vperm.slane %v407, 5
      %v3456 = vmul.f32 %v386, %v3455
      %v3457 = vmul.f32 %v387, %v3455
      %v3458 = vmul.f32 %v388, %v3455
      %v3459 = vmul.f32 %v389, %v3455
      %v3460 = vmul.f32 %v390, %v3455
      %v3461 = vmul.f32 %v391, %v3455
      %v3462 = vmul.f32 %v392, %v3455
      %v3463 = vmul.f32 %v393, %v3455
      %v3464 = vsel %vm422, %v3456, 0.0
      %3465 = vadd.xlane.f32.xlu0 %v3464
      %v3466 = vpop.xlane.xlu0 %3465
      %v3467 = vsel %vm422, %v3457, 0.0
      %3468 = vadd.xlane.f32.xlu0 %v3467
      %v3469 = vpop.xlane.xlu0 %3468
      %v3470 = vsel %vm422, %v3458, 0.0
      %3471 = vadd.xlane.f32.xlu0 %v3470
      %v3472 = vpop.xlane.xlu0 %3471
      %v3473 = vsel %vm422, %v3459, 0.0
      %3474 = vadd.xlane.f32.xlu0 %v3473
      %v3475 = vpop.xlane.xlu0 %3474
      %v3476 = vsel %vm422, %v3460, 0.0
      %3477 = vadd.xlane.f32.xlu0 %v3476
      %v3478 = vpop.xlane.xlu0 %3477
      %v3479 = vsel %vm422, %v3461, 0.0
      %3480 = vadd.xlane.f32.xlu0 %v3479
      %v3481 = vpop.xlane.xlu0 %3480
      %v3482 = vsel %vm422, %v3462, 0.0
      %3483 = vadd.xlane.f32.xlu0 %v3482
      %v3484 = vpop.xlane.xlu0 %3483
      %v3485 = vsel %vm422, %v3463, 0.0
      %3486 = vadd.xlane.f32.xlu0 %v3485
      %v3487 = vpop.xlane.xlu0 %3486
      %v3488 = vperm.slane %v409, 5
      %v3489 = vmul.f32 %v386, %v3488
      %v3490 = vmul.f32 %v387, %v3488
      %v3491 = vmul.f32 %v388, %v3488
      %v3492 = vmul.f32 %v389, %v3488
      %v3493 = vmul.f32 %v390, %v3488
      %v3494 = vmul.f32 %v391, %v3488
      %v3495 = vmul.f32 %v392, %v3488
      %v3496 = vmul.f32 %v393, %v3488
      %v3497 = vsel %vm422, %v3489, 0.0
      %3498 = vadd.xlane.f32.xlu0 %v3497
      %v3499 = vpop.xlane.xlu0 %3498
      %v3500 = vsel %vm422, %v3490, 0.0
      %3501 = vadd.xlane.f32.xlu0 %v3500
      %v3502 = vpop.xlane.xlu0 %3501
      %v3503 = vsel %vm422, %v3491, 0.0
      %3504 = vadd.xlane.f32.xlu0 %v3503
      %v3505 = vpop.xlane.xlu0 %3504
      %v3506 = vsel %vm422, %v3492, 0.0
      %3507 = vadd.xlane.f32.xlu0 %v3506
      %v3508 = vpop.xlane.xlu0 %3507
      %v3509 = vsel %vm422, %v3493, 0.0
      %3510 = vadd.xlane.f32.xlu0 %v3509
      %v3511 = vpop.xlane.xlu0 %3510
      %v3512 = vsel %vm422, %v3494, 0.0
      %3513 = vadd.xlane.f32.xlu0 %v3512
      %v3514 = vpop.xlane.xlu0 %3513
      %v3515 = vsel %vm422, %v3495, 0.0
      %3516 = vadd.xlane.f32.xlu0 %v3515
      %v3517 = vpop.xlane.xlu0 %3516
      %v3518 = vsel %vm422, %v3496, 0.0
      %3519 = vadd.xlane.f32.xlu0 %v3518
      %v3520 = vpop.xlane.xlu0 %3519
      %v3521 = vperm.slane %v412, 5
      %v3522 = vmul.f32 %v386, %v3521
      %v3523 = vmul.f32 %v387, %v3521
      %v3524 = vmul.f32 %v388, %v3521
      %v3525 = vmul.f32 %v389, %v3521
      %v3526 = vmul.f32 %v390, %v3521
      %v3527 = vmul.f32 %v391, %v3521
      %v3528 = vmul.f32 %v392, %v3521
      %v3529 = vmul.f32 %v393, %v3521
      %v3530 = vsel %vm422, %v3522, 0.0
      %3531 = vadd.xlane.f32.xlu0 %v3530
      %v3532 = vpop.xlane.xlu0 %3531
      %v3533 = vsel %vm422, %v3523, 0.0
      %3534 = vadd.xlane.f32.xlu0 %v3533
      %v3535 = vpop.xlane.xlu0 %3534
      %v3536 = vsel %vm422, %v3524, 0.0
      %3537 = vadd.xlane.f32.xlu0 %v3536
      %v3538 = vpop.xlane.xlu0 %3537
      %v3539 = vsel %vm422, %v3525, 0.0
      %3540 = vadd.xlane.f32.xlu0 %v3539
      %v3541 = vpop.xlane.xlu0 %3540
      %v3542 = vsel %vm422, %v3526, 0.0
      %3543 = vadd.xlane.f32.xlu0 %v3542
      %v3544 = vpop.xlane.xlu0 %3543
      %v3545 = vsel %vm422, %v3527, 0.0
      %3546 = vadd.xlane.f32.xlu0 %v3545
      %v3547 = vpop.xlane.xlu0 %3546
      %v3548 = vsel %vm422, %v3528, 0.0
      %3549 = vadd.xlane.f32.xlu0 %v3548
      %v3550 = vpop.xlane.xlu0 %3549
      %v3551 = vsel %vm422, %v3529, 0.0
      %3552 = vadd.xlane.f32.xlu0 %v3551
      %v3553 = vpop.xlane.xlu0 %3552
      %v3554 = vrot.slane %v411, 5
      %v3555 = vsel %vm422, %v3554, 0
      %3557 = vmatpush.msra.mxu0 0.0
      %3558 = vmatpush.msra.mxu0 0.0
      %3559 = vmatpush.msra.mxu0 0.0
      %3560 = vmatpush.msra.mxu0 0.0
      %3561 = vmatpush.msra.mxu0 0.0
      %3562 = vmatpush.msra.mxu0 0.0
      %3563 = vmatpush.msra.mxu0 0.0
      %3564 = vmatpush.msra.mxu0 0.0
      %v3565 = vand.u32 %v3214, 4294901760
      %3566 = vmatpush.msra.mxu0 %v3565
      %v3567 = vand.u32 %v3213, 4294901760
      %3568 = vmatpush.msra.mxu0 %v3567
      %v3569 = vand.u32 %v3212, 4294901760
      %3570 = vmatpush.msra.mxu0 %v3569
      %v3571 = vand.u32 %v3211, 4294901760
      %3572 = vmatpush.msra.mxu0 %v3571
      %v3573 = vand.u32 %v3210, 4294901760
      %3574 = vmatpush.msra.mxu0 %v3573
      %v3575 = vand.u32 %v3209, 4294901760
      %3576 = vmatpush.msra.mxu0 %v3575
      %v3577 = vand.u32 %v3208, 4294901760
      %3578 = vmatpush.msra.mxu0 %v3577
      %v3579 = vand.u32 %v3207, 4294901760
      %3580 = vmatpush.msra.mxu0 %v3579
      %v3581 = vand.u32 %v3555, 4294901760
      %v3582 = vsub.f32 %v3555, %v3581
      %v3583 = vand.u32 %v3582, 4294901760
      %v3584 = vsub.f32 %v3582, %v3583
      %v3585 = vand.u32 %v3584, 4294901760
      %3586 = vmatmul.f32.gmra.mxu0 %v3585
      %v3587 = vpop.f32.mrf.mxu0
      %v3588 = vadd.f32 0.0, %v3587
      %3589 = vdwg.mxu0
      %3590 = vmatpush.msra.mxu0 0.0
      %3591 = vmatpush.msra.mxu0 0.0
      %3592 = vmatpush.msra.mxu0 0.0
      %3593 = vmatpush.msra.mxu0 0.0
      %3594 = vmatpush.msra.mxu0 0.0
      %3595 = vmatpush.msra.mxu0 0.0
      %3596 = vmatpush.msra.mxu0 0.0
      %3597 = vmatpush.msra.mxu0 0.0
      %v3598 = vand.u32 %v3214, 4294901760
      %v3599 = vsub.f32 %v3214, %v3598
      %v3600 = vand.u32 %v3599, 4294901760
      %v3601 = vsub.f32 %v3599, %v3600
      %v3602 = vand.u32 %v3601, 4294901760
      %3603 = vmatpush.msra.mxu0 %v3602
      %v3604 = vand.u32 %v3213, 4294901760
      %v3605 = vsub.f32 %v3213, %v3604
      %v3606 = vand.u32 %v3605, 4294901760
      %v3607 = vsub.f32 %v3605, %v3606
      %v3608 = vand.u32 %v3607, 4294901760
      %3609 = vmatpush.msra.mxu0 %v3608
      %v3610 = vand.u32 %v3212, 4294901760
      %v3611 = vsub.f32 %v3212, %v3610
      %v3612 = vand.u32 %v3611, 4294901760
      %v3613 = vsub.f32 %v3611, %v3612
      %v3614 = vand.u32 %v3613, 4294901760
      %3615 = vmatpush.msra.mxu0 %v3614
      %v3616 = vand.u32 %v3211, 4294901760
      %v3617 = vsub.f32 %v3211, %v3616
      %v3618 = vand.u32 %v3617, 4294901760
      %v3619 = vsub.f32 %v3617, %v3618
      %v3620 = vand.u32 %v3619, 4294901760
      %3621 = vmatpush.msra.mxu0 %v3620
      %v3622 = vand.u32 %v3210, 4294901760
      %v3623 = vsub.f32 %v3210, %v3622
      %v3624 = vand.u32 %v3623, 4294901760
      %v3625 = vsub.f32 %v3623, %v3624
      %v3626 = vand.u32 %v3625, 4294901760
      %3627 = vmatpush.msra.mxu0 %v3626
      %v3628 = vand.u32 %v3209, 4294901760
      %v3629 = vsub.f32 %v3209, %v3628
      %v3630 = vand.u32 %v3629, 4294901760
      %v3631 = vsub.f32 %v3629, %v3630
      %v3632 = vand.u32 %v3631, 4294901760
      %3633 = vmatpush.msra.mxu0 %v3632
      %v3634 = vand.u32 %v3208, 4294901760
      %v3635 = vsub.f32 %v3208, %v3634
      %v3636 = vand.u32 %v3635, 4294901760
      %v3637 = vsub.f32 %v3635, %v3636
      %v3638 = vand.u32 %v3637, 4294901760
      %3639 = vmatpush.msra.mxu0 %v3638
      %v3640 = vand.u32 %v3207, 4294901760
      %v3641 = vsub.f32 %v3207, %v3640
      %v3642 = vand.u32 %v3641, 4294901760
      %v3643 = vsub.f32 %v3641, %v3642
      %v3644 = vand.u32 %v3643, 4294901760
      %3645 = vmatpush.msra.mxu0 %v3644
      %v3646 = vand.u32 %v3555, 4294901760
      %3647 = vmatmul.f32.gmra.mxu0 %v3646
      %v3648 = vpop.f32.mrf.mxu0
      %v3649 = vadd.f32 %v3588, %v3648
      %3650 = vdwg.mxu0
      %3651 = vmatpush.msra.mxu0 0.0
      %3652 = vmatpush.msra.mxu0 0.0
      %3653 = vmatpush.msra.mxu0 0.0
      %3654 = vmatpush.msra.mxu0 0.0
      %3655 = vmatpush.msra.mxu0 0.0
      %3656 = vmatpush.msra.mxu0 0.0
      %3657 = vmatpush.msra.mxu0 0.0
      %3658 = vmatpush.msra.mxu0 0.0
      %v3659 = vand.u32 %v3214, 4294901760
      %v3660 = vsub.f32 %v3214, %v3659
      %3661 = vmatpush.msra.mxu0 %v3660
      %v3662 = vand.u32 %v3213, 4294901760
      %v3663 = vsub.f32 %v3213, %v3662
      %3664 = vmatpush.msra.mxu0 %v3663
      %v3665 = vand.u32 %v3212, 4294901760
      %v3666 = vsub.f32 %v3212, %v3665
      %3667 = vmatpush.msra.mxu0 %v3666
      %v3668 = vand.u32 %v3211, 4294901760
      %v3669 = vsub.f32 %v3211, %v3668
      %3670 = vmatpush.msra.mxu0 %v3669
      %v3671 = vand.u32 %v3210, 4294901760
      %v3672 = vsub.f32 %v3210, %v3671
      %3673 = vmatpush.msra.mxu0 %v3672
      %v3674 = vand.u32 %v3209, 4294901760
      %v3675 = vsub.f32 %v3209, %v3674
      %3676 = vmatpush.msra.mxu0 %v3675
      %v3677 = vand.u32 %v3208, 4294901760
      %v3678 = vsub.f32 %v3208, %v3677
      %3679 = vmatpush.msra.mxu0 %v3678
      %v3680 = vand.u32 %v3207, 4294901760
      %v3681 = vsub.f32 %v3207, %v3680
      %3682 = vmatpush.msra.mxu0 %v3681
      %v3683 = vand.u32 %v3555, 4294901760
      %v3684 = vsub.f32 %v3555, %v3683
      %3685 = vmatmul.f32.gmra.mxu0 %v3684
      %v3686 = vpop.f32.mrf.mxu0
      %v3687 = vadd.f32 %v3649, %v3686
      %3688 = vdwg.mxu0
      %3689 = vmatpush.msra.mxu0 0.0
      %3690 = vmatpush.msra.mxu0 0.0
      %3691 = vmatpush.msra.mxu0 0.0
      %3692 = vmatpush.msra.mxu0 0.0
      %3693 = vmatpush.msra.mxu0 0.0
      %3694 = vmatpush.msra.mxu0 0.0
      %3695 = vmatpush.msra.mxu0 0.0
      %3696 = vmatpush.msra.mxu0 0.0
      %v3697 = vand.u32 %v3214, 4294901760
      %3698 = vmatpush.msra.mxu0 %v3697
      %v3699 = vand.u32 %v3213, 4294901760
      %3700 = vmatpush.msra.mxu0 %v3699
      %v3701 = vand.u32 %v3212, 4294901760
      %3702 = vmatpush.msra.mxu0 %v3701
      %v3703 = vand.u32 %v3211, 4294901760
      %3704 = vmatpush.msra.mxu0 %v3703
      %v3705 = vand.u32 %v3210, 4294901760
      %3706 = vmatpush.msra.mxu0 %v3705
      %v3707 = vand.u32 %v3209, 4294901760
      %3708 = vmatpush.msra.mxu0 %v3707
      %v3709 = vand.u32 %v3208, 4294901760
      %3710 = vmatpush.msra.mxu0 %v3709
      %v3711 = vand.u32 %v3207, 4294901760
      %3712 = vmatpush.msra.mxu0 %v3711
      %v3713 = vand.u32 %v3555, 4294901760
      %v3714 = vsub.f32 %v3555, %v3713
      %v3715 = vand.u32 %v3714, 4294901760
      %3716 = vmatmul.f32.gmra.mxu0 %v3715
      %v3717 = vpop.f32.mrf.mxu0
      %v3718 = vadd.f32 %v3687, %v3717
      %3719 = vdwg.mxu0
      %3720 = vmatpush.msra.mxu0 0.0
      %3721 = vmatpush.msra.mxu0 0.0
      %3722 = vmatpush.msra.mxu0 0.0
      %3723 = vmatpush.msra.mxu0 0.0
      %3724 = vmatpush.msra.mxu0 0.0
      %3725 = vmatpush.msra.mxu0 0.0
      %3726 = vmatpush.msra.mxu0 0.0
      %3727 = vmatpush.msra.mxu0 0.0
      %v3728 = vand.u32 %v3214, 4294901760
      %v3729 = vsub.f32 %v3214, %v3728
      %v3730 = vand.u32 %v3729, 4294901760
      %3731 = vmatpush.msra.mxu0 %v3730
      %v3732 = vand.u32 %v3213, 4294901760
      %v3733 = vsub.f32 %v3213, %v3732
      %v3734 = vand.u32 %v3733, 4294901760
      %3735 = vmatpush.msra.mxu0 %v3734
      %v3736 = vand.u32 %v3212, 4294901760
      %v3737 = vsub.f32 %v3212, %v3736
      %v3738 = vand.u32 %v3737, 4294901760
      %3739 = vmatpush.msra.mxu0 %v3738
      %v3740 = vand.u32 %v3211, 4294901760
      %v3741 = vsub.f32 %v3211, %v3740
      %v3742 = vand.u32 %v3741, 4294901760
      %3743 = vmatpush.msra.mxu0 %v3742
      %v3744 = vand.u32 %v3210, 4294901760
      %v3745 = vsub.f32 %v3210, %v3744
      %v3746 = vand.u32 %v3745, 4294901760
      %3747 = vmatpush.msra.mxu0 %v3746
      %v3748 = vand.u32 %v3209, 4294901760
      %v3749 = vsub.f32 %v3209, %v3748
      %v3750 = vand.u32 %v3749, 4294901760
      %3751 = vmatpush.msra.mxu0 %v3750
      %v3752 = vand.u32 %v3208, 4294901760
      %v3753 = vsub.f32 %v3208, %v3752
      %v3754 = vand.u32 %v3753, 4294901760
      %3755 = vmatpush.msra.mxu0 %v3754
      %v3756 = vand.u32 %v3207, 4294901760
      %v3757 = vsub.f32 %v3207, %v3756
      %v3758 = vand.u32 %v3757, 4294901760
      %3759 = vmatpush.msra.mxu0 %v3758
      %v3760 = vand.u32 %v3555, 4294901760
      %3761 = vmatmul.f32.gmra.mxu0 %v3760
      %v3762 = vpop.f32.mrf.mxu0
      %v3763 = vadd.f32 %v3718, %v3762
      %3764 = vdwg.mxu0
      %3765 = vmatpush.msra.mxu0 0.0
      %3766 = vmatpush.msra.mxu0 0.0
      %3767 = vmatpush.msra.mxu0 0.0
      %3768 = vmatpush.msra.mxu0 0.0
      %3769 = vmatpush.msra.mxu0 0.0
      %3770 = vmatpush.msra.mxu0 0.0
      %3771 = vmatpush.msra.mxu0 0.0
      %3772 = vmatpush.msra.mxu0 0.0
      %v3773 = vand.u32 %v3214, 4294901760
      %3774 = vmatpush.msra.mxu0 %v3773
      %v3775 = vand.u32 %v3213, 4294901760
      %3776 = vmatpush.msra.mxu0 %v3775
      %v3777 = vand.u32 %v3212, 4294901760
      %3778 = vmatpush.msra.mxu0 %v3777
      %v3779 = vand.u32 %v3211, 4294901760
      %3780 = vmatpush.msra.mxu0 %v3779
      %v3781 = vand.u32 %v3210, 4294901760
      %3782 = vmatpush.msra.mxu0 %v3781
      %v3783 = vand.u32 %v3209, 4294901760
      %3784 = vmatpush.msra.mxu0 %v3783
      %v3785 = vand.u32 %v3208, 4294901760
      %3786 = vmatpush.msra.mxu0 %v3785
      %v3787 = vand.u32 %v3207, 4294901760
      %3788 = vmatpush.msra.mxu0 %v3787
      %v3789 = vand.u32 %v3555, 4294901760
      %3790 = vmatmul.f32.gmra.mxu0 %v3789
      %v3791 = vpop.f32.mrf.mxu0
      %v3792 = vadd.f32 %v3763, %v3791
      %3793 = vdwg.mxu0
      %v3794 = vmul.f32 %v3207, %v3466
      %v3795 = vmul.f32 %v3208, %v3469
      %v3796 = vmul.f32 %v3209, %v3472
      %v3797 = vmul.f32 %v3210, %v3475
      %v3798 = vmul.f32 %v3211, %v3478
      %v3799 = vmul.f32 %v3212, %v3481
      %v3800 = vmul.f32 %v3213, %v3484
      %v3801 = vmul.f32 %v3214, %v3487
      %v3802 = vperm.slane %v3792, 0
      %v3803 = vmul.f32 %v3532, %v3802
      %v3804 = vmul.f32 %v3535, %v3802
      %v3805 = vmul.f32 %v3538, %v3802
      %v3806 = vmul.f32 %v3541, %v3802
      %v3807 = vmul.f32 %v3544, %v3802
      %v3808 = vmul.f32 %v3547, %v3802
      %v3809 = vmul.f32 %v3550, %v3802
      %v3810 = vmul.f32 %v3553, %v3802
      %v3811 = vperm.slane %v410, 5
      %v3812 = vmul.f32 %v3499, %v3811
      %v3813 = vmul.f32 %v3502, %v3811
      %v3814 = vmul.f32 %v3505, %v3811
      %v3815 = vmul.f32 %v3508, %v3811
      %v3816 = vmul.f32 %v3511, %v3811
      %v3817 = vmul.f32 %v3514, %v3811
      %v3818 = vmul.f32 %v3517, %v3811
      %v3819 = vmul.f32 %v3520, %v3811
      %v3820 = vadd.f32 %v3803, %v3812
      %v3821 = vadd.f32 %v3804, %v3813
      %v3822 = vadd.f32 %v3805, %v3814
      %v3823 = vadd.f32 %v3806, %v3815
      %v3824 = vadd.f32 %v3807, %v3816
      %v3825 = vadd.f32 %v3808, %v3817
      %v3826 = vadd.f32 %v3809, %v3818
      %v3827 = vadd.f32 %v3810, %v3819
      %v3828 = vmul.f32 %v3820, %v394
      %v3829 = vmul.f32 %v3821, %v395
      %v3830 = vmul.f32 %v3822, %v396
      %v3831 = vmul.f32 %v3823, %v397
      %v3832 = vmul.f32 %v3824, %v398
      %v3833 = vmul.f32 %v3825, %v399
      %v3834 = vmul.f32 %v3826, %v400
      %v3835 = vmul.f32 %v3827, %v401
      %v3836 = vadd.f32 %v3794, %v3828
      %v3837 = vadd.f32 %v3795, %v3829
      %v3838 = vadd.f32 %v3796, %v3830
      %v3839 = vadd.f32 %v3797, %v3831
      %v3840 = vadd.f32 %v3798, %v3832
      %v3841 = vadd.f32 %v3799, %v3833
      %v3842 = vadd.f32 %v3800, %v3834
      %v3843 = vadd.f32 %v3801, %v3835
      %v3844 = vrot.slane %v408, 5
      %v3845 = vsel %vm422, %v3844, 0
      %3847 = vmatpush.msra.mxu0 0.0
      %3848 = vmatpush.msra.mxu0 0.0
      %3849 = vmatpush.msra.mxu0 0.0
      %3850 = vmatpush.msra.mxu0 0.0
      %3851 = vmatpush.msra.mxu0 0.0
      %3852 = vmatpush.msra.mxu0 0.0
      %3853 = vmatpush.msra.mxu0 0.0
      %3854 = vmatpush.msra.mxu0 0.0
      %v3855 = vand.u32 %v3843, 4294901760
      %3856 = vmatpush.msra.mxu0 %v3855
      %v3857 = vand.u32 %v3842, 4294901760
      %3858 = vmatpush.msra.mxu0 %v3857
      %v3859 = vand.u32 %v3841, 4294901760
      %3860 = vmatpush.msra.mxu0 %v3859
      %v3861 = vand.u32 %v3840, 4294901760
      %3862 = vmatpush.msra.mxu0 %v3861
      %v3863 = vand.u32 %v3839, 4294901760
      %3864 = vmatpush.msra.mxu0 %v3863
      %v3865 = vand.u32 %v3838, 4294901760
      %3866 = vmatpush.msra.mxu0 %v3865
      %v3867 = vand.u32 %v3837, 4294901760
      %3868 = vmatpush.msra.mxu0 %v3867
      %v3869 = vand.u32 %v3836, 4294901760
      %3870 = vmatpush.msra.mxu0 %v3869
      %v3871 = vand.u32 %v3845, 4294901760
      %v3872 = vsub.f32 %v3845, %v3871
      %v3873 = vand.u32 %v3872, 4294901760
      %v3874 = vsub.f32 %v3872, %v3873
      %v3875 = vand.u32 %v3874, 4294901760
      %3876 = vmatmul.f32.gmra.mxu0 %v3875
      %v3877 = vpop.f32.mrf.mxu0
      %v3878 = vadd.f32 0.0, %v3877
      %3879 = vdwg.mxu0
      %3880 = vmatpush.msra.mxu0 0.0
      %3881 = vmatpush.msra.mxu0 0.0
      %3882 = vmatpush.msra.mxu0 0.0
      %3883 = vmatpush.msra.mxu0 0.0
      %3884 = vmatpush.msra.mxu0 0.0
      %3885 = vmatpush.msra.mxu0 0.0
      %3886 = vmatpush.msra.mxu0 0.0
      %3887 = vmatpush.msra.mxu0 0.0
      %v3888 = vand.u32 %v3843, 4294901760
      %v3889 = vsub.f32 %v3843, %v3888
      %v3890 = vand.u32 %v3889, 4294901760
      %v3891 = vsub.f32 %v3889, %v3890
      %v3892 = vand.u32 %v3891, 4294901760
      %3893 = vmatpush.msra.mxu0 %v3892
      %v3894 = vand.u32 %v3842, 4294901760
      %v3895 = vsub.f32 %v3842, %v3894
      %v3896 = vand.u32 %v3895, 4294901760
      %v3897 = vsub.f32 %v3895, %v3896
      %v3898 = vand.u32 %v3897, 4294901760
      %3899 = vmatpush.msra.mxu0 %v3898
      %v3900 = vand.u32 %v3841, 4294901760
      %v3901 = vsub.f32 %v3841, %v3900
      %v3902 = vand.u32 %v3901, 4294901760
      %v3903 = vsub.f32 %v3901, %v3902
      %v3904 = vand.u32 %v3903, 4294901760
      %3905 = vmatpush.msra.mxu0 %v3904
      %v3906 = vand.u32 %v3840, 4294901760
      %v3907 = vsub.f32 %v3840, %v3906
      %v3908 = vand.u32 %v3907, 4294901760
      %v3909 = vsub.f32 %v3907, %v3908
      %v3910 = vand.u32 %v3909, 4294901760
      %3911 = vmatpush.msra.mxu0 %v3910
      %v3912 = vand.u32 %v3839, 4294901760
      %v3913 = vsub.f32 %v3839, %v3912
      %v3914 = vand.u32 %v3913, 4294901760
      %v3915 = vsub.f32 %v3913, %v3914
      %v3916 = vand.u32 %v3915, 4294901760
      %3917 = vmatpush.msra.mxu0 %v3916
      %v3918 = vand.u32 %v3838, 4294901760
      %v3919 = vsub.f32 %v3838, %v3918
      %v3920 = vand.u32 %v3919, 4294901760
      %v3921 = vsub.f32 %v3919, %v3920
      %v3922 = vand.u32 %v3921, 4294901760
      %3923 = vmatpush.msra.mxu0 %v3922
      %v3924 = vand.u32 %v3837, 4294901760
      %v3925 = vsub.f32 %v3837, %v3924
      %v3926 = vand.u32 %v3925, 4294901760
      %v3927 = vsub.f32 %v3925, %v3926
      %v3928 = vand.u32 %v3927, 4294901760
      %3929 = vmatpush.msra.mxu0 %v3928
      %v3930 = vand.u32 %v3836, 4294901760
      %v3931 = vsub.f32 %v3836, %v3930
      %v3932 = vand.u32 %v3931, 4294901760
      %v3933 = vsub.f32 %v3931, %v3932
      %v3934 = vand.u32 %v3933, 4294901760
      %3935 = vmatpush.msra.mxu0 %v3934
      %v3936 = vand.u32 %v3845, 4294901760
      %3937 = vmatmul.f32.gmra.mxu0 %v3936
      %v3938 = vpop.f32.mrf.mxu0
      %v3939 = vadd.f32 %v3878, %v3938
      %3940 = vdwg.mxu0
      %3941 = vmatpush.msra.mxu0 0.0
      %3942 = vmatpush.msra.mxu0 0.0
      %3943 = vmatpush.msra.mxu0 0.0
      %3944 = vmatpush.msra.mxu0 0.0
      %3945 = vmatpush.msra.mxu0 0.0
      %3946 = vmatpush.msra.mxu0 0.0
      %3947 = vmatpush.msra.mxu0 0.0
      %3948 = vmatpush.msra.mxu0 0.0
      %v3949 = vand.u32 %v3843, 4294901760
      %v3950 = vsub.f32 %v3843, %v3949
      %3951 = vmatpush.msra.mxu0 %v3950
      %v3952 = vand.u32 %v3842, 4294901760
      %v3953 = vsub.f32 %v3842, %v3952
      %3954 = vmatpush.msra.mxu0 %v3953
      %v3955 = vand.u32 %v3841, 4294901760
      %v3956 = vsub.f32 %v3841, %v3955
      %3957 = vmatpush.msra.mxu0 %v3956
      %v3958 = vand.u32 %v3840, 4294901760
      %v3959 = vsub.f32 %v3840, %v3958
      %3960 = vmatpush.msra.mxu0 %v3959
      %v3961 = vand.u32 %v3839, 4294901760
      %v3962 = vsub.f32 %v3839, %v3961
      %3963 = vmatpush.msra.mxu0 %v3962
      %v3964 = vand.u32 %v3838, 4294901760
      %v3965 = vsub.f32 %v3838, %v3964
      %3966 = vmatpush.msra.mxu0 %v3965
      %v3967 = vand.u32 %v3837, 4294901760
      %v3968 = vsub.f32 %v3837, %v3967
      %3969 = vmatpush.msra.mxu0 %v3968
      %v3970 = vand.u32 %v3836, 4294901760
      %v3971 = vsub.f32 %v3836, %v3970
      %3972 = vmatpush.msra.mxu0 %v3971
      %v3973 = vand.u32 %v3845, 4294901760
      %v3974 = vsub.f32 %v3845, %v3973
      %3975 = vmatmul.f32.gmra.mxu0 %v3974
      %v3976 = vpop.f32.mrf.mxu0
      %v3977 = vadd.f32 %v3939, %v3976
      %3978 = vdwg.mxu0
      %3979 = vmatpush.msra.mxu0 0.0
      %3980 = vmatpush.msra.mxu0 0.0
      %3981 = vmatpush.msra.mxu0 0.0
      %3982 = vmatpush.msra.mxu0 0.0
      %3983 = vmatpush.msra.mxu0 0.0
      %3984 = vmatpush.msra.mxu0 0.0
      %3985 = vmatpush.msra.mxu0 0.0
      %3986 = vmatpush.msra.mxu0 0.0
      %v3987 = vand.u32 %v3843, 4294901760
      %3988 = vmatpush.msra.mxu0 %v3987
      %v3989 = vand.u32 %v3842, 4294901760
      %3990 = vmatpush.msra.mxu0 %v3989
      %v3991 = vand.u32 %v3841, 4294901760
      %3992 = vmatpush.msra.mxu0 %v3991
      %v3993 = vand.u32 %v3840, 4294901760
      %3994 = vmatpush.msra.mxu0 %v3993
      %v3995 = vand.u32 %v3839, 4294901760
      %3996 = vmatpush.msra.mxu0 %v3995
      %v3997 = vand.u32 %v3838, 4294901760
      %3998 = vmatpush.msra.mxu0 %v3997
      %v3999 = vand.u32 %v3837, 4294901760
      %4000 = vmatpush.msra.mxu0 %v3999
      %v4001 = vand.u32 %v3836, 4294901760
      %4002 = vmatpush.msra.mxu0 %v4001
      %v4003 = vand.u32 %v3845, 4294901760
      %v4004 = vsub.f32 %v3845, %v4003
      %v4005 = vand.u32 %v4004, 4294901760
      %4006 = vmatmul.f32.gmra.mxu0 %v4005
      %v4007 = vpop.f32.mrf.mxu0
      %v4008 = vadd.f32 %v3977, %v4007
      %4009 = vdwg.mxu0
      %4010 = vmatpush.msra.mxu0 0.0
      %4011 = vmatpush.msra.mxu0 0.0
      %4012 = vmatpush.msra.mxu0 0.0
      %4013 = vmatpush.msra.mxu0 0.0
      %4014 = vmatpush.msra.mxu0 0.0
      %4015 = vmatpush.msra.mxu0 0.0
      %4016 = vmatpush.msra.mxu0 0.0
      %4017 = vmatpush.msra.mxu0 0.0
      %v4018 = vand.u32 %v3843, 4294901760
      %v4019 = vsub.f32 %v3843, %v4018
      %v4020 = vand.u32 %v4019, 4294901760
      %4021 = vmatpush.msra.mxu0 %v4020
      %v4022 = vand.u32 %v3842, 4294901760
      %v4023 = vsub.f32 %v3842, %v4022
      %v4024 = vand.u32 %v4023, 4294901760
      %4025 = vmatpush.msra.mxu0 %v4024
      %v4026 = vand.u32 %v3841, 4294901760
      %v4027 = vsub.f32 %v3841, %v4026
      %v4028 = vand.u32 %v4027, 4294901760
      %4029 = vmatpush.msra.mxu0 %v4028
      %v4030 = vand.u32 %v3840, 4294901760
      %v4031 = vsub.f32 %v3840, %v4030
      %v4032 = vand.u32 %v4031, 4294901760
      %4033 = vmatpush.msra.mxu0 %v4032
      %v4034 = vand.u32 %v3839, 4294901760
      %v4035 = vsub.f32 %v3839, %v4034
      %v4036 = vand.u32 %v4035, 4294901760
      %4037 = vmatpush.msra.mxu0 %v4036
      %v4038 = vand.u32 %v3838, 4294901760
      %v4039 = vsub.f32 %v3838, %v4038
      %v4040 = vand.u32 %v4039, 4294901760
      %4041 = vmatpush.msra.mxu0 %v4040
      %v4042 = vand.u32 %v3837, 4294901760
      %v4043 = vsub.f32 %v3837, %v4042
      %v4044 = vand.u32 %v4043, 4294901760
      %4045 = vmatpush.msra.mxu0 %v4044
      %v4046 = vand.u32 %v3836, 4294901760
      %v4047 = vsub.f32 %v3836, %v4046
      %v4048 = vand.u32 %v4047, 4294901760
      %4049 = vmatpush.msra.mxu0 %v4048
      %v4050 = vand.u32 %v3845, 4294901760
      %4051 = vmatmul.f32.gmra.mxu0 %v4050
      %v4052 = vpop.f32.mrf.mxu0
      %v4053 = vadd.f32 %v4008, %v4052
      %4054 = vdwg.mxu0
      %4055 = vmatpush.msra.mxu0 0.0
      %4056 = vmatpush.msra.mxu0 0.0
      %4057 = vmatpush.msra.mxu0 0.0
      %4058 = vmatpush.msra.mxu0 0.0
      %4059 = vmatpush.msra.mxu0 0.0
      %4060 = vmatpush.msra.mxu0 0.0
      %4061 = vmatpush.msra.mxu0 0.0
      %4062 = vmatpush.msra.mxu0 0.0
      %v4063 = vand.u32 %v3843, 4294901760
      %4064 = vmatpush.msra.mxu0 %v4063
      %v4065 = vand.u32 %v3842, 4294901760
      %4066 = vmatpush.msra.mxu0 %v4065
      %v4067 = vand.u32 %v3841, 4294901760
      %4068 = vmatpush.msra.mxu0 %v4067
      %v4069 = vand.u32 %v3840, 4294901760
      %4070 = vmatpush.msra.mxu0 %v4069
      %v4071 = vand.u32 %v3839, 4294901760
      %4072 = vmatpush.msra.mxu0 %v4071
      %v4073 = vand.u32 %v3838, 4294901760
      %4074 = vmatpush.msra.mxu0 %v4073
      %v4075 = vand.u32 %v3837, 4294901760
      %4076 = vmatpush.msra.mxu0 %v4075
      %v4077 = vand.u32 %v3836, 4294901760
      %4078 = vmatpush.msra.mxu0 %v4077
      %v4079 = vand.u32 %v3845, 4294901760
      %4080 = vmatmul.f32.gmra.mxu0 %v4079
      %v4081 = vpop.f32.mrf.mxu0
      %v4082 = vadd.f32 %v4053, %v4081
      %4083 = vdwg.mxu0
      %v4084 = vperm.slane %v407, 6
      %v4085 = vmul.f32 %v386, %v4084
      %v4086 = vmul.f32 %v387, %v4084
      %v4087 = vmul.f32 %v388, %v4084
      %v4088 = vmul.f32 %v389, %v4084
      %v4089 = vmul.f32 %v390, %v4084
      %v4090 = vmul.f32 %v391, %v4084
      %v4091 = vmul.f32 %v392, %v4084
      %v4092 = vmul.f32 %v393, %v4084
      %v4093 = vsel %vm422, %v4085, 0.0
      %4094 = vadd.xlane.f32.xlu0 %v4093
      %v4095 = vpop.xlane.xlu0 %4094
      %v4096 = vsel %vm422, %v4086, 0.0
      %4097 = vadd.xlane.f32.xlu0 %v4096
      %v4098 = vpop.xlane.xlu0 %4097
      %v4099 = vsel %vm422, %v4087, 0.0
      %4100 = vadd.xlane.f32.xlu0 %v4099
      %v4101 = vpop.xlane.xlu0 %4100
      %v4102 = vsel %vm422, %v4088, 0.0
      %4103 = vadd.xlane.f32.xlu0 %v4102
      %v4104 = vpop.xlane.xlu0 %4103
      %v4105 = vsel %vm422, %v4089, 0.0
      %4106 = vadd.xlane.f32.xlu0 %v4105
      %v4107 = vpop.xlane.xlu0 %4106
      %v4108 = vsel %vm422, %v4090, 0.0
      %4109 = vadd.xlane.f32.xlu0 %v4108
      %v4110 = vpop.xlane.xlu0 %4109
      %v4111 = vsel %vm422, %v4091, 0.0
      %4112 = vadd.xlane.f32.xlu0 %v4111
      %v4113 = vpop.xlane.xlu0 %4112
      %v4114 = vsel %vm422, %v4092, 0.0
      %4115 = vadd.xlane.f32.xlu0 %v4114
      %v4116 = vpop.xlane.xlu0 %4115
      %v4117 = vperm.slane %v409, 6
      %v4118 = vmul.f32 %v386, %v4117
      %v4119 = vmul.f32 %v387, %v4117
      %v4120 = vmul.f32 %v388, %v4117
      %v4121 = vmul.f32 %v389, %v4117
      %v4122 = vmul.f32 %v390, %v4117
      %v4123 = vmul.f32 %v391, %v4117
      %v4124 = vmul.f32 %v392, %v4117
      %v4125 = vmul.f32 %v393, %v4117
      %v4126 = vsel %vm422, %v4118, 0.0
      %4127 = vadd.xlane.f32.xlu0 %v4126
      %v4128 = vpop.xlane.xlu0 %4127
      %v4129 = vsel %vm422, %v4119, 0.0
      %4130 = vadd.xlane.f32.xlu0 %v4129
      %v4131 = vpop.xlane.xlu0 %4130
      %v4132 = vsel %vm422, %v4120, 0.0
      %4133 = vadd.xlane.f32.xlu0 %v4132
      %v4134 = vpop.xlane.xlu0 %4133
      %v4135 = vsel %vm422, %v4121, 0.0
      %4136 = vadd.xlane.f32.xlu0 %v4135
      %v4137 = vpop.xlane.xlu0 %4136
      %v4138 = vsel %vm422, %v4122, 0.0
      %4139 = vadd.xlane.f32.xlu0 %v4138
      %v4140 = vpop.xlane.xlu0 %4139
      %v4141 = vsel %vm422, %v4123, 0.0
      %4142 = vadd.xlane.f32.xlu0 %v4141
      %v4143 = vpop.xlane.xlu0 %4142
      %v4144 = vsel %vm422, %v4124, 0.0
      %4145 = vadd.xlane.f32.xlu0 %v4144
      %v4146 = vpop.xlane.xlu0 %4145
      %v4147 = vsel %vm422, %v4125, 0.0
      %4148 = vadd.xlane.f32.xlu0 %v4147
      %v4149 = vpop.xlane.xlu0 %4148
      %v4150 = vperm.slane %v412, 6
      %v4151 = vmul.f32 %v386, %v4150
      %v4152 = vmul.f32 %v387, %v4150
      %v4153 = vmul.f32 %v388, %v4150
      %v4154 = vmul.f32 %v389, %v4150
      %v4155 = vmul.f32 %v390, %v4150
      %v4156 = vmul.f32 %v391, %v4150
      %v4157 = vmul.f32 %v392, %v4150
      %v4158 = vmul.f32 %v393, %v4150
      %v4159 = vsel %vm422, %v4151, 0.0
      %4160 = vadd.xlane.f32.xlu0 %v4159
      %v4161 = vpop.xlane.xlu0 %4160
      %v4162 = vsel %vm422, %v4152, 0.0
      %4163 = vadd.xlane.f32.xlu0 %v4162
      %v4164 = vpop.xlane.xlu0 %4163
      %v4165 = vsel %vm422, %v4153, 0.0
      %4166 = vadd.xlane.f32.xlu0 %v4165
      %v4167 = vpop.xlane.xlu0 %4166
      %v4168 = vsel %vm422, %v4154, 0.0
      %4169 = vadd.xlane.f32.xlu0 %v4168
      %v4170 = vpop.xlane.xlu0 %4169
      %v4171 = vsel %vm422, %v4155, 0.0
      %4172 = vadd.xlane.f32.xlu0 %v4171
      %v4173 = vpop.xlane.xlu0 %4172
      %v4174 = vsel %vm422, %v4156, 0.0
      %4175 = vadd.xlane.f32.xlu0 %v4174
      %v4176 = vpop.xlane.xlu0 %4175
      %v4177 = vsel %vm422, %v4157, 0.0
      %4178 = vadd.xlane.f32.xlu0 %v4177
      %v4179 = vpop.xlane.xlu0 %4178
      %v4180 = vsel %vm422, %v4158, 0.0
      %4181 = vadd.xlane.f32.xlu0 %v4180
      %v4182 = vpop.xlane.xlu0 %4181
      %v4183 = vrot.slane %v411, 6
      %v4184 = vsel %vm422, %v4183, 0
      %4186 = vmatpush.msra.mxu0 0.0
      %4187 = vmatpush.msra.mxu0 0.0
      %4188 = vmatpush.msra.mxu0 0.0
      %4189 = vmatpush.msra.mxu0 0.0
      %4190 = vmatpush.msra.mxu0 0.0
      %4191 = vmatpush.msra.mxu0 0.0
      %4192 = vmatpush.msra.mxu0 0.0
      %4193 = vmatpush.msra.mxu0 0.0
      %v4194 = vand.u32 %v3843, 4294901760
      %4195 = vmatpush.msra.mxu0 %v4194
      %v4196 = vand.u32 %v3842, 4294901760
      %4197 = vmatpush.msra.mxu0 %v4196
      %v4198 = vand.u32 %v3841, 4294901760
      %4199 = vmatpush.msra.mxu0 %v4198
      %v4200 = vand.u32 %v3840, 4294901760
      %4201 = vmatpush.msra.mxu0 %v4200
      %v4202 = vand.u32 %v3839, 4294901760
      %4203 = vmatpush.msra.mxu0 %v4202
      %v4204 = vand.u32 %v3838, 4294901760
      %4205 = vmatpush.msra.mxu0 %v4204
      %v4206 = vand.u32 %v3837, 4294901760
      %4207 = vmatpush.msra.mxu0 %v4206
      %v4208 = vand.u32 %v3836, 4294901760
      %4209 = vmatpush.msra.mxu0 %v4208
      %v4210 = vand.u32 %v4184, 4294901760
      %v4211 = vsub.f32 %v4184, %v4210
      %v4212 = vand.u32 %v4211, 4294901760
      %v4213 = vsub.f32 %v4211, %v4212
      %v4214 = vand.u32 %v4213, 4294901760
      %4215 = vmatmul.f32.gmra.mxu0 %v4214
      %v4216 = vpop.f32.mrf.mxu0
      %v4217 = vadd.f32 0.0, %v4216
      %4218 = vdwg.mxu0
      %4219 = vmatpush.msra.mxu0 0.0
      %4220 = vmatpush.msra.mxu0 0.0
      %4221 = vmatpush.msra.mxu0 0.0
      %4222 = vmatpush.msra.mxu0 0.0
      %4223 = vmatpush.msra.mxu0 0.0
      %4224 = vmatpush.msra.mxu0 0.0
      %4225 = vmatpush.msra.mxu0 0.0
      %4226 = vmatpush.msra.mxu0 0.0
      %v4227 = vand.u32 %v3843, 4294901760
      %v4228 = vsub.f32 %v3843, %v4227
      %v4229 = vand.u32 %v4228, 4294901760
      %v4230 = vsub.f32 %v4228, %v4229
      %v4231 = vand.u32 %v4230, 4294901760
      %4232 = vmatpush.msra.mxu0 %v4231
      %v4233 = vand.u32 %v3842, 4294901760
      %v4234 = vsub.f32 %v3842, %v4233
      %v4235 = vand.u32 %v4234, 4294901760
      %v4236 = vsub.f32 %v4234, %v4235
      %v4237 = vand.u32 %v4236, 4294901760
      %4238 = vmatpush.msra.mxu0 %v4237
      %v4239 = vand.u32 %v3841, 4294901760
      %v4240 = vsub.f32 %v3841, %v4239
      %v4241 = vand.u32 %v4240, 4294901760
      %v4242 = vsub.f32 %v4240, %v4241
      %v4243 = vand.u32 %v4242, 4294901760
      %4244 = vmatpush.msra.mxu0 %v4243
      %v4245 = vand.u32 %v3840, 4294901760
      %v4246 = vsub.f32 %v3840, %v4245
      %v4247 = vand.u32 %v4246, 4294901760
      %v4248 = vsub.f32 %v4246, %v4247
      %v4249 = vand.u32 %v4248, 4294901760
      %4250 = vmatpush.msra.mxu0 %v4249
      %v4251 = vand.u32 %v3839, 4294901760
      %v4252 = vsub.f32 %v3839, %v4251
      %v4253 = vand.u32 %v4252, 4294901760
      %v4254 = vsub.f32 %v4252, %v4253
      %v4255 = vand.u32 %v4254, 4294901760
      %4256 = vmatpush.msra.mxu0 %v4255
      %v4257 = vand.u32 %v3838, 4294901760
      %v4258 = vsub.f32 %v3838, %v4257
      %v4259 = vand.u32 %v4258, 4294901760
      %v4260 = vsub.f32 %v4258, %v4259
      %v4261 = vand.u32 %v4260, 4294901760
      %4262 = vmatpush.msra.mxu0 %v4261
      %v4263 = vand.u32 %v3837, 4294901760
      %v4264 = vsub.f32 %v3837, %v4263
      %v4265 = vand.u32 %v4264, 4294901760
      %v4266 = vsub.f32 %v4264, %v4265
      %v4267 = vand.u32 %v4266, 4294901760
      %4268 = vmatpush.msra.mxu0 %v4267
      %v4269 = vand.u32 %v3836, 4294901760
      %v4270 = vsub.f32 %v3836, %v4269
      %v4271 = vand.u32 %v4270, 4294901760
      %v4272 = vsub.f32 %v4270, %v4271
      %v4273 = vand.u32 %v4272, 4294901760
      %4274 = vmatpush.msra.mxu0 %v4273
      %v4275 = vand.u32 %v4184, 4294901760
      %4276 = vmatmul.f32.gmra.mxu0 %v4275
      %v4277 = vpop.f32.mrf.mxu0
      %v4278 = vadd.f32 %v4217, %v4277
      %4279 = vdwg.mxu0
      %4280 = vmatpush.msra.mxu0 0.0
      %4281 = vmatpush.msra.mxu0 0.0
      %4282 = vmatpush.msra.mxu0 0.0
      %4283 = vmatpush.msra.mxu0 0.0
      %4284 = vmatpush.msra.mxu0 0.0
      %4285 = vmatpush.msra.mxu0 0.0
      %4286 = vmatpush.msra.mxu0 0.0
      %4287 = vmatpush.msra.mxu0 0.0
      %v4288 = vand.u32 %v3843, 4294901760
      %v4289 = vsub.f32 %v3843, %v4288
      %4290 = vmatpush.msra.mxu0 %v4289
      %v4291 = vand.u32 %v3842, 4294901760
      %v4292 = vsub.f32 %v3842, %v4291
      %4293 = vmatpush.msra.mxu0 %v4292
      %v4294 = vand.u32 %v3841, 4294901760
      %v4295 = vsub.f32 %v3841, %v4294
      %4296 = vmatpush.msra.mxu0 %v4295
      %v4297 = vand.u32 %v3840, 4294901760
      %v4298 = vsub.f32 %v3840, %v4297
      %4299 = vmatpush.msra.mxu0 %v4298
      %v4300 = vand.u32 %v3839, 4294901760
      %v4301 = vsub.f32 %v3839, %v4300
      %4302 = vmatpush.msra.mxu0 %v4301
      %v4303 = vand.u32 %v3838, 4294901760
      %v4304 = vsub.f32 %v3838, %v4303
      %4305 = vmatpush.msra.mxu0 %v4304
      %v4306 = vand.u32 %v3837, 4294901760
      %v4307 = vsub.f32 %v3837, %v4306
      %4308 = vmatpush.msra.mxu0 %v4307
      %v4309 = vand.u32 %v3836, 4294901760
      %v4310 = vsub.f32 %v3836, %v4309
      %4311 = vmatpush.msra.mxu0 %v4310
      %v4312 = vand.u32 %v4184, 4294901760
      %v4313 = vsub.f32 %v4184, %v4312
      %4314 = vmatmul.f32.gmra.mxu0 %v4313
      %v4315 = vpop.f32.mrf.mxu0
      %v4316 = vadd.f32 %v4278, %v4315
      %4317 = vdwg.mxu0
      %4318 = vmatpush.msra.mxu0 0.0
      %4319 = vmatpush.msra.mxu0 0.0
      %4320 = vmatpush.msra.mxu0 0.0
      %4321 = vmatpush.msra.mxu0 0.0
      %4322 = vmatpush.msra.mxu0 0.0
      %4323 = vmatpush.msra.mxu0 0.0
      %4324 = vmatpush.msra.mxu0 0.0
      %4325 = vmatpush.msra.mxu0 0.0
      %v4326 = vand.u32 %v3843, 4294901760
      %4327 = vmatpush.msra.mxu0 %v4326
      %v4328 = vand.u32 %v3842, 4294901760
      %4329 = vmatpush.msra.mxu0 %v4328
      %v4330 = vand.u32 %v3841, 4294901760
      %4331 = vmatpush.msra.mxu0 %v4330
      %v4332 = vand.u32 %v3840, 4294901760
      %4333 = vmatpush.msra.mxu0 %v4332
      %v4334 = vand.u32 %v3839, 4294901760
      %4335 = vmatpush.msra.mxu0 %v4334
      %v4336 = vand.u32 %v3838, 4294901760
      %4337 = vmatpush.msra.mxu0 %v4336
      %v4338 = vand.u32 %v3837, 4294901760
      %4339 = vmatpush.msra.mxu0 %v4338
      %v4340 = vand.u32 %v3836, 4294901760
      %4341 = vmatpush.msra.mxu0 %v4340
      %v4342 = vand.u32 %v4184, 4294901760
      %v4343 = vsub.f32 %v4184, %v4342
      %v4344 = vand.u32 %v4343, 4294901760
      %4345 = vmatmul.f32.gmra.mxu0 %v4344
      %v4346 = vpop.f32.mrf.mxu0
      %v4347 = vadd.f32 %v4316, %v4346
      %4348 = vdwg.mxu0
      %4349 = vmatpush.msra.mxu0 0.0
      %4350 = vmatpush.msra.mxu0 0.0
      %4351 = vmatpush.msra.mxu0 0.0
      %4352 = vmatpush.msra.mxu0 0.0
      %4353 = vmatpush.msra.mxu0 0.0
      %4354 = vmatpush.msra.mxu0 0.0
      %4355 = vmatpush.msra.mxu0 0.0
      %4356 = vmatpush.msra.mxu0 0.0
      %v4357 = vand.u32 %v3843, 4294901760
      %v4358 = vsub.f32 %v3843, %v4357
      %v4359 = vand.u32 %v4358, 4294901760
      %4360 = vmatpush.msra.mxu0 %v4359
      %v4361 = vand.u32 %v3842, 4294901760
      %v4362 = vsub.f32 %v3842, %v4361
      %v4363 = vand.u32 %v4362, 4294901760
      %4364 = vmatpush.msra.mxu0 %v4363
      %v4365 = vand.u32 %v3841, 4294901760
      %v4366 = vsub.f32 %v3841, %v4365
      %v4367 = vand.u32 %v4366, 4294901760
      %4368 = vmatpush.msra.mxu0 %v4367
      %v4369 = vand.u32 %v3840, 4294901760
      %v4370 = vsub.f32 %v3840, %v4369
      %v4371 = vand.u32 %v4370, 4294901760
      %4372 = vmatpush.msra.mxu0 %v4371
      %v4373 = vand.u32 %v3839, 4294901760
      %v4374 = vsub.f32 %v3839, %v4373
      %v4375 = vand.u32 %v4374, 4294901760
      %4376 = vmatpush.msra.mxu0 %v4375
      %v4377 = vand.u32 %v3838, 4294901760
      %v4378 = vsub.f32 %v3838, %v4377
      %v4379 = vand.u32 %v4378, 4294901760
      %4380 = vmatpush.msra.mxu0 %v4379
      %v4381 = vand.u32 %v3837, 4294901760
      %v4382 = vsub.f32 %v3837, %v4381
      %v4383 = vand.u32 %v4382, 4294901760
      %4384 = vmatpush.msra.mxu0 %v4383
      %v4385 = vand.u32 %v3836, 4294901760
      %v4386 = vsub.f32 %v3836, %v4385
      %v4387 = vand.u32 %v4386, 4294901760
      %4388 = vmatpush.msra.mxu0 %v4387
      %v4389 = vand.u32 %v4184, 4294901760
      %4390 = vmatmul.f32.gmra.mxu0 %v4389
      %v4391 = vpop.f32.mrf.mxu0
      %v4392 = vadd.f32 %v4347, %v4391
      %4393 = vdwg.mxu0
      %4394 = vmatpush.msra.mxu0 0.0
      %4395 = vmatpush.msra.mxu0 0.0
      %4396 = vmatpush.msra.mxu0 0.0
      %4397 = vmatpush.msra.mxu0 0.0
      %4398 = vmatpush.msra.mxu0 0.0
      %4399 = vmatpush.msra.mxu0 0.0
      %4400 = vmatpush.msra.mxu0 0.0
      %4401 = vmatpush.msra.mxu0 0.0
      %v4402 = vand.u32 %v3843, 4294901760
      %4403 = vmatpush.msra.mxu0 %v4402
      %v4404 = vand.u32 %v3842, 4294901760
      %4405 = vmatpush.msra.mxu0 %v4404
      %v4406 = vand.u32 %v3841, 4294901760
      %4407 = vmatpush.msra.mxu0 %v4406
      %v4408 = vand.u32 %v3840, 4294901760
      %4409 = vmatpush.msra.mxu0 %v4408
      %v4410 = vand.u32 %v3839, 4294901760
      %4411 = vmatpush.msra.mxu0 %v4410
      %v4412 = vand.u32 %v3838, 4294901760
      %4413 = vmatpush.msra.mxu0 %v4412
      %v4414 = vand.u32 %v3837, 4294901760
      %4415 = vmatpush.msra.mxu0 %v4414
      %v4416 = vand.u32 %v3836, 4294901760
      %4417 = vmatpush.msra.mxu0 %v4416
      %v4418 = vand.u32 %v4184, 4294901760
      %4419 = vmatmul.f32.gmra.mxu0 %v4418
      %v4420 = vpop.f32.mrf.mxu0
      %v4421 = vadd.f32 %v4392, %v4420
      %4422 = vdwg.mxu0
      %v4423 = vmul.f32 %v3836, %v4095
      %v4424 = vmul.f32 %v3837, %v4098
      %v4425 = vmul.f32 %v3838, %v4101
      %v4426 = vmul.f32 %v3839, %v4104
      %v4427 = vmul.f32 %v3840, %v4107
      %v4428 = vmul.f32 %v3841, %v4110
      %v4429 = vmul.f32 %v3842, %v4113
      %v4430 = vmul.f32 %v3843, %v4116
      %v4431 = vperm.slane %v4421, 0
      %v4432 = vmul.f32 %v4161, %v4431
      %v4433 = vmul.f32 %v4164, %v4431
      %v4434 = vmul.f32 %v4167, %v4431
      %v4435 = vmul.f32 %v4170, %v4431
      %v4436 = vmul.f32 %v4173, %v4431
      %v4437 = vmul.f32 %v4176, %v4431
      %v4438 = vmul.f32 %v4179, %v4431
      %v4439 = vmul.f32 %v4182, %v4431
      %v4440 = vperm.slane %v410, 6
      %v4441 = vmul.f32 %v4128, %v4440
      %v4442 = vmul.f32 %v4131, %v4440
      %v4443 = vmul.f32 %v4134, %v4440
      %v4444 = vmul.f32 %v4137, %v4440
      %v4445 = vmul.f32 %v4140, %v4440
      %v4446 = vmul.f32 %v4143, %v4440
      %v4447 = vmul.f32 %v4146, %v4440
      %v4448 = vmul.f32 %v4149, %v4440
      %v4449 = vadd.f32 %v4432, %v4441
      %v4450 = vadd.f32 %v4433, %v4442
      %v4451 = vadd.f32 %v4434, %v4443
      %v4452 = vadd.f32 %v4435, %v4444
      %v4453 = vadd.f32 %v4436, %v4445
      %v4454 = vadd.f32 %v4437, %v4446
      %v4455 = vadd.f32 %v4438, %v4447
      %v4456 = vadd.f32 %v4439, %v4448
      %v4457 = vmul.f32 %v4449, %v394
      %v4458 = vmul.f32 %v4450, %v395
      %v4459 = vmul.f32 %v4451, %v396
      %v4460 = vmul.f32 %v4452, %v397
      %v4461 = vmul.f32 %v4453, %v398
      %v4462 = vmul.f32 %v4454, %v399
      %v4463 = vmul.f32 %v4455, %v400
      %v4464 = vmul.f32 %v4456, %v401
      %v4465 = vadd.f32 %v4423, %v4457
      %v4466 = vadd.f32 %v4424, %v4458
      %v4467 = vadd.f32 %v4425, %v4459
      %v4468 = vadd.f32 %v4426, %v4460
      %v4469 = vadd.f32 %v4427, %v4461
      %v4470 = vadd.f32 %v4428, %v4462
      %v4471 = vadd.f32 %v4429, %v4463
      %v4472 = vadd.f32 %v4430, %v4464
      %v4473 = vrot.slane %v408, 6
      %v4474 = vsel %vm422, %v4473, 0
      %4476 = vmatpush.msra.mxu0 0.0
      %4477 = vmatpush.msra.mxu0 0.0
      %4478 = vmatpush.msra.mxu0 0.0
      %4479 = vmatpush.msra.mxu0 0.0
      %4480 = vmatpush.msra.mxu0 0.0
      %4481 = vmatpush.msra.mxu0 0.0
      %4482 = vmatpush.msra.mxu0 0.0
      %4483 = vmatpush.msra.mxu0 0.0
      %v4484 = vand.u32 %v4472, 4294901760
      %4485 = vmatpush.msra.mxu0 %v4484
      %v4486 = vand.u32 %v4471, 4294901760
      %4487 = vmatpush.msra.mxu0 %v4486
      %v4488 = vand.u32 %v4470, 4294901760
      %4489 = vmatpush.msra.mxu0 %v4488
      %v4490 = vand.u32 %v4469, 4294901760
      %4491 = vmatpush.msra.mxu0 %v4490
      %v4492 = vand.u32 %v4468, 4294901760
      %4493 = vmatpush.msra.mxu0 %v4492
      %v4494 = vand.u32 %v4467, 4294901760
      %4495 = vmatpush.msra.mxu0 %v4494
      %v4496 = vand.u32 %v4466, 4294901760
      %4497 = vmatpush.msra.mxu0 %v4496
      %v4498 = vand.u32 %v4465, 4294901760
      %4499 = vmatpush.msra.mxu0 %v4498
      %v4500 = vand.u32 %v4474, 4294901760
      %v4501 = vsub.f32 %v4474, %v4500
      %v4502 = vand.u32 %v4501, 4294901760
      %v4503 = vsub.f32 %v4501, %v4502
      %v4504 = vand.u32 %v4503, 4294901760
      %4505 = vmatmul.f32.gmra.mxu0 %v4504
      %v4506 = vpop.f32.mrf.mxu0
      %v4507 = vadd.f32 0.0, %v4506
      %4508 = vdwg.mxu0
      %4509 = vmatpush.msra.mxu0 0.0
      %4510 = vmatpush.msra.mxu0 0.0
      %4511 = vmatpush.msra.mxu0 0.0
      %4512 = vmatpush.msra.mxu0 0.0
      %4513 = vmatpush.msra.mxu0 0.0
      %4514 = vmatpush.msra.mxu0 0.0
      %4515 = vmatpush.msra.mxu0 0.0
      %4516 = vmatpush.msra.mxu0 0.0
      %v4517 = vand.u32 %v4472, 4294901760
      %v4518 = vsub.f32 %v4472, %v4517
      %v4519 = vand.u32 %v4518, 4294901760
      %v4520 = vsub.f32 %v4518, %v4519
      %v4521 = vand.u32 %v4520, 4294901760
      %4522 = vmatpush.msra.mxu0 %v4521
      %v4523 = vand.u32 %v4471, 4294901760
      %v4524 = vsub.f32 %v4471, %v4523
      %v4525 = vand.u32 %v4524, 4294901760
      %v4526 = vsub.f32 %v4524, %v4525
      %v4527 = vand.u32 %v4526, 4294901760
      %4528 = vmatpush.msra.mxu0 %v4527
      %v4529 = vand.u32 %v4470, 4294901760
      %v4530 = vsub.f32 %v4470, %v4529
      %v4531 = vand.u32 %v4530, 4294901760
      %v4532 = vsub.f32 %v4530, %v4531
      %v4533 = vand.u32 %v4532, 4294901760
      %4534 = vmatpush.msra.mxu0 %v4533
      %v4535 = vand.u32 %v4469, 4294901760
      %v4536 = vsub.f32 %v4469, %v4535
      %v4537 = vand.u32 %v4536, 4294901760
      %v4538 = vsub.f32 %v4536, %v4537
      %v4539 = vand.u32 %v4538, 4294901760
      %4540 = vmatpush.msra.mxu0 %v4539
      %v4541 = vand.u32 %v4468, 4294901760
      %v4542 = vsub.f32 %v4468, %v4541
      %v4543 = vand.u32 %v4542, 4294901760
      %v4544 = vsub.f32 %v4542, %v4543
      %v4545 = vand.u32 %v4544, 4294901760
      %4546 = vmatpush.msra.mxu0 %v4545
      %v4547 = vand.u32 %v4467, 4294901760
      %v4548 = vsub.f32 %v4467, %v4547
      %v4549 = vand.u32 %v4548, 4294901760
      %v4550 = vsub.f32 %v4548, %v4549
      %v4551 = vand.u32 %v4550, 4294901760
      %4552 = vmatpush.msra.mxu0 %v4551
      %v4553 = vand.u32 %v4466, 4294901760
      %v4554 = vsub.f32 %v4466, %v4553
      %v4555 = vand.u32 %v4554, 4294901760
      %v4556 = vsub.f32 %v4554, %v4555
      %v4557 = vand.u32 %v4556, 4294901760
      %4558 = vmatpush.msra.mxu0 %v4557
      %v4559 = vand.u32 %v4465, 4294901760
      %v4560 = vsub.f32 %v4465, %v4559
      %v4561 = vand.u32 %v4560, 4294901760
      %v4562 = vsub.f32 %v4560, %v4561
      %v4563 = vand.u32 %v4562, 4294901760
      %4564 = vmatpush.msra.mxu0 %v4563
      %v4565 = vand.u32 %v4474, 4294901760
      %4566 = vmatmul.f32.gmra.mxu0 %v4565
      %v4567 = vpop.f32.mrf.mxu0
      %v4568 = vadd.f32 %v4507, %v4567
      %4569 = vdwg.mxu0
      %4570 = vmatpush.msra.mxu0 0.0
      %4571 = vmatpush.msra.mxu0 0.0
      %4572 = vmatpush.msra.mxu0 0.0
      %4573 = vmatpush.msra.mxu0 0.0
      %4574 = vmatpush.msra.mxu0 0.0
      %4575 = vmatpush.msra.mxu0 0.0
      %4576 = vmatpush.msra.mxu0 0.0
      %4577 = vmatpush.msra.mxu0 0.0
      %v4578 = vand.u32 %v4472, 4294901760
      %v4579 = vsub.f32 %v4472, %v4578
      %4580 = vmatpush.msra.mxu0 %v4579
      %v4581 = vand.u32 %v4471, 4294901760
      %v4582 = vsub.f32 %v4471, %v4581
      %4583 = vmatpush.msra.mxu0 %v4582
      %v4584 = vand.u32 %v4470, 4294901760
      %v4585 = vsub.f32 %v4470, %v4584
      %4586 = vmatpush.msra.mxu0 %v4585
      %v4587 = vand.u32 %v4469, 4294901760
      %v4588 = vsub.f32 %v4469, %v4587
      %4589 = vmatpush.msra.mxu0 %v4588
      %v4590 = vand.u32 %v4468, 4294901760
      %v4591 = vsub.f32 %v4468, %v4590
      %4592 = vmatpush.msra.mxu0 %v4591
      %v4593 = vand.u32 %v4467, 4294901760
      %v4594 = vsub.f32 %v4467, %v4593
      %4595 = vmatpush.msra.mxu0 %v4594
      %v4596 = vand.u32 %v4466, 4294901760
      %v4597 = vsub.f32 %v4466, %v4596
      %4598 = vmatpush.msra.mxu0 %v4597
      %v4599 = vand.u32 %v4465, 4294901760
      %v4600 = vsub.f32 %v4465, %v4599
      %4601 = vmatpush.msra.mxu0 %v4600
      %v4602 = vand.u32 %v4474, 4294901760
      %v4603 = vsub.f32 %v4474, %v4602
      %4604 = vmatmul.f32.gmra.mxu0 %v4603
      %v4605 = vpop.f32.mrf.mxu0
      %v4606 = vadd.f32 %v4568, %v4605
      %4607 = vdwg.mxu0
      %4608 = vmatpush.msra.mxu0 0.0
      %4609 = vmatpush.msra.mxu0 0.0
      %4610 = vmatpush.msra.mxu0 0.0
      %4611 = vmatpush.msra.mxu0 0.0
      %4612 = vmatpush.msra.mxu0 0.0
      %4613 = vmatpush.msra.mxu0 0.0
      %4614 = vmatpush.msra.mxu0 0.0
      %4615 = vmatpush.msra.mxu0 0.0
      %v4616 = vand.u32 %v4472, 4294901760
      %4617 = vmatpush.msra.mxu0 %v4616
      %v4618 = vand.u32 %v4471, 4294901760
      %4619 = vmatpush.msra.mxu0 %v4618
      %v4620 = vand.u32 %v4470, 4294901760
      %4621 = vmatpush.msra.mxu0 %v4620
      %v4622 = vand.u32 %v4469, 4294901760
      %4623 = vmatpush.msra.mxu0 %v4622
      %v4624 = vand.u32 %v4468, 4294901760
      %4625 = vmatpush.msra.mxu0 %v4624
      %v4626 = vand.u32 %v4467, 4294901760
      %4627 = vmatpush.msra.mxu0 %v4626
      %v4628 = vand.u32 %v4466, 4294901760
      %4629 = vmatpush.msra.mxu0 %v4628
      %v4630 = vand.u32 %v4465, 4294901760
      %4631 = vmatpush.msra.mxu0 %v4630
      %v4632 = vand.u32 %v4474, 4294901760
      %v4633 = vsub.f32 %v4474, %v4632
      %v4634 = vand.u32 %v4633, 4294901760
      %4635 = vmatmul.f32.gmra.mxu0 %v4634
      %v4636 = vpop.f32.mrf.mxu0
      %v4637 = vadd.f32 %v4606, %v4636
      %4638 = vdwg.mxu0
      %4639 = vmatpush.msra.mxu0 0.0
      %4640 = vmatpush.msra.mxu0 0.0
      %4641 = vmatpush.msra.mxu0 0.0
      %4642 = vmatpush.msra.mxu0 0.0
      %4643 = vmatpush.msra.mxu0 0.0
      %4644 = vmatpush.msra.mxu0 0.0
      %4645 = vmatpush.msra.mxu0 0.0
      %4646 = vmatpush.msra.mxu0 0.0
      %v4647 = vand.u32 %v4472, 4294901760
      %v4648 = vsub.f32 %v4472, %v4647
      %v4649 = vand.u32 %v4648, 4294901760
      %4650 = vmatpush.msra.mxu0 %v4649
      %v4651 = vand.u32 %v4471, 4294901760
      %v4652 = vsub.f32 %v4471, %v4651
      %v4653 = vand.u32 %v4652, 4294901760
      %4654 = vmatpush.msra.mxu0 %v4653
      %v4655 = vand.u32 %v4470, 4294901760
      %v4656 = vsub.f32 %v4470, %v4655
      %v4657 = vand.u32 %v4656, 4294901760
      %4658 = vmatpush.msra.mxu0 %v4657
      %v4659 = vand.u32 %v4469, 4294901760
      %v4660 = vsub.f32 %v4469, %v4659
      %v4661 = vand.u32 %v4660, 4294901760
      %4662 = vmatpush.msra.mxu0 %v4661
      %v4663 = vand.u32 %v4468, 4294901760
      %v4664 = vsub.f32 %v4468, %v4663
      %v4665 = vand.u32 %v4664, 4294901760
      %4666 = vmatpush.msra.mxu0 %v4665
      %v4667 = vand.u32 %v4467, 4294901760
      %v4668 = vsub.f32 %v4467, %v4667
      %v4669 = vand.u32 %v4668, 4294901760
      %4670 = vmatpush.msra.mxu0 %v4669
      %v4671 = vand.u32 %v4466, 4294901760
      %v4672 = vsub.f32 %v4466, %v4671
      %v4673 = vand.u32 %v4672, 4294901760
      %4674 = vmatpush.msra.mxu0 %v4673
      %v4675 = vand.u32 %v4465, 4294901760
      %v4676 = vsub.f32 %v4465, %v4675
      %v4677 = vand.u32 %v4676, 4294901760
      %4678 = vmatpush.msra.mxu0 %v4677
      %v4679 = vand.u32 %v4474, 4294901760
      %4680 = vmatmul.f32.gmra.mxu0 %v4679
      %v4681 = vpop.f32.mrf.mxu0
      %v4682 = vadd.f32 %v4637, %v4681
      %4683 = vdwg.mxu0
      %4684 = vmatpush.msra.mxu0 0.0
      %4685 = vmatpush.msra.mxu0 0.0
      %4686 = vmatpush.msra.mxu0 0.0
      %4687 = vmatpush.msra.mxu0 0.0
      %4688 = vmatpush.msra.mxu0 0.0
      %4689 = vmatpush.msra.mxu0 0.0
      %4690 = vmatpush.msra.mxu0 0.0
      %4691 = vmatpush.msra.mxu0 0.0
      %v4692 = vand.u32 %v4472, 4294901760
      %4693 = vmatpush.msra.mxu0 %v4692
      %v4694 = vand.u32 %v4471, 4294901760
      %4695 = vmatpush.msra.mxu0 %v4694
      %v4696 = vand.u32 %v4470, 4294901760
      %4697 = vmatpush.msra.mxu0 %v4696
      %v4698 = vand.u32 %v4469, 4294901760
      %4699 = vmatpush.msra.mxu0 %v4698
      %v4700 = vand.u32 %v4468, 4294901760
      %4701 = vmatpush.msra.mxu0 %v4700
      %v4702 = vand.u32 %v4467, 4294901760
      %4703 = vmatpush.msra.mxu0 %v4702
      %v4704 = vand.u32 %v4466, 4294901760
      %4705 = vmatpush.msra.mxu0 %v4704
      %v4706 = vand.u32 %v4465, 4294901760
      %4707 = vmatpush.msra.mxu0 %v4706
      %v4708 = vand.u32 %v4474, 4294901760
      %4709 = vmatmul.f32.gmra.mxu0 %v4708
      %v4710 = vpop.f32.mrf.mxu0
      %v4711 = vadd.f32 %v4682, %v4710
      %4712 = vdwg.mxu0
      %v4713 = vperm.slane %v407, 7
      %v4714 = vmul.f32 %v386, %v4713
      %v4715 = vmul.f32 %v387, %v4713
      %v4716 = vmul.f32 %v388, %v4713
      %v4717 = vmul.f32 %v389, %v4713
      %v4718 = vmul.f32 %v390, %v4713
      %v4719 = vmul.f32 %v391, %v4713
      %v4720 = vmul.f32 %v392, %v4713
      %v4721 = vmul.f32 %v393, %v4713
      %v4722 = vsel %vm422, %v4714, 0.0
      %4723 = vadd.xlane.f32.xlu0 %v4722
      %v4724 = vpop.xlane.xlu0 %4723
      %v4725 = vsel %vm422, %v4715, 0.0
      %4726 = vadd.xlane.f32.xlu0 %v4725
      %v4727 = vpop.xlane.xlu0 %4726
      %v4728 = vsel %vm422, %v4716, 0.0
      %4729 = vadd.xlane.f32.xlu0 %v4728
      %v4730 = vpop.xlane.xlu0 %4729
      %v4731 = vsel %vm422, %v4717, 0.0
      %4732 = vadd.xlane.f32.xlu0 %v4731
      %v4733 = vpop.xlane.xlu0 %4732
      %v4734 = vsel %vm422, %v4718, 0.0
      %4735 = vadd.xlane.f32.xlu0 %v4734
      %v4736 = vpop.xlane.xlu0 %4735
      %v4737 = vsel %vm422, %v4719, 0.0
      %4738 = vadd.xlane.f32.xlu0 %v4737
      %v4739 = vpop.xlane.xlu0 %4738
      %v4740 = vsel %vm422, %v4720, 0.0
      %4741 = vadd.xlane.f32.xlu0 %v4740
      %v4742 = vpop.xlane.xlu0 %4741
      %v4743 = vsel %vm422, %v4721, 0.0
      %4744 = vadd.xlane.f32.xlu0 %v4743
      %v4745 = vpop.xlane.xlu0 %4744
      %v4746 = vperm.slane %v409, 7
      %v4747 = vmul.f32 %v386, %v4746
      %v4748 = vmul.f32 %v387, %v4746
      %v4749 = vmul.f32 %v388, %v4746
      %v4750 = vmul.f32 %v389, %v4746
      %v4751 = vmul.f32 %v390, %v4746
      %v4752 = vmul.f32 %v391, %v4746
      %v4753 = vmul.f32 %v392, %v4746
      %v4754 = vmul.f32 %v393, %v4746
      %v4755 = vsel %vm422, %v4747, 0.0
      %4756 = vadd.xlane.f32.xlu0 %v4755
      %v4757 = vpop.xlane.xlu0 %4756
      %v4758 = vsel %vm422, %v4748, 0.0
      %4759 = vadd.xlane.f32.xlu0 %v4758
      %v4760 = vpop.xlane.xlu0 %4759
      %v4761 = vsel %vm422, %v4749, 0.0
      %4762 = vadd.xlane.f32.xlu0 %v4761
      %v4763 = vpop.xlane.xlu0 %4762
      %v4764 = vsel %vm422, %v4750, 0.0
      %4765 = vadd.xlane.f32.xlu0 %v4764
      %v4766 = vpop.xlane.xlu0 %4765
      %v4767 = vsel %vm422, %v4751, 0.0
      %4768 = vadd.xlane.f32.xlu0 %v4767
      %v4769 = vpop.xlane.xlu0 %4768
      %v4770 = vsel %vm422, %v4752, 0.0
      %4771 = vadd.xlane.f32.xlu0 %v4770
      %v4772 = vpop.xlane.xlu0 %4771
      %v4773 = vsel %vm422, %v4753, 0.0
      %4774 = vadd.xlane.f32.xlu0 %v4773
      %v4775 = vpop.xlane.xlu0 %4774
      %v4776 = vsel %vm422, %v4754, 0.0
      %4777 = vadd.xlane.f32.xlu0 %v4776
      %v4778 = vpop.xlane.xlu0 %4777
      %v4779 = vperm.slane %v412, 7
      %v4780 = vmul.f32 %v386, %v4779
      %v4781 = vmul.f32 %v387, %v4779
      %v4782 = vmul.f32 %v388, %v4779
      %v4783 = vmul.f32 %v389, %v4779
      %v4784 = vmul.f32 %v390, %v4779
      %v4785 = vmul.f32 %v391, %v4779
      %v4786 = vmul.f32 %v392, %v4779
      %v4787 = vmul.f32 %v393, %v4779
      %v4788 = vsel %vm422, %v4780, 0.0
      %4789 = vadd.xlane.f32.xlu0 %v4788
      %v4790 = vpop.xlane.xlu0 %4789
      %v4791 = vsel %vm422, %v4781, 0.0
      %4792 = vadd.xlane.f32.xlu0 %v4791
      %v4793 = vpop.xlane.xlu0 %4792
      %v4794 = vsel %vm422, %v4782, 0.0
      %4795 = vadd.xlane.f32.xlu0 %v4794
      %v4796 = vpop.xlane.xlu0 %4795
      %v4797 = vsel %vm422, %v4783, 0.0
      %4798 = vadd.xlane.f32.xlu0 %v4797
      %v4799 = vpop.xlane.xlu0 %4798
      %v4800 = vsel %vm422, %v4784, 0.0
      %4801 = vadd.xlane.f32.xlu0 %v4800
      %v4802 = vpop.xlane.xlu0 %4801
      %v4803 = vsel %vm422, %v4785, 0.0
      %4804 = vadd.xlane.f32.xlu0 %v4803
      %v4805 = vpop.xlane.xlu0 %4804
      %v4806 = vsel %vm422, %v4786, 0.0
      %4807 = vadd.xlane.f32.xlu0 %v4806
      %v4808 = vpop.xlane.xlu0 %4807
      %v4809 = vsel %vm422, %v4787, 0.0
      %4810 = vadd.xlane.f32.xlu0 %v4809
      %v4811 = vpop.xlane.xlu0 %4810
      %v4812 = vrot.slane %v411, 7
      %v4813 = vsel %vm422, %v4812, 0
      %4815 = vmatpush.msra.mxu0 0.0
      %4816 = vmatpush.msra.mxu0 0.0
      %4817 = vmatpush.msra.mxu0 0.0
      %4818 = vmatpush.msra.mxu0 0.0
      %4819 = vmatpush.msra.mxu0 0.0
      %4820 = vmatpush.msra.mxu0 0.0
      %4821 = vmatpush.msra.mxu0 0.0
      %4822 = vmatpush.msra.mxu0 0.0
      %v4823 = vand.u32 %v4472, 4294901760
      %4824 = vmatpush.msra.mxu0 %v4823
      %v4825 = vand.u32 %v4471, 4294901760
      %4826 = vmatpush.msra.mxu0 %v4825
      %v4827 = vand.u32 %v4470, 4294901760
      %4828 = vmatpush.msra.mxu0 %v4827
      %v4829 = vand.u32 %v4469, 4294901760
      %4830 = vmatpush.msra.mxu0 %v4829
      %v4831 = vand.u32 %v4468, 4294901760
      %4832 = vmatpush.msra.mxu0 %v4831
      %v4833 = vand.u32 %v4467, 4294901760
      %4834 = vmatpush.msra.mxu0 %v4833
      %v4835 = vand.u32 %v4466, 4294901760
      %4836 = vmatpush.msra.mxu0 %v4835
      %v4837 = vand.u32 %v4465, 4294901760
      %4838 = vmatpush.msra.mxu0 %v4837
      %v4839 = vand.u32 %v4813, 4294901760
      %v4840 = vsub.f32 %v4813, %v4839
      %v4841 = vand.u32 %v4840, 4294901760
      %v4842 = vsub.f32 %v4840, %v4841
      %v4843 = vand.u32 %v4842, 4294901760
      %4844 = vmatmul.f32.gmra.mxu0 %v4843
      %v4845 = vpop.f32.mrf.mxu0
      %v4846 = vadd.f32 0.0, %v4845
      %4847 = vdwg.mxu0
      %4848 = vmatpush.msra.mxu0 0.0
      %4849 = vmatpush.msra.mxu0 0.0
      %4850 = vmatpush.msra.mxu0 0.0
      %4851 = vmatpush.msra.mxu0 0.0
      %4852 = vmatpush.msra.mxu0 0.0
      %4853 = vmatpush.msra.mxu0 0.0
      %4854 = vmatpush.msra.mxu0 0.0
      %4855 = vmatpush.msra.mxu0 0.0
      %v4856 = vand.u32 %v4472, 4294901760
      %v4857 = vsub.f32 %v4472, %v4856
      %v4858 = vand.u32 %v4857, 4294901760
      %v4859 = vsub.f32 %v4857, %v4858
      %v4860 = vand.u32 %v4859, 4294901760
      %4861 = vmatpush.msra.mxu0 %v4860
      %v4862 = vand.u32 %v4471, 4294901760
      %v4863 = vsub.f32 %v4471, %v4862
      %v4864 = vand.u32 %v4863, 4294901760
      %v4865 = vsub.f32 %v4863, %v4864
      %v4866 = vand.u32 %v4865, 4294901760
      %4867 = vmatpush.msra.mxu0 %v4866
      %v4868 = vand.u32 %v4470, 4294901760
      %v4869 = vsub.f32 %v4470, %v4868
      %v4870 = vand.u32 %v4869, 4294901760
      %v4871 = vsub.f32 %v4869, %v4870
      %v4872 = vand.u32 %v4871, 4294901760
      %4873 = vmatpush.msra.mxu0 %v4872
      %v4874 = vand.u32 %v4469, 4294901760
      %v4875 = vsub.f32 %v4469, %v4874
      %v4876 = vand.u32 %v4875, 4294901760
      %v4877 = vsub.f32 %v4875, %v4876
      %v4878 = vand.u32 %v4877, 4294901760
      %4879 = vmatpush.msra.mxu0 %v4878
      %v4880 = vand.u32 %v4468, 4294901760
      %v4881 = vsub.f32 %v4468, %v4880
      %v4882 = vand.u32 %v4881, 4294901760
      %v4883 = vsub.f32 %v4881, %v4882
      %v4884 = vand.u32 %v4883, 4294901760
      %4885 = vmatpush.msra.mxu0 %v4884
      %v4886 = vand.u32 %v4467, 4294901760
      %v4887 = vsub.f32 %v4467, %v4886
      %v4888 = vand.u32 %v4887, 4294901760
      %v4889 = vsub.f32 %v4887, %v4888
      %v4890 = vand.u32 %v4889, 4294901760
      %4891 = vmatpush.msra.mxu0 %v4890
      %v4892 = vand.u32 %v4466, 4294901760
      %v4893 = vsub.f32 %v4466, %v4892
      %v4894 = vand.u32 %v4893, 4294901760
      %v4895 = vsub.f32 %v4893, %v4894
      %v4896 = vand.u32 %v4895, 4294901760
      %4897 = vmatpush.msra.mxu0 %v4896
      %v4898 = vand.u32 %v4465, 4294901760
      %v4899 = vsub.f32 %v4465, %v4898
      %v4900 = vand.u32 %v4899, 4294901760
      %v4901 = vsub.f32 %v4899, %v4900
      %v4902 = vand.u32 %v4901, 4294901760
      %4903 = vmatpush.msra.mxu0 %v4902
      %v4904 = vand.u32 %v4813, 4294901760
      %4905 = vmatmul.f32.gmra.mxu0 %v4904
      %v4906 = vpop.f32.mrf.mxu0
      %v4907 = vadd.f32 %v4846, %v4906
      %4908 = vdwg.mxu0
      %4909 = vmatpush.msra.mxu0 0.0
      %4910 = vmatpush.msra.mxu0 0.0
      %4911 = vmatpush.msra.mxu0 0.0
      %4912 = vmatpush.msra.mxu0 0.0
      %4913 = vmatpush.msra.mxu0 0.0
      %4914 = vmatpush.msra.mxu0 0.0
      %4915 = vmatpush.msra.mxu0 0.0
      %4916 = vmatpush.msra.mxu0 0.0
      %v4917 = vand.u32 %v4472, 4294901760
      %v4918 = vsub.f32 %v4472, %v4917
      %4919 = vmatpush.msra.mxu0 %v4918
      %v4920 = vand.u32 %v4471, 4294901760
      %v4921 = vsub.f32 %v4471, %v4920
      %4922 = vmatpush.msra.mxu0 %v4921
      %v4923 = vand.u32 %v4470, 4294901760
      %v4924 = vsub.f32 %v4470, %v4923
      %4925 = vmatpush.msra.mxu0 %v4924
      %v4926 = vand.u32 %v4469, 4294901760
      %v4927 = vsub.f32 %v4469, %v4926
      %4928 = vmatpush.msra.mxu0 %v4927
      %v4929 = vand.u32 %v4468, 4294901760
      %v4930 = vsub.f32 %v4468, %v4929
      %4931 = vmatpush.msra.mxu0 %v4930
      %v4932 = vand.u32 %v4467, 4294901760
      %v4933 = vsub.f32 %v4467, %v4932
      %4934 = vmatpush.msra.mxu0 %v4933
      %v4935 = vand.u32 %v4466, 4294901760
      %v4936 = vsub.f32 %v4466, %v4935
      %4937 = vmatpush.msra.mxu0 %v4936
      %v4938 = vand.u32 %v4465, 4294901760
      %v4939 = vsub.f32 %v4465, %v4938
      %4940 = vmatpush.msra.mxu0 %v4939
      %v4941 = vand.u32 %v4813, 4294901760
      %v4942 = vsub.f32 %v4813, %v4941
      %4943 = vmatmul.f32.gmra.mxu0 %v4942
      %v4944 = vpop.f32.mrf.mxu0
      %v4945 = vadd.f32 %v4907, %v4944
      %4946 = vdwg.mxu0
      %4947 = vmatpush.msra.mxu0 0.0
      %4948 = vmatpush.msra.mxu0 0.0
      %4949 = vmatpush.msra.mxu0 0.0
      %4950 = vmatpush.msra.mxu0 0.0
      %4951 = vmatpush.msra.mxu0 0.0
      %4952 = vmatpush.msra.mxu0 0.0
      %4953 = vmatpush.msra.mxu0 0.0
      %4954 = vmatpush.msra.mxu0 0.0
      %v4955 = vand.u32 %v4472, 4294901760
      %4956 = vmatpush.msra.mxu0 %v4955
      %v4957 = vand.u32 %v4471, 4294901760
      %4958 = vmatpush.msra.mxu0 %v4957
      %v4959 = vand.u32 %v4470, 4294901760
      %4960 = vmatpush.msra.mxu0 %v4959
      %v4961 = vand.u32 %v4469, 4294901760
      %4962 = vmatpush.msra.mxu0 %v4961
      %v4963 = vand.u32 %v4468, 4294901760
      %4964 = vmatpush.msra.mxu0 %v4963
      %v4965 = vand.u32 %v4467, 4294901760
      %4966 = vmatpush.msra.mxu0 %v4965
      %v4967 = vand.u32 %v4466, 4294901760
      %4968 = vmatpush.msra.mxu0 %v4967
      %v4969 = vand.u32 %v4465, 4294901760
      %4970 = vmatpush.msra.mxu0 %v4969
      %v4971 = vand.u32 %v4813, 4294901760
      %v4972 = vsub.f32 %v4813, %v4971
      %v4973 = vand.u32 %v4972, 4294901760
      %4974 = vmatmul.f32.gmra.mxu0 %v4973
      %v4975 = vpop.f32.mrf.mxu0
      %v4976 = vadd.f32 %v4945, %v4975
      %4977 = vdwg.mxu0
      %4978 = vmatpush.msra.mxu0 0.0
      %4979 = vmatpush.msra.mxu0 0.0
      %4980 = vmatpush.msra.mxu0 0.0
      %4981 = vmatpush.msra.mxu0 0.0
      %4982 = vmatpush.msra.mxu0 0.0
      %4983 = vmatpush.msra.mxu0 0.0
      %4984 = vmatpush.msra.mxu0 0.0
      %4985 = vmatpush.msra.mxu0 0.0
      %v4986 = vand.u32 %v4472, 4294901760
      %v4987 = vsub.f32 %v4472, %v4986
      %v4988 = vand.u32 %v4987, 4294901760
      %4989 = vmatpush.msra.mxu0 %v4988
      %v4990 = vand.u32 %v4471, 4294901760
      %v4991 = vsub.f32 %v4471, %v4990
      %v4992 = vand.u32 %v4991, 4294901760
      %4993 = vmatpush.msra.mxu0 %v4992
      %v4994 = vand.u32 %v4470, 4294901760
      %v4995 = vsub.f32 %v4470, %v4994
      %v4996 = vand.u32 %v4995, 4294901760
      %4997 = vmatpush.msra.mxu0 %v4996
      %v4998 = vand.u32 %v4469, 4294901760
      %v4999 = vsub.f32 %v4469, %v4998
      %v5000 = vand.u32 %v4999, 4294901760
      %5001 = vmatpush.msra.mxu0 %v5000
      %v5002 = vand.u32 %v4468, 4294901760
      %v5003 = vsub.f32 %v4468, %v5002
      %v5004 = vand.u32 %v5003, 4294901760
      %5005 = vmatpush.msra.mxu0 %v5004
      %v5006 = vand.u32 %v4467, 4294901760
      %v5007 = vsub.f32 %v4467, %v5006
      %v5008 = vand.u32 %v5007, 4294901760
      %5009 = vmatpush.msra.mxu0 %v5008
      %v5010 = vand.u32 %v4466, 4294901760
      %v5011 = vsub.f32 %v4466, %v5010
      %v5012 = vand.u32 %v5011, 4294901760
      %5013 = vmatpush.msra.mxu0 %v5012
      %v5014 = vand.u32 %v4465, 4294901760
      %v5015 = vsub.f32 %v4465, %v5014
      %v5016 = vand.u32 %v5015, 4294901760
      %5017 = vmatpush.msra.mxu0 %v5016
      %v5018 = vand.u32 %v4813, 4294901760
      %5019 = vmatmul.f32.gmra.mxu0 %v5018
      %v5020 = vpop.f32.mrf.mxu0
      %v5021 = vadd.f32 %v4976, %v5020
      %5022 = vdwg.mxu0
      %5023 = vmatpush.msra.mxu0 0.0
      %5024 = vmatpush.msra.mxu0 0.0
      %5025 = vmatpush.msra.mxu0 0.0
      %5026 = vmatpush.msra.mxu0 0.0
      %5027 = vmatpush.msra.mxu0 0.0
      %5028 = vmatpush.msra.mxu0 0.0
      %5029 = vmatpush.msra.mxu0 0.0
      %5030 = vmatpush.msra.mxu0 0.0
      %v5031 = vand.u32 %v4472, 4294901760
      %5032 = vmatpush.msra.mxu0 %v5031
      %v5033 = vand.u32 %v4471, 4294901760
      %5034 = vmatpush.msra.mxu0 %v5033
      %v5035 = vand.u32 %v4470, 4294901760
      %5036 = vmatpush.msra.mxu0 %v5035
      %v5037 = vand.u32 %v4469, 4294901760
      %5038 = vmatpush.msra.mxu0 %v5037
      %v5039 = vand.u32 %v4468, 4294901760
      %5040 = vmatpush.msra.mxu0 %v5039
      %v5041 = vand.u32 %v4467, 4294901760
      %5042 = vmatpush.msra.mxu0 %v5041
      %v5043 = vand.u32 %v4466, 4294901760
      %5044 = vmatpush.msra.mxu0 %v5043
      %v5045 = vand.u32 %v4465, 4294901760
      %5046 = vmatpush.msra.mxu0 %v5045
      %v5047 = vand.u32 %v4813, 4294901760
      %5048 = vmatmul.f32.gmra.mxu0 %v5047
      %v5049 = vpop.f32.mrf.mxu0
      %v5050 = vadd.f32 %v5021, %v5049
      %5051 = vdwg.mxu0
      %v5052 = vmul.f32 %v4465, %v4724
      %v5053 = vmul.f32 %v4466, %v4727
      %v5054 = vmul.f32 %v4467, %v4730
      %v5055 = vmul.f32 %v4468, %v4733
      %v5056 = vmul.f32 %v4469, %v4736
      %v5057 = vmul.f32 %v4470, %v4739
      %v5058 = vmul.f32 %v4471, %v4742
      %v5059 = vmul.f32 %v4472, %v4745
      %v5060 = vperm.slane %v5050, 0
      %v5061 = vmul.f32 %v4790, %v5060
      %v5062 = vmul.f32 %v4793, %v5060
      %v5063 = vmul.f32 %v4796, %v5060
      %v5064 = vmul.f32 %v4799, %v5060
      %v5065 = vmul.f32 %v4802, %v5060
      %v5066 = vmul.f32 %v4805, %v5060
      %v5067 = vmul.f32 %v4808, %v5060
      %v5068 = vmul.f32 %v4811, %v5060
      %v5069 = vperm.slane %v410, 7
      %v5070 = vmul.f32 %v4757, %v5069
      %v5071 = vmul.f32 %v4760, %v5069
      %v5072 = vmul.f32 %v4763, %v5069
      %v5073 = vmul.f32 %v4766, %v5069
      %v5074 = vmul.f32 %v4769, %v5069
      %v5075 = vmul.f32 %v4772, %v5069
      %v5076 = vmul.f32 %v4775, %v5069
      %v5077 = vmul.f32 %v4778, %v5069
      %v5078 = vadd.f32 %v5061, %v5070
      %v5079 = vadd.f32 %v5062, %v5071
      %v5080 = vadd.f32 %v5063, %v5072
      %v5081 = vadd.f32 %v5064, %v5073
      %v5082 = vadd.f32 %v5065, %v5074
      %v5083 = vadd.f32 %v5066, %v5075
      %v5084 = vadd.f32 %v5067, %v5076
      %v5085 = vadd.f32 %v5068, %v5077
      %v5086 = vmul.f32 %v5078, %v394
      %v5087 = vmul.f32 %v5079, %v395
      %v5088 = vmul.f32 %v5080, %v396
      %v5089 = vmul.f32 %v5081, %v397
      %v5090 = vmul.f32 %v5082, %v398
      %v5091 = vmul.f32 %v5083, %v399
      %v5092 = vmul.f32 %v5084, %v400
      %v5093 = vmul.f32 %v5085, %v401
      %v5094 = vadd.f32 %v5052, %v5086
      %v5095 = vadd.f32 %v5053, %v5087
      %v5096 = vadd.f32 %v5054, %v5088
      %v5097 = vadd.f32 %v5055, %v5089
      %v5098 = vadd.f32 %v5056, %v5090
      %v5099 = vadd.f32 %v5057, %v5091
      %v5100 = vadd.f32 %v5058, %v5092
      %v5101 = vadd.f32 %v5059, %v5093
      %v5102 = vrot.slane %v408, 7
      %v5103 = vsel %vm422, %v5102, 0
      %5105 = vmatpush.msra.mxu0 0.0
      %5106 = vmatpush.msra.mxu0 0.0
      %5107 = vmatpush.msra.mxu0 0.0
      %5108 = vmatpush.msra.mxu0 0.0
      %5109 = vmatpush.msra.mxu0 0.0
      %5110 = vmatpush.msra.mxu0 0.0
      %5111 = vmatpush.msra.mxu0 0.0
      %5112 = vmatpush.msra.mxu0 0.0
      %v5113 = vand.u32 %v5101, 4294901760
      %5114 = vmatpush.msra.mxu0 %v5113
      %v5115 = vand.u32 %v5100, 4294901760
      %5116 = vmatpush.msra.mxu0 %v5115
      %v5117 = vand.u32 %v5099, 4294901760
      %5118 = vmatpush.msra.mxu0 %v5117
      %v5119 = vand.u32 %v5098, 4294901760
      %5120 = vmatpush.msra.mxu0 %v5119
      %v5121 = vand.u32 %v5097, 4294901760
      %5122 = vmatpush.msra.mxu0 %v5121
      %v5123 = vand.u32 %v5096, 4294901760
      %5124 = vmatpush.msra.mxu0 %v5123
      %v5125 = vand.u32 %v5095, 4294901760
      %5126 = vmatpush.msra.mxu0 %v5125
      %v5127 = vand.u32 %v5094, 4294901760
      %5128 = vmatpush.msra.mxu0 %v5127
      %v5129 = vand.u32 %v5103, 4294901760
      %v5130 = vsub.f32 %v5103, %v5129
      %v5131 = vand.u32 %v5130, 4294901760
      %v5132 = vsub.f32 %v5130, %v5131
      %v5133 = vand.u32 %v5132, 4294901760
      %5134 = vmatmul.f32.gmra.mxu0 %v5133
      %v5135 = vpop.f32.mrf.mxu0
      %v5136 = vadd.f32 0.0, %v5135
      %5137 = vdwg.mxu0
      %5138 = vmatpush.msra.mxu0 0.0
      %5139 = vmatpush.msra.mxu0 0.0
      %5140 = vmatpush.msra.mxu0 0.0
      %5141 = vmatpush.msra.mxu0 0.0
      %5142 = vmatpush.msra.mxu0 0.0
      %5143 = vmatpush.msra.mxu0 0.0
      %5144 = vmatpush.msra.mxu0 0.0
      %5145 = vmatpush.msra.mxu0 0.0
      %v5146 = vand.u32 %v5101, 4294901760
      %v5147 = vsub.f32 %v5101, %v5146
      %v5148 = vand.u32 %v5147, 4294901760
      %v5149 = vsub.f32 %v5147, %v5148
      %v5150 = vand.u32 %v5149, 4294901760
      %5151 = vmatpush.msra.mxu0 %v5150
      %v5152 = vand.u32 %v5100, 4294901760
      %v5153 = vsub.f32 %v5100, %v5152
      %v5154 = vand.u32 %v5153, 4294901760
      %v5155 = vsub.f32 %v5153, %v5154
      %v5156 = vand.u32 %v5155, 4294901760
      %5157 = vmatpush.msra.mxu0 %v5156
      %v5158 = vand.u32 %v5099, 4294901760
      %v5159 = vsub.f32 %v5099, %v5158
      %v5160 = vand.u32 %v5159, 4294901760
      %v5161 = vsub.f32 %v5159, %v5160
      %v5162 = vand.u32 %v5161, 4294901760
      %5163 = vmatpush.msra.mxu0 %v5162
      %v5164 = vand.u32 %v5098, 4294901760
      %v5165 = vsub.f32 %v5098, %v5164
      %v5166 = vand.u32 %v5165, 4294901760
      %v5167 = vsub.f32 %v5165, %v5166
      %v5168 = vand.u32 %v5167, 4294901760
      %5169 = vmatpush.msra.mxu0 %v5168
      %v5170 = vand.u32 %v5097, 4294901760
      %v5171 = vsub.f32 %v5097, %v5170
      %v5172 = vand.u32 %v5171, 4294901760
      %v5173 = vsub.f32 %v5171, %v5172
      %v5174 = vand.u32 %v5173, 4294901760
      %5175 = vmatpush.msra.mxu0 %v5174
      %v5176 = vand.u32 %v5096, 4294901760
      %v5177 = vsub.f32 %v5096, %v5176
      %v5178 = vand.u32 %v5177, 4294901760
      %v5179 = vsub.f32 %v5177, %v5178
      %v5180 = vand.u32 %v5179, 4294901760
      %5181 = vmatpush.msra.mxu0 %v5180
      %v5182 = vand.u32 %v5095, 4294901760
      %v5183 = vsub.f32 %v5095, %v5182
      %v5184 = vand.u32 %v5183, 4294901760
      %v5185 = vsub.f32 %v5183, %v5184
      %v5186 = vand.u32 %v5185, 4294901760
      %5187 = vmatpush.msra.mxu0 %v5186
      %v5188 = vand.u32 %v5094, 4294901760
      %v5189 = vsub.f32 %v5094, %v5188
      %v5190 = vand.u32 %v5189, 4294901760
      %v5191 = vsub.f32 %v5189, %v5190
      %v5192 = vand.u32 %v5191, 4294901760
      %5193 = vmatpush.msra.mxu0 %v5192
      %v5194 = vand.u32 %v5103, 4294901760
      %5195 = vmatmul.f32.gmra.mxu0 %v5194
      %v5196 = vpop.f32.mrf.mxu0
      %v5197 = vadd.f32 %v5136, %v5196
      %5198 = vdwg.mxu0
      %5199 = vmatpush.msra.mxu0 0.0
      %5200 = vmatpush.msra.mxu0 0.0
      %5201 = vmatpush.msra.mxu0 0.0
      %5202 = vmatpush.msra.mxu0 0.0
      %5203 = vmatpush.msra.mxu0 0.0
      %5204 = vmatpush.msra.mxu0 0.0
      %5205 = vmatpush.msra.mxu0 0.0
      %5206 = vmatpush.msra.mxu0 0.0
      %v5207 = vand.u32 %v5101, 4294901760
      %v5208 = vsub.f32 %v5101, %v5207
      %5209 = vmatpush.msra.mxu0 %v5208
      %v5210 = vand.u32 %v5100, 4294901760
      %v5211 = vsub.f32 %v5100, %v5210
      %5212 = vmatpush.msra.mxu0 %v5211
      %v5213 = vand.u32 %v5099, 4294901760
      %v5214 = vsub.f32 %v5099, %v5213
      %5215 = vmatpush.msra.mxu0 %v5214
      %v5216 = vand.u32 %v5098, 4294901760
      %v5217 = vsub.f32 %v5098, %v5216
      %5218 = vmatpush.msra.mxu0 %v5217
      %v5219 = vand.u32 %v5097, 4294901760
      %v5220 = vsub.f32 %v5097, %v5219
      %5221 = vmatpush.msra.mxu0 %v5220
      %v5222 = vand.u32 %v5096, 4294901760
      %v5223 = vsub.f32 %v5096, %v5222
      %5224 = vmatpush.msra.mxu0 %v5223
      %v5225 = vand.u32 %v5095, 4294901760
      %v5226 = vsub.f32 %v5095, %v5225
      %5227 = vmatpush.msra.mxu0 %v5226
      %v5228 = vand.u32 %v5094, 4294901760
      %v5229 = vsub.f32 %v5094, %v5228
      %5230 = vmatpush.msra.mxu0 %v5229
      %v5231 = vand.u32 %v5103, 4294901760
      %v5232 = vsub.f32 %v5103, %v5231
      %5233 = vmatmul.f32.gmra.mxu0 %v5232
      %v5234 = vpop.f32.mrf.mxu0
      %v5235 = vadd.f32 %v5197, %v5234
      %5236 = vdwg.mxu0
      %5237 = vmatpush.msra.mxu0 0.0
      %5238 = vmatpush.msra.mxu0 0.0
      %5239 = vmatpush.msra.mxu0 0.0
      %5240 = vmatpush.msra.mxu0 0.0
      %5241 = vmatpush.msra.mxu0 0.0
      %5242 = vmatpush.msra.mxu0 0.0
      %5243 = vmatpush.msra.mxu0 0.0
      %5244 = vmatpush.msra.mxu0 0.0
      %v5245 = vand.u32 %v5101, 4294901760
      %5246 = vmatpush.msra.mxu0 %v5245
      %v5247 = vand.u32 %v5100, 4294901760
      %5248 = vmatpush.msra.mxu0 %v5247
      %v5249 = vand.u32 %v5099, 4294901760
      %5250 = vmatpush.msra.mxu0 %v5249
      %v5251 = vand.u32 %v5098, 4294901760
      %5252 = vmatpush.msra.mxu0 %v5251
      %v5253 = vand.u32 %v5097, 4294901760
      %5254 = vmatpush.msra.mxu0 %v5253
      %v5255 = vand.u32 %v5096, 4294901760
      %5256 = vmatpush.msra.mxu0 %v5255
      %v5257 = vand.u32 %v5095, 4294901760
      %5258 = vmatpush.msra.mxu0 %v5257
      %v5259 = vand.u32 %v5094, 4294901760
      %5260 = vmatpush.msra.mxu0 %v5259
      %v5261 = vand.u32 %v5103, 4294901760
      %v5262 = vsub.f32 %v5103, %v5261
      %v5263 = vand.u32 %v5262, 4294901760
      %5264 = vmatmul.f32.gmra.mxu0 %v5263
      %v5265 = vpop.f32.mrf.mxu0
      %v5266 = vadd.f32 %v5235, %v5265
      %5267 = vdwg.mxu0
      %5268 = vmatpush.msra.mxu0 0.0
      %5269 = vmatpush.msra.mxu0 0.0
      %5270 = vmatpush.msra.mxu0 0.0
      %5271 = vmatpush.msra.mxu0 0.0
      %5272 = vmatpush.msra.mxu0 0.0
      %5273 = vmatpush.msra.mxu0 0.0
      %5274 = vmatpush.msra.mxu0 0.0
      %5275 = vmatpush.msra.mxu0 0.0
      %v5276 = vand.u32 %v5101, 4294901760
      %v5277 = vsub.f32 %v5101, %v5276
      %v5278 = vand.u32 %v5277, 4294901760
      %5279 = vmatpush.msra.mxu0 %v5278
      %v5280 = vand.u32 %v5100, 4294901760
      %v5281 = vsub.f32 %v5100, %v5280
      %v5282 = vand.u32 %v5281, 4294901760
      %5283 = vmatpush.msra.mxu0 %v5282
      %v5284 = vand.u32 %v5099, 4294901760
      %v5285 = vsub.f32 %v5099, %v5284
      %v5286 = vand.u32 %v5285, 4294901760
      %5287 = vmatpush.msra.mxu0 %v5286
      %v5288 = vand.u32 %v5098, 4294901760
      %v5289 = vsub.f32 %v5098, %v5288
      %v5290 = vand.u32 %v5289, 4294901760
      %5291 = vmatpush.msra.mxu0 %v5290
      %v5292 = vand.u32 %v5097, 4294901760
      %v5293 = vsub.f32 %v5097, %v5292
      %v5294 = vand.u32 %v5293, 4294901760
      %5295 = vmatpush.msra.mxu0 %v5294
      %v5296 = vand.u32 %v5096, 4294901760
      %v5297 = vsub.f32 %v5096, %v5296
      %v5298 = vand.u32 %v5297, 4294901760
      %5299 = vmatpush.msra.mxu0 %v5298
      %v5300 = vand.u32 %v5095, 4294901760
      %v5301 = vsub.f32 %v5095, %v5300
      %v5302 = vand.u32 %v5301, 4294901760
      %5303 = vmatpush.msra.mxu0 %v5302
      %v5304 = vand.u32 %v5094, 4294901760
      %v5305 = vsub.f32 %v5094, %v5304
      %v5306 = vand.u32 %v5305, 4294901760
      %5307 = vmatpush.msra.mxu0 %v5306
      %v5308 = vand.u32 %v5103, 4294901760
      %5309 = vmatmul.f32.gmra.mxu0 %v5308
      %v5310 = vpop.f32.mrf.mxu0
      %v5311 = vadd.f32 %v5266, %v5310
      %5312 = vdwg.mxu0
      %5313 = vmatpush.msra.mxu0 0.0
      %5314 = vmatpush.msra.mxu0 0.0
      %5315 = vmatpush.msra.mxu0 0.0
      %5316 = vmatpush.msra.mxu0 0.0
      %5317 = vmatpush.msra.mxu0 0.0
      %5318 = vmatpush.msra.mxu0 0.0
      %5319 = vmatpush.msra.mxu0 0.0
      %5320 = vmatpush.msra.mxu0 0.0
      %v5321 = vand.u32 %v5101, 4294901760
      %5322 = vmatpush.msra.mxu0 %v5321
      %v5323 = vand.u32 %v5100, 4294901760
      %5324 = vmatpush.msra.mxu0 %v5323
      %v5325 = vand.u32 %v5099, 4294901760
      %5326 = vmatpush.msra.mxu0 %v5325
      %v5327 = vand.u32 %v5098, 4294901760
      %5328 = vmatpush.msra.mxu0 %v5327
      %v5329 = vand.u32 %v5097, 4294901760
      %5330 = vmatpush.msra.mxu0 %v5329
      %v5331 = vand.u32 %v5096, 4294901760
      %5332 = vmatpush.msra.mxu0 %v5331
      %v5333 = vand.u32 %v5095, 4294901760
      %5334 = vmatpush.msra.mxu0 %v5333
      %v5335 = vand.u32 %v5094, 4294901760
      %5336 = vmatpush.msra.mxu0 %v5335
      %v5337 = vand.u32 %v5103, 4294901760
      %5338 = vmatmul.f32.gmra.mxu0 %v5337
      %v5339 = vpop.f32.mrf.mxu0
      %v5340 = vadd.f32 %v5311, %v5339
      %5341 = vdwg.mxu0
      %v5343 = vrot.slane %v1566, 7
      %v5346 = vrot.slane %v2195, 6
      %v5349 = vrot.slane %v2824, 5
      %v5352 = vrot.slane %v3453, 4
      %v5355 = vrot.slane %v4082, 3
      %v5358 = vrot.slane %v4711, 2
      %v5361 = vrot.slane %v5340, 1
      %vm5363 = vcmask 1040384
      %v5364 = vsel %vm5363, %v937, %v5343
      %vm5365 = vcmask 1041408
      %v5366 = vsel %vm5365, %v5364, %v5346
      %vm5367 = vcmask 1042432
      %v5368 = vsel %vm5367, %v5366, %v5349
      %vm5369 = vcmask 1043456
      %v5370 = vsel %vm5369, %v5368, %v5352
      %vm5371 = vcmask 1044480
      %v5372 = vsel %vm5371, %v5370, %v5355
      %vm5373 = vcmask 1045504
      %v5374 = vsel %vm5373, %v5372, %v5358
      %vm5375 = vcmask 1046528
      %v5376 = vsel %vm5375, %v5374, %v5361
      %5377 = vst.msk [vmem:[%s358] sm:$0xff] %vm422, %v5376
      %p5378 = scmp.lt.s32.totalorder %s18, 1
      %s5379 = scalar_select %p5378, %s18, 1
      %s5380 = smul.addr %s5379, 8
      %s5381 = scalar_lea.vmem %s7, %s5380
      // Predicated region
      $region49: #{forward_pallas.6} parent=47 // pred_check
        %p5382 = pneg %p213
      $region50: #{forward_pallas.6} parent=47 // pred_check_branch
        %5384 = sbr.rel (%p5382) target = $region52
      $region51: #{forward_pallas.6} parent=47 // pred_region
        _
      $region52: #{forward_pallas.6} parent=47 // pred_fallthru
        _
    $region48: #{forward_pallas.6} parent=5 // pred_fallthru
      _
    %p5385 = scmp.le.s32.totalorder 2, %s13
    // Predicated region
    $region53: #{forward_pallas.6} parent=5 // pred_check
      %p5386 = pneg %p5385
    $region54: #{forward_pallas.6} parent=5 // pred_check_branch
      %5388 = sbr.rel (%p5386) target = $region56
    $region55: #{forward_pallas.6} parent=5 // pred_region
      %s5389 = ssub.s32 %s13, 2
      // Predicated region
      $region57: #{forward_pallas.6} parent=55 // pred_check
        %p5390 = pneg %p219
      $region58: #{forward_pallas.6} parent=55 // pred_check_branch
        %5392 = sbr.rel (%p5390) target = $region60
      $region59: #{forward_pallas.6} parent=55 // pred_region
        %p5393 = scmp.lt.s32.totalorder %s19, 1
        %s5394 = scalar_select %p5393, %s19, 1
        %s5395 = smul.addr %s5394, 8
        %s5396 = scalar_lea.vmem %s7, %s5395
      $region60: #{forward_pallas.6} parent=55 // pred_fallthru
        _
    $region56: #{forward_pallas.6} parent=5 // pred_fallthru
      _
  $region6: #{forward_pallas.6} parent=0 // loop_footer
    %s17 = sadd.s32 1, %s13
  $region7: #{forward_pallas.6} parent=0 // loop_footer_branch
    %12 = sbr.rel target = $region3
  $region8: #{forward_pallas.6} parent=0 // loop_exit
    _

</llo_original>
